<compile_context>
chip_gen: v7x
topology: tpu7x:2x2x1
jax: 0.10.0
libtpu: 0.0.40
codegen_flags: <defaults>
</compile_context>

<pallas_src>
import functools

import jax
import jax.numpy as jnp
from jax.experimental import pallas as pl
from jax.experimental.pallas import tpu as pltpu

# ----------------------------- configuration -------------------------------
C_FEAT = 64            # backbone feature channels (stand-in size)
C_HID = 4 * C_FEAT     # ConvNeXt block expansion
BINS = 128             # SimDR 1-D classification bins (lane-dense)
J_SINGLE = 21
J_INTER = 2 * J_SINGLE
PATCH = 4              # stem patchify size / stride

# fused head column layout: joint-major, (x, y, z) interleaved, BINS lanes each;
# single-hand joints first, then interacting-hand joints.
POS_SINGLE = 3 * J_SINGLE              # 63 column-groups of 128 bins
POS_TOTAL = 3 * (J_SINGLE + J_INTER)   # 189
HEAD_TOTAL = POS_TOTAL * BINS          # 24192
NUM_TILES = 3                          # head-weight streaming grid steps
POS_PER_TILE = POS_TOTAL // NUM_TILES  # 63 (== POS_SINGLE: tile 0 is "single")
TILE_N = POS_PER_TILE * BINS           # 8064 output lanes per streamed tile
assert POS_PER_TILE == POS_SINGLE
assert NUM_TILES * TILE_N == HEAD_TOTAL

_NUM_BB = 12           # number of resident backbone refs passed to the kernels


# ------------------------------ kernel helpers ------------------------------
def _ln(x, g, b, eps=1e-6):
    mu = jnp.mean(x, axis=-1, keepdims=True)
    var = jnp.mean((x - mu) ** 2, axis=-1, keepdims=True)
    return (x - mu) * jax.lax.rsqrt(var + eps) * g + b


def _backbone_gap(bb_refs, *, n, hw):
    """Fused: stem matmul -> LN -> LN -> pw1+GELU -> pw2 -> residual -> GAP."""
    (patch_ref, stem_w_ref, stem_b_ref, stem_g_ref, stem_beta_ref,
     blk_g_ref, blk_beta_ref, pw1_w_ref, pw1_b_ref, pw2_w_ref, pw2_b_ref,
     gamma_ref) = bb_refs
    x = patch_ref[...].astype(jnp.bfloat16)
    feat = jnp.dot(x, stem_w_ref[...],
                   preferred_element_type=jnp.float32) + stem_b_ref[...]
    feat = _ln(feat, stem_g_ref[...], stem_beta_ref[...])
    # ConvNeXt block (depthwise 7x7 omitted — see TODO at top of file)
    h = _ln(feat, blk_g_ref[...], blk_beta_ref[...])
    h = jnp.dot(h.astype(jnp.bfloat16), pw1_w_ref[...],
                preferred_element_type=jnp.float32) + pw1_b_ref[...]
    h = jax.nn.gelu(h, approximate=True)   # TODO(synk): torch default is exact erf
    h = jnp.dot(h.astype(jnp.bfloat16), pw2_w_ref[...],
                preferred_element_type=jnp.float32) + pw2_b_ref[...]
    feat = feat + h * gamma_ref[...]
    # fused global-average-pool as a single reshaped reduction
    return jnp.mean(feat.reshape(n, hw, C_FEAT), axis=1)          # [n, C_FEAT]


def _head_tile(gap_ref, head_w_ref, head_b_ref):
    return (jnp.dot(gap_ref[...].astype(jnp.bfloat16), head_w_ref[...],
                    preferred_element_type=jnp.float32) + head_b_ref[...])


# ------------------------------ Pallas kernels ------------------------------
def _fused_test_kernel(*refs, n, hw):
    """Backbone (step 0, into scratch) + one streamed head tile -> logits tile."""
    bb_refs = refs[:_NUM_BB]
    head_w_ref, head_b_ref, logits_ref, gap_ref = refs[_NUM_BB:]
    j = pl.program_id(0)

    @pl.when(j == 0)
    def _():
        gap_ref[...] = _backbone_gap(bb_refs, n=n, hw=hw)

    logits_ref[...] = _head_tile(gap_ref, head_w_ref, head_b_ref)


def _fused_train_kernel(*refs, n, hw, group_scales):
    """Backbone + head tile + in-tile cross-entropy; accumulates 4 group losses."""
    bb_refs = refs[:_NUM_BB]
    head_w_ref, head_b_ref, tbin_ref, w_ref, loss_ref, gap_ref = refs[_NUM_BB:]
    j = pl.program_id(0)

    @pl.when(j == 0)
    def _():
        gap_ref[...] = _backbone_gap(bb_refs, n=n, hw=hw)
        loss_ref[...] = jnp.zeros_like(loss_ref)

    logits = _head_tile(gap_ref, head_w_ref, head_b_ref)          # [n, TILE_N]
    lg = logits.reshape(n, POS_PER_TILE, BINS)                    # per-bin groups
    mx = jnp.max(lg, axis=-1, keepdims=True)
    lse = jnp.log(jnp.sum(jnp.exp(lg - mx), axis=-1, keepdims=True)) + mx
    logp = lg - lse
    lane = jax.lax.broadcasted_iota(jnp.int32, lg.shape, 2)
    tb = tbin_ref[0][:, :, None]                                  # [n, P, 1] int32
    nll = jnp.sum(jnp.where(lane == tb, -logp, 0.0), axis=-1)     # [n, P]
    contrib = nll * w_ref[0] * (1.0 / BINS)                       # [n, P]

    pos = jax.lax.broadcasted_iota(jnp.int32, contrib.shape, 1)
    is_xy = (pos % 3) < 2          # (x, y) columns vs. z column within a joint
    is_single = j == 0             # tile 0 holds exactly the single-hand joints
    lane4 = jax.lax.broadcasted_iota(jnp.int32, (1, 4), 1)
    upd = jnp.zeros((1, 4), jnp.float32)
    scale = jnp.zeros((1, 4), jnp.float32)
    # group ids: 0=single_2d, 1=inter_2d, 2=single_z, 3=inter_z
    for gid, (single_flag, xy_flag) in enumerate(
            ((True, True), (False, True), (True, False), (False, False))):
        m = is_xy if xy_flag else jnp.logical_not(is_xy)
        m = jnp.logical_and(
            m, is_single if single_flag else jnp.logical_not(is_single))
        s = jnp.sum(jnp.where(m, contrib, 0.0), keepdims=True)    # (1, 1)
        upd = upd + jnp.where(lane4 == gid, s, 0.0)
        scale = scale + jnp.where(lane4 == gid, group_scales[gid], 0.0)
    loss_ref[...] = loss_ref[...] + upd

    @pl.when(j == pl.num_programs(0) - 1)
    def _():
        loss_ref[...] = loss_ref[...] * scale     # group mean * 100, done in-kernel


# ------------------------------ kernel wrappers -----------------------------
def _resident(shape):
    nd = len(shape)
    return pl.BlockSpec(shape, lambda j, _nd=nd: (0,) * _nd)


def _backbone_in_specs(m, pdim):
    return [
        _resident((m, pdim)),
        _resident((pdim, C_FEAT)), _resident((1, C_FEAT)),
        _resident((1, C_FEAT)), _resident((1, C_FEAT)),
        _resident((1, C_FEAT)), _resident((1, C_FEAT)),
        _resident((C_FEAT, C_HID)), _resident((1, C_HID)),
        _resident((C_HID, C_FEAT)), _resident((1, C_FEAT)),
        _resident((1, C_FEAT)),
    ]


def _backbone_args(params, patches):
    return (patches,
            params["stem_w"], params["stem_b"], params["stem_g"],
            params["stem_beta"], params["blk_g"], params["blk_beta"],
            params["pw1_w"], params["pw1_b"], params["pw2_w"], params["pw2_b"],
            params["blk_gamma"])


def _patchify(x_nchw):
    x = jnp.transpose(x_nchw, (0, 2, 3, 1)).astype(jnp.float32)   # NHWC
    n, h, w, c = x.shape
    hp, wp = h // PATCH, w // PATCH
    x = x.reshape(n, hp, PATCH, wp, PATCH, c)
    x = jnp.transpose(x, (0, 1, 3, 2, 4, 5))
    return x.reshape(n * hp * wp, PATCH * PATCH * c), hp * wp


def forward_test(params, x):
    patches, hw = _patchify(x)
    m, pdim = patches.shape
    n = x.shape[0]
    kernel = functools.partial(_fused_test_kernel, n=n, hw=hw)
    logits = pl.pallas_call(
        kernel,
        out_shape=jax.ShapeDtypeStruct((n, HEAD_TOTAL), jnp.float32),
        grid=(NUM_TILES,),
        in_specs=_backbone_in_specs(m, pdim) + [
            pl.BlockSpec((C_FEAT, TILE_N), lambda j: (0, j)),
            pl.BlockSpec((1, TILE_N), lambda j: (0, j)),
        ],
        out_specs=pl.BlockSpec((n, TILE_N), lambda j: (0, j)),
        scratch_shapes=[pltpu.VMEM((n, C_FEAT), jnp.float32)],
        compiler_params=pltpu.CompilerParams(
            dimension_semantics=("arbitrary",)),  # GAP scratch reused across steps
    )(*_backbone_args(params, patches), params["head_w"], params["head_b"])
    # joint-major (x,y,z) column layout -> straight contiguous reshapes, no concat
    single = logits[:, :POS_SINGLE * BINS].reshape(n, J_SINGLE, 3, BINS)
    inter = logits[:, POS_SINGLE * BINS:].reshape(n, J_INTER, 3, BINS)
    return {"joint_simdr_single": single, "joint_simdr_inter": inter}


def forward_train(params, x, targets_singles, targets_inters,
                  targets_weights_singles, targets_weights_inters):
    patches, hw = _patchify(x)
    m, pdim = patches.shape
    n = x.shape[0]

    # per-column-group target bins / weights in the fused-head column order
    coords = jnp.concatenate(
        [targets_singles.reshape(n, POS_SINGLE),
         targets_inters.reshape(n, 3 * J_INTER)], axis=1)          # [N, 189]
    tbin = jnp.clip(jnp.floor(coords), 0, BINS - 1).astype(jnp.int32)
    wvec = jnp.concatenate(
        [jnp.repeat(targets_weights_singles.astype(jnp.float32), 3, axis=1),
         jnp.repeat(targets_weights_inters.astype(jnp.float32), 3, axis=1)],
        axis=1)                                                     # [N, 189]
    tbin_t = tbin.reshape(n, NUM_TILES, POS_PER_TILE).transpose(1, 0, 2)
    w_t = wvec.reshape(n, NUM_TILES, POS_PER_TILE).transpose(1, 0, 2)

    counts = (n * J_SINGLE * 2, n * J_INTER * 2, n * J_SINGLE, n * J_INTER)
    group_scales = tuple(100.0 / c for c in counts)                # mean * 100

    kernel = functools.partial(_fused_train_kernel, n=n, hw=hw,
                               group_scales=group_scales)
    loss_vec = pl.pallas_call(
        kernel,
        out_shape=jax.ShapeDtypeStruct((1, 4), jnp.float32),
        grid=(NUM_TILES,),
        in_specs=_backbone_in_specs(m, pdim) + [
            pl.BlockSpec((C_FEAT, TILE_N), lambda j: (0, j)),
            pl.BlockSpec((1, TILE_N), lambda j: (0, j)),
            pl.BlockSpec((1, n, POS_PER_TILE), lambda j: (j, 0, 0)),
            pl.BlockSpec((1, n, POS_PER_TILE), lambda j: (j, 0, 0)),
        ],
        out_specs=pl.BlockSpec((1, 4), lambda j: (0, 0)),           # accumulator
        scratch_shapes=[pltpu.VMEM((n, C_FEAT), jnp.float32)],
        compiler_params=pltpu.CompilerParams(
            dimension_semantics=("arbitrary",)),
    )(*_backbone_args(params, patches), params["head_w"], params["head_b"],
      tbin_t, w_t)
    return {
        "simdr_single_2d": loss_vec[0, 0],
        "simdr_inter_2d": loss_vec[0, 1],
        "simdr_single_z": loss_vec[0, 2],
        "simdr_inter_z": loss_vec[0, 3],
    }


# ------------------------------ parameters ----------------------------------
def init_params(key):
    ks = jax.random.split(key, 4)

    def w(k, shape, scale):
        # matmul weights stored in bf16 (halves HBM streaming; f32 accumulation)
        return (scale * jax.random.normal(k, shape, jnp.float32)).astype(jnp.bfloat16)

    pdim = PATCH * PATCH * 3
    return {
        # backbone (convnext_tiny stand-in)
        "stem_w": w(ks[0], (pdim, C_FEAT), 0.1),
        "stem_b": jnp.zeros((1, C_FEAT), jnp.float32),
        "stem_g": jnp.ones((1, C_FEAT), jnp.float32),
        "stem_beta": jnp.zeros((1, C_FEAT), jnp.float32),
        "blk_g": jnp.ones((1, C_FEAT), jnp.float32),
        "blk_beta": jnp.zeros((1, C_FEAT), jnp.float32),
        "pw1_w": w(ks[1], (C_FEAT, C_HID), 0.05),
        "pw1_b": jnp.zeros((1, C_HID), jnp.float32),
        "pw2_w": w(ks[2], (C_HID, C_FEAT), 0.05),
        "pw2_b": jnp.zeros((1, C_FEAT), jnp.float32),
        "blk_gamma": 1e-6 * jnp.ones((1, C_FEAT), jnp.float32),
        # all four SimDR heads fused into one weight/bias; columns joint-major
        # with (x, y, z) interleaved, singles first then inters.
        "head_w": w(ks[3], (C_FEAT, HEAD_TOTAL), 0.05),
        "head_b": jnp.zeros((1, HEAD_TOTAL), jnp.float32),
    }


# ------------------------------ model forward --------------------------------
@functools.partial(jax.jit, static_argnames=("mode",))
def model_forward(params, x, targets_singles, targets_inters,
                  targets_weights_singles, targets_weights_inters, mode):
    if mode == "train":
        return forward_train(params, x, targets_singles, targets_inters,
                             targets_weights_singles, targets_weights_inters)
    elif mode == "test":
        return forward_test(params, x)


# ---------------------------------- main -------------------------------------
if __name__ == "__main__":
    key = jax.random.PRNGKey(0)
    kp, kx, kts, kti = jax.random.split(key, 4)

    params = init_params(kp)

    N, H, W = 2, 32, 32
    x = jax.random.normal(kx, (N, 3, H, W), jnp.float32)          # NCHW input

    targets_singles = jax.random.uniform(
        kts, (N, J_SINGLE, 3), minval=0.0, maxval=float(BINS))
    targets_inters = jax.random.uniform(
        kti, (N, J_INTER, 3), minval=0.0, maxval=float(BINS))
    targets_weights_singles = jnp.ones((N, J_SINGLE), jnp.float32)
    targets_weights_inters = jnp.ones((N, J_INTER), jnp.float32)

    # train mode
    losses = model_forward(params, x, targets_singles, targets_inters,
                           targets_weights_singles, targets_weights_inters,
                           mode="train")
    losses = jax.tree_util.tree_map(jax.block_until_ready, losses)

    # test mode
    outs = model_forward(params, x, targets_singles, targets_inters,
                         targets_weights_singles, targets_weights_inters,
                         mode="test")
    outs = jax.tree_util.tree_map(jax.block_until_ready, outs)

    assert outs["joint_simdr_single"].shape == (N, J_SINGLE, 3, BINS)
    assert outs["joint_simdr_inter"].shape == (N, J_INTER, 3, BINS)
    assert all(bool(jnp.isfinite(v)) for v in losses.values())

    print("KERNEL_OK")
</pallas_src>

<mosaic_0001>
module attributes {stable_mosaic.version = 11 : i64} {
  func.func @_fused_train_kernel(%arg0: i32, %arg1: memref<128x48xf32, #tpu.memory_space<vmem>>, %arg2: memref<48x64xbf16, #tpu.memory_space<vmem>>, %arg3: memref<1x64xf32, #tpu.memory_space<vmem>>, %arg4: memref<1x64xf32, #tpu.memory_space<vmem>>, %arg5: memref<1x64xf32, #tpu.memory_space<vmem>>, %arg6: memref<1x64xf32, #tpu.memory_space<vmem>>, %arg7: memref<1x64xf32, #tpu.memory_space<vmem>>, %arg8: memref<64x256xbf16, #tpu.memory_space<vmem>>, %arg9: memref<1x256xf32, #tpu.memory_space<vmem>>, %arg10: memref<256x64xbf16, #tpu.memory_space<vmem>>, %arg11: memref<1x64xf32, #tpu.memory_space<vmem>>, %arg12: memref<1x64xf32, #tpu.memory_space<vmem>>, %arg13: memref<64x8064xbf16, #tpu.memory_space<vmem>>, %arg14: memref<1x8064xf32, #tpu.memory_space<vmem>>, %arg15: memref<1x2x63xi32, #tpu.memory_space<vmem>>, %arg16: memref<1x2x63xf32, #tpu.memory_space<vmem>>, %arg17: memref<1x4xf32, #tpu.memory_space<vmem>>, %arg18: memref<2x64xf32, #tpu.memory_space<vmem>>) attributes {dimension_semantics = [#tpu.dimension_semantics<arbitrary>], iteration_bounds = array<i64: 3>, scalar_prefetch = 0 : i64, scratch_operands = 1 : i64, tpu.core_type = #tpu.core_type<tc>, window_params = [{pipeline_mode = #tpu.pipeline_mode<synchronous>, transform_indices = @transform_0, window_bounds = array<i64: 128, 48>}, {pipeline_mode = #tpu.pipeline_mode<synchronous>, transform_indices = @transform_1, window_bounds = array<i64: 48, 64>}, {pipeline_mode = #tpu.pipeline_mode<synchronous>, transform_indices = @transform_2, window_bounds = array<i64: 1, 64>}, {pipeline_mode = #tpu.pipeline_mode<synchronous>, transform_indices = @transform_3, window_bounds = array<i64: 1, 64>}, {pipeline_mode = #tpu.pipeline_mode<synchronous>, transform_indices = @transform_4, window_bounds = array<i64: 1, 64>}, {pipeline_mode = #tpu.pipeline_mode<synchronous>, transform_indices = @transform_5, window_bounds = array<i64: 1, 64>}, {pipeline_mode = #tpu.pipeline_mode<synchronous>, transform_indices = @transform_6, window_bounds = array<i64: 1, 64>}, {pipeline_mode = #tpu.pipeline_mode<synchronous>, transform_indices = @transform_7, window_bounds = array<i64: 64, 256>}, {pipeline_mode = #tpu.pipeline_mode<synchronous>, transform_indices = @transform_8, window_bounds = array<i64: 1, 256>}, {pipeline_mode = #tpu.pipeline_mode<synchronous>, transform_indices = @transform_9, window_bounds = array<i64: 256, 64>}, {pipeline_mode = #tpu.pipeline_mode<synchronous>, transform_indices = @transform_10, window_bounds = array<i64: 1, 64>}, {pipeline_mode = #tpu.pipeline_mode<synchronous>, transform_indices = @transform_11, window_bounds = array<i64: 1, 64>}, {transform_indices = @transform_12, window_bounds = array<i64: 64, 8064>}, {transform_indices = @transform_13, window_bounds = array<i64: 1, 8064>}, {transform_indices = @transform_14, window_bounds = array<i64: 1, 2, 63>}, {transform_indices = @transform_15, window_bounds = array<i64: 1, 2, 63>}, {pipeline_mode = #tpu.pipeline_mode<synchronous>, transform_indices = @transform_16, window_bounds = array<i64: 1, 4>}]} {
    %c0_i32 = arith.constant 0 : i32
    %0 = arith.cmpi eq, %arg0, %c0_i32 : i32
    %1 = arith.extui %0 : i1 to i32
    %c0_i32_0 = arith.constant 0 : i32
    %2 = arith.cmpi ne, %1, %c0_i32_0 : i32
    scf.if %2 {
      %c0_62 = arith.constant 0 : index
      %c0_63 = arith.constant 0 : index
      %159 = vector.load %arg1[%c0_62, %c0_63] : memref<128x48xf32, #tpu.memory_space<vmem>>, vector<128x48xf32>
      %160 = arith.truncf %159 : vector<128x48xf32> to vector<128x48xbf16>
      %c0_64 = arith.constant 0 : index
      %c0_65 = arith.constant 0 : index
      %161 = vector.load %arg2[%c0_64, %c0_65] : memref<48x64xbf16, #tpu.memory_space<vmem>>, vector<48x64xbf16>
      %cst_66 = arith.constant dense<0.000000e+00> : vector<128x64xf32>
      %162 = tpu.matmul %160, %161, %cst_66 {dimension_numbers = #tpu.dot_dimension_numbers<[1], [0], [0], [1], [0, 0, 1, 1], [], []>} : vector<128x48xbf16>, vector<48x64xbf16>, vector<128x64xf32> -> vector<128x64xf32>
      %c0_67 = arith.constant 0 : index
      %c0_68 = arith.constant 0 : index
      %163 = vector.load %arg3[%c0_67, %c0_68] : memref<1x64xf32, #tpu.memory_space<vmem>>, vector<1x64xf32>
      %164 = vector.broadcast %163 : vector<1x64xf32> to vector<128x64xf32>
      %165 = arith.addf %162, %164 : vector<128x64xf32>
      %c0_69 = arith.constant 0 : index
      %c0_70 = arith.constant 0 : index
      %166 = vector.load %arg4[%c0_69, %c0_70] : memref<1x64xf32, #tpu.memory_space<vmem>>, vector<1x64xf32>
      %c0_71 = arith.constant 0 : index
      %c0_72 = arith.constant 0 : index
      %167 = vector.load %arg5[%c0_71, %c0_72] : memref<1x64xf32, #tpu.memory_space<vmem>>, vector<1x64xf32>
      %cst_73 = arith.constant dense<0.000000e+00> : vector<128xf32>
      %168 = vector.multi_reduction <add>, %165, %cst_73 [1] : vector<128x64xf32> to vector<128xf32>
      %169 = vector.shape_cast %168 : vector<128xf32> to vector<128x1xf32>
      %cst_74 = arith.constant 6.400000e+01 : f32
      %170 = vector.broadcast %cst_74 : f32 to vector<128x1xf32>
      %171 = arith.divf %169, %170 : vector<128x1xf32>
      %172 = vector.broadcast %171 : vector<128x1xf32> to vector<128x64xf32>
      %173 = arith.subf %165, %172 : vector<128x64xf32>
      %174 = arith.mulf %173, %173 : vector<128x64xf32>
      %cst_75 = arith.constant dense<0.000000e+00> : vector<128xf32>
      %175 = vector.multi_reduction <add>, %174, %cst_75 [1] : vector<128x64xf32> to vector<128xf32>
      %176 = vector.shape_cast %175 : vector<128xf32> to vector<128x1xf32>
      %cst_76 = arith.constant 6.400000e+01 : f32
      %177 = vector.broadcast %cst_76 : f32 to vector<128x1xf32>
      %178 = arith.divf %176, %177 : vector<128x1xf32>
      %179 = vector.broadcast %171 : vector<128x1xf32> to vector<128x64xf32>
      %180 = arith.subf %165, %179 : vector<128x64xf32>
      %cst_77 = arith.constant 9.99999997E-7 : f32
      %181 = vector.broadcast %cst_77 : f32 to vector<128x1xf32>
      %182 = arith.addf %178, %181 : vector<128x1xf32>
      %183 = math.rsqrt %182 : vector<128x1xf32>
      %184 = vector.broadcast %183 : vector<128x1xf32> to vector<128x64xf32>
      %185 = arith.mulf %180, %184 : vector<128x64xf32>
      %186 = vector.broadcast %166 : vector<1x64xf32> to vector<128x64xf32>
      %187 = arith.mulf %185, %186 : vector<128x64xf32>
      %188 = vector.broadcast %167 : vector<1x64xf32> to vector<128x64xf32>
      %189 = arith.addf %187, %188 : vector<128x64xf32>
      %c0_78 = arith.constant 0 : index
      %c0_79 = arith.constant 0 : index
      %190 = vector.load %arg6[%c0_78, %c0_79] : memref<1x64xf32, #tpu.memory_space<vmem>>, vector<1x64xf32>
      %c0_80 = arith.constant 0 : index
      %c0_81 = arith.constant 0 : index
      %191 = vector.load %arg7[%c0_80, %c0_81] : memref<1x64xf32, #tpu.memory_space<vmem>>, vector<1x64xf32>
      %cst_82 = arith.constant dense<0.000000e+00> : vector<128xf32>
      %192 = vector.multi_reduction <add>, %189, %cst_82 [1] : vector<128x64xf32> to vector<128xf32>
      %193 = vector.shape_cast %192 : vector<128xf32> to vector<128x1xf32>
      %cst_83 = arith.constant 6.400000e+01 : f32
      %194 = vector.broadcast %cst_83 : f32 to vector<128x1xf32>
      %195 = arith.divf %193, %194 : vector<128x1xf32>
      %196 = vector.broadcast %195 : vector<128x1xf32> to vector<128x64xf32>
      %197 = arith.subf %189, %196 : vector<128x64xf32>
      %198 = arith.mulf %197, %197 : vector<128x64xf32>
      %cst_84 = arith.constant dense<0.000000e+00> : vector<128xf32>
      %199 = vector.multi_reduction <add>, %198, %cst_84 [1] : vector<128x64xf32> to vector<128xf32>
      %200 = vector.shape_cast %199 : vector<128xf32> to vector<128x1xf32>
      %cst_85 = arith.constant 6.400000e+01 : f32
      %201 = vector.broadcast %cst_85 : f32 to vector<128x1xf32>
      %202 = arith.divf %200, %201 : vector<128x1xf32>
      %203 = vector.broadcast %195 : vector<128x1xf32> to vector<128x64xf32>
      %204 = arith.subf %189, %203 : vector<128x64xf32>
      %cst_86 = arith.constant 9.99999997E-7 : f32
      %205 = vector.broadcast %cst_86 : f32 to vector<128x1xf32>
      %206 = arith.addf %202, %205 : vector<128x1xf32>
      %207 = math.rsqrt %206 : vector<128x1xf32>
      %208 = vector.broadcast %207 : vector<128x1xf32> to vector<128x64xf32>
      %209 = arith.mulf %204, %208 : vector<128x64xf32>
      %210 = vector.broadcast %190 : vector<1x64xf32> to vector<128x64xf32>
      %211 = arith.mulf %209, %210 : vector<128x64xf32>
      %212 = vector.broadcast %191 : vector<1x64xf32> to vector<128x64xf32>
      %213 = arith.addf %211, %212 : vector<128x64xf32>
      %214 = arith.truncf %213 : vector<128x64xf32> to vector<128x64xbf16>
      %c0_87 = arith.constant 0 : index
      %c0_88 = arith.constant 0 : index
      %215 = vector.load %arg8[%c0_87, %c0_88] : memref<64x256xbf16, #tpu.memory_space<vmem>>, vector<64x256xbf16>
      %cst_89 = arith.constant dense<0.000000e+00> : vector<128x256xf32>
      %216 = tpu.matmul %214, %215, %cst_89 {dimension_numbers = #tpu.dot_dimension_numbers<[1], [0], [0], [1], [0, 0, 1, 1], [], []>} : vector<128x64xbf16>, vector<64x256xbf16>, vector<128x256xf32> -> vector<128x256xf32>
      %c0_90 = arith.constant 0 : index
      %c0_91 = arith.constant 0 : index
      %217 = vector.load %arg9[%c0_90, %c0_91] : memref<1x256xf32, #tpu.memory_space<vmem>>, vector<1x256xf32>
      %218 = vector.broadcast %217 : vector<1x256xf32> to vector<128x256xf32>
      %219 = arith.addf %216, %218 : vector<128x256xf32>
      %220 = arith.mulf %219, %219 : vector<128x256xf32>
      %221 = arith.mulf %219, %220 : vector<128x256xf32>
      %cst_92 = arith.constant 4.471500e-02 : f32
      %222 = vector.broadcast %cst_92 : f32 to vector<128x256xf32>
      %223 = arith.mulf %222, %221 : vector<128x256xf32>
      %224 = arith.addf %219, %223 : vector<128x256xf32>
      %cst_93 = arith.constant 0.797884583 : f32
      %225 = vector.broadcast %cst_93 : f32 to vector<128x256xf32>
      %226 = arith.mulf %225, %224 : vector<128x256xf32>
      %227 = math.tanh %226 : vector<128x256xf32>
      %cst_94 = arith.constant 1.000000e+00 : f32
      %228 = vector.broadcast %cst_94 : f32 to vector<128x256xf32>
      %229 = arith.addf %228, %227 : vector<128x256xf32>
      %cst_95 = arith.constant 5.000000e-01 : f32
      %230 = vector.broadcast %cst_95 : f32 to vector<128x256xf32>
      %231 = arith.mulf %230, %229 : vector<128x256xf32>
      %232 = arith.mulf %219, %231 : vector<128x256xf32>
      %233 = arith.truncf %232 : vector<128x256xf32> to vector<128x256xbf16>
      %c0_96 = arith.constant 0 : index
      %c0_97 = arith.constant 0 : index
      %234 = vector.load %arg10[%c0_96, %c0_97] : memref<256x64xbf16, #tpu.memory_space<vmem>>, vector<256x64xbf16>
      %cst_98 = arith.constant dense<0.000000e+00> : vector<128x64xf32>
      %235 = tpu.matmul %233, %234, %cst_98 {dimension_numbers = #tpu.dot_dimension_numbers<[1], [0], [0], [1], [0, 0, 1, 1], [], []>} : vector<128x256xbf16>, vector<256x64xbf16>, vector<128x64xf32> -> vector<128x64xf32>
      %c0_99 = arith.constant 0 : index
      %c0_100 = arith.constant 0 : index
      %236 = vector.load %arg11[%c0_99, %c0_100] : memref<1x64xf32, #tpu.memory_space<vmem>>, vector<1x64xf32>
      %237 = vector.broadcast %236 : vector<1x64xf32> to vector<128x64xf32>
      %238 = arith.addf %235, %237 : vector<128x64xf32>
      %c0_101 = arith.constant 0 : index
      %c0_102 = arith.constant 0 : index
      %239 = vector.load %arg12[%c0_101, %c0_102] : memref<1x64xf32, #tpu.memory_space<vmem>>, vector<1x64xf32>
      %240 = vector.broadcast %239 : vector<1x64xf32> to vector<128x64xf32>
      %241 = arith.mulf %238, %240 : vector<128x64xf32>
      %242 = arith.addf %189, %241 : vector<128x64xf32>
      %243 = vector.shape_cast %242 : vector<128x64xf32> to vector<2x64x64xf32>
      %cst_103 = arith.constant dense<0.000000e+00> : vector<2x64xf32>
      %244 = vector.multi_reduction <add>, %243, %cst_103 [1] : vector<2x64x64xf32> to vector<2x64xf32>
      %cst_104 = arith.constant 6.400000e+01 : f32
      %245 = vector.broadcast %cst_104 : f32 to vector<2x64xf32>
      %246 = arith.divf %244, %245 : vector<2x64xf32>
      %c0_105 = arith.constant 0 : index
      %c0_106 = arith.constant 0 : index
      %247 = vector.load %arg18[%c0_105, %c0_106] : memref<2x64xf32, #tpu.memory_space<vmem>>, vector<2x64xf32>
      tpu.vector_store %arg18[%c0_105, %c0_106], %246 {strides = array<i32>} : memref<2x64xf32, #tpu.memory_space<vmem>>, vector<2x64xf32>,
      %cst_107 = arith.constant 0.000000e+00 : f32
      %248 = vector.broadcast %cst_107 : f32 to vector<1x4xf32>
      %c0_108 = arith.constant 0 : index
      %c0_109 = arith.constant 0 : index
      %249 = vector.load %arg17[%c0_108, %c0_109] : memref<1x4xf32, #tpu.memory_space<vmem>>, vector<1x4xf32>
      tpu.vector_store %arg17[%c0_108, %c0_109], %248 {strides = array<i32>} : memref<1x4xf32, #tpu.memory_space<vmem>>, vector<1x4xf32>,
    } else {
    }
    %c0 = arith.constant 0 : index
    %c0_1 = arith.constant 0 : index
    %3 = vector.load %arg18[%c0, %c0_1] : memref<2x64xf32, #tpu.memory_space<vmem>>, vector<2x64xf32>
    %4 = arith.truncf %3 : vector<2x64xf32> to vector<2x64xbf16>
    %c0_2 = arith.constant 0 : index
    %c0_3 = arith.constant 0 : index
    %5 = vector.load %arg13[%c0_2, %c0_3] : memref<64x8064xbf16, #tpu.memory_space<vmem>>, vector<64x8064xbf16>
    %cst = arith.constant dense<0.000000e+00> : vector<2x8064xf32>
    %6 = tpu.matmul %4, %5, %cst {dimension_numbers = #tpu.dot_dimension_numbers<[1], [0], [0], [1], [0, 0, 1, 1], [], []>} : vector<2x64xbf16>, vector<64x8064xbf16>, vector<2x8064xf32> -> vector<2x8064xf32>
    %c0_4 = arith.constant 0 : index
    %c0_5 = arith.constant 0 : index
    %7 = vector.load %arg14[%c0_4, %c0_5] : memref<1x8064xf32, #tpu.memory_space<vmem>>, vector<1x8064xf32>
    %8 = vector.broadcast %7 : vector<1x8064xf32> to vector<2x8064xf32>
    %9 = arith.addf %6, %8 : vector<2x8064xf32>
    %10 = vector.shape_cast %9 : vector<2x8064xf32> to vector<2x63x128xf32>
    %cst_6 = arith.constant dense<0xFF800000> : vector<2x63xf32>
    %11 = vector.multi_reduction <maximumf>, %10, %cst_6 [2] : vector<2x63x128xf32> to vector<2x63xf32>
    %12 = vector.shape_cast %11 : vector<2x63xf32> to vector<2x63x1xf32>
    %13 = vector.broadcast %12 : vector<2x63x1xf32> to vector<2x63x128xf32>
    %14 = arith.subf %10, %13 : vector<2x63x128xf32>
    %15 = math.exp %14 : vector<2x63x128xf32>
    %cst_7 = arith.constant dense<0.000000e+00> : vector<2x63xf32>
    %16 = vector.multi_reduction <add>, %15, %cst_7 [2] : vector<2x63x128xf32> to vector<2x63xf32>
    %17 = vector.shape_cast %16 : vector<2x63xf32> to vector<2x63x1xf32>
    %18 = math.log %17 : vector<2x63x1xf32>
    %19 = arith.addf %18, %12 : vector<2x63x1xf32>
    %20 = vector.broadcast %19 : vector<2x63x1xf32> to vector<2x63x128xf32>
    %21 = arith.subf %10, %20 : vector<2x63x128xf32>
    %22 = tpu.iota {dimensions = array<i32: 2>} : vector<2x63x128xi32>
    %c0_8 = arith.constant 0 : index
    %c0_9 = arith.constant 0 : index
    %c0_10 = arith.constant 0 : index
    %23 = vector.load %arg15[%c0_8, %c0_9, %c0_10] : memref<1x2x63xi32, #tpu.memory_space<vmem>>, vector<1x2x63xi32>
    %24 = vector.shape_cast %23 : vector<1x2x63xi32> to vector<2x63xi32>
    %25 = vector.shape_cast %24 : vector<2x63xi32> to vector<2x63x1xi32>
    %26 = vector.broadcast %25 : vector<2x63x1xi32> to vector<2x63x128xi32>
    %27 = arith.cmpi eq, %22, %26 : vector<2x63x128xi32>
    %cst_11 = arith.constant 0.000000e+00 : f32
    %28 = vector.broadcast %cst_11 : f32 to vector<2x63x128xf32>
    %29 = arith.subf %28, %21 : vector<2x63x128xf32>
    %cst_12 = arith.constant 0.000000e+00 : f32
    %30 = vector.broadcast %cst_12 : f32 to vector<2x63x128xf32>
    %31 = arith.select %27, %29, %30 : vector<2x63x128xi1>, vector<2x63x128xf32>
    %cst_13 = arith.constant dense<0.000000e+00> : vector<2x63xf32>
    %32 = vector.multi_reduction <add>, %31, %cst_13 [2] : vector<2x63x128xf32> to vector<2x63xf32>
    %c0_14 = arith.constant 0 : index
    %c0_15 = arith.constant 0 : index
    %c0_16 = arith.constant 0 : index
    %33 = vector.load %arg16[%c0_14, %c0_15, %c0_16] : memref<1x2x63xf32, #tpu.memory_space<vmem>>, vector<1x2x63xf32>
    %34 = vector.shape_cast %33 : vector<1x2x63xf32> to vector<2x63xf32>
    %35 = arith.mulf %32, %34 : vector<2x63xf32>
    %cst_17 = arith.constant 7.812500e-03 : f32
    %36 = vector.broadcast %cst_17 : f32 to vector<2x63xf32>
    %37 = arith.mulf %35, %36 : vector<2x63xf32>
    %38 = tpu.iota {dimensions = array<i32: 1>} : vector<2x63xi32>
    %c3_i32 = arith.constant 3 : i32
    %c0_i32_18 = arith.constant 0 : i32
    %39 = arith.cmpi eq, %c3_i32, %c0_i32_18 : i32
    %c1_i32 = arith.constant 1 : i32
    %40 = arith.select %39, %c1_i32, %c3_i32 : i32
    %41 = vector.broadcast %40 : i32 to vector<2x63xi32>
    %42 = arith.remsi %38, %41 : vector<2x63xi32>
    %c0_i32_19 = arith.constant 0 : i32
    %43 = vector.broadcast %c0_i32_19 : i32 to vector<2x63xi32>
    %44 = arith.cmpi ne, %42, %43 : vector<2x63xi32>
    %c0_i32_20 = arith.constant 0 : i32
    %45 = vector.broadcast %c0_i32_20 : i32 to vector<2x63xi32>
    %46 = arith.cmpi slt, %42, %45 : vector<2x63xi32>
    %c0_i32_21 = arith.constant 0 : i32
    %47 = arith.cmpi slt, %40, %c0_i32_21 : i32
    %48 = vector.broadcast %47 : i1 to vector<2x63xi1>
    %49 = vector.broadcast %48 : vector<2x63xi1> to vector<2x63xi1>
    %50 = arith.xori %46, %49 : vector<2x63xi1>
    %51 = arith.andi %50, %44 : vector<2x63xi1>
    %52 = vector.broadcast %40 : i32 to vector<2x63xi32>
    %53 = arith.addi %42, %52 : vector<2x63xi32>
    %54 = arith.select %51, %53, %42 : vector<2x63xi1>, vector<2x63xi32>
    %c2_i32 = arith.constant 2 : i32
    %55 = vector.broadcast %c2_i32 : i32 to vector<2x63xi32>
    %56 = arith.cmpi slt, %54, %55 : vector<2x63xi32>
    %c0_i32_22 = arith.constant 0 : i32
    %57 = arith.cmpi eq, %arg0, %c0_i32_22 : i32
    %58 = tpu.iota {dimensions = array<i32: 1>} : vector<1x4xi32>
    %cst_23 = arith.constant 0.000000e+00 : f32
    %59 = vector.broadcast %cst_23 : f32 to vector<1x4xf32>
    %cst_24 = arith.constant 0.000000e+00 : f32
    %60 = vector.broadcast %cst_24 : f32 to vector<1x4xf32>
    %61 = vector.broadcast %57 : i1 to vector<2x63xi1>
    %62 = arith.andi %56, %61 : vector<2x63xi1>
    %cst_25 = arith.constant 0.000000e+00 : f32
    %63 = vector.broadcast %cst_25 : f32 to vector<2x63xf32>
    %64 = arith.select %62, %37, %63 : vector<2x63xi1>, vector<2x63xf32>
    %65 = vector.shape_cast %64 : vector<2x63xf32> to vector<1x2x63xf32>
    %cst_26 = arith.constant dense<0.000000e+00> : vector<1xf32>
    %66 = vector.multi_reduction <add>, %65, %cst_26 [1, 2] : vector<1x2x63xf32> to vector<1xf32>
    %67 = vector.shape_cast %66 : vector<1xf32> to vector<1x1x1xf32>
    %68 = vector.extract %67[0, 0, 0] : f32 from vector<1x1x1xf32>
    %69 = vector.broadcast %68 : f32 to vector<1x1xf32>
    %c0_i32_27 = arith.constant 0 : i32
    %70 = vector.broadcast %c0_i32_27 : i32 to vector<1x4xi32>
    %71 = arith.cmpi eq, %58, %70 : vector<1x4xi32>
    %cst_28 = arith.constant 0.000000e+00 : f32
    %72 = vector.shape_cast %69 : vector<1x1xf32> to vector<1x1xf32>
    %73 = vector.broadcast %72 : vector<1x1xf32> to vector<1x4xf32>
    %74 = vector.broadcast %cst_28 : f32 to vector<1x4xf32>
    %75 = arith.select %71, %73, %74 : vector<1x4xi1>, vector<1x4xf32>
    %76 = arith.addf %59, %75 : vector<1x4xf32>
    %c0_i32_29 = arith.constant 0 : i32
    %77 = vector.broadcast %c0_i32_29 : i32 to vector<1x4xi32>
    %78 = arith.cmpi eq, %58, %77 : vector<1x4xi32>
    %cst_30 = arith.constant 1.19047618 : f32
    %cst_31 = arith.constant 0.000000e+00 : f32
    %79 = vector.broadcast %cst_30 : f32 to vector<1x4xf32>
    %80 = vector.broadcast %cst_31 : f32 to vector<1x4xf32>
    %81 = arith.select %78, %79, %80 : vector<1x4xi1>, vector<1x4xf32>
    %82 = arith.addf %60, %81 : vector<1x4xf32>
    %true = arith.constant true
    %83 = arith.xori %57, %true : i1
    %84 = vector.broadcast %83 : i1 to vector<2x63xi1>
    %85 = arith.andi %56, %84 : vector<2x63xi1>
    %cst_32 = arith.constant 0.000000e+00 : f32
    %86 = vector.broadcast %cst_32 : f32 to vector<2x63xf32>
    %87 = arith.select %85, %37, %86 : vector<2x63xi1>, vector<2x63xf32>
    %88 = vector.shape_cast %87 : vector<2x63xf32> to vector<1x2x63xf32>
    %cst_33 = arith.constant dense<0.000000e+00> : vector<1xf32>
    %89 = vector.multi_reduction <add>, %88, %cst_33 [1, 2] : vector<1x2x63xf32> to vector<1xf32>
    %90 = vector.shape_cast %89 : vector<1xf32> to vector<1x1x1xf32>
    %91 = vector.extract %90[0, 0, 0] : f32 from vector<1x1x1xf32>
    %92 = vector.broadcast %91 : f32 to vector<1x1xf32>
    %c1_i32_34 = arith.constant 1 : i32
    %93 = vector.broadcast %c1_i32_34 : i32 to vector<1x4xi32>
    %94 = arith.cmpi eq, %58, %93 : vector<1x4xi32>
    %cst_35 = arith.constant 0.000000e+00 : f32
    %95 = vector.shape_cast %92 : vector<1x1xf32> to vector<1x1xf32>
    %96 = vector.broadcast %95 : vector<1x1xf32> to vector<1x4xf32>
    %97 = vector.broadcast %cst_35 : f32 to vector<1x4xf32>
    %98 = arith.select %94, %96, %97 : vector<1x4xi1>, vector<1x4xf32>
    %99 = arith.addf %76, %98 : vector<1x4xf32>
    %c1_i32_36 = arith.constant 1 : i32
    %100 = vector.broadcast %c1_i32_36 : i32 to vector<1x4xi32>
    %101 = arith.cmpi eq, %58, %100 : vector<1x4xi32>
    %cst_37 = arith.constant 0.59523809 : f32
    %cst_38 = arith.constant 0.000000e+00 : f32
    %102 = vector.broadcast %cst_37 : f32 to vector<1x4xf32>
    %103 = vector.broadcast %cst_38 : f32 to vector<1x4xf32>
    %104 = arith.select %101, %102, %103 : vector<1x4xi1>, vector<1x4xf32>
    %105 = arith.addf %82, %104 : vector<1x4xf32>
    %cst_39 = arith.constant dense<true> : vector<2x63xi1>
    %106 = arith.xori %56, %cst_39 : vector<2x63xi1>
    %107 = vector.broadcast %57 : i1 to vector<2x63xi1>
    %108 = arith.andi %106, %107 : vector<2x63xi1>
    %cst_40 = arith.constant 0.000000e+00 : f32
    %109 = vector.broadcast %cst_40 : f32 to vector<2x63xf32>
    %110 = arith.select %108, %37, %109 : vector<2x63xi1>, vector<2x63xf32>
    %111 = vector.shape_cast %110 : vector<2x63xf32> to vector<1x2x63xf32>
    %cst_41 = arith.constant dense<0.000000e+00> : vector<1xf32>
    %112 = vector.multi_reduction <add>, %111, %cst_41 [1, 2] : vector<1x2x63xf32> to vector<1xf32>
    %113 = vector.shape_cast %112 : vector<1xf32> to vector<1x1x1xf32>
    %114 = vector.extract %113[0, 0, 0] : f32 from vector<1x1x1xf32>
    %115 = vector.broadcast %114 : f32 to vector<1x1xf32>
    %c2_i32_42 = arith.constant 2 : i32
    %116 = vector.broadcast %c2_i32_42 : i32 to vector<1x4xi32>
    %117 = arith.cmpi eq, %58, %116 : vector<1x4xi32>
    %cst_43 = arith.constant 0.000000e+00 : f32
    %118 = vector.shape_cast %115 : vector<1x1xf32> to vector<1x1xf32>
    %119 = vector.broadcast %118 : vector<1x1xf32> to vector<1x4xf32>
    %120 = vector.broadcast %cst_43 : f32 to vector<1x4xf32>
    %121 = arith.select %117, %119, %120 : vector<1x4xi1>, vector<1x4xf32>
    %122 = arith.addf %99, %121 : vector<1x4xf32>
    %c2_i32_44 = arith.constant 2 : i32
    %123 = vector.broadcast %c2_i32_44 : i32 to vector<1x4xi32>
    %124 = arith.cmpi eq, %58, %123 : vector<1x4xi32>
    %cst_45 = arith.constant 2.38095236 : f32
    %cst_46 = arith.constant 0.000000e+00 : f32
    %125 = vector.broadcast %cst_45 : f32 to vector<1x4xf32>
    %126 = vector.broadcast %cst_46 : f32 to vector<1x4xf32>
    %127 = arith.select %124, %125, %126 : vector<1x4xi1>, vector<1x4xf32>
    %128 = arith.addf %105, %127 : vector<1x4xf32>
    %cst_47 = arith.constant dense<true> : vector<2x63xi1>
    %129 = arith.xori %56, %cst_47 : vector<2x63xi1>
    %true_48 = arith.constant true
    %130 = arith.xori %57, %true_48 : i1
    %131 = vector.broadcast %130 : i1 to vector<2x63xi1>
    %132 = arith.andi %129, %131 : vector<2x63xi1>
    %cst_49 = arith.constant 0.000000e+00 : f32
    %133 = vector.broadcast %cst_49 : f32 to vector<2x63xf32>
    %134 = arith.select %132, %37, %133 : vector<2x63xi1>, vector<2x63xf32>
    %135 = vector.shape_cast %134 : vector<2x63xf32> to vector<1x2x63xf32>
    %cst_50 = arith.constant dense<0.000000e+00> : vector<1xf32>
    %136 = vector.multi_reduction <add>, %135, %cst_50 [1, 2] : vector<1x2x63xf32> to vector<1xf32>
    %137 = vector.shape_cast %136 : vector<1xf32> to vector<1x1x1xf32>
    %138 = vector.extract %137[0, 0, 0] : f32 from vector<1x1x1xf32>
    %139 = vector.broadcast %138 : f32 to vector<1x1xf32>
    %c3_i32_51 = arith.constant 3 : i32
    %140 = vector.broadcast %c3_i32_51 : i32 to vector<1x4xi32>
    %141 = arith.cmpi eq, %58, %140 : vector<1x4xi32>
    %cst_52 = arith.constant 0.000000e+00 : f32
    %142 = vector.shape_cast %139 : vector<1x1xf32> to vector<1x1xf32>
    %143 = vector.broadcast %142 : vector<1x1xf32> to vector<1x4xf32>
    %144 = vector.broadcast %cst_52 : f32 to vector<1x4xf32>
    %145 = arith.select %141, %143, %144 : vector<1x4xi1>, vector<1x4xf32>
    %146 = arith.addf %122, %145 : vector<1x4xf32>
    %c3_i32_53 = arith.constant 3 : i32
    %147 = vector.broadcast %c3_i32_53 : i32 to vector<1x4xi32>
    %148 = arith.cmpi eq, %58, %147 : vector<1x4xi32>
    %cst_54 = arith.constant 1.19047618 : f32
    %cst_55 = arith.constant 0.000000e+00 : f32
    %149 = vector.broadcast %cst_54 : f32 to vector<1x4xf32>
    %150 = vector.broadcast %cst_55 : f32 to vector<1x4xf32>
    %151 = arith.select %148, %149, %150 : vector<1x4xi1>, vector<1x4xf32>
    %152 = arith.addf %128, %151 : vector<1x4xf32>
    %c0_56 = arith.constant 0 : index
    %c0_57 = arith.constant 0 : index
    %153 = vector.load %arg17[%c0_56, %c0_57] : memref<1x4xf32, #tpu.memory_space<vmem>>, vector<1x4xf32>
    %154 = arith.addf %153, %146 : vector<1x4xf32>
    %c0_58 = arith.constant 0 : index
    %c0_59 = arith.constant 0 : index
    %155 = vector.load %arg17[%c0_58, %c0_59] : memref<1x4xf32, #tpu.memory_space<vmem>>, vector<1x4xf32>
    tpu.vector_store %arg17[%c0_58, %c0_59], %154 {strides = array<i32>} : memref<1x4xf32, #tpu.memory_space<vmem>>, vector<1x4xf32>,
    %c2_i32_60 = arith.constant 2 : i32
    %156 = arith.cmpi eq, %arg0, %c2_i32_60 : i32
    %157 = arith.extui %156 : i1 to i32
    %c0_i32_61 = arith.constant 0 : i32
    %158 = arith.cmpi ne, %157, %c0_i32_61 : i32
    scf.if %158 {
      %c0_62 = arith.constant 0 : index
      %c0_63 = arith.constant 0 : index
      %159 = vector.load %arg17[%c0_62, %c0_63] : memref<1x4xf32, #tpu.memory_space<vmem>>, vector<1x4xf32>
      %160 = arith.mulf %159, %152 : vector<1x4xf32>
      %c0_64 = arith.constant 0 : index
      %c0_65 = arith.constant 0 : index
      %161 = vector.load %arg17[%c0_64, %c0_65] : memref<1x4xf32, #tpu.memory_space<vmem>>, vector<1x4xf32>
      tpu.vector_store %arg17[%c0_64, %c0_65], %160 {strides = array<i32>} : memref<1x4xf32, #tpu.memory_space<vmem>>, vector<1x4xf32>,
    } else {
    }
    return
  }
  func.func @transform_0(%arg0: i32) -> (i32, i32) {
    %c0_i32 = arith.constant 0 : i32
    %c0_i32_0 = arith.constant 0 : i32
    %c0_i32_1 = arith.constant 0 : i32
    return %c0_i32, %c0_i32_0 : i32, i32
  }
  func.func @transform_1(%arg0: i32) -> (i32, i32) {
    %c0_i32 = arith.constant 0 : i32
    %c0_i32_0 = arith.constant 0 : i32
    %c0_i32_1 = arith.constant 0 : i32
    return %c0_i32, %c0_i32_0 : i32, i32
  }
  func.func @transform_2(%arg0: i32) -> (i32, i32) {
    %c0_i32 = arith.constant 0 : i32
    %c0_i32_0 = arith.constant 0 : i32
    %c0_i32_1 = arith.constant 0 : i32
    return %c0_i32, %c0_i32_0 : i32, i32
  }
  func.func @transform_3(%arg0: i32) -> (i32, i32) {
    %c0_i32 = arith.constant 0 : i32
    %c0_i32_0 = arith.constant 0 : i32
    %c0_i32_1 = arith.constant 0 : i32
    return %c0_i32, %c0_i32_0 : i32, i32
  }
  func.func @transform_4(%arg0: i32) -> (i32, i32) {
    %c0_i32 = arith.constant 0 : i32
    %c0_i32_0 = arith.constant 0 : i32
    %c0_i32_1 = arith.constant 0 : i32
    return %c0_i32, %c0_i32_0 : i32, i32
  }
  func.func @transform_5(%arg0: i32) -> (i32, i32) {
    %c0_i32 = arith.constant 0 : i32
    %c0_i32_0 = arith.constant 0 : i32
    %c0_i32_1 = arith.constant 0 : i32
    return %c0_i32, %c0_i32_0 : i32, i32
  }
  func.func @transform_6(%arg0: i32) -> (i32, i32) {
    %c0_i32 = arith.constant 0 : i32
    %c0_i32_0 = arith.constant 0 : i32
    %c0_i32_1 = arith.constant 0 : i32
    return %c0_i32, %c0_i32_0 : i32, i32
  }
  func.func @transform_7(%arg0: i32) -> (i32, i32) {
    %c0_i32 = arith.constant 0 : i32
    %c0_i32_0 = arith.constant 0 : i32
    %c0_i32_1 = arith.constant 0 : i32
    return %c0_i32, %c0_i32_0 : i32, i32
  }
  func.func @transform_8(%arg0: i32) -> (i32, i32) {
    %c0_i32 = arith.constant 0 : i32
    %c0_i32_0 = arith.constant 0 : i32
    %c0_i32_1 = arith.constant 0 : i32
    return %c0_i32, %c0_i32_0 : i32, i32
  }
  func.func @transform_9(%arg0: i32) -> (i32, i32) {
    %c0_i32 = arith.constant 0 : i32
    %c0_i32_0 = arith.constant 0 : i32
    %c0_i32_1 = arith.constant 0 : i32
    return %c0_i32, %c0_i32_0 : i32, i32
  }
  func.func @transform_10(%arg0: i32) -> (i32, i32) {
    %c0_i32 = arith.constant 0 : i32
    %c0_i32_0 = arith.constant 0 : i32
    %c0_i32_1 = arith.constant 0 : i32
    return %c0_i32, %c0_i32_0 : i32, i32
  }
  func.func @transform_11(%arg0: i32) -> (i32, i32) {
    %c0_i32 = arith.constant 0 : i32
    %c0_i32_0 = arith.constant 0 : i32
    %c0_i32_1 = arith.constant 0 : i32
    return %c0_i32, %c0_i32_0 : i32, i32
  }
  func.func @transform_12(%arg0: i32) -> (i32, i32) {
    %c0_i32 = arith.constant 0 : i32
    %c0_i32_0 = arith.constant 0 : i32
    return %c0_i32, %arg0 : i32, i32
  }
  func.func @transform_13(%arg0: i32) -> (i32, i32) {
    %c0_i32 = arith.constant 0 : i32
    %c0_i32_0 = arith.constant 0 : i32
    return %c0_i32, %arg0 : i32, i32
  }
  func.func @transform_14(%arg0: i32) -> (i32, i32, i32) {
    %c0_i32 = arith.constant 0 : i32
    %c0_i32_0 = arith.constant 0 : i32
    %c0_i32_1 = arith.constant 0 : i32
    return %arg0, %c0_i32, %c0_i32_0 : i32, i32, i32
  }
  func.func @transform_15(%arg0: i32) -> (i32, i32, i32) {
    %c0_i32 = arith.constant 0 : i32
    %c0_i32_0 = arith.constant 0 : i32
    %c0_i32_1 = arith.constant 0 : i32
    return %arg0, %c0_i32, %c0_i32_0 : i32, i32, i32
  }
  func.func @transform_16(%arg0: i32) -> (i32, i32) {
    %c0_i32 = arith.constant 0 : i32
    %c0_i32_0 = arith.constant 0 : i32
    %c0_i32_1 = arith.constant 0 : i32
    return %c0_i32, %c0_i32_0 : i32, i32
  }
}

</mosaic_0001>

<llo_original>
// kernel: model_forward.1
$region0: #{model_forward.1}
  #allocation0 [shape = 'u32[]', space=smem, size = 0x4, offset = 0x4, fixed_abs, tag = 'smem constant byte address 0x4 - core index']
  #allocation1 [shape = 'u32[144,128]{1,0:T(1,128)}', space=vmem, size = 0x12000, scoped, tag = 'internal scratch']
  #allocation2 [shape = 'f32[2,64]{1,0:T(2,128)}', space=vmem, size = 0x400, scoped, tag = 'scratch operand']
  %s0 = inlined_call_operand.vmem [shape: f32[128,48], index: 0, kind: input, shape index: {}]
  %s1 = inlined_call_operand.hbm [shape: bf16[48,64], index: 1, kind: input, shape index: {}]
  %s2 = inlined_call_operand.hbm [shape: f32[1,64], index: 2, kind: input, shape index: {}]
  %s3 = inlined_call_operand.hbm [shape: f32[1,64], index: 3, kind: input, shape index: {}]
  %s4 = inlined_call_operand.hbm [shape: f32[1,64], index: 4, kind: input, shape index: {}]
  %s5 = inlined_call_operand.hbm [shape: f32[1,64], index: 5, kind: input, shape index: {}]
  %s6 = inlined_call_operand.hbm [shape: f32[1,64], index: 6, kind: input, shape index: {}]
  %s7 = inlined_call_operand.hbm [shape: bf16[64,256], index: 7, kind: input, shape index: {}]
  %s8 = inlined_call_operand.hbm [shape: f32[1,256], index: 8, kind: input, shape index: {}]
  %s9 = inlined_call_operand.vmem [shape: bf16[256,64], index: 9, kind: input, shape index: {}]
  %s10 = inlined_call_operand.hbm [shape: f32[1,64], index: 10, kind: input, shape index: {}]
  %s11 = inlined_call_operand.hbm [shape: f32[1,64], index: 11, kind: input, shape index: {}]
  %s12 = inlined_call_operand.hbm [shape: bf16[64,24192], index: 12, kind: input, shape index: {}]
  %s13 = inlined_call_operand.vmem [shape: f32[1,24192], index: 13, kind: input, shape index: {}]
  %s14 = inlined_call_operand.vmem [shape: s32[3,2,63], index: 14, kind: input, shape index: {}]
  %s15 = inlined_call_operand.vmem [shape: f32[3,2,63], index: 15, kind: input, shape index: {}]
  %s16 = inlined_call_operand.vmem [shape: f32[1,4], index: 16, kind: output, shape index: {}]
  %s17 = sld [smem:[#allocation0]]
  $region149: #{model_forward.1} parent=0
    _
  %s19 = ssub.s32 1, %s17
  %s20 = scalar_select 0, %s19, %s17
  $region1: #{model_forward.1} parent=0
    #allocation3 [shape = 'u8[12288]{0}', space=vmem, size = 0x3000, scoped, tag = 'input window, operand 1, single buffered']
    #allocation4 [shape = 's32[2]{0}', space=sflag, size = 0x8, scoped, tag = 'scoped memory for model_forward.1']
    #allocation5 [shape = 'u8[512]{0}', space=vmem, size = 0x400, scoped, tag = 'input window, operand 2, single buffered']
    #allocation6 [shape = 's32[1]{0}', space=sflag, size = 0x4, scoped, tag = 'scoped memory for model_forward.1']
    #allocation7 [shape = 'u8[512]{0}', space=vmem, size = 0x400, scoped, tag = 'input window, operand 3, single buffered']
    #allocation8 [shape = 'u8[512]{0}', space=vmem, size = 0x400, scoped, tag = 'input window, operand 4, single buffered']
    #allocation9 [shape = 's32[1]{0}', space=sflag, size = 0x4, scoped, tag = 'scoped memory for model_forward.1']
    #allocation10 [shape = 'u8[512]{0}', space=vmem, size = 0x400, scoped, tag = 'input window, operand 5, single buffered']
    #allocation11 [shape = 'u8[512]{0}', space=vmem, size = 0x400, scoped, tag = 'input window, operand 6, single buffered']
    #allocation12 [shape = 's32[1]{0}', space=sflag, size = 0x4, scoped, tag = 'scoped memory for model_forward.1']
    #allocation13 [shape = 'u8[32768]{0}', space=vmem, size = 0x8000, scoped, tag = 'input window, operand 7, single buffered']
    #allocation14 [shape = 'u8[1024]{0}', space=vmem, size = 0x400, scoped, tag = 'input window, operand 8, single buffered']
    #allocation15 [shape = 's32[1]{0}', space=sflag, size = 0x4, scoped, tag = 'scoped memory for model_forward.1']
    #allocation16 [shape = 'u8[512]{0}', space=vmem, size = 0x400, scoped, tag = 'input window, operand 10, single buffered']
    #allocation17 [shape = 'u8[512]{0}', space=vmem, size = 0x400, scoped, tag = 'input window, operand 11, single buffered']
    #allocation18 [shape = 's32[1]{0}', space=sflag, size = 0x4, scoped, tag = 'scoped memory for model_forward.1']
    #allocation19 [shape = 'u8[2064384]{0}', space=vmem, size = 0x1f8000, scoped, tag = 'input window, operand 12']
    %21 = vsyncpa [#allocation4], 0
    %22 = vsyncpa [#allocation6], 0
    %23 = vsyncpa [#allocation9], 0
    %24 = vsyncpa [#allocation12], 0
    %25 = vsyncpa [#allocation15], 0
    %26 = vsyncpa [#allocation18], 0
    loop: start=0, step=1, limit=5
    $region2: #{model_forward.1} parent=1 // loop_pre_header
      _
    $region3: #{model_forward.1} parent=1 // loop_header
      %s28 = sphi 0, %s32
      %p29 = scmp.ge.s32.totalorder %s28, 5
      %s36 = sphi 0, %s36
      %s38 = sphi 0, %s36
      %s39 = sphi 0, %s38
      %s53 = sphi 0, %s39
      %s57 = sphi 0, %s57
      %s59 = sphi 0, %s57
      %s60 = sphi 0, %s59
      %s74 = sphi 0, %s60
      %s78 = sphi 0, %s78
      %s80 = sphi 0, %s78
      %s81 = sphi 0, %s80
      %s95 = sphi 0, %s81
      %s99 = sphi 0, %s99
      %s101 = sphi 0, %s99
      %s102 = sphi 0, %s101
      %s116 = sphi 0, %s102
      %s120 = sphi 0, %s120
      %s122 = sphi 0, %s120
      %s123 = sphi 0, %s122
      %s137 = sphi 0, %s123
      %s141 = sphi 0, %s141
      %s143 = sphi 0, %s141
      %s144 = sphi 0, %s143
      %s158 = sphi 0, %s144
      %s162 = sphi 0, %s162
      %s164 = sphi 0, %s162
      %s165 = sphi 0, %s164
      %s179 = sphi 0, %s165
      %s183 = sphi 0, %s183
      %s185 = sphi 0, %s183
      %s186 = sphi 0, %s185
      %s200 = sphi 0, %s186
      %s204 = sphi 0, %s204
      %s206 = sphi 0, %s204
      %s207 = sphi 0, %s206
      %s221 = sphi 0, %s207
      %s225 = sphi 0, %s225
      %s227 = sphi 0, %s225
      %s228 = sphi 0, %s227
      %s242 = sphi 0, %s228
      %s246 = sphi 0, %s246
      %s248 = sphi 0, %s246
      %s249 = sphi 0, %s248
      %s263 = sphi 0, %s249
      %s267 = sphi 0, %s267
      %s269 = sphi 0, %s267
      %s270 = sphi 0, %s269
      %s284 = sphi 0, %s270
      %s290 = sphi 0, %s292
      %s293 = sphi 0, %s290
      %s294 = sphi 0, %s293
      %s310 = sphi 0, %s294
      %s316 = sphi 0, %s318
      %s319 = sphi 0, %s316
      %s320 = sphi 0, %s319
      %s336 = sphi 0, %s320
      %s342 = sphi 0, %s344
      %s345 = sphi 0, %s342
      %s346 = sphi 0, %s345
      %s362 = sphi 0, %s346
      %s368 = sphi 0, %s370
      %s371 = sphi 0, %s368
      %s372 = sphi 0, %s371
      %s388 = sphi 0, %s372
      %s392 = sphi 0, %s392
      %s394 = sphi 0, %s392
      %s395 = sphi 0, %s394
      %s409 = sphi 0, %s395
    $region4: #{model_forward.1} parent=1 // loop_header_branch
      %31 = sbr.rel (%p29) target = $region8
    $region5: #{model_forward.1} parent=1 // loop_body
      %s33 = ssub.s32 %s28, 1
      %s34 = ssub.s32 %s28, 2
      %s35 = sadd.s32 %s28, 1
      %s37 = sadd.s32 %s36, 1
      %p40 = scmp.eq.s32.totalorder %s28, 2
      %p41 = scmp.ne.s32.totalorder %s36, %s38
      %p42 = scmp.eq.s32.totalorder %s28, 0
      %p43 = por %p41, %p42
      %p44 = scmp.ne.s32.totalorder %s36, %s38
      %p45 = scmp.eq.s32.totalorder %s33, 2
      %p46 = por %p44, %p45
      %p47 = scmp.ne.s32.totalorder %s38, %s39
      %p48 = scmp.eq.s32.totalorder %s33, 0
      %p49 = por %p47, %p48
      %p50 = scmp.ne.s32.totalorder %s38, %s39
      %p51 = scmp.eq.s32.totalorder %s34, 2
      %p52 = por %p50, %p51
      %p54 = scmp.ne.s32.totalorder %s39, %s53
      %p55 = scmp.eq.s32.totalorder %s34, 0
      %p56 = por %p54, %p55
      %s58 = sadd.s32 %s57, 1
      %p61 = scmp.eq.s32.totalorder %s28, 2
      %p62 = scmp.ne.s32.totalorder %s57, %s59
      %p63 = scmp.eq.s32.totalorder %s28, 0
      %p64 = por %p62, %p63
      %p65 = scmp.ne.s32.totalorder %s57, %s59
      %p66 = scmp.eq.s32.totalorder %s33, 2
      %p67 = por %p65, %p66
      %p68 = scmp.ne.s32.totalorder %s59, %s60
      %p69 = scmp.eq.s32.totalorder %s33, 0
      %p70 = por %p68, %p69
      %p71 = scmp.ne.s32.totalorder %s59, %s60
      %p72 = scmp.eq.s32.totalorder %s34, 2
      %p73 = por %p71, %p72
      %p75 = scmp.ne.s32.totalorder %s60, %s74
      %p76 = scmp.eq.s32.totalorder %s34, 0
      %p77 = por %p75, %p76
      %s79 = sadd.s32 %s78, 1
      %p82 = scmp.eq.s32.totalorder %s28, 2
      %p83 = scmp.ne.s32.totalorder %s78, %s80
      %p84 = scmp.eq.s32.totalorder %s28, 0
      %p85 = por %p83, %p84
      %p86 = scmp.ne.s32.totalorder %s78, %s80
      %p87 = scmp.eq.s32.totalorder %s33, 2
      %p88 = por %p86, %p87
      %p89 = scmp.ne.s32.totalorder %s80, %s81
      %p90 = scmp.eq.s32.totalorder %s33, 0
      %p91 = por %p89, %p90
      %p92 = scmp.ne.s32.totalorder %s80, %s81
      %p93 = scmp.eq.s32.totalorder %s34, 2
      %p94 = por %p92, %p93
      %p96 = scmp.ne.s32.totalorder %s81, %s95
      %p97 = scmp.eq.s32.totalorder %s34, 0
      %p98 = por %p96, %p97
      %s100 = sadd.s32 %s99, 1
      %p103 = scmp.eq.s32.totalorder %s28, 2
      %p104 = scmp.ne.s32.totalorder %s99, %s101
      %p105 = scmp.eq.s32.totalorder %s28, 0
      %p106 = por %p104, %p105
      %p107 = scmp.ne.s32.totalorder %s99, %s101
      %p108 = scmp.eq.s32.totalorder %s33, 2
      %p109 = por %p107, %p108
      %p110 = scmp.ne.s32.totalorder %s101, %s102
      %p111 = scmp.eq.s32.totalorder %s33, 0
      %p112 = por %p110, %p111
      %p113 = scmp.ne.s32.totalorder %s101, %s102
      %p114 = scmp.eq.s32.totalorder %s34, 2
      %p115 = por %p113, %p114
      %p117 = scmp.ne.s32.totalorder %s102, %s116
      %p118 = scmp.eq.s32.totalorder %s34, 0
      %p119 = por %p117, %p118
      %s121 = sadd.s32 %s120, 1
      %p124 = scmp.eq.s32.totalorder %s28, 2
      %p125 = scmp.ne.s32.totalorder %s120, %s122
      %p126 = scmp.eq.s32.totalorder %s28, 0
      %p127 = por %p125, %p126
      %p128 = scmp.ne.s32.totalorder %s120, %s122
      %p129 = scmp.eq.s32.totalorder %s33, 2
      %p130 = por %p128, %p129
      %p131 = scmp.ne.s32.totalorder %s122, %s123
      %p132 = scmp.eq.s32.totalorder %s33, 0
      %p133 = por %p131, %p132
      %p134 = scmp.ne.s32.totalorder %s122, %s123
      %p135 = scmp.eq.s32.totalorder %s34, 2
      %p136 = por %p134, %p135
      %p138 = scmp.ne.s32.totalorder %s123, %s137
      %p139 = scmp.eq.s32.totalorder %s34, 0
      %p140 = por %p138, %p139
      %s142 = sadd.s32 %s141, 1
      %p145 = scmp.eq.s32.totalorder %s28, 2
      %p146 = scmp.ne.s32.totalorder %s141, %s143
      %p147 = scmp.eq.s32.totalorder %s28, 0
      %p148 = por %p146, %p147
      %p149 = scmp.ne.s32.totalorder %s141, %s143
      %p150 = scmp.eq.s32.totalorder %s33, 2
      %p151 = por %p149, %p150
      %p152 = scmp.ne.s32.totalorder %s143, %s144
      %p153 = scmp.eq.s32.totalorder %s33, 0
      %p154 = por %p152, %p153
      %p155 = scmp.ne.s32.totalorder %s143, %s144
      %p156 = scmp.eq.s32.totalorder %s34, 2
      %p157 = por %p155, %p156
      %p159 = scmp.ne.s32.totalorder %s144, %s158
      %p160 = scmp.eq.s32.totalorder %s34, 0
      %p161 = por %p159, %p160
      %s163 = sadd.s32 %s162, 1
      %p166 = scmp.eq.s32.totalorder %s28, 2
      %p167 = scmp.ne.s32.totalorder %s162, %s164
      %p168 = scmp.eq.s32.totalorder %s28, 0
      %p169 = por %p167, %p168
      %p170 = scmp.ne.s32.totalorder %s162, %s164
      %p171 = scmp.eq.s32.totalorder %s33, 2
      %p172 = por %p170, %p171
      %p173 = scmp.ne.s32.totalorder %s164, %s165
      %p174 = scmp.eq.s32.totalorder %s33, 0
      %p175 = por %p173, %p174
      %p176 = scmp.ne.s32.totalorder %s164, %s165
      %p177 = scmp.eq.s32.totalorder %s34, 2
      %p178 = por %p176, %p177
      %p180 = scmp.ne.s32.totalorder %s165, %s179
      %p181 = scmp.eq.s32.totalorder %s34, 0
      %p182 = por %p180, %p181
      %s184 = sadd.s32 %s183, 1
      %p187 = scmp.eq.s32.totalorder %s28, 2
      %p188 = scmp.ne.s32.totalorder %s183, %s185
      %p189 = scmp.eq.s32.totalorder %s28, 0
      %p190 = por %p188, %p189
      %p191 = scmp.ne.s32.totalorder %s183, %s185
      %p192 = scmp.eq.s32.totalorder %s33, 2
      %p193 = por %p191, %p192
      %p194 = scmp.ne.s32.totalorder %s185, %s186
      %p195 = scmp.eq.s32.totalorder %s33, 0
      %p196 = por %p194, %p195
      %p197 = scmp.ne.s32.totalorder %s185, %s186
      %p198 = scmp.eq.s32.totalorder %s34, 2
      %p199 = por %p197, %p198
      %p201 = scmp.ne.s32.totalorder %s186, %s200
      %p202 = scmp.eq.s32.totalorder %s34, 0
      %p203 = por %p201, %p202
      %s205 = sadd.s32 %s204, 1
      %p208 = scmp.eq.s32.totalorder %s28, 2
      %p209 = scmp.ne.s32.totalorder %s204, %s206
      %p210 = scmp.eq.s32.totalorder %s28, 0
      %p211 = por %p209, %p210
      %p212 = scmp.ne.s32.totalorder %s204, %s206
      %p213 = scmp.eq.s32.totalorder %s33, 2
      %p214 = por %p212, %p213
      %p215 = scmp.ne.s32.totalorder %s206, %s207
      %p216 = scmp.eq.s32.totalorder %s33, 0
      %p217 = por %p215, %p216
      %p218 = scmp.ne.s32.totalorder %s206, %s207
      %p219 = scmp.eq.s32.totalorder %s34, 2
      %p220 = por %p218, %p219
      %p222 = scmp.ne.s32.totalorder %s207, %s221
      %p223 = scmp.eq.s32.totalorder %s34, 0
      %p224 = por %p222, %p223
      %s226 = sadd.s32 %s225, 1
      %p229 = scmp.eq.s32.totalorder %s28, 2
      %p230 = scmp.ne.s32.totalorder %s225, %s227
      %p231 = scmp.eq.s32.totalorder %s28, 0
      %p232 = por %p230, %p231
      %p233 = scmp.ne.s32.totalorder %s225, %s227
      %p234 = scmp.eq.s32.totalorder %s33, 2
      %p235 = por %p233, %p234
      %p236 = scmp.ne.s32.totalorder %s227, %s228
      %p237 = scmp.eq.s32.totalorder %s33, 0
      %p238 = por %p236, %p237
      %p239 = scmp.ne.s32.totalorder %s227, %s228
      %p240 = scmp.eq.s32.totalorder %s34, 2
      %p241 = por %p239, %p240
      %p243 = scmp.ne.s32.totalorder %s228, %s242
      %p244 = scmp.eq.s32.totalorder %s34, 0
      %p245 = por %p243, %p244
      %s247 = sadd.s32 %s246, 1
      %p250 = scmp.eq.s32.totalorder %s28, 2
      %p251 = scmp.ne.s32.totalorder %s246, %s248
      %p252 = scmp.eq.s32.totalorder %s28, 0
      %p253 = por %p251, %p252
      %p254 = scmp.ne.s32.totalorder %s246, %s248
      %p255 = scmp.eq.s32.totalorder %s33, 2
      %p256 = por %p254, %p255
      %p257 = scmp.ne.s32.totalorder %s248, %s249
      %p258 = scmp.eq.s32.totalorder %s33, 0
      %p259 = por %p257, %p258
      %p260 = scmp.ne.s32.totalorder %s248, %s249
      %p261 = scmp.eq.s32.totalorder %s34, 2
      %p262 = por %p260, %p261
      %p264 = scmp.ne.s32.totalorder %s249, %s263
      %p265 = scmp.eq.s32.totalorder %s34, 0
      %p266 = por %p264, %p265
      %s268 = sadd.s32 %s267, 1
      %p271 = scmp.eq.s32.totalorder %s28, 2
      %p272 = scmp.ne.s32.totalorder %s267, %s269
      %p273 = scmp.eq.s32.totalorder %s28, 0
      %p274 = por %p272, %p273
      %p275 = scmp.ne.s32.totalorder %s267, %s269
      %p276 = scmp.eq.s32.totalorder %s33, 2
      %p277 = por %p275, %p276
      %p278 = scmp.ne.s32.totalorder %s269, %s270
      %p279 = scmp.eq.s32.totalorder %s33, 0
      %p280 = por %p278, %p279
      %p281 = scmp.ne.s32.totalorder %s269, %s270
      %p282 = scmp.eq.s32.totalorder %s34, 2
      %p283 = por %p281, %p282
      %p285 = scmp.ne.s32.totalorder %s270, %s284
      %p286 = scmp.eq.s32.totalorder %s34, 0
      %p287 = por %p285, %p286
      %s288 = ssub.s32 %s28, %s35
      %p289 = scmp.eq.s32.totalorder %s288, 0
      %s291 = sadd.s32 %s290, 1
      %s292 = scalar_select %p289, %s290, %s291
      %p295 = pneg %p289
      %p296 = scmp.eq.s32.totalorder %s28, 2
      %p297 = por %p295, %p296
      %p298 = scmp.ne.s32.totalorder %s290, %s293
      %p299 = scmp.eq.s32.totalorder %s28, 0
      %p300 = por %p298, %p299
      %p301 = scmp.ne.s32.totalorder %s290, %s293
      %p302 = scmp.eq.s32.totalorder %s33, 2
      %p303 = por %p301, %p302
      %p304 = scmp.ne.s32.totalorder %s293, %s294
      %p305 = scmp.eq.s32.totalorder %s33, 0
      %p306 = por %p304, %p305
      %p307 = scmp.ne.s32.totalorder %s293, %s294
      %p308 = scmp.eq.s32.totalorder %s34, 2
      %p309 = por %p307, %p308
      %p311 = scmp.ne.s32.totalorder %s294, %s310
      %p312 = scmp.eq.s32.totalorder %s34, 0
      %p313 = por %p311, %p312
      %s314 = ssub.s32 %s28, %s35
      %p315 = scmp.eq.s32.totalorder %s314, 0
      %s317 = sadd.s32 %s316, 1
      %s318 = scalar_select %p315, %s316, %s317
      %p321 = pneg %p315
      %p322 = scmp.eq.s32.totalorder %s28, 2
      %p323 = por %p321, %p322
      %p324 = scmp.ne.s32.totalorder %s316, %s319
      %p325 = scmp.eq.s32.totalorder %s28, 0
      %p326 = por %p324, %p325
      %p327 = scmp.ne.s32.totalorder %s316, %s319
      %p328 = scmp.eq.s32.totalorder %s33, 2
      %p329 = por %p327, %p328
      %p330 = scmp.ne.s32.totalorder %s319, %s320
      %p331 = scmp.eq.s32.totalorder %s33, 0
      %p332 = por %p330, %p331
      %p333 = scmp.ne.s32.totalorder %s319, %s320
      %p334 = scmp.eq.s32.totalorder %s34, 2
      %p335 = por %p333, %p334
      %p337 = scmp.ne.s32.totalorder %s320, %s336
      %p338 = scmp.eq.s32.totalorder %s34, 0
      %p339 = por %p337, %p338
      %s340 = ssub.s32 %s28, %s35
      %p341 = scmp.eq.s32.totalorder %s340, 0
      %s343 = sadd.s32 %s342, 1
      %s344 = scalar_select %p341, %s342, %s343
      %p347 = pneg %p341
      %p348 = scmp.eq.s32.totalorder %s28, 2
      %p349 = por %p347, %p348
      %p350 = scmp.ne.s32.totalorder %s342, %s345
      %p351 = scmp.eq.s32.totalorder %s28, 0
      %p352 = por %p350, %p351
      %p353 = scmp.ne.s32.totalorder %s342, %s345
      %p354 = scmp.eq.s32.totalorder %s33, 2
      %p355 = por %p353, %p354
      %p356 = scmp.ne.s32.totalorder %s345, %s346
      %p357 = scmp.eq.s32.totalorder %s33, 0
      %p358 = por %p356, %p357
      %p359 = scmp.ne.s32.totalorder %s345, %s346
      %p360 = scmp.eq.s32.totalorder %s34, 2
      %p361 = por %p359, %p360
      %p363 = scmp.ne.s32.totalorder %s346, %s362
      %p364 = scmp.eq.s32.totalorder %s34, 0
      %p365 = por %p363, %p364
      %s366 = ssub.s32 %s28, %s35
      %p367 = scmp.eq.s32.totalorder %s366, 0
      %s369 = sadd.s32 %s368, 1
      %s370 = scalar_select %p367, %s368, %s369
      %p373 = pneg %p367
      %p374 = scmp.eq.s32.totalorder %s28, 2
      %p375 = por %p373, %p374
      %p376 = scmp.ne.s32.totalorder %s368, %s371
      %p377 = scmp.eq.s32.totalorder %s28, 0
      %p378 = por %p376, %p377
      %p379 = scmp.ne.s32.totalorder %s368, %s371
      %p380 = scmp.eq.s32.totalorder %s33, 2
      %p381 = por %p379, %p380
      %p382 = scmp.ne.s32.totalorder %s371, %s372
      %p383 = scmp.eq.s32.totalorder %s33, 0
      %p384 = por %p382, %p383
      %p385 = scmp.ne.s32.totalorder %s371, %s372
      %p386 = scmp.eq.s32.totalorder %s34, 2
      %p387 = por %p385, %p386
      %p389 = scmp.ne.s32.totalorder %s372, %s388
      %p390 = scmp.eq.s32.totalorder %s34, 0
      %p391 = por %p389, %p390
      %s393 = sadd.s32 %s392, 1
      %p396 = scmp.eq.s32.totalorder %s28, 2
      %p397 = scmp.ne.s32.totalorder %s392, %s394
      %p398 = scmp.eq.s32.totalorder %s28, 0
      %p399 = por %p397, %p398
      %p400 = scmp.ne.s32.totalorder %s392, %s394
      %p401 = scmp.eq.s32.totalorder %s33, 2
      %p402 = por %p400, %p401
      %p403 = scmp.ne.s32.totalorder %s394, %s395
      %p404 = scmp.eq.s32.totalorder %s33, 0
      %p405 = por %p403, %p404
      %p406 = scmp.ne.s32.totalorder %s394, %s395
      %p407 = scmp.eq.s32.totalorder %s34, 2
      %p408 = por %p406, %p407
      %p410 = scmp.ne.s32.totalorder %s395, %s409
      %p411 = scmp.eq.s32.totalorder %s34, 0
      %p412 = por %p410, %p411
      %p413 = scmp.le.s32.totalorder 1, %s28
      %p414 = scmp.lt.s32.totalorder %s28, 4
      %p415 = pnand %p413, %p414
      %p416 = pneg %p415
      // Predicated region
      $region9: #{model_forward.1} parent=5 // pred_check
        _
      $region10: #{model_forward.1} parent=5 // pred_check_branch
        %418 = sbr.rel (%p415) target = $region12
      $region11: #{model_forward.1} parent=5 // pred_region
        %s419 = ssub.s32 %s28, 1
        // Predicated region
        $region13: #{model_forward.1} parent=11 // pred_check
          %p420 = pneg %p49
        $region14: #{model_forward.1} parent=11 // pred_check_branch
          %422 = sbr.rel (%p420) target = $region16
        $region15: #{model_forward.1} parent=11 // pred_region
          _
        $region16: #{model_forward.1} parent=11 // pred_fallthru
          _
        // Predicated region
        $region17: #{model_forward.1} parent=11 // pred_check
          %p423 = pneg %p70
        $region18: #{model_forward.1} parent=11 // pred_check_branch
          %425 = sbr.rel (%p423) target = $region20
        $region19: #{model_forward.1} parent=11 // pred_region
          %s427 = ssub.s32 384, 384
          %428 = vsyncadd [#allocation4], %s427
          %s429 = sshll.u32 [#allocation3], 4
          %s430 = int_to_ptr.vmem [resolvable:$true] %s429
          %435 = dma.hbm_to_vmem [thread:$0]  %s1, 384, %s430, [#allocation4], 64, 64, 4
        $region20: #{model_forward.1} parent=11 // pred_fallthru
          _
        // Predicated region
        $region21: #{model_forward.1} parent=11 // pred_check
          %p436 = pneg %p91
        $region22: #{model_forward.1} parent=11 // pred_check_branch
          %438 = sbr.rel (%p436) target = $region24
        $region23: #{model_forward.1} parent=11 // pred_region
          %s440 = ssub.s32 16, 16
          %441 = vsyncadd [#allocation6], %s440
          %s443 = sshll.u32 [#allocation5], 4
          %s444 = int_to_ptr.vmem [resolvable:$true] %s443
          %446 = dma.hbm_to_vmem [thread:$0]  %s2, 16, %s444, [#allocation6]
        $region24: #{model_forward.1} parent=11 // pred_fallthru
          _
        // Predicated region
        $region25: #{model_forward.1} parent=11 // pred_check
          %p447 = pneg %p112
        $region26: #{model_forward.1} parent=11 // pred_check_branch
          %449 = sbr.rel (%p447) target = $region28
        $region27: #{model_forward.1} parent=11 // pred_region
          %s451 = ssub.s32 16, 16
          %452 = vsyncadd [#allocation6], %s451
          %s454 = sshll.u32 [#allocation7], 4
          %s455 = int_to_ptr.vmem [resolvable:$true] %s454
          %457 = dma.hbm_to_vmem [thread:$0]  %s3, 16, %s455, [#allocation6]
        $region28: #{model_forward.1} parent=11 // pred_fallthru
          _
        // Predicated region
        $region29: #{model_forward.1} parent=11 // pred_check
          %p458 = pneg %p133
        $region30: #{model_forward.1} parent=11 // pred_check_branch
          %460 = sbr.rel (%p458) target = $region32
        $region31: #{model_forward.1} parent=11 // pred_region
          %s462 = ssub.s32 16, 16
          %463 = vsyncadd [#allocation9], %s462
          %s465 = sshll.u32 [#allocation8], 4
          %s466 = int_to_ptr.vmem [resolvable:$true] %s465
          %468 = dma.hbm_to_vmem [thread:$0]  %s4, 16, %s466, [#allocation9]
        $region32: #{model_forward.1} parent=11 // pred_fallthru
          _
        // Predicated region
        $region33: #{model_forward.1} parent=11 // pred_check
          %p469 = pneg %p154
        $region34: #{model_forward.1} parent=11 // pred_check_branch
          %471 = sbr.rel (%p469) target = $region36
        $region35: #{model_forward.1} parent=11 // pred_region
          %s473 = ssub.s32 16, 16
          %474 = vsyncadd [#allocation9], %s473
          %s476 = sshll.u32 [#allocation10], 4
          %s477 = int_to_ptr.vmem [resolvable:$true] %s476
          %479 = dma.hbm_to_vmem [thread:$0]  %s5, 16, %s477, [#allocation9]
        $region36: #{model_forward.1} parent=11 // pred_fallthru
          _
        // Predicated region
        $region37: #{model_forward.1} parent=11 // pred_check
          %p480 = pneg %p175
        $region38: #{model_forward.1} parent=11 // pred_check_branch
          %482 = sbr.rel (%p480) target = $region40
        $region39: #{model_forward.1} parent=11 // pred_region
          %s484 = ssub.s32 16, 16
          %485 = vsyncadd [#allocation12], %s484
          %s487 = sshll.u32 [#allocation11], 4
          %s488 = int_to_ptr.vmem [resolvable:$true] %s487
          %490 = dma.hbm_to_vmem [thread:$0]  %s6, 16, %s488, [#allocation12]
        $region40: #{model_forward.1} parent=11 // pred_fallthru
          _
        // Predicated region
        $region41: #{model_forward.1} parent=11 // pred_check
          %p491 = pneg %p196
        $region42: #{model_forward.1} parent=11 // pred_check_branch
          %493 = sbr.rel (%p491) target = $region44
        $region43: #{model_forward.1} parent=11 // pred_region
          %s495 = ssub.s32 1024, 1024
          %496 = vsyncadd [#allocation12], %s495
          %s497 = sshll.u32 [#allocation13], 4
          %s498 = int_to_ptr.vmem [resolvable:$true] %s497
          %503 = dma.hbm_to_vmem [thread:$0]  %s7, 1024, %s498, [#allocation12], 128, 128, 8
        $region44: #{model_forward.1} parent=11 // pred_fallthru
          _
        // Predicated region
        $region45: #{model_forward.1} parent=11 // pred_check
          %p504 = pneg %p217
        $region46: #{model_forward.1} parent=11 // pred_check_branch
          %506 = sbr.rel (%p504) target = $region48
        $region47: #{model_forward.1} parent=11 // pred_region
          %s508 = ssub.s32 32, 32
          %509 = vsyncadd [#allocation15], %s508
          %s511 = sshll.u32 [#allocation14], 4
          %s512 = int_to_ptr.vmem [resolvable:$true] %s511
          %514 = dma.hbm_to_vmem [thread:$0]  %s8, 32, %s512, [#allocation15]
        $region48: #{model_forward.1} parent=11 // pred_fallthru
          _
        // Predicated region
        $region49: #{model_forward.1} parent=11 // pred_check
          %p515 = pneg %p238
        $region50: #{model_forward.1} parent=11 // pred_check_branch
          %517 = sbr.rel (%p515) target = $region52
        $region51: #{model_forward.1} parent=11 // pred_region
          _
        $region52: #{model_forward.1} parent=11 // pred_fallthru
          _
        // Predicated region
        $region53: #{model_forward.1} parent=11 // pred_check
          %p518 = pneg %p259
        $region54: #{model_forward.1} parent=11 // pred_check_branch
          %520 = sbr.rel (%p518) target = $region56
        $region55: #{model_forward.1} parent=11 // pred_region
          %s522 = ssub.s32 16, 16
          %523 = vsyncadd [#allocation15], %s522
          %s525 = sshll.u32 [#allocation16], 4
          %s526 = int_to_ptr.vmem [resolvable:$true] %s525
          %528 = dma.hbm_to_vmem [thread:$0]  %s10, 16, %s526, [#allocation15]
        $region56: #{model_forward.1} parent=11 // pred_fallthru
          _
        // Predicated region
        $region57: #{model_forward.1} parent=11 // pred_check
          %p529 = pneg %p280
        $region58: #{model_forward.1} parent=11 // pred_check_branch
          %531 = sbr.rel (%p529) target = $region60
        $region59: #{model_forward.1} parent=11 // pred_region
          %s533 = ssub.s32 16, 16
          %534 = vsyncadd [#allocation18], %s533
          %s536 = sshll.u32 [#allocation17], 4
          %s537 = int_to_ptr.vmem [resolvable:$true] %s536
          %539 = dma.hbm_to_vmem [thread:$0]  %s11, 16, %s537, [#allocation18]
        $region60: #{model_forward.1} parent=11 // pred_fallthru
          _
      $region12: #{model_forward.1} parent=5 // pred_fallthru
        _
      %p540 = scmp.lt.s32.totalorder %s28, 3
      // Predicated region
      $region61: #{model_forward.1} parent=5 // pred_check
        %p541 = pneg %p540
      $region62: #{model_forward.1} parent=5 // pred_check_branch
        %543 = sbr.rel (%p541) target = $region64
      $region63: #{model_forward.1} parent=5 // pred_region
        // Predicated region
        $region65: #{model_forward.1} parent=63 // pred_check
          %p544 = pneg %p300
        $region66: #{model_forward.1} parent=63 // pred_check_branch
          %546 = sbr.rel (%p544) target = $region68
        $region67: #{model_forward.1} parent=63 // pred_region
          %s547 = sand.u32 %s28, 1
          %s548 = scalar_lea.sflag [#allocation4], %s547
          %s549 = sand.u32 %s290, 1
          %s550 = smul.addr %s549, 2016
          %s551 = scalar_lea.vmem [#allocation19], %s550
          %s552 = smul.u32 63, %s28
          %s554 = ssub.s32 32256, 32256
          %555 = vsyncadd %s548, %s554
          %s556 = smul.addr %s552, 64
          %s557 = scalar_lea.hbm %s12, %s556
          %s558 = sshll.u32 %s551, 4
          %s559 = int_to_ptr.vmem [resolvable:$true] %s558
          %564 = dma.hbm_to_vmem [thread:$0]  %s557, 32256, %s559, %s548, 12096, 4032, 252
        $region68: #{model_forward.1} parent=63 // pred_fallthru
          _
        // Predicated region
        $region69: #{model_forward.1} parent=63 // pred_check
          %p565 = pneg %p326
        $region70: #{model_forward.1} parent=63 // pred_check_branch
          %567 = sbr.rel (%p565) target = $region72
        $region71: #{model_forward.1} parent=63 // pred_region
          %s568 = smul.u32 63, %s28
          %p569 = scmp.lt.s32.totalorder %s568, 188
          %s570 = scalar_select %p569, %s568, 188
          %s571 = scalar_lea.vmem %s13, %s570
          %s572 = smul.u32 63, %s28
        $region72: #{model_forward.1} parent=63 // pred_fallthru
          _
        // Predicated region
        $region73: #{model_forward.1} parent=63 // pred_check
          %p573 = pneg %p352
        $region74: #{model_forward.1} parent=63 // pred_check_branch
          %575 = sbr.rel (%p573) target = $region76
        $region75: #{model_forward.1} parent=63 // pred_region
          %p576 = scmp.lt.s32.totalorder %s28, 2
          %s577 = scalar_select %p576, %s28, 2
          %s578 = smul.addr %s577, 2
          %s579 = scalar_lea.vmem %s14, %s578
        $region76: #{model_forward.1} parent=63 // pred_fallthru
          _
        // Predicated region
        $region77: #{model_forward.1} parent=63 // pred_check
          %p580 = pneg %p378
        $region78: #{model_forward.1} parent=63 // pred_check_branch
          %582 = sbr.rel (%p580) target = $region80
        $region79: #{model_forward.1} parent=63 // pred_region
          %p583 = scmp.lt.s32.totalorder %s28, 2
          %s584 = scalar_select %p583, %s28, 2
          %s585 = smul.addr %s584, 2
          %s586 = scalar_lea.vmem %s15, %s585
        $region80: #{model_forward.1} parent=63 // pred_fallthru
          _
      $region64: #{model_forward.1} parent=5 // pred_fallthru
        _
      %p587 = scmp.le.s32.totalorder 1, %s28
      %p588 = scmp.lt.s32.totalorder %s28, 4
      %p589 = pnand %p587, %p588
      %p590 = pneg %p589
      // Predicated region
      $region81: #{model_forward.1} parent=5 // pred_check
        _
      $region82: #{model_forward.1} parent=5 // pred_check_branch
        %592 = sbr.rel (%p589) target = $region84
      $region83: #{model_forward.1} parent=5 // pred_region
        %s593 = ssub.s32 %s28, 1
        // Predicated region
        $region85: #{model_forward.1} parent=83 // pred_check
          %p594 = pneg %p70
        $region86: #{model_forward.1} parent=83 // pred_check_branch
          %596 = sbr.rel (%p594) target = $region88
        $region87: #{model_forward.1} parent=83 // pred_region
          %597 = dma.done [#allocation4], 384
        $region88: #{model_forward.1} parent=83 // pred_fallthru
          _
        // Predicated region
        $region89: #{model_forward.1} parent=83 // pred_check
          %p598 = pneg %p91
        $region90: #{model_forward.1} parent=83 // pred_check_branch
          %600 = sbr.rel (%p598) target = $region92
        $region91: #{model_forward.1} parent=83 // pred_region
          %601 = dma.done [#allocation6], 16
        $region92: #{model_forward.1} parent=83 // pred_fallthru
          _
        // Predicated region
        $region93: #{model_forward.1} parent=83 // pred_check
          %p602 = pneg %p112
        $region94: #{model_forward.1} parent=83 // pred_check_branch
          %604 = sbr.rel (%p602) target = $region96
        $region95: #{model_forward.1} parent=83 // pred_region
          %605 = dma.done [#allocation6], 16
        $region96: #{model_forward.1} parent=83 // pred_fallthru
          _
        // Predicated region
        $region97: #{model_forward.1} parent=83 // pred_check
          %p606 = pneg %p133
        $region98: #{model_forward.1} parent=83 // pred_check_branch
          %608 = sbr.rel (%p606) target = $region100
        $region99: #{model_forward.1} parent=83 // pred_region
          %609 = dma.done [#allocation9], 16
        $region100: #{model_forward.1} parent=83 // pred_fallthru
          _
        // Predicated region
        $region101: #{model_forward.1} parent=83 // pred_check
          %p610 = pneg %p154
        $region102: #{model_forward.1} parent=83 // pred_check_branch
          %612 = sbr.rel (%p610) target = $region104
        $region103: #{model_forward.1} parent=83 // pred_region
          %613 = dma.done [#allocation9], 16
        $region104: #{model_forward.1} parent=83 // pred_fallthru
          _
        // Predicated region
        $region105: #{model_forward.1} parent=83 // pred_check
          %p614 = pneg %p175
        $region106: #{model_forward.1} parent=83 // pred_check_branch
          %616 = sbr.rel (%p614) target = $region108
        $region107: #{model_forward.1} parent=83 // pred_region
          %617 = dma.done [#allocation12], 16
        $region108: #{model_forward.1} parent=83 // pred_fallthru
          _
        // Predicated region
        $region109: #{model_forward.1} parent=83 // pred_check
          %p618 = pneg %p196
        $region110: #{model_forward.1} parent=83 // pred_check_branch
          %620 = sbr.rel (%p618) target = $region112
        $region111: #{model_forward.1} parent=83 // pred_region
          %621 = dma.done [#allocation12], 1024
        $region112: #{model_forward.1} parent=83 // pred_fallthru
          _
        // Predicated region
        $region113: #{model_forward.1} parent=83 // pred_check
          %p622 = pneg %p217
        $region114: #{model_forward.1} parent=83 // pred_check_branch
          %624 = sbr.rel (%p622) target = $region116
        $region115: #{model_forward.1} parent=83 // pred_region
          %625 = dma.done [#allocation15], 32
        $region116: #{model_forward.1} parent=83 // pred_fallthru
          _
        // Predicated region
        $region117: #{model_forward.1} parent=83 // pred_check
          %p626 = pneg %p259
        $region118: #{model_forward.1} parent=83 // pred_check_branch
          %628 = sbr.rel (%p626) target = $region120
        $region119: #{model_forward.1} parent=83 // pred_region
          %629 = dma.done [#allocation15], 16
        $region120: #{model_forward.1} parent=83 // pred_fallthru
          _
        // Predicated region
        $region121: #{model_forward.1} parent=83 // pred_check
          %p630 = pneg %p280
        $region122: #{model_forward.1} parent=83 // pred_check_branch
          %632 = sbr.rel (%p630) target = $region124
        $region123: #{model_forward.1} parent=83 // pred_region
          %633 = dma.done [#allocation18], 16
        $region124: #{model_forward.1} parent=83 // pred_fallthru
          _
        %s634 = sand.u32 %s33, 1
        %s635 = scalar_lea.sflag [#allocation4], %s634
        %s636 = sand.u32 %s293, 1
        %s637 = smul.addr %s636, 2016
        %s638 = scalar_lea.vmem [#allocation19], %s637
        // Predicated region
        $region125: #{model_forward.1} parent=83 // pred_check
          %p639 = pneg %p306
        $region126: #{model_forward.1} parent=83 // pred_check_branch
          %641 = sbr.rel (%p639) target = $region128
        $region127: #{model_forward.1} parent=83 // pred_region
          %642 = dma.done %s635, 32256
        $region128: #{model_forward.1} parent=83 // pred_fallthru
          _
        %p643 = pneg %p49
        %p644 = pneg %p46
        %p645 = pneg %p70
        %p646 = pneg %p67
        %p647 = pneg %p91
        %p648 = pneg %p88
        %p649 = pneg %p112
        %p650 = pneg %p109
        %p651 = pneg %p133
        %p652 = pneg %p130
        %p653 = pneg %p154
        %p654 = pneg %p151
        %p655 = pneg %p175
        %p656 = pneg %p172
        %p657 = pneg %p196
        %p658 = pneg %p193
        %p659 = pneg %p217
        %p660 = pneg %p214
        %p661 = pneg %p238
        %p662 = pneg %p235
        %p663 = pneg %p259
        %p664 = pneg %p256
        %p665 = pneg %p280
        %p666 = pneg %p277
        %s667 = sand.u32 %s33, 1
        %s668 = scalar_lea.sflag [#allocation4], %s667
        %s669 = sand.u32 %s293, 1
        %s670 = smul.addr %s669, 2016
        %s671 = scalar_lea.vmem [#allocation19], %s670
        %p672 = pneg %p306
        %p673 = pneg %p303
        %s674 = smul.u32 63, %s33
        %p675 = scmp.lt.s32.totalorder %s674, 188
        %s676 = scalar_select %p675, %s674, 188
        %s677 = scalar_lea.vmem %s13, %s676
        %p678 = pneg %p332
        %p679 = pneg %p329
        %p680 = scmp.lt.s32.totalorder %s33, 2
        %s681 = scalar_select %p680, %s33, 2
        %s682 = smul.addr %s681, 2
        %s683 = scalar_lea.vmem %s14, %s682
        %p684 = pneg %p358
        %p685 = pneg %p355
        %p686 = scmp.lt.s32.totalorder %s33, 2
        %s687 = scalar_select %p686, %s33, 2
        %s688 = smul.addr %s687, 2
        %s689 = scalar_lea.vmem %s15, %s688
        %p690 = pneg %p384
        %p691 = pneg %p381
        %p692 = pneg %p405
        %p693 = pneg %p402
        %s694 = smul.u32 63, %s33
        %s695 = smul.u32 63, %s33
        %p696 = scmp.lt.s32.totalorder %s695, 188
        %s697 = scalar_select %p696, %s695, 188
        %s698 = scalar_lea.vmem %s13, %s697
        %s699 = smul.u32 63, %s33
        %p700 = scmp.lt.s32.totalorder %s33, 2
        %s701 = scalar_select %p700, %s33, 2
        %s702 = smul.addr %s701, 2
        %s703 = scalar_lea.vmem %s14, %s702
        %p704 = scmp.lt.s32.totalorder %s33, 2
        %s705 = scalar_select %p704, %s33, 2
        %s706 = smul.addr %s705, 2
        %s707 = scalar_lea.vmem %s15, %s706
        %p709 = scmp.eq.s32.totalorder %s33, 0
        // Predicated region
        $region129: #{model_forward.1} parent=83 // pred_check
          %p710 = pneg %p709
        $region130: #{model_forward.1} parent=83 // pred_check_branch
          %712 = sbr.rel (%p710) target = $region132
        $region131: #{model_forward.1} parent=83 // pred_region
          %v713 = vld [vmem:[%s0] sm:$0xff]
          %v714 = vld [vmem:[%s0 + $0x8] sm:$0xff]
          %v715 = vld [vmem:[%s0 + $0x10] sm:$0xff]
          %v716 = vld [vmem:[%s0 + $0x18] sm:$0xff]
          %v717 = vld [vmem:[%s0 + $0x20] sm:$0xff]
          %v718 = vld [vmem:[%s0 + $0x28] sm:$0xff]
          %v719 = vld [vmem:[%s0 + $0x30] sm:$0xff]
          %v720 = vld [vmem:[%s0 + $0x38] sm:$0xff]
          %v721 = vld [vmem:[%s0 + $0x40] sm:$0xff]
          %v722 = vld [vmem:[%s0 + $0x48] sm:$0xff]
          %v723 = vld [vmem:[%s0 + $0x50] sm:$0xff]
          %v724 = vld [vmem:[%s0 + $0x58] sm:$0xff]
          %v725 = vld [vmem:[%s0 + $0x60] sm:$0xff]
          %v726 = vld [vmem:[%s0 + $0x68] sm:$0xff]
          %v727 = vld [vmem:[%s0 + $0x70] sm:$0xff]
          %v728 = vld [vmem:[%s0 + $0x78] sm:$0xff]
          %v729 = vpack.c.bf16 %v714, %v713
          %v730 = vpack.c.bf16 %v716, %v715
          %v731 = vpack.c.bf16 %v718, %v717
          %v732 = vpack.c.bf16 %v720, %v719
          %v733 = vpack.c.bf16 %v722, %v721
          %v734 = vpack.c.bf16 %v724, %v723
          %v735 = vpack.c.bf16 %v726, %v725
          %v736 = vpack.c.bf16 %v728, %v727
          %v737 = vld [vmem:[#allocation3] sm:$0xf]
          %v738 = vld [vmem:[#allocation3 + $0x4] sm:$0xf]
          %v739 = vld [vmem:[#allocation3 + $0x8] sm:$0xf]
          %v740 = vld [vmem:[#allocation3 + $0xc] sm:$0xf]
          %v741 = vld [vmem:[#allocation3 + $0x10] sm:$0xf]
          %v742 = vld [vmem:[#allocation3 + $0x14] sm:$0xf]
          %v743 = vld [vmem:[#allocation5] sm:$0x1]
          %v745 = vlaneseq
          %v746 = vshrl.u32 %v745, 7
          %v747 = vsub.s32 0, %v746
          %v748 = vrot.slane %v743, %v747
          %v756 = vunpack.c.l.b16 %v737
          %v757 = vunpack.c.l.b16 %v738
          %v758 = vunpack.c.l.b16 %v739
          %v759 = vunpack.c.l.b16 %v740
          %v760 = vunpack.c.l.b16 %v741
          %v761 = vunpack.c.l.b16 %v742
          %v762 = vpack.c.b16 %v757, %v756
          %v763 = vpack.c.b16 %v759, %v758
          %v764 = vpack.c.b16 %v761, %v760
          %vm768 = vcmask 392192
          %v770 = vsel %vm768, %v729, 0
          %v773 = vsel %vm768, %v730, 0
          %v776 = vsel %vm768, %v731, 0
          %v779 = vsel %vm768, %v732, 0
          %v782 = vsel %vm768, %v733, 0
          %v785 = vsel %vm768, %v734, 0
          %v788 = vsel %vm768, %v735, 0
          %v791 = vsel %vm768, %v736, 0
          %793 = vmatprep.subr.bf16.mxu0 0
          %794 = vmatpush1.bf16.msra.mxu0 %v762
          %795 = vmatprep.subr.bf16.mxu0 0
          %796 = vmatpush1.bf16.msra.mxu0 %v763
          %797 = vmatprep.subr.bf16.mxu0 0
          %798 = vmatpush1.bf16.msra.mxu0 %v764
          %799 = vmatprep.subr.bf16.mxu0 0
          %800 = vmatpush1.bf16.msra.mxu0 0
          %801 = vmatprep.subr.bf16.mxu0 0
          %802 = vmatpush1.bf16.msra.mxu0 0
          %803 = vmatprep.subr.bf16.mxu0 0
          %804 = vmatpush1.bf16.msra.mxu0 0
          %805 = vmatprep.subr.bf16.mxu0 0
          %806 = vmatpush1.bf16.msra.mxu0 0
          %807 = vmatprep.subr.bf16.mxu0 0
          %808 = vmatpush1.bf16.msra.mxu0 0
          %809 = vmatprep.subr.bf16.mxu0 0
          %810 = vmatpush1.bf16.msra.mxu0 0
          %811 = vmatprep.subr.bf16.mxu0 0
          %812 = vmatpush1.bf16.msra.mxu0 0
          %813 = vmatprep.subr.bf16.mxu0 0
          %814 = vmatpush1.bf16.msra.mxu0 0
          %815 = vmatprep.subr.bf16.mxu0 0
          %816 = vmatpush1.bf16.msra.mxu0 0
          %817 = vmatprep.subr.bf16.mxu0 0
          %818 = vmatpush1.bf16.msra.mxu0 0
          %819 = vmatprep.subr.bf16.mxu0 0
          %820 = vmatpush1.bf16.msra.mxu0 0
          %821 = vmatprep.subr.bf16.mxu0 0
          %822 = vmatpush1.bf16.msra.mxu0 0
          %823 = vmatprep.subr.bf16.mxu0 0
          %824 = vmatpush1.bf16.msra.mxu0 0
          %825 = vmatprep.mubr.bf16.mxu0 0
          %826 = vmatmul.mubr.bf16.gmra.mrb[0].mxu0 %v770
          %v827 = vpop.f32.mrb[0].mxu0
          %v828 = vadd.f32 %v748, %v827
          %v829 = vpop.f32.mrb[0].mxu0
          %v830 = vpop.f32.mrb[0].mxu0
          %v831 = vadd.f32 %v748, %v830
          %v832 = vpop.f32.mrb[0].mxu0
          %833 = vmatprep.mubr.bf16.mxu0 0
          %834 = vmatmul.mubr.bf16.gmra.mrb[0].mxu0 %v773
          %v835 = vpop.f32.mrb[0].mxu0
          %v836 = vadd.f32 %v748, %v835
          %v837 = vpop.f32.mrb[0].mxu0
          %v838 = vpop.f32.mrb[0].mxu0
          %v839 = vadd.f32 %v748, %v838
          %v840 = vpop.f32.mrb[0].mxu0
          %841 = vmatprep.mubr.bf16.mxu0 0
          %842 = vmatmul.mubr.bf16.gmra.mrb[0].mxu0 %v776
          %v843 = vpop.f32.mrb[0].mxu0
          %v844 = vadd.f32 %v748, %v843
          %v845 = vpop.f32.mrb[0].mxu0
          %v846 = vpop.f32.mrb[0].mxu0
          %v847 = vadd.f32 %v748, %v846
          %v848 = vpop.f32.mrb[0].mxu0
          %849 = vmatprep.mubr.bf16.mxu0 0
          %850 = vmatmul.mubr.bf16.gmra.mrb[0].mxu0 %v779
          %v851 = vpop.f32.mrb[0].mxu0
          %v852 = vadd.f32 %v748, %v851
          %v853 = vpop.f32.mrb[0].mxu0
          %v854 = vpop.f32.mrb[0].mxu0
          %v855 = vadd.f32 %v748, %v854
          %v856 = vpop.f32.mrb[0].mxu0
          %857 = vmatprep.mubr.bf16.mxu0 0
          %858 = vmatmul.mubr.bf16.gmra.mrb[0].mxu0 %v782
          %v859 = vpop.f32.mrb[0].mxu0
          %v860 = vadd.f32 %v748, %v859
          %v861 = vpop.f32.mrb[0].mxu0
          %v862 = vpop.f32.mrb[0].mxu0
          %v863 = vadd.f32 %v748, %v862
          %v864 = vpop.f32.mrb[0].mxu0
          %865 = vmatprep.mubr.bf16.mxu0 0
          %866 = vmatmul.mubr.bf16.gmra.mrb[0].mxu0 %v785
          %v867 = vpop.f32.mrb[0].mxu0
          %v868 = vadd.f32 %v748, %v867
          %v869 = vpop.f32.mrb[0].mxu0
          %v870 = vpop.f32.mrb[0].mxu0
          %v871 = vadd.f32 %v748, %v870
          %v872 = vpop.f32.mrb[0].mxu0
          %873 = vmatprep.mubr.bf16.mxu0 0
          %874 = vmatmul.mubr.bf16.gmra.mrb[0].mxu0 %v788
          %v875 = vpop.f32.mrb[0].mxu0
          %v876 = vadd.f32 %v748, %v875
          %v877 = vpop.f32.mrb[0].mxu0
          %v878 = vpop.f32.mrb[0].mxu0
          %v879 = vadd.f32 %v748, %v878
          %v880 = vpop.f32.mrb[0].mxu0
          %881 = vmatprep.mubr.bf16.mxu0 0
          %882 = vmatmul.mubr.bf16.gmra.mrb[0].mxu0 %v791
          %v883 = vpop.f32.mrb[0].mxu0
          %v884 = vadd.f32 %v748, %v883
          %v885 = vpop.f32.mrb[0].mxu0
          %v886 = vpop.f32.mrb[0].mxu0
          %v887 = vadd.f32 %v748, %v886
          %v888 = vpop.f32.mrb[0].mxu0
          %889 = vdwg.mxu0
          %v890 = vld [vmem:[#allocation7] sm:$0x1]
          %v891 = vld [vmem:[#allocation8] sm:$0x1]
          %vm892 = vcmask 523264
          %v893 = vsel %vm892, %v828, 0.0
          %894 = vadd.xlane.f32.xlu0 %v893
          %v895 = vpop.xlane.xlu0 %894
          %v896 = vsel %vm892, %v831, 0.0
          %897 = vadd.xlane.f32.xlu0 %v896
          %v898 = vpop.xlane.xlu0 %897
          %v899 = vsel %vm892, %v836, 0.0
          %900 = vadd.xlane.f32.xlu0 %v899
          %v901 = vpop.xlane.xlu0 %900
          %v902 = vsel %vm892, %v839, 0.0
          %903 = vadd.xlane.f32.xlu0 %v902
          %v904 = vpop.xlane.xlu0 %903
          %v905 = vsel %vm892, %v844, 0.0
          %906 = vadd.xlane.f32.xlu0 %v905
          %v907 = vpop.xlane.xlu0 %906
          %v908 = vsel %vm892, %v847, 0.0
          %909 = vadd.xlane.f32.xlu0 %v908
          %v910 = vpop.xlane.xlu0 %909
          %v911 = vsel %vm892, %v852, 0.0
          %912 = vadd.xlane.f32.xlu0 %v911
          %v913 = vpop.xlane.xlu0 %912
          %v914 = vsel %vm892, %v855, 0.0
          %915 = vadd.xlane.f32.xlu0 %v914
          %v916 = vpop.xlane.xlu0 %915
          %v917 = vsel %vm892, %v860, 0.0
          %918 = vadd.xlane.f32.xlu0 %v917
          %v919 = vpop.xlane.xlu0 %918
          %v920 = vsel %vm892, %v863, 0.0
          %921 = vadd.xlane.f32.xlu0 %v920
          %v922 = vpop.xlane.xlu0 %921
          %v923 = vsel %vm892, %v868, 0.0
          %924 = vadd.xlane.f32.xlu0 %v923
          %v925 = vpop.xlane.xlu0 %924
          %v926 = vsel %vm892, %v871, 0.0
          %927 = vadd.xlane.f32.xlu0 %v926
          %v928 = vpop.xlane.xlu0 %927
          %v929 = vsel %vm892, %v876, 0.0
          %930 = vadd.xlane.f32.xlu0 %v929
          %v931 = vpop.xlane.xlu0 %930
          %v932 = vsel %vm892, %v879, 0.0
          %933 = vadd.xlane.f32.xlu0 %v932
          %v934 = vpop.xlane.xlu0 %933
          %v935 = vsel %vm892, %v884, 0.0
          %936 = vadd.xlane.f32.xlu0 %v935
          %v937 = vpop.xlane.xlu0 %936
          %v938 = vsel %vm892, %v887, 0.0
          %939 = vadd.xlane.f32.xlu0 %v938
          %v940 = vpop.xlane.xlu0 %939
          %v941 = vrcp.pop 64.0
          %v942 = vmul.f32 %v895, %v941
          %v943 = vmul.f32 %v898, %v941
          %v944 = vmul.f32 %v901, %v941
          %v945 = vmul.f32 %v904, %v941
          %v946 = vmul.f32 %v907, %v941
          %v947 = vmul.f32 %v910, %v941
          %v948 = vmul.f32 %v913, %v941
          %v949 = vmul.f32 %v916, %v941
          %v950 = vmul.f32 %v919, %v941
          %v951 = vmul.f32 %v922, %v941
          %v952 = vmul.f32 %v925, %v941
          %v953 = vmul.f32 %v928, %v941
          %v954 = vmul.f32 %v931, %v941
          %v955 = vmul.f32 %v934, %v941
          %v956 = vmul.f32 %v937, %v941
          %v957 = vmul.f32 %v940, %v941
          %v958 = vsub.f32 %v828, %v942
          %v959 = vsub.f32 %v831, %v943
          %v960 = vsub.f32 %v836, %v944
          %v961 = vsub.f32 %v839, %v945
          %v962 = vsub.f32 %v844, %v946
          %v963 = vsub.f32 %v847, %v947
          %v964 = vsub.f32 %v852, %v948
          %v965 = vsub.f32 %v855, %v949
          %v966 = vsub.f32 %v860, %v950
          %v967 = vsub.f32 %v863, %v951
          %v968 = vsub.f32 %v868, %v952
          %v969 = vsub.f32 %v871, %v953
          %v970 = vsub.f32 %v876, %v954
          %v971 = vsub.f32 %v879, %v955
          %v972 = vsub.f32 %v884, %v956
          %v973 = vsub.f32 %v887, %v957
          %v974 = vmul.f32 %v958, %v958
          %v975 = vmul.f32 %v959, %v959
          %v976 = vmul.f32 %v960, %v960
          %v977 = vmul.f32 %v961, %v961
          %v978 = vmul.f32 %v962, %v962
          %v979 = vmul.f32 %v963, %v963
          %v980 = vmul.f32 %v964, %v964
          %v981 = vmul.f32 %v965, %v965
          %v982 = vmul.f32 %v966, %v966
          %v983 = vmul.f32 %v967, %v967
          %v984 = vmul.f32 %v968, %v968
          %v985 = vmul.f32 %v969, %v969
          %v986 = vmul.f32 %v970, %v970
          %v987 = vmul.f32 %v971, %v971
          %v988 = vmul.f32 %v972, %v972
          %v989 = vmul.f32 %v973, %v973
          %v990 = vsel %vm892, %v974, 0.0
          %991 = vadd.xlane.f32.xlu0 %v990
          %v992 = vpop.xlane.xlu0 %991
          %v993 = vsel %vm892, %v975, 0.0
          %994 = vadd.xlane.f32.xlu0 %v993
          %v995 = vpop.xlane.xlu0 %994
          %v996 = vsel %vm892, %v976, 0.0
          %997 = vadd.xlane.f32.xlu0 %v996
          %v998 = vpop.xlane.xlu0 %997
          %v999 = vsel %vm892, %v977, 0.0
          %1000 = vadd.xlane.f32.xlu0 %v999
          %v1001 = vpop.xlane.xlu0 %1000
          %v1002 = vsel %vm892, %v978, 0.0
          %1003 = vadd.xlane.f32.xlu0 %v1002
          %v1004 = vpop.xlane.xlu0 %1003
          %v1005 = vsel %vm892, %v979, 0.0
          %1006 = vadd.xlane.f32.xlu0 %v1005
          %v1007 = vpop.xlane.xlu0 %1006
          %v1008 = vsel %vm892, %v980, 0.0
          %1009 = vadd.xlane.f32.xlu0 %v1008
          %v1010 = vpop.xlane.xlu0 %1009
          %v1011 = vsel %vm892, %v981, 0.0
          %1012 = vadd.xlane.f32.xlu0 %v1011
          %v1013 = vpop.xlane.xlu0 %1012
          %v1014 = vsel %vm892, %v982, 0.0
          %1015 = vadd.xlane.f32.xlu0 %v1014
          %v1016 = vpop.xlane.xlu0 %1015
          %v1017 = vsel %vm892, %v983, 0.0
          %1018 = vadd.xlane.f32.xlu0 %v1017
          %v1019 = vpop.xlane.xlu0 %1018
          %v1020 = vsel %vm892, %v984, 0.0
          %1021 = vadd.xlane.f32.xlu0 %v1020
          %v1022 = vpop.xlane.xlu0 %1021
          %v1023 = vsel %vm892, %v985, 0.0
          %1024 = vadd.xlane.f32.xlu0 %v1023
          %v1025 = vpop.xlane.xlu0 %1024
          %v1026 = vsel %vm892, %v986, 0.0
          %1027 = vadd.xlane.f32.xlu0 %v1026
          %v1028 = vpop.xlane.xlu0 %1027
          %v1029 = vsel %vm892, %v987, 0.0
          %1030 = vadd.xlane.f32.xlu0 %v1029
          %v1031 = vpop.xlane.xlu0 %1030
          %v1032 = vsel %vm892, %v988, 0.0
          %1033 = vadd.xlane.f32.xlu0 %v1032
          %v1034 = vpop.xlane.xlu0 %1033
          %v1035 = vsel %vm892, %v989, 0.0
          %1036 = vadd.xlane.f32.xlu0 %v1035
          %v1037 = vpop.xlane.xlu0 %1036
          %v1038 = vmul.f32 %v992, %v941
          %v1039 = vmul.f32 %v995, %v941
          %v1040 = vmul.f32 %v998, %v941
          %v1041 = vmul.f32 %v1001, %v941
          %v1042 = vmul.f32 %v1004, %v941
          %v1043 = vmul.f32 %v1007, %v941
          %v1044 = vmul.f32 %v1010, %v941
          %v1045 = vmul.f32 %v1013, %v941
          %v1046 = vmul.f32 %v1016, %v941
          %v1047 = vmul.f32 %v1019, %v941
          %v1048 = vmul.f32 %v1022, %v941
          %v1049 = vmul.f32 %v1025, %v941
          %v1050 = vmul.f32 %v1028, %v941
          %v1051 = vmul.f32 %v1031, %v941
          %v1052 = vmul.f32 %v1034, %v941
          %v1053 = vmul.f32 %v1037, %v941
          %v1054 = vadd.f32 %v1038, 1e-06
          %v1055 = vadd.f32 %v1039, 1e-06
          %v1056 = vadd.f32 %v1040, 1e-06
          %v1057 = vadd.f32 %v1041, 1e-06
          %v1058 = vadd.f32 %v1042, 1e-06
          %v1059 = vadd.f32 %v1043, 1e-06
          %v1060 = vadd.f32 %v1044, 1e-06
          %v1061 = vadd.f32 %v1045, 1e-06
          %v1062 = vadd.f32 %v1046, 1e-06
          %v1063 = vadd.f32 %v1047, 1e-06
          %v1064 = vadd.f32 %v1048, 1e-06
          %v1065 = vadd.f32 %v1049, 1e-06
          %v1066 = vadd.f32 %v1050, 1e-06
          %v1067 = vadd.f32 %v1051, 1e-06
          %v1068 = vadd.f32 %v1052, 1e-06
          %v1069 = vadd.f32 %v1053, 1e-06
          %v1070 = vrsqrt.pop %v1054
          %v1071 = vrsqrt.pop %v1055
          %v1072 = vrsqrt.pop %v1056
          %v1073 = vrsqrt.pop %v1057
          %v1074 = vrsqrt.pop %v1058
          %v1075 = vrsqrt.pop %v1059
          %v1076 = vrsqrt.pop %v1060
          %v1077 = vrsqrt.pop %v1061
          %v1078 = vrsqrt.pop %v1062
          %v1079 = vrsqrt.pop %v1063
          %v1080 = vrsqrt.pop %v1064
          %v1081 = vrsqrt.pop %v1065
          %v1082 = vrsqrt.pop %v1066
          %v1083 = vrsqrt.pop %v1067
          %v1084 = vrsqrt.pop %v1068
          %v1085 = vrsqrt.pop %v1069
          %v1086 = vmul.f32 %v958, %v1070
          %v1087 = vmul.f32 %v959, %v1071
          %v1088 = vmul.f32 %v960, %v1072
          %v1089 = vmul.f32 %v961, %v1073
          %v1090 = vmul.f32 %v962, %v1074
          %v1091 = vmul.f32 %v963, %v1075
          %v1092 = vmul.f32 %v964, %v1076
          %v1093 = vmul.f32 %v965, %v1077
          %v1094 = vmul.f32 %v966, %v1078
          %v1095 = vmul.f32 %v967, %v1079
          %v1096 = vmul.f32 %v968, %v1080
          %v1097 = vmul.f32 %v969, %v1081
          %v1098 = vmul.f32 %v970, %v1082
          %v1099 = vmul.f32 %v971, %v1083
          %v1100 = vmul.f32 %v972, %v1084
          %v1101 = vmul.f32 %v973, %v1085
          %v1103 = vlaneseq
          %v1104 = vshrl.u32 %v1103, 7
          %v1105 = vsub.s32 0, %v1104
          %v1106 = vrot.slane %v890, %v1105
          %v1108 = vmul.f32 %v1086, %v1106
          %v1109 = vmul.f32 %v1087, %v1106
          %v1110 = vmul.f32 %v1088, %v1106
          %v1111 = vmul.f32 %v1089, %v1106
          %v1112 = vmul.f32 %v1090, %v1106
          %v1113 = vmul.f32 %v1091, %v1106
          %v1114 = vmul.f32 %v1092, %v1106
          %v1115 = vmul.f32 %v1093, %v1106
          %v1116 = vmul.f32 %v1094, %v1106
          %v1117 = vmul.f32 %v1095, %v1106
          %v1118 = vmul.f32 %v1096, %v1106
          %v1119 = vmul.f32 %v1097, %v1106
          %v1120 = vmul.f32 %v1098, %v1106
          %v1121 = vmul.f32 %v1099, %v1106
          %v1122 = vmul.f32 %v1100, %v1106
          %v1123 = vmul.f32 %v1101, %v1106
          %v1125 = vlaneseq
          %v1126 = vshrl.u32 %v1125, 7
          %v1127 = vsub.s32 0, %v1126
          %v1128 = vrot.slane %v891, %v1127
          %v1130 = vadd.f32 %v1108, %v1128
          %v1131 = vadd.f32 %v1109, %v1128
          %v1132 = vadd.f32 %v1110, %v1128
          %v1133 = vadd.f32 %v1111, %v1128
          %v1134 = vadd.f32 %v1112, %v1128
          %v1135 = vadd.f32 %v1113, %v1128
          %v1136 = vadd.f32 %v1114, %v1128
          %v1137 = vadd.f32 %v1115, %v1128
          %v1138 = vadd.f32 %v1116, %v1128
          %v1139 = vadd.f32 %v1117, %v1128
          %v1140 = vadd.f32 %v1118, %v1128
          %v1141 = vadd.f32 %v1119, %v1128
          %v1142 = vadd.f32 %v1120, %v1128
          %v1143 = vadd.f32 %v1121, %v1128
          %v1144 = vadd.f32 %v1122, %v1128
          %v1145 = vadd.f32 %v1123, %v1128
          %v1146 = vld [vmem:[#allocation10] sm:$0x1]
          %v1147 = vld [vmem:[#allocation11] sm:$0x1]
          %v1148 = vsel %vm892, %v1130, 0.0
          %1149 = vadd.xlane.f32.xlu0 %v1148
          %v1150 = vpop.xlane.xlu0 %1149
          %v1151 = vsel %vm892, %v1131, 0.0
          %1152 = vadd.xlane.f32.xlu0 %v1151
          %v1153 = vpop.xlane.xlu0 %1152
          %v1154 = vsel %vm892, %v1132, 0.0
          %1155 = vadd.xlane.f32.xlu0 %v1154
          %v1156 = vpop.xlane.xlu0 %1155
          %v1157 = vsel %vm892, %v1133, 0.0
          %1158 = vadd.xlane.f32.xlu0 %v1157
          %v1159 = vpop.xlane.xlu0 %1158
          %v1160 = vsel %vm892, %v1134, 0.0
          %1161 = vadd.xlane.f32.xlu0 %v1160
          %v1162 = vpop.xlane.xlu0 %1161
          %v1163 = vsel %vm892, %v1135, 0.0
          %1164 = vadd.xlane.f32.xlu0 %v1163
          %v1165 = vpop.xlane.xlu0 %1164
          %v1166 = vsel %vm892, %v1136, 0.0
          %1167 = vadd.xlane.f32.xlu0 %v1166
          %v1168 = vpop.xlane.xlu0 %1167
          %v1169 = vsel %vm892, %v1137, 0.0
          %1170 = vadd.xlane.f32.xlu0 %v1169
          %v1171 = vpop.xlane.xlu0 %1170
          %v1172 = vsel %vm892, %v1138, 0.0
          %1173 = vadd.xlane.f32.xlu0 %v1172
          %v1174 = vpop.xlane.xlu0 %1173
          %v1175 = vsel %vm892, %v1139, 0.0
          %1176 = vadd.xlane.f32.xlu0 %v1175
          %v1177 = vpop.xlane.xlu0 %1176
          %v1178 = vsel %vm892, %v1140, 0.0
          %1179 = vadd.xlane.f32.xlu0 %v1178
          %v1180 = vpop.xlane.xlu0 %1179
          %v1181 = vsel %vm892, %v1141, 0.0
          %1182 = vadd.xlane.f32.xlu0 %v1181
          %v1183 = vpop.xlane.xlu0 %1182
          %v1184 = vsel %vm892, %v1142, 0.0
          %1185 = vadd.xlane.f32.xlu0 %v1184
          %v1186 = vpop.xlane.xlu0 %1185
          %v1187 = vsel %vm892, %v1143, 0.0
          %1188 = vadd.xlane.f32.xlu0 %v1187
          %v1189 = vpop.xlane.xlu0 %1188
          %v1190 = vsel %vm892, %v1144, 0.0
          %1191 = vadd.xlane.f32.xlu0 %v1190
          %v1192 = vpop.xlane.xlu0 %1191
          %v1193 = vsel %vm892, %v1145, 0.0
          %1194 = vadd.xlane.f32.xlu0 %v1193
          %v1195 = vpop.xlane.xlu0 %1194
          %v1196 = vmul.f32 %v1150, %v941
          %v1197 = vmul.f32 %v1153, %v941
          %v1198 = vmul.f32 %v1156, %v941
          %v1199 = vmul.f32 %v1159, %v941
          %v1200 = vmul.f32 %v1162, %v941
          %v1201 = vmul.f32 %v1165, %v941
          %v1202 = vmul.f32 %v1168, %v941
          %v1203 = vmul.f32 %v1171, %v941
          %v1204 = vmul.f32 %v1174, %v941
          %v1205 = vmul.f32 %v1177, %v941
          %v1206 = vmul.f32 %v1180, %v941
          %v1207 = vmul.f32 %v1183, %v941
          %v1208 = vmul.f32 %v1186, %v941
          %v1209 = vmul.f32 %v1189, %v941
          %v1210 = vmul.f32 %v1192, %v941
          %v1211 = vmul.f32 %v1195, %v941
          %v1212 = vsub.f32 %v1130, %v1196
          %v1213 = vsub.f32 %v1131, %v1197
          %v1214 = vsub.f32 %v1132, %v1198
          %v1215 = vsub.f32 %v1133, %v1199
          %v1216 = vsub.f32 %v1134, %v1200
          %v1217 = vsub.f32 %v1135, %v1201
          %v1218 = vsub.f32 %v1136, %v1202
          %v1219 = vsub.f32 %v1137, %v1203
          %v1220 = vsub.f32 %v1138, %v1204
          %v1221 = vsub.f32 %v1139, %v1205
          %v1222 = vsub.f32 %v1140, %v1206
          %v1223 = vsub.f32 %v1141, %v1207
          %v1224 = vsub.f32 %v1142, %v1208
          %v1225 = vsub.f32 %v1143, %v1209
          %v1226 = vsub.f32 %v1144, %v1210
          %v1227 = vsub.f32 %v1145, %v1211
          %v1228 = vmul.f32 %v1212, %v1212
          %v1229 = vmul.f32 %v1213, %v1213
          %v1230 = vmul.f32 %v1214, %v1214
          %v1231 = vmul.f32 %v1215, %v1215
          %v1232 = vmul.f32 %v1216, %v1216
          %v1233 = vmul.f32 %v1217, %v1217
          %v1234 = vmul.f32 %v1218, %v1218
          %v1235 = vmul.f32 %v1219, %v1219
          %v1236 = vmul.f32 %v1220, %v1220
          %v1237 = vmul.f32 %v1221, %v1221
          %v1238 = vmul.f32 %v1222, %v1222
          %v1239 = vmul.f32 %v1223, %v1223
          %v1240 = vmul.f32 %v1224, %v1224
          %v1241 = vmul.f32 %v1225, %v1225
          %v1242 = vmul.f32 %v1226, %v1226
          %v1243 = vmul.f32 %v1227, %v1227
          %v1244 = vsel %vm892, %v1228, 0.0
          %1245 = vadd.xlane.f32.xlu0 %v1244
          %v1246 = vpop.xlane.xlu0 %1245
          %v1247 = vsel %vm892, %v1229, 0.0
          %1248 = vadd.xlane.f32.xlu0 %v1247
          %v1249 = vpop.xlane.xlu0 %1248
          %v1250 = vsel %vm892, %v1230, 0.0
          %1251 = vadd.xlane.f32.xlu0 %v1250
          %v1252 = vpop.xlane.xlu0 %1251
          %v1253 = vsel %vm892, %v1231, 0.0
          %1254 = vadd.xlane.f32.xlu0 %v1253
          %v1255 = vpop.xlane.xlu0 %1254
          %v1256 = vsel %vm892, %v1232, 0.0
          %1257 = vadd.xlane.f32.xlu0 %v1256
          %v1258 = vpop.xlane.xlu0 %1257
          %v1259 = vsel %vm892, %v1233, 0.0
          %1260 = vadd.xlane.f32.xlu0 %v1259
          %v1261 = vpop.xlane.xlu0 %1260
          %v1262 = vsel %vm892, %v1234, 0.0
          %1263 = vadd.xlane.f32.xlu0 %v1262
          %v1264 = vpop.xlane.xlu0 %1263
          %v1265 = vsel %vm892, %v1235, 0.0
          %1266 = vadd.xlane.f32.xlu0 %v1265
          %v1267 = vpop.xlane.xlu0 %1266
          %v1268 = vsel %vm892, %v1236, 0.0
          %1269 = vadd.xlane.f32.xlu0 %v1268
          %v1270 = vpop.xlane.xlu0 %1269
          %v1271 = vsel %vm892, %v1237, 0.0
          %1272 = vadd.xlane.f32.xlu0 %v1271
          %v1273 = vpop.xlane.xlu0 %1272
          %v1274 = vsel %vm892, %v1238, 0.0
          %1275 = vadd.xlane.f32.xlu0 %v1274
          %v1276 = vpop.xlane.xlu0 %1275
          %v1277 = vsel %vm892, %v1239, 0.0
          %1278 = vadd.xlane.f32.xlu0 %v1277
          %v1279 = vpop.xlane.xlu0 %1278
          %v1280 = vsel %vm892, %v1240, 0.0
          %1281 = vadd.xlane.f32.xlu0 %v1280
          %v1282 = vpop.xlane.xlu0 %1281
          %v1283 = vsel %vm892, %v1241, 0.0
          %1284 = vadd.xlane.f32.xlu0 %v1283
          %v1285 = vpop.xlane.xlu0 %1284
          %v1286 = vsel %vm892, %v1242, 0.0
          %1287 = vadd.xlane.f32.xlu0 %v1286
          %v1288 = vpop.xlane.xlu0 %1287
          %v1289 = vsel %vm892, %v1243, 0.0
          %1290 = vadd.xlane.f32.xlu0 %v1289
          %v1291 = vpop.xlane.xlu0 %1290
          %v1292 = vmul.f32 %v1246, %v941
          %v1293 = vmul.f32 %v1249, %v941
          %v1294 = vmul.f32 %v1252, %v941
          %v1295 = vmul.f32 %v1255, %v941
          %v1296 = vmul.f32 %v1258, %v941
          %v1297 = vmul.f32 %v1261, %v941
          %v1298 = vmul.f32 %v1264, %v941
          %v1299 = vmul.f32 %v1267, %v941
          %v1300 = vmul.f32 %v1270, %v941
          %v1301 = vmul.f32 %v1273, %v941
          %v1302 = vmul.f32 %v1276, %v941
          %v1303 = vmul.f32 %v1279, %v941
          %v1304 = vmul.f32 %v1282, %v941
          %v1305 = vmul.f32 %v1285, %v941
          %v1306 = vmul.f32 %v1288, %v941
          %v1307 = vmul.f32 %v1291, %v941
          %v1308 = vadd.f32 %v1292, 1e-06
          %v1309 = vadd.f32 %v1293, 1e-06
          %v1310 = vadd.f32 %v1294, 1e-06
          %v1311 = vadd.f32 %v1295, 1e-06
          %v1312 = vadd.f32 %v1296, 1e-06
          %v1313 = vadd.f32 %v1297, 1e-06
          %v1314 = vadd.f32 %v1298, 1e-06
          %v1315 = vadd.f32 %v1299, 1e-06
          %v1316 = vadd.f32 %v1300, 1e-06
          %v1317 = vadd.f32 %v1301, 1e-06
          %v1318 = vadd.f32 %v1302, 1e-06
          %v1319 = vadd.f32 %v1303, 1e-06
          %v1320 = vadd.f32 %v1304, 1e-06
          %v1321 = vadd.f32 %v1305, 1e-06
          %v1322 = vadd.f32 %v1306, 1e-06
          %v1323 = vadd.f32 %v1307, 1e-06
          %v1324 = vrsqrt.pop %v1308
          %v1325 = vrsqrt.pop %v1309
          %v1326 = vrsqrt.pop %v1310
          %v1327 = vrsqrt.pop %v1311
          %v1328 = vrsqrt.pop %v1312
          %v1329 = vrsqrt.pop %v1313
          %v1330 = vrsqrt.pop %v1314
          %v1331 = vrsqrt.pop %v1315
          %v1332 = vrsqrt.pop %v1316
          %v1333 = vrsqrt.pop %v1317
          %v1334 = vrsqrt.pop %v1318
          %v1335 = vrsqrt.pop %v1319
          %v1336 = vrsqrt.pop %v1320
          %v1337 = vrsqrt.pop %v1321
          %v1338 = vrsqrt.pop %v1322
          %v1339 = vrsqrt.pop %v1323
          %v1340 = vmul.f32 %v1212, %v1324
          %v1341 = vmul.f32 %v1213, %v1325
          %v1342 = vmul.f32 %v1214, %v1326
          %v1343 = vmul.f32 %v1215, %v1327
          %v1344 = vmul.f32 %v1216, %v1328
          %v1345 = vmul.f32 %v1217, %v1329
          %v1346 = vmul.f32 %v1218, %v1330
          %v1347 = vmul.f32 %v1219, %v1331
          %v1348 = vmul.f32 %v1220, %v1332
          %v1349 = vmul.f32 %v1221, %v1333
          %v1350 = vmul.f32 %v1222, %v1334
          %v1351 = vmul.f32 %v1223, %v1335
          %v1352 = vmul.f32 %v1224, %v1336
          %v1353 = vmul.f32 %v1225, %v1337
          %v1354 = vmul.f32 %v1226, %v1338
          %v1355 = vmul.f32 %v1227, %v1339
          %v1357 = vlaneseq
          %v1358 = vshrl.u32 %v1357, 7
          %v1359 = vsub.s32 0, %v1358
          %v1360 = vrot.slane %v1146, %v1359
          %v1362 = vmul.f32 %v1340, %v1360
          %v1363 = vmul.f32 %v1341, %v1360
          %v1364 = vmul.f32 %v1342, %v1360
          %v1365 = vmul.f32 %v1343, %v1360
          %v1366 = vmul.f32 %v1344, %v1360
          %v1367 = vmul.f32 %v1345, %v1360
          %v1368 = vmul.f32 %v1346, %v1360
          %v1369 = vmul.f32 %v1347, %v1360
          %v1370 = vmul.f32 %v1348, %v1360
          %v1371 = vmul.f32 %v1349, %v1360
          %v1372 = vmul.f32 %v1350, %v1360
          %v1373 = vmul.f32 %v1351, %v1360
          %v1374 = vmul.f32 %v1352, %v1360
          %v1375 = vmul.f32 %v1353, %v1360
          %v1376 = vmul.f32 %v1354, %v1360
          %v1377 = vmul.f32 %v1355, %v1360
          %v1379 = vlaneseq
          %v1380 = vshrl.u32 %v1379, 7
          %v1381 = vsub.s32 0, %v1380
          %v1382 = vrot.slane %v1147, %v1381
          %v1384 = vadd.f32 %v1362, %v1382
          %v1385 = vadd.f32 %v1363, %v1382
          %v1386 = vadd.f32 %v1364, %v1382
          %v1387 = vadd.f32 %v1365, %v1382
          %v1388 = vadd.f32 %v1366, %v1382
          %v1389 = vadd.f32 %v1367, %v1382
          %v1390 = vadd.f32 %v1368, %v1382
          %v1391 = vadd.f32 %v1369, %v1382
          %v1392 = vadd.f32 %v1370, %v1382
          %v1393 = vadd.f32 %v1371, %v1382
          %v1394 = vadd.f32 %v1372, %v1382
          %v1395 = vadd.f32 %v1373, %v1382
          %v1396 = vadd.f32 %v1374, %v1382
          %v1397 = vadd.f32 %v1375, %v1382
          %v1398 = vadd.f32 %v1376, %v1382
          %v1399 = vadd.f32 %v1377, %v1382
          %v1400 = vpack.c.bf16 %v1385, %v1384
          %v1401 = vpack.c.bf16 %v1387, %v1386
          %v1402 = vpack.c.bf16 %v1389, %v1388
          %v1403 = vpack.c.bf16 %v1391, %v1390
          %v1404 = vpack.c.bf16 %v1393, %v1392
          %v1405 = vpack.c.bf16 %v1395, %v1394
          %v1406 = vpack.c.bf16 %v1397, %v1396
          %v1407 = vpack.c.bf16 %v1399, %v1398
          %v1408 = vld [vmem:[#allocation13] sm:$0xff]
          %v1409 = vld [vmem:[#allocation13 + $0x8] sm:$0xff]
          %v1410 = vld [vmem:[#allocation13 + $0x10] sm:$0xff]
          %v1411 = vld [vmem:[#allocation13 + $0x18] sm:$0xff]
          %v1412 = vld [vmem:[#allocation13 + $0x20] sm:$0xff]
          %v1413 = vld [vmem:[#allocation13 + $0x28] sm:$0xff]
          %v1414 = vld [vmem:[#allocation13 + $0x30] sm:$0xff]
          %v1415 = vld [vmem:[#allocation13 + $0x38] sm:$0xff]
          %v1416 = vld [vmem:[#allocation14] sm:$0x3]
          %v1418 = vlaneseq
          %v1419 = vshrl.u32 %v1418, 7
          %v1420 = vsub.s32 0, %v1419
          %v1421 = vrot.slane %v1416, %v1420
          %v1422 = vlaneseq
          %v1423 = vshrl.u32 %v1422, 7
          %v1424 = vsub.s32 1, %v1423
          %v1425 = vrot.slane %v1416, %v1424
          %v1436 = vunpack.c.l.b16 %v1408
          %v1437 = vunpack.c.h.b16 %v1408
          %v1438 = vunpack.c.l.b16 %v1409
          %v1439 = vunpack.c.h.b16 %v1409
          %v1440 = vunpack.c.l.b16 %v1410
          %v1441 = vunpack.c.h.b16 %v1410
          %v1442 = vunpack.c.l.b16 %v1411
          %v1443 = vunpack.c.h.b16 %v1411
          %v1444 = vunpack.c.l.b16 %v1412
          %v1445 = vunpack.c.h.b16 %v1412
          %v1446 = vunpack.c.l.b16 %v1413
          %v1447 = vunpack.c.h.b16 %v1413
          %v1448 = vunpack.c.l.b16 %v1414
          %v1449 = vunpack.c.h.b16 %v1414
          %v1450 = vunpack.c.l.b16 %v1415
          %v1451 = vunpack.c.h.b16 %v1415
          %v1452 = vpack.c.b16 %v1438, %v1436
          %v1453 = vpack.c.b16 %v1439, %v1437
          %v1454 = vpack.c.b16 %v1442, %v1440
          %v1455 = vpack.c.b16 %v1443, %v1441
          %v1456 = vpack.c.b16 %v1446, %v1444
          %v1457 = vpack.c.b16 %v1447, %v1445
          %v1458 = vpack.c.b16 %v1450, %v1448
          %v1459 = vpack.c.b16 %v1451, %v1449
          %v1469 = vsel %vm892, %v1400, 0
          %v1472 = vsel %vm892, %v1401, 0
          %v1475 = vsel %vm892, %v1402, 0
          %v1478 = vsel %vm892, %v1403, 0
          %v1481 = vsel %vm892, %v1404, 0
          %v1484 = vsel %vm892, %v1405, 0
          %v1487 = vsel %vm892, %v1406, 0
          %v1490 = vsel %vm892, %v1407, 0
          %1492 = vmatprep.subr.bf16.mxu0 %v1453
          %1493 = vmatpush1.bf16.msra.mxu0 %v1452
          %1494 = vmatprep.subr.bf16.mxu0 %v1455
          %1495 = vmatpush1.bf16.msra.mxu0 %v1454
          %1496 = vmatprep.subr.bf16.mxu0 %v1457
          %1497 = vmatpush1.bf16.msra.mxu0 %v1456
          %1498 = vmatprep.subr.bf16.mxu0 %v1459
          %1499 = vmatpush1.bf16.msra.mxu0 %v1458
          %1500 = vmatprep.subr.bf16.mxu0 0
          %1501 = vmatpush1.bf16.msra.mxu0 0
          %1502 = vmatprep.subr.bf16.mxu0 0
          %1503 = vmatpush1.bf16.msra.mxu0 0
          %1504 = vmatprep.subr.bf16.mxu0 0
          %1505 = vmatpush1.bf16.msra.mxu0 0
          %1506 = vmatprep.subr.bf16.mxu0 0
          %1507 = vmatpush1.bf16.msra.mxu0 0
          %1508 = vmatprep.subr.bf16.mxu0 0
          %1509 = vmatpush1.bf16.msra.mxu0 0
          %1510 = vmatprep.subr.bf16.mxu0 0
          %1511 = vmatpush1.bf16.msra.mxu0 0
          %1512 = vmatprep.subr.bf16.mxu0 0
          %1513 = vmatpush1.bf16.msra.mxu0 0
          %1514 = vmatprep.subr.bf16.mxu0 0
          %1515 = vmatpush1.bf16.msra.mxu0 0
          %1516 = vmatprep.subr.bf16.mxu0 0
          %1517 = vmatpush1.bf16.msra.mxu0 0
          %1518 = vmatprep.subr.bf16.mxu0 0
          %1519 = vmatpush1.bf16.msra.mxu0 0
          %1520 = vmatprep.subr.bf16.mxu0 0
          %1521 = vmatpush1.bf16.msra.mxu0 0
          %1522 = vmatprep.subr.bf16.mxu0 0
          %1523 = vmatpush1.bf16.msra.mxu0 0
          %1524 = vmatprep.mubr.bf16.mxu0 0
          %1525 = vmatmul.mubr.bf16.gmra.mrb[0].mxu0 %v1469
          %v1526 = vpop.f32.mrb[0].mxu0
          %v1527 = vadd.f32 %v1421, %v1526
          %v1528 = vpop.f32.mrb[0].mxu0
          %v1529 = vadd.f32 %v1425, %v1528
          %v1530 = vpop.f32.mrb[0].mxu0
          %v1531 = vadd.f32 %v1421, %v1530
          %v1532 = vpop.f32.mrb[0].mxu0
          %v1533 = vadd.f32 %v1425, %v1532
          %1534 = vmatprep.mubr.bf16.mxu0 0
          %1535 = vmatmul.mubr.bf16.gmra.mrb[0].mxu0 %v1472
          %v1536 = vpop.f32.mrb[0].mxu0
          %v1537 = vadd.f32 %v1421, %v1536
          %v1538 = vpop.f32.mrb[0].mxu0
          %v1539 = vadd.f32 %v1425, %v1538
          %v1540 = vpop.f32.mrb[0].mxu0
          %v1541 = vadd.f32 %v1421, %v1540
          %v1542 = vpop.f32.mrb[0].mxu0
          %v1543 = vadd.f32 %v1425, %v1542
          %1544 = vmatprep.mubr.bf16.mxu0 0
          %1545 = vmatmul.mubr.bf16.gmra.mrb[0].mxu0 %v1475
          %v1546 = vpop.f32.mrb[0].mxu0
          %v1547 = vadd.f32 %v1421, %v1546
          %v1548 = vpop.f32.mrb[0].mxu0
          %v1549 = vadd.f32 %v1425, %v1548
          %v1550 = vpop.f32.mrb[0].mxu0
          %v1551 = vadd.f32 %v1421, %v1550
          %v1552 = vpop.f32.mrb[0].mxu0
          %v1553 = vadd.f32 %v1425, %v1552
          %1554 = vmatprep.mubr.bf16.mxu0 0
          %1555 = vmatmul.mubr.bf16.gmra.mrb[0].mxu0 %v1478
          %v1556 = vpop.f32.mrb[0].mxu0
          %v1557 = vadd.f32 %v1421, %v1556
          %v1558 = vpop.f32.mrb[0].mxu0
          %v1559 = vadd.f32 %v1425, %v1558
          %v1560 = vpop.f32.mrb[0].mxu0
          %v1561 = vadd.f32 %v1421, %v1560
          %v1562 = vpop.f32.mrb[0].mxu0
          %v1563 = vadd.f32 %v1425, %v1562
          %1564 = vmatprep.mubr.bf16.mxu0 0
          %1565 = vmatmul.mubr.bf16.gmra.mrb[0].mxu0 %v1481
          %v1566 = vpop.f32.mrb[0].mxu0
          %v1567 = vadd.f32 %v1421, %v1566
          %v1568 = vpop.f32.mrb[0].mxu0
          %v1569 = vadd.f32 %v1425, %v1568
          %v1570 = vpop.f32.mrb[0].mxu0
          %v1571 = vadd.f32 %v1421, %v1570
          %v1572 = vpop.f32.mrb[0].mxu0
          %v1573 = vadd.f32 %v1425, %v1572
          %1574 = vmatprep.mubr.bf16.mxu0 0
          %1575 = vmatmul.mubr.bf16.gmra.mrb[0].mxu0 %v1484
          %v1576 = vpop.f32.mrb[0].mxu0
          %v1577 = vadd.f32 %v1421, %v1576
          %v1578 = vpop.f32.mrb[0].mxu0
          %v1579 = vadd.f32 %v1425, %v1578
          %v1580 = vpop.f32.mrb[0].mxu0
          %v1581 = vadd.f32 %v1421, %v1580
          %v1582 = vpop.f32.mrb[0].mxu0
          %v1583 = vadd.f32 %v1425, %v1582
          %1584 = vmatprep.mubr.bf16.mxu0 0
          %1585 = vmatmul.mubr.bf16.gmra.mrb[0].mxu0 %v1487
          %v1586 = vpop.f32.mrb[0].mxu0
          %v1587 = vadd.f32 %v1421, %v1586
          %v1588 = vpop.f32.mrb[0].mxu0
          %v1589 = vadd.f32 %v1425, %v1588
          %v1590 = vpop.f32.mrb[0].mxu0
          %v1591 = vadd.f32 %v1421, %v1590
          %v1592 = vpop.f32.mrb[0].mxu0
          %v1593 = vadd.f32 %v1425, %v1592
          %1594 = vmatprep.mubr.bf16.mxu0 0
          %1595 = vmatmul.mubr.bf16.gmra.mrb[0].mxu0 %v1490
          %v1596 = vpop.f32.mrb[0].mxu0
          %v1597 = vadd.f32 %v1421, %v1596
          %v1598 = vpop.f32.mrb[0].mxu0
          %v1599 = vadd.f32 %v1425, %v1598
          %v1600 = vpop.f32.mrb[0].mxu0
          %v1601 = vadd.f32 %v1421, %v1600
          %v1602 = vpop.f32.mrb[0].mxu0
          %v1603 = vadd.f32 %v1425, %v1602
          %1604 = vdwg.mxu0
          %v1605 = vmul.f32 %v1527, %v1527
          %v1606 = vmul.f32 %v1529, %v1529
          %v1607 = vmul.f32 %v1531, %v1531
          %v1608 = vmul.f32 %v1533, %v1533
          %v1609 = vmul.f32 %v1537, %v1537
          %v1610 = vmul.f32 %v1539, %v1539
          %v1611 = vmul.f32 %v1541, %v1541
          %v1612 = vmul.f32 %v1543, %v1543
          %v1613 = vmul.f32 %v1547, %v1547
          %v1614 = vmul.f32 %v1549, %v1549
          %v1615 = vmul.f32 %v1551, %v1551
          %v1616 = vmul.f32 %v1553, %v1553
          %v1617 = vmul.f32 %v1557, %v1557
          %v1618 = vmul.f32 %v1559, %v1559
          %v1619 = vmul.f32 %v1561, %v1561
          %v1620 = vmul.f32 %v1563, %v1563
          %v1621 = vmul.f32 %v1567, %v1567
          %v1622 = vmul.f32 %v1569, %v1569
          %v1623 = vmul.f32 %v1571, %v1571
          %v1624 = vmul.f32 %v1573, %v1573
          %v1625 = vmul.f32 %v1577, %v1577
          %v1626 = vmul.f32 %v1579, %v1579
          %v1627 = vmul.f32 %v1581, %v1581
          %v1628 = vmul.f32 %v1583, %v1583
          %v1629 = vmul.f32 %v1587, %v1587
          %v1630 = vmul.f32 %v1589, %v1589
          %v1631 = vmul.f32 %v1591, %v1591
          %v1632 = vmul.f32 %v1593, %v1593
          %v1633 = vmul.f32 %v1597, %v1597
          %v1634 = vmul.f32 %v1599, %v1599
          %v1635 = vmul.f32 %v1601, %v1601
          %v1636 = vmul.f32 %v1603, %v1603
          %v1637 = vmul.f32 %v1527, %v1605
          %v1638 = vmul.f32 %v1529, %v1606
          %v1639 = vmul.f32 %v1531, %v1607
          %v1640 = vmul.f32 %v1533, %v1608
          %v1641 = vmul.f32 %v1537, %v1609
          %v1642 = vmul.f32 %v1539, %v1610
          %v1643 = vmul.f32 %v1541, %v1611
          %v1644 = vmul.f32 %v1543, %v1612
          %v1645 = vmul.f32 %v1547, %v1613
          %v1646 = vmul.f32 %v1549, %v1614
          %v1647 = vmul.f32 %v1551, %v1615
          %v1648 = vmul.f32 %v1553, %v1616
          %v1649 = vmul.f32 %v1557, %v1617
          %v1650 = vmul.f32 %v1559, %v1618
          %v1651 = vmul.f32 %v1561, %v1619
          %v1652 = vmul.f32 %v1563, %v1620
          %v1653 = vmul.f32 %v1567, %v1621
          %v1654 = vmul.f32 %v1569, %v1622
          %v1655 = vmul.f32 %v1571, %v1623
          %v1656 = vmul.f32 %v1573, %v1624
          %v1657 = vmul.f32 %v1577, %v1625
          %v1658 = vmul.f32 %v1579, %v1626
          %v1659 = vmul.f32 %v1581, %v1627
          %v1660 = vmul.f32 %v1583, %v1628
          %v1661 = vmul.f32 %v1587, %v1629
          %v1662 = vmul.f32 %v1589, %v1630
          %v1663 = vmul.f32 %v1591, %v1631
          %v1664 = vmul.f32 %v1593, %v1632
          %v1665 = vmul.f32 %v1597, %v1633
          %v1666 = vmul.f32 %v1599, %v1634
          %v1667 = vmul.f32 %v1601, %v1635
          %v1668 = vmul.f32 %v1603, %v1636
          %v1669 = vmul.f32 %v1637, 0.044715
          %v1670 = vmul.f32 %v1638, 0.044715
          %v1671 = vmul.f32 %v1639, 0.044715
          %v1672 = vmul.f32 %v1640, 0.044715
          %v1673 = vmul.f32 %v1641, 0.044715
          %v1674 = vmul.f32 %v1642, 0.044715
          %v1675 = vmul.f32 %v1643, 0.044715
          %v1676 = vmul.f32 %v1644, 0.044715
          %v1677 = vmul.f32 %v1645, 0.044715
          %v1678 = vmul.f32 %v1646, 0.044715
          %v1679 = vmul.f32 %v1647, 0.044715
          %v1680 = vmul.f32 %v1648, 0.044715
          %v1681 = vmul.f32 %v1649, 0.044715
          %v1682 = vmul.f32 %v1650, 0.044715
          %v1683 = vmul.f32 %v1651, 0.044715
          %v1684 = vmul.f32 %v1652, 0.044715
          %v1685 = vmul.f32 %v1653, 0.044715
          %v1686 = vmul.f32 %v1654, 0.044715
          %v1687 = vmul.f32 %v1655, 0.044715
          %v1688 = vmul.f32 %v1656, 0.044715
          %v1689 = vmul.f32 %v1657, 0.044715
          %v1690 = vmul.f32 %v1658, 0.044715
          %v1691 = vmul.f32 %v1659, 0.044715
          %v1692 = vmul.f32 %v1660, 0.044715
          %v1693 = vmul.f32 %v1661, 0.044715
          %v1694 = vmul.f32 %v1662, 0.044715
          %v1695 = vmul.f32 %v1663, 0.044715
          %v1696 = vmul.f32 %v1664, 0.044715
          %v1697 = vmul.f32 %v1665, 0.044715
          %v1698 = vmul.f32 %v1666, 0.044715
          %v1699 = vmul.f32 %v1667, 0.044715
          %v1700 = vmul.f32 %v1668, 0.044715
          %v1701 = vadd.f32 %v1527, %v1669
          %v1702 = vadd.f32 %v1529, %v1670
          %v1703 = vadd.f32 %v1531, %v1671
          %v1704 = vadd.f32 %v1533, %v1672
          %v1705 = vadd.f32 %v1537, %v1673
          %v1706 = vadd.f32 %v1539, %v1674
          %v1707 = vadd.f32 %v1541, %v1675
          %v1708 = vadd.f32 %v1543, %v1676
          %v1709 = vadd.f32 %v1547, %v1677
          %v1710 = vadd.f32 %v1549, %v1678
          %v1711 = vadd.f32 %v1551, %v1679
          %v1712 = vadd.f32 %v1553, %v1680
          %v1713 = vadd.f32 %v1557, %v1681
          %v1714 = vadd.f32 %v1559, %v1682
          %v1715 = vadd.f32 %v1561, %v1683
          %v1716 = vadd.f32 %v1563, %v1684
          %v1717 = vadd.f32 %v1567, %v1685
          %v1718 = vadd.f32 %v1569, %v1686
          %v1719 = vadd.f32 %v1571, %v1687
          %v1720 = vadd.f32 %v1573, %v1688
          %v1721 = vadd.f32 %v1577, %v1689
          %v1722 = vadd.f32 %v1579, %v1690
          %v1723 = vadd.f32 %v1581, %v1691
          %v1724 = vadd.f32 %v1583, %v1692
          %v1725 = vadd.f32 %v1587, %v1693
          %v1726 = vadd.f32 %v1589, %v1694
          %v1727 = vadd.f32 %v1591, %v1695
          %v1728 = vadd.f32 %v1593, %v1696
          %v1729 = vadd.f32 %v1597, %v1697
          %v1730 = vadd.f32 %v1599, %v1698
          %v1731 = vadd.f32 %v1601, %v1699
          %v1732 = vadd.f32 %v1603, %v1700
          %v1733 = vmul.f32 %v1701, 0.7978846
          %v1734 = vmul.f32 %v1702, 0.7978846
          %v1735 = vmul.f32 %v1703, 0.7978846
          %v1736 = vmul.f32 %v1704, 0.7978846
          %v1737 = vmul.f32 %v1705, 0.7978846
          %v1738 = vmul.f32 %v1706, 0.7978846
          %v1739 = vmul.f32 %v1707, 0.7978846
          %v1740 = vmul.f32 %v1708, 0.7978846
          %v1741 = vmul.f32 %v1709, 0.7978846
          %v1742 = vmul.f32 %v1710, 0.7978846
          %v1743 = vmul.f32 %v1711, 0.7978846
          %v1744 = vmul.f32 %v1712, 0.7978846
          %v1745 = vmul.f32 %v1713, 0.7978846
          %v1746 = vmul.f32 %v1714, 0.7978846
          %v1747 = vmul.f32 %v1715, 0.7978846
          %v1748 = vmul.f32 %v1716, 0.7978846
          %v1749 = vmul.f32 %v1717, 0.7978846
          %v1750 = vmul.f32 %v1718, 0.7978846
          %v1751 = vmul.f32 %v1719, 0.7978846
          %v1752 = vmul.f32 %v1720, 0.7978846
          %v1753 = vmul.f32 %v1721, 0.7978846
          %v1754 = vmul.f32 %v1722, 0.7978846
          %v1755 = vmul.f32 %v1723, 0.7978846
          %v1756 = vmul.f32 %v1724, 0.7978846
          %v1757 = vmul.f32 %v1725, 0.7978846
          %v1758 = vmul.f32 %v1726, 0.7978846
          %v1759 = vmul.f32 %v1727, 0.7978846
          %v1760 = vmul.f32 %v1728, 0.7978846
          %v1761 = vmul.f32 %v1729, 0.7978846
          %v1762 = vmul.f32 %v1730, 0.7978846
          %v1763 = vmul.f32 %v1731, 0.7978846
          %v1764 = vmul.f32 %v1732, 0.7978846
          %v1765 = vtanh.pop %v1733
          %v1766 = vtanh.pop %v1734
          %v1767 = vtanh.pop %v1735
          %v1768 = vtanh.pop %v1736
          %v1769 = vtanh.pop %v1737
          %v1770 = vtanh.pop %v1738
          %v1771 = vtanh.pop %v1739
          %v1772 = vtanh.pop %v1740
          %v1773 = vtanh.pop %v1741
          %v1774 = vtanh.pop %v1742
          %v1775 = vtanh.pop %v1743
          %v1776 = vtanh.pop %v1744
          %v1777 = vtanh.pop %v1745
          %v1778 = vtanh.pop %v1746
          %v1779 = vtanh.pop %v1747
          %v1780 = vtanh.pop %v1748
          %v1781 = vtanh.pop %v1749
          %v1782 = vtanh.pop %v1750
          %v1783 = vtanh.pop %v1751
          %v1784 = vtanh.pop %v1752
          %v1785 = vtanh.pop %v1753
          %v1786 = vtanh.pop %v1754
          %v1787 = vtanh.pop %v1755
          %v1788 = vtanh.pop %v1756
          %v1789 = vtanh.pop %v1757
          %v1790 = vtanh.pop %v1758
          %v1791 = vtanh.pop %v1759
          %v1792 = vtanh.pop %v1760
          %v1793 = vtanh.pop %v1761
          %v1794 = vtanh.pop %v1762
          %v1795 = vtanh.pop %v1763
          %v1796 = vtanh.pop %v1764
          %v1797 = vadd.f32 %v1765, 1.0
          %v1798 = vadd.f32 %v1766, 1.0
          %v1799 = vadd.f32 %v1767, 1.0
          %v1800 = vadd.f32 %v1768, 1.0
          %v1801 = vadd.f32 %v1769, 1.0
          %v1802 = vadd.f32 %v1770, 1.0
          %v1803 = vadd.f32 %v1771, 1.0
          %v1804 = vadd.f32 %v1772, 1.0
          %v1805 = vadd.f32 %v1773, 1.0
          %v1806 = vadd.f32 %v1774, 1.0
          %v1807 = vadd.f32 %v1775, 1.0
          %v1808 = vadd.f32 %v1776, 1.0
          %v1809 = vadd.f32 %v1777, 1.0
          %v1810 = vadd.f32 %v1778, 1.0
          %v1811 = vadd.f32 %v1779, 1.0
          %v1812 = vadd.f32 %v1780, 1.0
          %v1813 = vadd.f32 %v1781, 1.0
          %v1814 = vadd.f32 %v1782, 1.0
          %v1815 = vadd.f32 %v1783, 1.0
          %v1816 = vadd.f32 %v1784, 1.0
          %v1817 = vadd.f32 %v1785, 1.0
          %v1818 = vadd.f32 %v1786, 1.0
          %v1819 = vadd.f32 %v1787, 1.0
          %v1820 = vadd.f32 %v1788, 1.0
          %v1821 = vadd.f32 %v1789, 1.0
          %v1822 = vadd.f32 %v1790, 1.0
          %v1823 = vadd.f32 %v1791, 1.0
          %v1824 = vadd.f32 %v1792, 1.0
          %v1825 = vadd.f32 %v1793, 1.0
          %v1826 = vadd.f32 %v1794, 1.0
          %v1827 = vadd.f32 %v1795, 1.0
          %v1828 = vadd.f32 %v1796, 1.0
          %v1829 = vmul.f32 %v1797, 0.5
          %v1830 = vmul.f32 %v1798, 0.5
          %v1831 = vmul.f32 %v1799, 0.5
          %v1832 = vmul.f32 %v1800, 0.5
          %v1833 = vmul.f32 %v1801, 0.5
          %v1834 = vmul.f32 %v1802, 0.5
          %v1835 = vmul.f32 %v1803, 0.5
          %v1836 = vmul.f32 %v1804, 0.5
          %v1837 = vmul.f32 %v1805, 0.5
          %v1838 = vmul.f32 %v1806, 0.5
          %v1839 = vmul.f32 %v1807, 0.5
          %v1840 = vmul.f32 %v1808, 0.5
          %v1841 = vmul.f32 %v1809, 0.5
          %v1842 = vmul.f32 %v1810, 0.5
          %v1843 = vmul.f32 %v1811, 0.5
          %v1844 = vmul.f32 %v1812, 0.5
          %v1845 = vmul.f32 %v1813, 0.5
          %v1846 = vmul.f32 %v1814, 0.5
          %v1847 = vmul.f32 %v1815, 0.5
          %v1848 = vmul.f32 %v1816, 0.5
          %v1849 = vmul.f32 %v1817, 0.5
          %v1850 = vmul.f32 %v1818, 0.5
          %v1851 = vmul.f32 %v1819, 0.5
          %v1852 = vmul.f32 %v1820, 0.5
          %v1853 = vmul.f32 %v1821, 0.5
          %v1854 = vmul.f32 %v1822, 0.5
          %v1855 = vmul.f32 %v1823, 0.5
          %v1856 = vmul.f32 %v1824, 0.5
          %v1857 = vmul.f32 %v1825, 0.5
          %v1858 = vmul.f32 %v1826, 0.5
          %v1859 = vmul.f32 %v1827, 0.5
          %v1860 = vmul.f32 %v1828, 0.5
          %v1861 = vmul.f32 %v1527, %v1829
          %v1862 = vmul.f32 %v1529, %v1830
          %v1863 = vmul.f32 %v1531, %v1831
          %v1864 = vmul.f32 %v1533, %v1832
          %v1865 = vmul.f32 %v1537, %v1833
          %v1866 = vmul.f32 %v1539, %v1834
          %v1867 = vmul.f32 %v1541, %v1835
          %v1868 = vmul.f32 %v1543, %v1836
          %v1869 = vmul.f32 %v1547, %v1837
          %v1870 = vmul.f32 %v1549, %v1838
          %v1871 = vmul.f32 %v1551, %v1839
          %v1872 = vmul.f32 %v1553, %v1840
          %v1873 = vmul.f32 %v1557, %v1841
          %v1874 = vmul.f32 %v1559, %v1842
          %v1875 = vmul.f32 %v1561, %v1843
          %v1876 = vmul.f32 %v1563, %v1844
          %v1877 = vmul.f32 %v1567, %v1845
          %v1878 = vmul.f32 %v1569, %v1846
          %v1879 = vmul.f32 %v1571, %v1847
          %v1880 = vmul.f32 %v1573, %v1848
          %v1881 = vmul.f32 %v1577, %v1849
          %v1882 = vmul.f32 %v1579, %v1850
          %v1883 = vmul.f32 %v1581, %v1851
          %v1884 = vmul.f32 %v1583, %v1852
          %v1885 = vmul.f32 %v1587, %v1853
          %v1886 = vmul.f32 %v1589, %v1854
          %v1887 = vmul.f32 %v1591, %v1855
          %v1888 = vmul.f32 %v1593, %v1856
          %v1889 = vmul.f32 %v1597, %v1857
          %v1890 = vmul.f32 %v1599, %v1858
          %v1891 = vmul.f32 %v1601, %v1859
          %v1892 = vmul.f32 %v1603, %v1860
          %v1893 = vpack.c.bf16 %v1863, %v1861
          %v1894 = vpack.c.bf16 %v1864, %v1862
          %v1895 = vpack.c.bf16 %v1867, %v1865
          %v1896 = vpack.c.bf16 %v1868, %v1866
          %v1897 = vpack.c.bf16 %v1871, %v1869
          %v1898 = vpack.c.bf16 %v1872, %v1870
          %v1899 = vpack.c.bf16 %v1875, %v1873
          %v1900 = vpack.c.bf16 %v1876, %v1874
          %v1901 = vpack.c.bf16 %v1879, %v1877
          %v1902 = vpack.c.bf16 %v1880, %v1878
          %v1903 = vpack.c.bf16 %v1883, %v1881
          %v1904 = vpack.c.bf16 %v1884, %v1882
          %v1905 = vpack.c.bf16 %v1887, %v1885
          %v1906 = vpack.c.bf16 %v1888, %v1886
          %v1907 = vpack.c.bf16 %v1891, %v1889
          %v1908 = vpack.c.bf16 %v1892, %v1890
          %v1909 = vld [vmem:[%s9] sm:$0xf]
          %v1910 = vld [vmem:[%s9 + $0x4] sm:$0xf]
          %v1911 = vld [vmem:[%s9 + $0x8] sm:$0xf]
          %v1912 = vld [vmem:[%s9 + $0xc] sm:$0xf]
          %v1913 = vld [vmem:[%s9 + $0x10] sm:$0xf]
          %v1914 = vld [vmem:[%s9 + $0x14] sm:$0xf]
          %v1915 = vld [vmem:[%s9 + $0x18] sm:$0xf]
          %v1916 = vld [vmem:[%s9 + $0x1c] sm:$0xf]
          %v1917 = vld [vmem:[%s9 + $0x20] sm:$0xf]
          %v1918 = vld [vmem:[%s9 + $0x24] sm:$0xf]
          %v1919 = vld [vmem:[%s9 + $0x28] sm:$0xf]
          %v1920 = vld [vmem:[%s9 + $0x2c] sm:$0xf]
          %v1921 = vld [vmem:[%s9 + $0x30] sm:$0xf]
          %v1922 = vld [vmem:[%s9 + $0x34] sm:$0xf]
          %v1923 = vld [vmem:[%s9 + $0x38] sm:$0xf]
          %v1924 = vld [vmem:[%s9 + $0x3c] sm:$0xf]
          %v1925 = vld [vmem:[%s9 + $0x40] sm:$0xf]
          %v1926 = vld [vmem:[%s9 + $0x44] sm:$0xf]
          %v1927 = vld [vmem:[%s9 + $0x48] sm:$0xf]
          %v1928 = vld [vmem:[%s9 + $0x4c] sm:$0xf]
          %v1929 = vld [vmem:[%s9 + $0x50] sm:$0xf]
          %v1930 = vld [vmem:[%s9 + $0x54] sm:$0xf]
          %v1931 = vld [vmem:[%s9 + $0x58] sm:$0xf]
          %v1932 = vld [vmem:[%s9 + $0x5c] sm:$0xf]
          %v1933 = vld [vmem:[%s9 + $0x60] sm:$0xf]
          %v1934 = vld [vmem:[%s9 + $0x64] sm:$0xf]
          %v1935 = vld [vmem:[%s9 + $0x68] sm:$0xf]
          %v1936 = vld [vmem:[%s9 + $0x6c] sm:$0xf]
          %v1937 = vld [vmem:[%s9 + $0x70] sm:$0xf]
          %v1938 = vld [vmem:[%s9 + $0x74] sm:$0xf]
          %v1939 = vld [vmem:[%s9 + $0x78] sm:$0xf]
          %v1940 = vld [vmem:[%s9 + $0x7c] sm:$0xf]
          %v1941 = vld [vmem:[#allocation16] sm:$0x1]
          %v1943 = vlaneseq
          %v1944 = vshrl.u32 %v1943, 7
          %v1945 = vsub.s32 0, %v1944
          %v1946 = vrot.slane %v1941, %v1945
          %v1980 = vunpack.c.l.b16 %v1909
          %v1981 = vunpack.c.l.b16 %v1910
          %v1982 = vunpack.c.l.b16 %v1911
          %v1983 = vunpack.c.l.b16 %v1912
          %v1984 = vunpack.c.l.b16 %v1913
          %v1985 = vunpack.c.l.b16 %v1914
          %v1986 = vunpack.c.l.b16 %v1915
          %v1987 = vunpack.c.l.b16 %v1916
          %v1988 = vunpack.c.l.b16 %v1917
          %v1989 = vunpack.c.l.b16 %v1918
          %v1990 = vunpack.c.l.b16 %v1919
          %v1991 = vunpack.c.l.b16 %v1920
          %v1992 = vunpack.c.l.b16 %v1921
          %v1993 = vunpack.c.l.b16 %v1922
          %v1994 = vunpack.c.l.b16 %v1923
          %v1995 = vunpack.c.l.b16 %v1924
          %v1996 = vunpack.c.l.b16 %v1925
          %v1997 = vunpack.c.l.b16 %v1926
          %v1998 = vunpack.c.l.b16 %v1927
          %v1999 = vunpack.c.l.b16 %v1928
          %v2000 = vunpack.c.l.b16 %v1929
          %v2001 = vunpack.c.l.b16 %v1930
          %v2002 = vunpack.c.l.b16 %v1931
          %v2003 = vunpack.c.l.b16 %v1932
          %v2004 = vunpack.c.l.b16 %v1933
          %v2005 = vunpack.c.l.b16 %v1934
          %v2006 = vunpack.c.l.b16 %v1935
          %v2007 = vunpack.c.l.b16 %v1936
          %v2008 = vunpack.c.l.b16 %v1937
          %v2009 = vunpack.c.l.b16 %v1938
          %v2010 = vunpack.c.l.b16 %v1939
          %v2011 = vunpack.c.l.b16 %v1940
          %v2012 = vpack.c.b16 %v1981, %v1980
          %v2013 = vpack.c.b16 %v1983, %v1982
          %v2014 = vpack.c.b16 %v1985, %v1984
          %v2015 = vpack.c.b16 %v1987, %v1986
          %v2016 = vpack.c.b16 %v1989, %v1988
          %v2017 = vpack.c.b16 %v1991, %v1990
          %v2018 = vpack.c.b16 %v1993, %v1992
          %v2019 = vpack.c.b16 %v1995, %v1994
          %v2020 = vpack.c.b16 %v1997, %v1996
          %v2021 = vpack.c.b16 %v1999, %v1998
          %v2022 = vpack.c.b16 %v2001, %v2000
          %v2023 = vpack.c.b16 %v2003, %v2002
          %v2024 = vpack.c.b16 %v2005, %v2004
          %v2025 = vpack.c.b16 %v2007, %v2006
          %v2026 = vpack.c.b16 %v2009, %v2008
          %v2027 = vpack.c.b16 %v2011, %v2010
          %2044 = vmatprep.subr.bf16.mxu0 0
          %2045 = vmatpush1.bf16.msra.mxu0 %v2012
          %2046 = vmatprep.subr.bf16.mxu0 0
          %2047 = vmatpush1.bf16.msra.mxu0 %v2013
          %2048 = vmatprep.subr.bf16.mxu0 0
          %2049 = vmatpush1.bf16.msra.mxu0 %v2014
          %2050 = vmatprep.subr.bf16.mxu0 0
          %2051 = vmatpush1.bf16.msra.mxu0 %v2015
          %2052 = vmatprep.subr.bf16.mxu0 0
          %2053 = vmatpush1.bf16.msra.mxu0 %v2016
          %2054 = vmatprep.subr.bf16.mxu0 0
          %2055 = vmatpush1.bf16.msra.mxu0 %v2017
          %2056 = vmatprep.subr.bf16.mxu0 0
          %2057 = vmatpush1.bf16.msra.mxu0 %v2018
          %2058 = vmatprep.subr.bf16.mxu0 0
          %2059 = vmatpush1.bf16.msra.mxu0 %v2019
          %2060 = vmatprep.subr.bf16.mxu0 0
          %2061 = vmatpush1.bf16.msra.mxu0 %v2020
          %2062 = vmatprep.subr.bf16.mxu0 0
          %2063 = vmatpush1.bf16.msra.mxu0 %v2021
          %2064 = vmatprep.subr.bf16.mxu0 0
          %2065 = vmatpush1.bf16.msra.mxu0 %v2022
          %2066 = vmatprep.subr.bf16.mxu0 0
          %2067 = vmatpush1.bf16.msra.mxu0 %v2023
          %2068 = vmatprep.subr.bf16.mxu0 0
          %2069 = vmatpush1.bf16.msra.mxu0 %v2024
          %2070 = vmatprep.subr.bf16.mxu0 0
          %2071 = vmatpush1.bf16.msra.mxu0 %v2025
          %2072 = vmatprep.subr.bf16.mxu0 0
          %2073 = vmatpush1.bf16.msra.mxu0 %v2026
          %2074 = vmatprep.subr.bf16.mxu0 0
          %2075 = vmatpush1.bf16.msra.mxu0 %v2027
          %2076 = vmatprep.mubr.bf16.mxu0 %v1894
          %2077 = vmatmul.mubr.bf16.gmra.mrb[0].mxu0 %v1893
          %v2078 = vpop.f32.mrb[0].mxu0
          %v2079 = vadd.f32 %v1946, %v2078
          %v2080 = vpop.f32.mrb[0].mxu0
          %v2081 = vpop.f32.mrb[0].mxu0
          %v2082 = vadd.f32 %v1946, %v2081
          %v2083 = vpop.f32.mrb[0].mxu0
          %2084 = vmatprep.mubr.bf16.mxu0 %v1896
          %2085 = vmatmul.mubr.bf16.gmra.mrb[0].mxu0 %v1895
          %v2086 = vpop.f32.mrb[0].mxu0
          %v2087 = vadd.f32 %v1946, %v2086
          %v2088 = vpop.f32.mrb[0].mxu0
          %v2089 = vpop.f32.mrb[0].mxu0
          %v2090 = vadd.f32 %v1946, %v2089
          %v2091 = vpop.f32.mrb[0].mxu0
          %2092 = vmatprep.mubr.bf16.mxu0 %v1898
          %2093 = vmatmul.mubr.bf16.gmra.mrb[0].mxu0 %v1897
          %v2094 = vpop.f32.mrb[0].mxu0
          %v2095 = vadd.f32 %v1946, %v2094
          %v2096 = vpop.f32.mrb[0].mxu0
          %v2097 = vpop.f32.mrb[0].mxu0
          %v2098 = vadd.f32 %v1946, %v2097
          %v2099 = vpop.f32.mrb[0].mxu0
          %2100 = vmatprep.mubr.bf16.mxu0 %v1900
          %2101 = vmatmul.mubr.bf16.gmra.mrb[0].mxu0 %v1899
          %v2102 = vpop.f32.mrb[0].mxu0
          %v2103 = vadd.f32 %v1946, %v2102
          %v2104 = vpop.f32.mrb[0].mxu0
          %v2105 = vpop.f32.mrb[0].mxu0
          %v2106 = vadd.f32 %v1946, %v2105
          %v2107 = vpop.f32.mrb[0].mxu0
          %2108 = vmatprep.mubr.bf16.mxu0 %v1902
          %2109 = vmatmul.mubr.bf16.gmra.mrb[0].mxu0 %v1901
          %v2110 = vpop.f32.mrb[0].mxu0
          %v2111 = vadd.f32 %v1946, %v2110
          %v2112 = vpop.f32.mrb[0].mxu0
          %v2113 = vpop.f32.mrb[0].mxu0
          %v2114 = vadd.f32 %v1946, %v2113
          %v2115 = vpop.f32.mrb[0].mxu0
          %2116 = vmatprep.mubr.bf16.mxu0 %v1904
          %2117 = vmatmul.mubr.bf16.gmra.mrb[0].mxu0 %v1903
          %v2118 = vpop.f32.mrb[0].mxu0
          %v2119 = vadd.f32 %v1946, %v2118
          %v2120 = vpop.f32.mrb[0].mxu0
          %v2121 = vpop.f32.mrb[0].mxu0
          %v2122 = vadd.f32 %v1946, %v2121
          %v2123 = vpop.f32.mrb[0].mxu0
          %2124 = vmatprep.mubr.bf16.mxu0 %v1906
          %2125 = vmatmul.mubr.bf16.gmra.mrb[0].mxu0 %v1905
          %v2126 = vpop.f32.mrb[0].mxu0
          %v2127 = vadd.f32 %v1946, %v2126
          %v2128 = vpop.f32.mrb[0].mxu0
          %v2129 = vpop.f32.mrb[0].mxu0
          %v2130 = vadd.f32 %v1946, %v2129
          %v2131 = vpop.f32.mrb[0].mxu0
          %2132 = vmatprep.mubr.bf16.mxu0 %v1908
          %2133 = vmatmul.mubr.bf16.gmra.mrb[0].mxu0 %v1907
          %v2134 = vpop.f32.mrb[0].mxu0
          %v2135 = vadd.f32 %v1946, %v2134
          %v2136 = vpop.f32.mrb[0].mxu0
          %v2137 = vpop.f32.mrb[0].mxu0
          %v2138 = vadd.f32 %v1946, %v2137
          %v2139 = vpop.f32.mrb[0].mxu0
          %2140 = vdwg.mxu0
          %v2141 = vld [vmem:[#allocation17] sm:$0x1]
          %v2143 = vlaneseq
          %v2144 = vshrl.u32 %v2143, 7
          %v2145 = vsub.s32 0, %v2144
          %v2146 = vrot.slane %v2141, %v2145
          %v2148 = vmul.f32 %v2079, %v2146
          %v2149 = vmul.f32 %v2082, %v2146
          %v2150 = vmul.f32 %v2087, %v2146
          %v2151 = vmul.f32 %v2090, %v2146
          %v2152 = vmul.f32 %v2095, %v2146
          %v2153 = vmul.f32 %v2098, %v2146
          %v2154 = vmul.f32 %v2103, %v2146
          %v2155 = vmul.f32 %v2106, %v2146
          %v2156 = vmul.f32 %v2111, %v2146
          %v2157 = vmul.f32 %v2114, %v2146
          %v2158 = vmul.f32 %v2119, %v2146
          %v2159 = vmul.f32 %v2122, %v2146
          %v2160 = vmul.f32 %v2127, %v2146
          %v2161 = vmul.f32 %v2130, %v2146
          %v2162 = vmul.f32 %v2135, %v2146
          %v2163 = vmul.f32 %v2138, %v2146
          %v2164 = vadd.f32 %v1130, %v2148
          %v2165 = vadd.f32 %v1131, %v2149
          %v2166 = vadd.f32 %v1132, %v2150
          %v2167 = vadd.f32 %v1133, %v2151
          %v2168 = vadd.f32 %v1134, %v2152
          %v2169 = vadd.f32 %v1135, %v2153
          %v2170 = vadd.f32 %v1136, %v2154
          %v2171 = vadd.f32 %v1137, %v2155
          %v2172 = vadd.f32 %v1138, %v2156
          %v2173 = vadd.f32 %v1139, %v2157
          %v2174 = vadd.f32 %v1140, %v2158
          %v2175 = vadd.f32 %v1141, %v2159
          %v2176 = vadd.f32 %v1142, %v2160
          %v2177 = vadd.f32 %v1143, %v2161
          %v2178 = vadd.f32 %v1144, %v2162
          %v2179 = vadd.f32 %v1145, %v2163
          %v2180 = vsel %vm892, %v2164, 0.0
          %v2181 = vsel %vm892, %v2165, 0.0
          %v2182 = vadd.f32 %v2180, %v2181
          %v2183 = vsel %vm892, %v2166, 0.0
          %v2184 = vadd.f32 %v2182, %v2183
          %v2185 = vsel %vm892, %v2167, 0.0
          %v2186 = vadd.f32 %v2184, %v2185
          %v2187 = vsel %vm892, %v2168, 0.0
          %v2188 = vadd.f32 %v2186, %v2187
          %v2189 = vsel %vm892, %v2169, 0.0
          %v2190 = vadd.f32 %v2188, %v2189
          %v2191 = vsel %vm892, %v2170, 0.0
          %v2192 = vadd.f32 %v2190, %v2191
          %v2193 = vsel %vm892, %v2171, 0.0
          %v2194 = vadd.f32 %v2192, %v2193
          %v2195 = vrot.slane %v2194, 4
          %v2196 = vadd.f32 %v2194, %v2195
          %v2197 = vrot.slane %v2196, 2
          %v2198 = vadd.f32 %v2196, %v2197
          %v2199 = vrot.slane %v2198, 1
          %v2200 = vadd.f32 %v2198, %v2199
          %v2201 = vsel %vm892, %v2172, 0.0
          %v2202 = vsel %vm892, %v2173, 0.0
          %v2203 = vadd.f32 %v2201, %v2202
          %v2204 = vsel %vm892, %v2174, 0.0
          %v2205 = vadd.f32 %v2203, %v2204
          %v2206 = vsel %vm892, %v2175, 0.0
          %v2207 = vadd.f32 %v2205, %v2206
          %v2208 = vsel %vm892, %v2176, 0.0
          %v2209 = vadd.f32 %v2207, %v2208
          %v2210 = vsel %vm892, %v2177, 0.0
          %v2211 = vadd.f32 %v2209, %v2210
          %v2212 = vsel %vm892, %v2178, 0.0
          %v2213 = vadd.f32 %v2211, %v2212
          %v2214 = vsel %vm892, %v2179, 0.0
          %v2215 = vadd.f32 %v2213, %v2214
          %v2216 = vrot.slane %v2215, 4
          %v2217 = vadd.f32 %v2215, %v2216
          %v2218 = vrot.slane %v2217, 2
          %v2219 = vadd.f32 %v2217, %v2218
          %v2220 = vrot.slane %v2219, 1
          %v2221 = vadd.f32 %v2219, %v2220
          %v2222 = vmul.f32 %v2200, %v941
          %v2223 = vmul.f32 %v2221, %v941
          %vm2226 = vcmask 1041409
          %v2227 = vsel %vm2226, %v2223, %v2222
          %vm2229 = vcmask 517120
          %2230 = vst.msk [vmem:[#allocation2] sm:$0x3] %vm2229, %v2227
          %vm2231 = vcmask 24576
          %2232 = vst.msk [vmem:[%s16] sm:$0x1] %vm2231, 0.0
        $region132: #{model_forward.1} parent=83 // pred_fallthru
          _
        %v2233 = vld [vmem:[#allocation2] sm:$0x3]
        %v2234 = vpack.c.bf16 %v2233, %v2233
        %v2235 = vld [vmem:[%s638] sm:$0xff]
        %v2236 = vld [vmem:[%s638 + $0x8] sm:$0xff]
        %v2237 = vld [vmem:[%s638 + $0x10] sm:$0xff]
        %v2238 = vld [vmem:[%s638 + $0x18] sm:$0xff]
        %v2239 = vld [vmem:[%s638 + $0x20] sm:$0xff]
        %v2240 = vld [vmem:[%s638 + $0x28] sm:$0xff]
        %v2241 = vld [vmem:[%s638 + $0x30] sm:$0xff]
        %v2242 = vld [vmem:[%s638 + $0x38] sm:$0xff]
        %v2243 = vld [vmem:[%s638 + $0x40] sm:$0xff]
        %v2244 = vld [vmem:[%s638 + $0x48] sm:$0xff]
        %v2245 = vld [vmem:[%s638 + $0x50] sm:$0xff]
        %v2246 = vld [vmem:[%s638 + $0x58] sm:$0xff]
        %v2247 = vld [vmem:[%s638 + $0x60] sm:$0xff]
        %v2248 = vld [vmem:[%s638 + $0x68] sm:$0xff]
        %v2249 = vld [vmem:[%s638 + $0x70] sm:$0xff]
        %v2250 = vld [vmem:[%s638 + $0x78] sm:$0xff]
        %v2251 = vld [vmem:[%s638 + $0x80] sm:$0xff]
        %v2252 = vld [vmem:[%s638 + $0x88] sm:$0xff]
        %v2253 = vld [vmem:[%s638 + $0x90] sm:$0xff]
        %v2254 = vld [vmem:[%s638 + $0x98] sm:$0xff]
        %v2255 = vld [vmem:[%s638 + $0xa0] sm:$0xff]
        %v2256 = vld [vmem:[%s638 + $0xa8] sm:$0xff]
        %v2257 = vld [vmem:[%s638 + $0xb0] sm:$0xff]
        %v2258 = vld [vmem:[%s638 + $0xb8] sm:$0xff]
        %v2259 = vld [vmem:[%s638 + $0xc0] sm:$0xff]
        %v2260 = vld [vmem:[%s638 + $0xc8] sm:$0xff]
        %v2261 = vld [vmem:[%s638 + $0xd0] sm:$0xff]
        %v2262 = vld [vmem:[%s638 + $0xd8] sm:$0xff]
        %v2263 = vld [vmem:[%s638 + $0xe0] sm:$0xff]
        %v2264 = vld [vmem:[%s638 + $0xe8] sm:$0xff]
        %v2265 = vld [vmem:[%s638 + $0xf0] sm:$0xff]
        %v2266 = vld [vmem:[%s638 + $0xf8] sm:$0xf]
        %v2267 = vld [vmem:[%s638 + $0xfc] sm:$0xff]
        %v2268 = vld [vmem:[%s638 + $0x104] sm:$0xff]
        %v2269 = vld [vmem:[%s638 + $0x10c] sm:$0xff]
        %v2270 = vld [vmem:[%s638 + $0x114] sm:$0xff]
        %v2271 = vld [vmem:[%s638 + $0x11c] sm:$0xff]
        %v2272 = vld [vmem:[%s638 + $0x124] sm:$0xff]
        %v2273 = vld [vmem:[%s638 + $0x12c] sm:$0xff]
        %v2274 = vld [vmem:[%s638 + $0x134] sm:$0xff]
        %v2275 = vld [vmem:[%s638 + $0x13c] sm:$0xff]
        %v2276 = vld [vmem:[%s638 + $0x144] sm:$0xff]
        %v2277 = vld [vmem:[%s638 + $0x14c] sm:$0xff]
        %v2278 = vld [vmem:[%s638 + $0x154] sm:$0xff]
        %v2279 = vld [vmem:[%s638 + $0x15c] sm:$0xff]
        %v2280 = vld [vmem:[%s638 + $0x164] sm:$0xff]
        %v2281 = vld [vmem:[%s638 + $0x16c] sm:$0xff]
        %v2282 = vld [vmem:[%s638 + $0x174] sm:$0xff]
        %v2283 = vld [vmem:[%s638 + $0x17c] sm:$0xff]
        %v2284 = vld [vmem:[%s638 + $0x184] sm:$0xff]
        %v2285 = vld [vmem:[%s638 + $0x18c] sm:$0xff]
        %v2286 = vld [vmem:[%s638 + $0x194] sm:$0xff]
        %v2287 = vld [vmem:[%s638 + $0x19c] sm:$0xff]
        %v2288 = vld [vmem:[%s638 + $0x1a4] sm:$0xff]
        %v2289 = vld [vmem:[%s638 + $0x1ac] sm:$0xff]
        %v2290 = vld [vmem:[%s638 + $0x1b4] sm:$0xff]
        %v2291 = vld [vmem:[%s638 + $0x1bc] sm:$0xff]
        %v2292 = vld [vmem:[%s638 + $0x1c4] sm:$0xff]
        %v2293 = vld [vmem:[%s638 + $0x1cc] sm:$0xff]
        %v2294 = vld [vmem:[%s638 + $0x1d4] sm:$0xff]
        %v2295 = vld [vmem:[%s638 + $0x1dc] sm:$0xff]
        %v2296 = vld [vmem:[%s638 + $0x1e4] sm:$0xff]
        %v2297 = vld [vmem:[%s638 + $0x1ec] sm:$0xff]
        %v2298 = vld [vmem:[%s638 + $0x1f4] sm:$0xf]
        %v2299 = vld [vmem:[%s638 + $0x1f8] sm:$0xff]
        %v2300 = vld [vmem:[%s638 + $0x200] sm:$0xff]
        %v2301 = vld [vmem:[%s638 + $0x208] sm:$0xff]
        %v2302 = vld [vmem:[%s638 + $0x210] sm:$0xff]
        %v2303 = vld [vmem:[%s638 + $0x218] sm:$0xff]
        %v2304 = vld [vmem:[%s638 + $0x220] sm:$0xff]
        %v2305 = vld [vmem:[%s638 + $0x228] sm:$0xff]
        %v2306 = vld [vmem:[%s638 + $0x230] sm:$0xff]
        %v2307 = vld [vmem:[%s638 + $0x238] sm:$0xff]
        %v2308 = vld [vmem:[%s638 + $0x240] sm:$0xff]
        %v2309 = vld [vmem:[%s638 + $0x248] sm:$0xff]
        %v2310 = vld [vmem:[%s638 + $0x250] sm:$0xff]
        %v2311 = vld [vmem:[%s638 + $0x258] sm:$0xff]
        %v2312 = vld [vmem:[%s638 + $0x260] sm:$0xff]
        %v2313 = vld [vmem:[%s638 + $0x268] sm:$0xff]
        %v2314 = vld [vmem:[%s638 + $0x270] sm:$0xff]
        %v2315 = vld [vmem:[%s638 + $0x278] sm:$0xff]
        %v2316 = vld [vmem:[%s638 + $0x280] sm:$0xff]
        %v2317 = vld [vmem:[%s638 + $0x288] sm:$0xff]
        %v2318 = vld [vmem:[%s638 + $0x290] sm:$0xff]
        %v2319 = vld [vmem:[%s638 + $0x298] sm:$0xff]
        %v2320 = vld [vmem:[%s638 + $0x2a0] sm:$0xff]
        %v2321 = vld [vmem:[%s638 + $0x2a8] sm:$0xff]
        %v2322 = vld [vmem:[%s638 + $0x2b0] sm:$0xff]
        %v2323 = vld [vmem:[%s638 + $0x2b8] sm:$0xff]
        %v2324 = vld [vmem:[%s638 + $0x2c0] sm:$0xff]
        %v2325 = vld [vmem:[%s638 + $0x2c8] sm:$0xff]
        %v2326 = vld [vmem:[%s638 + $0x2d0] sm:$0xff]
        %v2327 = vld [vmem:[%s638 + $0x2d8] sm:$0xff]
        %v2328 = vld [vmem:[%s638 + $0x2e0] sm:$0xff]
        %v2329 = vld [vmem:[%s638 + $0x2e8] sm:$0xff]
        %v2330 = vld [vmem:[%s638 + $0x2f0] sm:$0xf]
        %v2331 = vld [vmem:[%s638 + $0x2f4] sm:$0xff]
        %v2332 = vld [vmem:[%s638 + $0x2fc] sm:$0xff]
        %v2333 = vld [vmem:[%s638 + $0x304] sm:$0xff]
        %v2334 = vld [vmem:[%s638 + $0x30c] sm:$0xff]
        %v2335 = vld [vmem:[%s638 + $0x314] sm:$0xff]
        %v2336 = vld [vmem:[%s638 + $0x31c] sm:$0xff]
        %v2337 = vld [vmem:[%s638 + $0x324] sm:$0xff]
        %v2338 = vld [vmem:[%s638 + $0x32c] sm:$0xff]
        %v2339 = vld [vmem:[%s638 + $0x334] sm:$0xff]
        %v2340 = vld [vmem:[%s638 + $0x33c] sm:$0xff]
        %v2341 = vld [vmem:[%s638 + $0x344] sm:$0xff]
        %v2342 = vld [vmem:[%s638 + $0x34c] sm:$0xff]
        %v2343 = vld [vmem:[%s638 + $0x354] sm:$0xff]
        %v2344 = vld [vmem:[%s638 + $0x35c] sm:$0xff]
        %v2345 = vld [vmem:[%s638 + $0x364] sm:$0xff]
        %v2346 = vld [vmem:[%s638 + $0x36c] sm:$0xff]
        %v2347 = vld [vmem:[%s638 + $0x374] sm:$0xff]
        %v2348 = vld [vmem:[%s638 + $0x37c] sm:$0xff]
        %v2349 = vld [vmem:[%s638 + $0x384] sm:$0xff]
        %v2350 = vld [vmem:[%s638 + $0x38c] sm:$0xff]
        %v2351 = vld [vmem:[%s638 + $0x394] sm:$0xff]
        %v2352 = vld [vmem:[%s638 + $0x39c] sm:$0xff]
        %v2353 = vld [vmem:[%s638 + $0x3a4] sm:$0xff]
        %v2354 = vld [vmem:[%s638 + $0x3ac] sm:$0xff]
        %v2355 = vld [vmem:[%s638 + $0x3b4] sm:$0xff]
        %v2356 = vld [vmem:[%s638 + $0x3bc] sm:$0xff]
        %v2357 = vld [vmem:[%s638 + $0x3c4] sm:$0xff]
        %v2358 = vld [vmem:[%s638 + $0x3cc] sm:$0xff]
        %v2359 = vld [vmem:[%s638 + $0x3d4] sm:$0xff]
        %v2360 = vld [vmem:[%s638 + $0x3dc] sm:$0xff]
        %v2361 = vld [vmem:[%s638 + $0x3e4] sm:$0xff]
        %v2362 = vld [vmem:[%s638 + $0x3ec] sm:$0xf]
        %v2363 = vld [vmem:[%s638 + $0x3f0] sm:$0xff]
        %v2364 = vld [vmem:[%s638 + $0x3f8] sm:$0xff]
        %v2365 = vld [vmem:[%s638 + $0x400] sm:$0xff]
        %v2366 = vld [vmem:[%s638 + $0x408] sm:$0xff]
        %v2367 = vld [vmem:[%s638 + $0x410] sm:$0xff]
        %v2368 = vld [vmem:[%s638 + $0x418] sm:$0xff]
        %v2369 = vld [vmem:[%s638 + $0x420] sm:$0xff]
        %v2370 = vld [vmem:[%s638 + $0x428] sm:$0xff]
        %v2371 = vld [vmem:[%s638 + $0x430] sm:$0xff]
        %v2372 = vld [vmem:[%s638 + $0x438] sm:$0xff]
        %v2373 = vld [vmem:[%s638 + $0x440] sm:$0xff]
        %v2374 = vld [vmem:[%s638 + $0x448] sm:$0xff]
        %v2375 = vld [vmem:[%s638 + $0x450] sm:$0xff]
        %v2376 = vld [vmem:[%s638 + $0x458] sm:$0xff]
        %v2377 = vld [vmem:[%s638 + $0x460] sm:$0xff]
        %v2378 = vld [vmem:[%s638 + $0x468] sm:$0xff]
        %v2379 = vld [vmem:[%s638 + $0x470] sm:$0xff]
        %v2380 = vld [vmem:[%s638 + $0x478] sm:$0xff]
        %v2381 = vld [vmem:[%s638 + $0x480] sm:$0xff]
        %v2382 = vld [vmem:[%s638 + $0x488] sm:$0xff]
        %v2383 = vld [vmem:[%s638 + $0x490] sm:$0xff]
        %v2384 = vld [vmem:[%s638 + $0x498] sm:$0xff]
        %v2385 = vld [vmem:[%s638 + $0x4a0] sm:$0xff]
        %v2386 = vld [vmem:[%s638 + $0x4a8] sm:$0xff]
        %v2387 = vld [vmem:[%s638 + $0x4b0] sm:$0xff]
        %v2388 = vld [vmem:[%s638 + $0x4b8] sm:$0xff]
        %v2389 = vld [vmem:[%s638 + $0x4c0] sm:$0xff]
        %v2390 = vld [vmem:[%s638 + $0x4c8] sm:$0xff]
        %v2391 = vld [vmem:[%s638 + $0x4d0] sm:$0xff]
        %v2392 = vld [vmem:[%s638 + $0x4d8] sm:$0xff]
        %v2393 = vld [vmem:[%s638 + $0x4e0] sm:$0xff]
        %v2394 = vld [vmem:[%s638 + $0x4e8] sm:$0xf]
        %v2395 = vld [vmem:[%s638 + $0x4ec] sm:$0xff]
        %v2396 = vld [vmem:[%s638 + $0x4f4] sm:$0xff]
        %v2397 = vld [vmem:[%s638 + $0x4fc] sm:$0xff]
        %v2398 = vld [vmem:[%s638 + $0x504] sm:$0xff]
        %v2399 = vld [vmem:[%s638 + $0x50c] sm:$0xff]
        %v2400 = vld [vmem:[%s638 + $0x514] sm:$0xff]
        %v2401 = vld [vmem:[%s638 + $0x51c] sm:$0xff]
        %v2402 = vld [vmem:[%s638 + $0x524] sm:$0xff]
        %v2403 = vld [vmem:[%s638 + $0x52c] sm:$0xff]
        %v2404 = vld [vmem:[%s638 + $0x534] sm:$0xff]
        %v2405 = vld [vmem:[%s638 + $0x53c] sm:$0xff]
        %v2406 = vld [vmem:[%s638 + $0x544] sm:$0xff]
        %v2407 = vld [vmem:[%s638 + $0x54c] sm:$0xff]
        %v2408 = vld [vmem:[%s638 + $0x554] sm:$0xff]
        %v2409 = vld [vmem:[%s638 + $0x55c] sm:$0xff]
        %v2410 = vld [vmem:[%s638 + $0x564] sm:$0xff]
        %v2411 = vld [vmem:[%s638 + $0x56c] sm:$0xff]
        %v2412 = vld [vmem:[%s638 + $0x574] sm:$0xff]
        %v2413 = vld [vmem:[%s638 + $0x57c] sm:$0xff]
        %v2414 = vld [vmem:[%s638 + $0x584] sm:$0xff]
        %v2415 = vld [vmem:[%s638 + $0x58c] sm:$0xff]
        %v2416 = vld [vmem:[%s638 + $0x594] sm:$0xff]
        %v2417 = vld [vmem:[%s638 + $0x59c] sm:$0xff]
        %v2418 = vld [vmem:[%s638 + $0x5a4] sm:$0xff]
        %v2419 = vld [vmem:[%s638 + $0x5ac] sm:$0xff]
        %v2420 = vld [vmem:[%s638 + $0x5b4] sm:$0xff]
        %v2421 = vld [vmem:[%s638 + $0x5bc] sm:$0xff]
        %v2422 = vld [vmem:[%s638 + $0x5c4] sm:$0xff]
        %v2423 = vld [vmem:[%s638 + $0x5cc] sm:$0xff]
        %v2424 = vld [vmem:[%s638 + $0x5d4] sm:$0xff]
        %v2425 = vld [vmem:[%s638 + $0x5dc] sm:$0xff]
        %v2426 = vld [vmem:[%s638 + $0x5e4] sm:$0xf]
        %v2427 = vld [vmem:[%s638 + $0x5e8] sm:$0xff]
        %v2428 = vld [vmem:[%s638 + $0x5f0] sm:$0xff]
        %v2429 = vld [vmem:[%s638 + $0x5f8] sm:$0xff]
        %v2430 = vld [vmem:[%s638 + $0x600] sm:$0xff]
        %v2431 = vld [vmem:[%s638 + $0x608] sm:$0xff]
        %v2432 = vld [vmem:[%s638 + $0x610] sm:$0xff]
        %v2433 = vld [vmem:[%s638 + $0x618] sm:$0xff]
        %v2434 = vld [vmem:[%s638 + $0x620] sm:$0xff]
        %v2435 = vld [vmem:[%s638 + $0x628] sm:$0xff]
        %v2436 = vld [vmem:[%s638 + $0x630] sm:$0xff]
        %v2437 = vld [vmem:[%s638 + $0x638] sm:$0xff]
        %v2438 = vld [vmem:[%s638 + $0x640] sm:$0xff]
        %v2439 = vld [vmem:[%s638 + $0x648] sm:$0xff]
        %v2440 = vld [vmem:[%s638 + $0x650] sm:$0xff]
        %v2441 = vld [vmem:[%s638 + $0x658] sm:$0xff]
        %v2442 = vld [vmem:[%s638 + $0x660] sm:$0xff]
        %v2443 = vld [vmem:[%s638 + $0x668] sm:$0xff]
        %v2444 = vld [vmem:[%s638 + $0x670] sm:$0xff]
        %v2445 = vld [vmem:[%s638 + $0x678] sm:$0xff]
        %v2446 = vld [vmem:[%s638 + $0x680] sm:$0xff]
        %v2447 = vld [vmem:[%s638 + $0x688] sm:$0xff]
        %v2448 = vld [vmem:[%s638 + $0x690] sm:$0xff]
        %v2449 = vld [vmem:[%s638 + $0x698] sm:$0xff]
        %v2450 = vld [vmem:[%s638 + $0x6a0] sm:$0xff]
        %v2451 = vld [vmem:[%s638 + $0x6a8] sm:$0xff]
        %v2452 = vld [vmem:[%s638 + $0x6b0] sm:$0xff]
        %v2453 = vld [vmem:[%s638 + $0x6b8] sm:$0xff]
        %v2454 = vld [vmem:[%s638 + $0x6c0] sm:$0xff]
        %v2455 = vld [vmem:[%s638 + $0x6c8] sm:$0xff]
        %v2456 = vld [vmem:[%s638 + $0x6d0] sm:$0xff]
        %v2457 = vld [vmem:[%s638 + $0x6d8] sm:$0xff]
        %v2458 = vld [vmem:[%s638 + $0x6e0] sm:$0xf]
        %v2459 = vld [vmem:[%s638 + $0x6e4] sm:$0xff]
        %v2460 = vld [vmem:[%s638 + $0x6ec] sm:$0xff]
        %v2461 = vld [vmem:[%s638 + $0x6f4] sm:$0xff]
        %v2462 = vld [vmem:[%s638 + $0x6fc] sm:$0xff]
        %v2463 = vld [vmem:[%s638 + $0x704] sm:$0xff]
        %v2464 = vld [vmem:[%s638 + $0x70c] sm:$0xff]
        %v2465 = vld [vmem:[%s638 + $0x714] sm:$0xff]
        %v2466 = vld [vmem:[%s638 + $0x71c] sm:$0xff]
        %v2467 = vld [vmem:[%s638 + $0x724] sm:$0xff]
        %v2468 = vld [vmem:[%s638 + $0x72c] sm:$0xff]
        %v2469 = vld [vmem:[%s638 + $0x734] sm:$0xff]
        %v2470 = vld [vmem:[%s638 + $0x73c] sm:$0xff]
        %v2471 = vld [vmem:[%s638 + $0x744] sm:$0xff]
        %v2472 = vld [vmem:[%s638 + $0x74c] sm:$0xff]
        %v2473 = vld [vmem:[%s638 + $0x754] sm:$0xff]
        %v2474 = vld [vmem:[%s638 + $0x75c] sm:$0xff]
        %v2475 = vld [vmem:[%s638 + $0x764] sm:$0xff]
        %v2476 = vld [vmem:[%s638 + $0x76c] sm:$0xff]
        %v2477 = vld [vmem:[%s638 + $0x774] sm:$0xff]
        %v2478 = vld [vmem:[%s638 + $0x77c] sm:$0xff]
        %v2479 = vld [vmem:[%s638 + $0x784] sm:$0xff]
        %v2480 = vld [vmem:[%s638 + $0x78c] sm:$0xff]
        %v2481 = vld [vmem:[%s638 + $0x794] sm:$0xff]
        %v2482 = vld [vmem:[%s638 + $0x79c] sm:$0xff]
        %v2483 = vld [vmem:[%s638 + $0x7a4] sm:$0xff]
        %v2484 = vld [vmem:[%s638 + $0x7ac] sm:$0xff]
        %v2485 = vld [vmem:[%s638 + $0x7b4] sm:$0xff]
        %v2486 = vld [vmem:[%s638 + $0x7bc] sm:$0xff]
        %v2487 = vld [vmem:[%s638 + $0x7c4] sm:$0xff]
        %v2488 = vld [vmem:[%s638 + $0x7cc] sm:$0xff]
        %v2489 = vld [vmem:[%s638 + $0x7d4] sm:$0xff]
        %v2490 = vld [vmem:[%s638 + $0x7dc] sm:$0xf]
        %v2491 = vld [vmem:[%s698] sm:$0xff]
        %v2492 = vld [vmem:[%s698 + $0x8] sm:$0xff]
        %v2493 = vld [vmem:[%s698 + $0x10] sm:$0xff]
        %v2494 = vld [vmem:[%s698 + $0x18] sm:$0xff]
        %v2495 = vld [vmem:[%s698 + $0x20] sm:$0xff]
        %v2496 = vld [vmem:[%s698 + $0x28] sm:$0xff]
        %v2497 = vld [vmem:[%s698 + $0x30] sm:$0xff]
        %v2498 = vld [vmem:[%s698 + $0x38] sm:$0xff]
        %v2507 = vlaneseq
        %v2508 = vshrl.u32 %v2507, 7
        %v2509 = vsub.s32 0, %v2508
        %v2510 = vrot.slane %v2491, %v2509
        %v2511 = vlaneseq
        %v2512 = vshrl.u32 %v2511, 7
        %v2513 = vsub.s32 1, %v2512
        %v2514 = vrot.slane %v2491, %v2513
        %v2515 = vlaneseq
        %v2516 = vshrl.u32 %v2515, 7
        %v2517 = vsub.s32 2, %v2516
        %v2518 = vrot.slane %v2491, %v2517
        %v2519 = vlaneseq
        %v2520 = vshrl.u32 %v2519, 7
        %v2521 = vsub.s32 3, %v2520
        %v2522 = vrot.slane %v2491, %v2521
        %v2523 = vlaneseq
        %v2524 = vshrl.u32 %v2523, 7
        %v2525 = vsub.s32 4, %v2524
        %v2526 = vrot.slane %v2491, %v2525
        %v2527 = vlaneseq
        %v2528 = vshrl.u32 %v2527, 7
        %v2529 = vsub.s32 5, %v2528
        %v2530 = vrot.slane %v2491, %v2529
        %v2531 = vlaneseq
        %v2532 = vshrl.u32 %v2531, 7
        %v2533 = vsub.s32 6, %v2532
        %v2534 = vrot.slane %v2491, %v2533
        %v2535 = vlaneseq
        %v2536 = vshrl.u32 %v2535, 7
        %v2537 = vsub.s32 7, %v2536
        %v2538 = vrot.slane %v2491, %v2537
        %v2539 = vlaneseq
        %v2540 = vshrl.u32 %v2539, 7
        %v2541 = vsub.s32 0, %v2540
        %v2542 = vrot.slane %v2492, %v2541
        %v2543 = vlaneseq
        %v2544 = vshrl.u32 %v2543, 7
        %v2545 = vsub.s32 1, %v2544
        %v2546 = vrot.slane %v2492, %v2545
        %v2547 = vlaneseq
        %v2548 = vshrl.u32 %v2547, 7
        %v2549 = vsub.s32 2, %v2548
        %v2550 = vrot.slane %v2492, %v2549
        %v2551 = vlaneseq
        %v2552 = vshrl.u32 %v2551, 7
        %v2553 = vsub.s32 3, %v2552
        %v2554 = vrot.slane %v2492, %v2553
        %v2555 = vlaneseq
        %v2556 = vshrl.u32 %v2555, 7
        %v2557 = vsub.s32 4, %v2556
        %v2558 = vrot.slane %v2492, %v2557
        %v2559 = vlaneseq
        %v2560 = vshrl.u32 %v2559, 7
        %v2561 = vsub.s32 5, %v2560
        %v2562 = vrot.slane %v2492, %v2561
        %v2563 = vlaneseq
        %v2564 = vshrl.u32 %v2563, 7
        %v2565 = vsub.s32 6, %v2564
        %v2566 = vrot.slane %v2492, %v2565
        %v2567 = vlaneseq
        %v2568 = vshrl.u32 %v2567, 7
        %v2569 = vsub.s32 7, %v2568
        %v2570 = vrot.slane %v2492, %v2569
        %v2571 = vlaneseq
        %v2572 = vshrl.u32 %v2571, 7
        %v2573 = vsub.s32 0, %v2572
        %v2574 = vrot.slane %v2493, %v2573
        %v2575 = vlaneseq
        %v2576 = vshrl.u32 %v2575, 7
        %v2577 = vsub.s32 1, %v2576
        %v2578 = vrot.slane %v2493, %v2577
        %v2579 = vlaneseq
        %v2580 = vshrl.u32 %v2579, 7
        %v2581 = vsub.s32 2, %v2580
        %v2582 = vrot.slane %v2493, %v2581
        %v2583 = vlaneseq
        %v2584 = vshrl.u32 %v2583, 7
        %v2585 = vsub.s32 3, %v2584
        %v2586 = vrot.slane %v2493, %v2585
        %v2587 = vlaneseq
        %v2588 = vshrl.u32 %v2587, 7
        %v2589 = vsub.s32 4, %v2588
        %v2590 = vrot.slane %v2493, %v2589
        %v2591 = vlaneseq
        %v2592 = vshrl.u32 %v2591, 7
        %v2593 = vsub.s32 5, %v2592
        %v2594 = vrot.slane %v2493, %v2593
        %v2595 = vlaneseq
        %v2596 = vshrl.u32 %v2595, 7
        %v2597 = vsub.s32 6, %v2596
        %v2598 = vrot.slane %v2493, %v2597
        %v2599 = vlaneseq
        %v2600 = vshrl.u32 %v2599, 7
        %v2601 = vsub.s32 7, %v2600
        %v2602 = vrot.slane %v2493, %v2601
        %v2603 = vlaneseq
        %v2604 = vshrl.u32 %v2603, 7
        %v2605 = vsub.s32 0, %v2604
        %v2606 = vrot.slane %v2494, %v2605
        %v2607 = vlaneseq
        %v2608 = vshrl.u32 %v2607, 7
        %v2609 = vsub.s32 1, %v2608
        %v2610 = vrot.slane %v2494, %v2609
        %v2611 = vlaneseq
        %v2612 = vshrl.u32 %v2611, 7
        %v2613 = vsub.s32 2, %v2612
        %v2614 = vrot.slane %v2494, %v2613
        %v2615 = vlaneseq
        %v2616 = vshrl.u32 %v2615, 7
        %v2617 = vsub.s32 3, %v2616
        %v2618 = vrot.slane %v2494, %v2617
        %v2619 = vlaneseq
        %v2620 = vshrl.u32 %v2619, 7
        %v2621 = vsub.s32 4, %v2620
        %v2622 = vrot.slane %v2494, %v2621
        %v2623 = vlaneseq
        %v2624 = vshrl.u32 %v2623, 7
        %v2625 = vsub.s32 5, %v2624
        %v2626 = vrot.slane %v2494, %v2625
        %v2627 = vlaneseq
        %v2628 = vshrl.u32 %v2627, 7
        %v2629 = vsub.s32 6, %v2628
        %v2630 = vrot.slane %v2494, %v2629
        %v2631 = vlaneseq
        %v2632 = vshrl.u32 %v2631, 7
        %v2633 = vsub.s32 7, %v2632
        %v2634 = vrot.slane %v2494, %v2633
        %v2635 = vlaneseq
        %v2636 = vshrl.u32 %v2635, 7
        %v2637 = vsub.s32 0, %v2636
        %v2638 = vrot.slane %v2495, %v2637
        %v2639 = vlaneseq
        %v2640 = vshrl.u32 %v2639, 7
        %v2641 = vsub.s32 1, %v2640
        %v2642 = vrot.slane %v2495, %v2641
        %v2643 = vlaneseq
        %v2644 = vshrl.u32 %v2643, 7
        %v2645 = vsub.s32 2, %v2644
        %v2646 = vrot.slane %v2495, %v2645
        %v2647 = vlaneseq
        %v2648 = vshrl.u32 %v2647, 7
        %v2649 = vsub.s32 3, %v2648
        %v2650 = vrot.slane %v2495, %v2649
        %v2651 = vlaneseq
        %v2652 = vshrl.u32 %v2651, 7
        %v2653 = vsub.s32 4, %v2652
        %v2654 = vrot.slane %v2495, %v2653
        %v2655 = vlaneseq
        %v2656 = vshrl.u32 %v2655, 7
        %v2657 = vsub.s32 5, %v2656
        %v2658 = vrot.slane %v2495, %v2657
        %v2659 = vlaneseq
        %v2660 = vshrl.u32 %v2659, 7
        %v2661 = vsub.s32 6, %v2660
        %v2662 = vrot.slane %v2495, %v2661
        %v2663 = vlaneseq
        %v2664 = vshrl.u32 %v2663, 7
        %v2665 = vsub.s32 7, %v2664
        %v2666 = vrot.slane %v2495, %v2665
        %v2667 = vlaneseq
        %v2668 = vshrl.u32 %v2667, 7
        %v2669 = vsub.s32 0, %v2668
        %v2670 = vrot.slane %v2496, %v2669
        %v2671 = vlaneseq
        %v2672 = vshrl.u32 %v2671, 7
        %v2673 = vsub.s32 1, %v2672
        %v2674 = vrot.slane %v2496, %v2673
        %v2675 = vlaneseq
        %v2676 = vshrl.u32 %v2675, 7
        %v2677 = vsub.s32 2, %v2676
        %v2678 = vrot.slane %v2496, %v2677
        %v2679 = vlaneseq
        %v2680 = vshrl.u32 %v2679, 7
        %v2681 = vsub.s32 3, %v2680
        %v2682 = vrot.slane %v2496, %v2681
        %v2683 = vlaneseq
        %v2684 = vshrl.u32 %v2683, 7
        %v2685 = vsub.s32 4, %v2684
        %v2686 = vrot.slane %v2496, %v2685
        %v2687 = vlaneseq
        %v2688 = vshrl.u32 %v2687, 7
        %v2689 = vsub.s32 5, %v2688
        %v2690 = vrot.slane %v2496, %v2689
        %v2691 = vlaneseq
        %v2692 = vshrl.u32 %v2691, 7
        %v2693 = vsub.s32 6, %v2692
        %v2694 = vrot.slane %v2496, %v2693
        %v2695 = vlaneseq
        %v2696 = vshrl.u32 %v2695, 7
        %v2697 = vsub.s32 7, %v2696
        %v2698 = vrot.slane %v2496, %v2697
        %v2699 = vlaneseq
        %v2700 = vshrl.u32 %v2699, 7
        %v2701 = vsub.s32 0, %v2700
        %v2702 = vrot.slane %v2497, %v2701
        %v2703 = vlaneseq
        %v2704 = vshrl.u32 %v2703, 7
        %v2705 = vsub.s32 1, %v2704
        %v2706 = vrot.slane %v2497, %v2705
        %v2707 = vlaneseq
        %v2708 = vshrl.u32 %v2707, 7
        %v2709 = vsub.s32 2, %v2708
        %v2710 = vrot.slane %v2497, %v2709
        %v2711 = vlaneseq
        %v2712 = vshrl.u32 %v2711, 7
        %v2713 = vsub.s32 3, %v2712
        %v2714 = vrot.slane %v2497, %v2713
        %v2715 = vlaneseq
        %v2716 = vshrl.u32 %v2715, 7
        %v2717 = vsub.s32 4, %v2716
        %v2718 = vrot.slane %v2497, %v2717
        %v2719 = vlaneseq
        %v2720 = vshrl.u32 %v2719, 7
        %v2721 = vsub.s32 5, %v2720
        %v2722 = vrot.slane %v2497, %v2721
        %v2723 = vlaneseq
        %v2724 = vshrl.u32 %v2723, 7
        %v2725 = vsub.s32 6, %v2724
        %v2726 = vrot.slane %v2497, %v2725
        %v2727 = vlaneseq
        %v2728 = vshrl.u32 %v2727, 7
        %v2729 = vsub.s32 7, %v2728
        %v2730 = vrot.slane %v2497, %v2729
        %v2731 = vlaneseq
        %v2732 = vshrl.u32 %v2731, 7
        %v2733 = vsub.s32 0, %v2732
        %v2734 = vrot.slane %v2498, %v2733
        %v2735 = vlaneseq
        %v2736 = vshrl.u32 %v2735, 7
        %v2737 = vsub.s32 1, %v2736
        %v2738 = vrot.slane %v2498, %v2737
        %v2739 = vlaneseq
        %v2740 = vshrl.u32 %v2739, 7
        %v2741 = vsub.s32 2, %v2740
        %v2742 = vrot.slane %v2498, %v2741
        %v2743 = vlaneseq
        %v2744 = vshrl.u32 %v2743, 7
        %v2745 = vsub.s32 3, %v2744
        %v2746 = vrot.slane %v2498, %v2745
        %v2747 = vlaneseq
        %v2748 = vshrl.u32 %v2747, 7
        %v2749 = vsub.s32 4, %v2748
        %v2750 = vrot.slane %v2498, %v2749
        %v2751 = vlaneseq
        %v2752 = vshrl.u32 %v2751, 7
        %v2753 = vsub.s32 5, %v2752
        %v2754 = vrot.slane %v2498, %v2753
        %v2755 = vlaneseq
        %v2756 = vshrl.u32 %v2755, 7
        %v2757 = vsub.s32 6, %v2756
        %v2758 = vrot.slane %v2498, %v2757
        %v3078 = vunpack.c.l.b16 %v2235
        %v3079 = vunpack.c.h.b16 %v2235
        %v3080 = vunpack.c.l.b16 %v2236
        %v3081 = vunpack.c.h.b16 %v2236
        %v3082 = vunpack.c.l.b16 %v2237
        %v3083 = vunpack.c.h.b16 %v2237
        %v3084 = vunpack.c.l.b16 %v2238
        %v3085 = vunpack.c.h.b16 %v2238
        %v3086 = vunpack.c.l.b16 %v2239
        %v3087 = vunpack.c.h.b16 %v2239
        %v3088 = vunpack.c.l.b16 %v2240
        %v3089 = vunpack.c.h.b16 %v2240
        %v3090 = vunpack.c.l.b16 %v2241
        %v3091 = vunpack.c.h.b16 %v2241
        %v3092 = vunpack.c.l.b16 %v2242
        %v3093 = vunpack.c.h.b16 %v2242
        %v3094 = vunpack.c.l.b16 %v2243
        %v3095 = vunpack.c.h.b16 %v2243
        %v3096 = vunpack.c.l.b16 %v2244
        %v3097 = vunpack.c.h.b16 %v2244
        %v3098 = vunpack.c.l.b16 %v2245
        %v3099 = vunpack.c.h.b16 %v2245
        %v3100 = vunpack.c.l.b16 %v2246
        %v3101 = vunpack.c.h.b16 %v2246
        %v3102 = vunpack.c.l.b16 %v2247
        %v3103 = vunpack.c.h.b16 %v2247
        %v3104 = vunpack.c.l.b16 %v2248
        %v3105 = vunpack.c.h.b16 %v2248
        %v3106 = vunpack.c.l.b16 %v2249
        %v3107 = vunpack.c.h.b16 %v2249
        %v3108 = vunpack.c.l.b16 %v2250
        %v3109 = vunpack.c.h.b16 %v2250
        %v3110 = vunpack.c.l.b16 %v2251
        %v3111 = vunpack.c.h.b16 %v2251
        %v3112 = vunpack.c.l.b16 %v2252
        %v3113 = vunpack.c.h.b16 %v2252
        %v3114 = vunpack.c.l.b16 %v2253
        %v3115 = vunpack.c.h.b16 %v2253
        %v3116 = vunpack.c.l.b16 %v2254
        %v3117 = vunpack.c.h.b16 %v2254
        %v3118 = vunpack.c.l.b16 %v2255
        %v3119 = vunpack.c.h.b16 %v2255
        %v3120 = vunpack.c.l.b16 %v2256
        %v3121 = vunpack.c.h.b16 %v2256
        %v3122 = vunpack.c.l.b16 %v2257
        %v3123 = vunpack.c.h.b16 %v2257
        %v3124 = vunpack.c.l.b16 %v2258
        %v3125 = vunpack.c.h.b16 %v2258
        %v3126 = vunpack.c.l.b16 %v2259
        %v3127 = vunpack.c.h.b16 %v2259
        %v3128 = vunpack.c.l.b16 %v2260
        %v3129 = vunpack.c.h.b16 %v2260
        %v3130 = vunpack.c.l.b16 %v2261
        %v3131 = vunpack.c.h.b16 %v2261
        %v3132 = vunpack.c.l.b16 %v2262
        %v3133 = vunpack.c.h.b16 %v2262
        %v3134 = vunpack.c.l.b16 %v2263
        %v3135 = vunpack.c.h.b16 %v2263
        %v3136 = vunpack.c.l.b16 %v2264
        %v3137 = vunpack.c.h.b16 %v2264
        %v3138 = vunpack.c.l.b16 %v2265
        %v3139 = vunpack.c.h.b16 %v2265
        %v3140 = vunpack.c.l.b16 %v2266
        %v3141 = vunpack.c.l.b16 %v2267
        %v3142 = vunpack.c.h.b16 %v2267
        %v3143 = vunpack.c.l.b16 %v2268
        %v3144 = vunpack.c.h.b16 %v2268
        %v3145 = vunpack.c.l.b16 %v2269
        %v3146 = vunpack.c.h.b16 %v2269
        %v3147 = vunpack.c.l.b16 %v2270
        %v3148 = vunpack.c.h.b16 %v2270
        %v3149 = vunpack.c.l.b16 %v2271
        %v3150 = vunpack.c.h.b16 %v2271
        %v3151 = vunpack.c.l.b16 %v2272
        %v3152 = vunpack.c.h.b16 %v2272
        %v3153 = vunpack.c.l.b16 %v2273
        %v3154 = vunpack.c.h.b16 %v2273
        %v3155 = vunpack.c.l.b16 %v2274
        %v3156 = vunpack.c.h.b16 %v2274
        %v3157 = vunpack.c.l.b16 %v2275
        %v3158 = vunpack.c.h.b16 %v2275
        %v3159 = vunpack.c.l.b16 %v2276
        %v3160 = vunpack.c.h.b16 %v2276
        %v3161 = vunpack.c.l.b16 %v2277
        %v3162 = vunpack.c.h.b16 %v2277
        %v3163 = vunpack.c.l.b16 %v2278
        %v3164 = vunpack.c.h.b16 %v2278
        %v3165 = vunpack.c.l.b16 %v2279
        %v3166 = vunpack.c.h.b16 %v2279
        %v3167 = vunpack.c.l.b16 %v2280
        %v3168 = vunpack.c.h.b16 %v2280
        %v3169 = vunpack.c.l.b16 %v2281
        %v3170 = vunpack.c.h.b16 %v2281
        %v3171 = vunpack.c.l.b16 %v2282
        %v3172 = vunpack.c.h.b16 %v2282
        %v3173 = vunpack.c.l.b16 %v2283
        %v3174 = vunpack.c.h.b16 %v2283
        %v3175 = vunpack.c.l.b16 %v2284
        %v3176 = vunpack.c.h.b16 %v2284
        %v3177 = vunpack.c.l.b16 %v2285
        %v3178 = vunpack.c.h.b16 %v2285
        %v3179 = vunpack.c.l.b16 %v2286
        %v3180 = vunpack.c.h.b16 %v2286
        %v3181 = vunpack.c.l.b16 %v2287
        %v3182 = vunpack.c.h.b16 %v2287
        %v3183 = vunpack.c.l.b16 %v2288
        %v3184 = vunpack.c.h.b16 %v2288
        %v3185 = vunpack.c.l.b16 %v2289
        %v3186 = vunpack.c.h.b16 %v2289
        %v3187 = vunpack.c.l.b16 %v2290
        %v3188 = vunpack.c.h.b16 %v2290
        %v3189 = vunpack.c.l.b16 %v2291
        %v3190 = vunpack.c.h.b16 %v2291
        %v3191 = vunpack.c.l.b16 %v2292
        %v3192 = vunpack.c.h.b16 %v2292
        %v3193 = vunpack.c.l.b16 %v2293
        %v3194 = vunpack.c.h.b16 %v2293
        %v3195 = vunpack.c.l.b16 %v2294
        %v3196 = vunpack.c.h.b16 %v2294
        %v3197 = vunpack.c.l.b16 %v2295
        %v3198 = vunpack.c.h.b16 %v2295
        %v3199 = vunpack.c.l.b16 %v2296
        %v3200 = vunpack.c.h.b16 %v2296
        %v3201 = vunpack.c.l.b16 %v2297
        %v3202 = vunpack.c.h.b16 %v2297
        %v3203 = vunpack.c.l.b16 %v2298
        %v3204 = vunpack.c.l.b16 %v2299
        %v3205 = vunpack.c.h.b16 %v2299
        %v3206 = vunpack.c.l.b16 %v2300
        %v3207 = vunpack.c.h.b16 %v2300
        %v3208 = vunpack.c.l.b16 %v2301
        %v3209 = vunpack.c.h.b16 %v2301
        %v3210 = vunpack.c.l.b16 %v2302
        %v3211 = vunpack.c.h.b16 %v2302
        %v3212 = vunpack.c.l.b16 %v2303
        %v3213 = vunpack.c.h.b16 %v2303
        %v3214 = vunpack.c.l.b16 %v2304
        %v3215 = vunpack.c.h.b16 %v2304
        %v3216 = vunpack.c.l.b16 %v2305
        %v3217 = vunpack.c.h.b16 %v2305
        %v3218 = vunpack.c.l.b16 %v2306
        %v3219 = vunpack.c.h.b16 %v2306
        %v3220 = vunpack.c.l.b16 %v2307
        %v3221 = vunpack.c.h.b16 %v2307
        %v3222 = vunpack.c.l.b16 %v2308
        %v3223 = vunpack.c.h.b16 %v2308
        %v3224 = vunpack.c.l.b16 %v2309
        %v3225 = vunpack.c.h.b16 %v2309
        %v3226 = vunpack.c.l.b16 %v2310
        %v3227 = vunpack.c.h.b16 %v2310
        %v3228 = vunpack.c.l.b16 %v2311
        %v3229 = vunpack.c.h.b16 %v2311
        %v3230 = vunpack.c.l.b16 %v2312
        %v3231 = vunpack.c.h.b16 %v2312
        %v3232 = vunpack.c.l.b16 %v2313
        %v3233 = vunpack.c.h.b16 %v2313
        %v3234 = vunpack.c.l.b16 %v2314
        %v3235 = vunpack.c.h.b16 %v2314
        %v3236 = vunpack.c.l.b16 %v2315
        %v3237 = vunpack.c.h.b16 %v2315
        %v3238 = vunpack.c.l.b16 %v2316
        %v3239 = vunpack.c.h.b16 %v2316
        %v3240 = vunpack.c.l.b16 %v2317
        %v3241 = vunpack.c.h.b16 %v2317
        %v3242 = vunpack.c.l.b16 %v2318
        %v3243 = vunpack.c.h.b16 %v2318
        %v3244 = vunpack.c.l.b16 %v2319
        %v3245 = vunpack.c.h.b16 %v2319
        %v3246 = vunpack.c.l.b16 %v2320
        %v3247 = vunpack.c.h.b16 %v2320
        %v3248 = vunpack.c.l.b16 %v2321
        %v3249 = vunpack.c.h.b16 %v2321
        %v3250 = vunpack.c.l.b16 %v2322
        %v3251 = vunpack.c.h.b16 %v2322
        %v3252 = vunpack.c.l.b16 %v2323
        %v3253 = vunpack.c.h.b16 %v2323
        %v3254 = vunpack.c.l.b16 %v2324
        %v3255 = vunpack.c.h.b16 %v2324
        %v3256 = vunpack.c.l.b16 %v2325
        %v3257 = vunpack.c.h.b16 %v2325
        %v3258 = vunpack.c.l.b16 %v2326
        %v3259 = vunpack.c.h.b16 %v2326
        %v3260 = vunpack.c.l.b16 %v2327
        %v3261 = vunpack.c.h.b16 %v2327
        %v3262 = vunpack.c.l.b16 %v2328
        %v3263 = vunpack.c.h.b16 %v2328
        %v3264 = vunpack.c.l.b16 %v2329
        %v3265 = vunpack.c.h.b16 %v2329
        %v3266 = vunpack.c.l.b16 %v2330
        %v3267 = vunpack.c.l.b16 %v2331
        %v3268 = vunpack.c.h.b16 %v2331
        %v3269 = vunpack.c.l.b16 %v2332
        %v3270 = vunpack.c.h.b16 %v2332
        %v3271 = vunpack.c.l.b16 %v2333
        %v3272 = vunpack.c.h.b16 %v2333
        %v3273 = vunpack.c.l.b16 %v2334
        %v3274 = vunpack.c.h.b16 %v2334
        %v3275 = vunpack.c.l.b16 %v2335
        %v3276 = vunpack.c.h.b16 %v2335
        %v3277 = vunpack.c.l.b16 %v2336
        %v3278 = vunpack.c.h.b16 %v2336
        %v3279 = vunpack.c.l.b16 %v2337
        %v3280 = vunpack.c.h.b16 %v2337
        %v3281 = vunpack.c.l.b16 %v2338
        %v3282 = vunpack.c.h.b16 %v2338
        %v3283 = vunpack.c.l.b16 %v2339
        %v3284 = vunpack.c.h.b16 %v2339
        %v3285 = vunpack.c.l.b16 %v2340
        %v3286 = vunpack.c.h.b16 %v2340
        %v3287 = vunpack.c.l.b16 %v2341
        %v3288 = vunpack.c.h.b16 %v2341
        %v3289 = vunpack.c.l.b16 %v2342
        %v3290 = vunpack.c.h.b16 %v2342
        %v3291 = vunpack.c.l.b16 %v2343
        %v3292 = vunpack.c.h.b16 %v2343
        %v3293 = vunpack.c.l.b16 %v2344
        %v3294 = vunpack.c.h.b16 %v2344
        %v3295 = vunpack.c.l.b16 %v2345
        %v3296 = vunpack.c.h.b16 %v2345
        %v3297 = vunpack.c.l.b16 %v2346
        %v3298 = vunpack.c.h.b16 %v2346
        %v3299 = vunpack.c.l.b16 %v2347
        %v3300 = vunpack.c.h.b16 %v2347
        %v3301 = vunpack.c.l.b16 %v2348
        %v3302 = vunpack.c.h.b16 %v2348
        %v3303 = vunpack.c.l.b16 %v2349
        %v3304 = vunpack.c.h.b16 %v2349
        %v3305 = vunpack.c.l.b16 %v2350
        %v3306 = vunpack.c.h.b16 %v2350
        %v3307 = vunpack.c.l.b16 %v2351
        %v3308 = vunpack.c.h.b16 %v2351
        %v3309 = vunpack.c.l.b16 %v2352
        %v3310 = vunpack.c.h.b16 %v2352
        %v3311 = vunpack.c.l.b16 %v2353
        %v3312 = vunpack.c.h.b16 %v2353
        %v3313 = vunpack.c.l.b16 %v2354
        %v3314 = vunpack.c.h.b16 %v2354
        %v3315 = vunpack.c.l.b16 %v2355
        %v3316 = vunpack.c.h.b16 %v2355
        %v3317 = vunpack.c.l.b16 %v2356
        %v3318 = vunpack.c.h.b16 %v2356
        %v3319 = vunpack.c.l.b16 %v2357
        %v3320 = vunpack.c.h.b16 %v2357
        %v3321 = vunpack.c.l.b16 %v2358
        %v3322 = vunpack.c.h.b16 %v2358
        %v3323 = vunpack.c.l.b16 %v2359
        %v3324 = vunpack.c.h.b16 %v2359
        %v3325 = vunpack.c.l.b16 %v2360
        %v3326 = vunpack.c.h.b16 %v2360
        %v3327 = vunpack.c.l.b16 %v2361
        %v3328 = vunpack.c.h.b16 %v2361
        %v3329 = vunpack.c.l.b16 %v2362
        %v3330 = vunpack.c.l.b16 %v2363
        %v3331 = vunpack.c.h.b16 %v2363
        %v3332 = vunpack.c.l.b16 %v2364
        %v3333 = vunpack.c.h.b16 %v2364
        %v3334 = vunpack.c.l.b16 %v2365
        %v3335 = vunpack.c.h.b16 %v2365
        %v3336 = vunpack.c.l.b16 %v2366
        %v3337 = vunpack.c.h.b16 %v2366
        %v3338 = vunpack.c.l.b16 %v2367
        %v3339 = vunpack.c.h.b16 %v2367
        %v3340 = vunpack.c.l.b16 %v2368
        %v3341 = vunpack.c.h.b16 %v2368
        %v3342 = vunpack.c.l.b16 %v2369
        %v3343 = vunpack.c.h.b16 %v2369
        %v3344 = vunpack.c.l.b16 %v2370
        %v3345 = vunpack.c.h.b16 %v2370
        %v3346 = vunpack.c.l.b16 %v2371
        %v3347 = vunpack.c.h.b16 %v2371
        %v3348 = vunpack.c.l.b16 %v2372
        %v3349 = vunpack.c.h.b16 %v2372
        %v3350 = vunpack.c.l.b16 %v2373
        %v3351 = vunpack.c.h.b16 %v2373
        %v3352 = vunpack.c.l.b16 %v2374
        %v3353 = vunpack.c.h.b16 %v2374
        %v3354 = vunpack.c.l.b16 %v2375
        %v3355 = vunpack.c.h.b16 %v2375
        %v3356 = vunpack.c.l.b16 %v2376
        %v3357 = vunpack.c.h.b16 %v2376
        %v3358 = vunpack.c.l.b16 %v2377
        %v3359 = vunpack.c.h.b16 %v2377
        %v3360 = vunpack.c.l.b16 %v2378
        %v3361 = vunpack.c.h.b16 %v2378
        %v3362 = vunpack.c.l.b16 %v2379
        %v3363 = vunpack.c.h.b16 %v2379
        %v3364 = vunpack.c.l.b16 %v2380
        %v3365 = vunpack.c.h.b16 %v2380
        %v3366 = vunpack.c.l.b16 %v2381
        %v3367 = vunpack.c.h.b16 %v2381
        %v3368 = vunpack.c.l.b16 %v2382
        %v3369 = vunpack.c.h.b16 %v2382
        %v3370 = vunpack.c.l.b16 %v2383
        %v3371 = vunpack.c.h.b16 %v2383
        %v3372 = vunpack.c.l.b16 %v2384
        %v3373 = vunpack.c.h.b16 %v2384
        %v3374 = vunpack.c.l.b16 %v2385
        %v3375 = vunpack.c.h.b16 %v2385
        %v3376 = vunpack.c.l.b16 %v2386
        %v3377 = vunpack.c.h.b16 %v2386
        %v3378 = vunpack.c.l.b16 %v2387
        %v3379 = vunpack.c.h.b16 %v2387
        %v3380 = vunpack.c.l.b16 %v2388
        %v3381 = vunpack.c.h.b16 %v2388
        %v3382 = vunpack.c.l.b16 %v2389
        %v3383 = vunpack.c.h.b16 %v2389
        %v3384 = vunpack.c.l.b16 %v2390
        %v3385 = vunpack.c.h.b16 %v2390
        %v3386 = vunpack.c.l.b16 %v2391
        %v3387 = vunpack.c.h.b16 %v2391
        %v3388 = vunpack.c.l.b16 %v2392
        %v3389 = vunpack.c.h.b16 %v2392
        %v3390 = vunpack.c.l.b16 %v2393
        %v3391 = vunpack.c.h.b16 %v2393
        %v3392 = vunpack.c.l.b16 %v2394
        %v3393 = vunpack.c.l.b16 %v2395
        %v3394 = vunpack.c.h.b16 %v2395
        %v3395 = vunpack.c.l.b16 %v2396
        %v3396 = vunpack.c.h.b16 %v2396
        %v3397 = vunpack.c.l.b16 %v2397
        %v3398 = vunpack.c.h.b16 %v2397
        %v3399 = vunpack.c.l.b16 %v2398
        %v3400 = vunpack.c.h.b16 %v2398
        %v3401 = vunpack.c.l.b16 %v2399
        %v3402 = vunpack.c.h.b16 %v2399
        %v3403 = vunpack.c.l.b16 %v2400
        %v3404 = vunpack.c.h.b16 %v2400
        %v3405 = vunpack.c.l.b16 %v2401
        %v3406 = vunpack.c.h.b16 %v2401
        %v3407 = vunpack.c.l.b16 %v2402
        %v3408 = vunpack.c.h.b16 %v2402
        %v3409 = vunpack.c.l.b16 %v2403
        %v3410 = vunpack.c.h.b16 %v2403
        %v3411 = vunpack.c.l.b16 %v2404
        %v3412 = vunpack.c.h.b16 %v2404
        %v3413 = vunpack.c.l.b16 %v2405
        %v3414 = vunpack.c.h.b16 %v2405
        %v3415 = vunpack.c.l.b16 %v2406
        %v3416 = vunpack.c.h.b16 %v2406
        %v3417 = vunpack.c.l.b16 %v2407
        %v3418 = vunpack.c.h.b16 %v2407
        %v3419 = vunpack.c.l.b16 %v2408
        %v3420 = vunpack.c.h.b16 %v2408
        %v3421 = vunpack.c.l.b16 %v2409
        %v3422 = vunpack.c.h.b16 %v2409
        %v3423 = vunpack.c.l.b16 %v2410
        %v3424 = vunpack.c.h.b16 %v2410
        %v3425 = vunpack.c.l.b16 %v2411
        %v3426 = vunpack.c.h.b16 %v2411
        %v3427 = vunpack.c.l.b16 %v2412
        %v3428 = vunpack.c.h.b16 %v2412
        %v3429 = vunpack.c.l.b16 %v2413
        %v3430 = vunpack.c.h.b16 %v2413
        %v3431 = vunpack.c.l.b16 %v2414
        %v3432 = vunpack.c.h.b16 %v2414
        %v3433 = vunpack.c.l.b16 %v2415
        %v3434 = vunpack.c.h.b16 %v2415
        %v3435 = vunpack.c.l.b16 %v2416
        %v3436 = vunpack.c.h.b16 %v2416
        %v3437 = vunpack.c.l.b16 %v2417
        %v3438 = vunpack.c.h.b16 %v2417
        %v3439 = vunpack.c.l.b16 %v2418
        %v3440 = vunpack.c.h.b16 %v2418
        %v3441 = vunpack.c.l.b16 %v2419
        %v3442 = vunpack.c.h.b16 %v2419
        %v3443 = vunpack.c.l.b16 %v2420
        %v3444 = vunpack.c.h.b16 %v2420
        %v3445 = vunpack.c.l.b16 %v2421
        %v3446 = vunpack.c.h.b16 %v2421
        %v3447 = vunpack.c.l.b16 %v2422
        %v3448 = vunpack.c.h.b16 %v2422
        %v3449 = vunpack.c.l.b16 %v2423
        %v3450 = vunpack.c.h.b16 %v2423
        %v3451 = vunpack.c.l.b16 %v2424
        %v3452 = vunpack.c.h.b16 %v2424
        %v3453 = vunpack.c.l.b16 %v2425
        %v3454 = vunpack.c.h.b16 %v2425
        %v3455 = vunpack.c.l.b16 %v2426
        %v3456 = vunpack.c.l.b16 %v2427
        %v3457 = vunpack.c.h.b16 %v2427
        %v3458 = vunpack.c.l.b16 %v2428
        %v3459 = vunpack.c.h.b16 %v2428
        %v3460 = vunpack.c.l.b16 %v2429
        %v3461 = vunpack.c.h.b16 %v2429
        %v3462 = vunpack.c.l.b16 %v2430
        %v3463 = vunpack.c.h.b16 %v2430
        %v3464 = vunpack.c.l.b16 %v2431
        %v3465 = vunpack.c.h.b16 %v2431
        %v3466 = vunpack.c.l.b16 %v2432
        %v3467 = vunpack.c.h.b16 %v2432
        %v3468 = vunpack.c.l.b16 %v2433
        %v3469 = vunpack.c.h.b16 %v2433
        %v3470 = vunpack.c.l.b16 %v2434
        %v3471 = vunpack.c.h.b16 %v2434
        %v3472 = vunpack.c.l.b16 %v2435
        %v3473 = vunpack.c.h.b16 %v2435
        %v3474 = vunpack.c.l.b16 %v2436
        %v3475 = vunpack.c.h.b16 %v2436
        %v3476 = vunpack.c.l.b16 %v2437
        %v3477 = vunpack.c.h.b16 %v2437
        %v3478 = vunpack.c.l.b16 %v2438
        %v3479 = vunpack.c.h.b16 %v2438
        %v3480 = vunpack.c.l.b16 %v2439
        %v3481 = vunpack.c.h.b16 %v2439
        %v3482 = vunpack.c.l.b16 %v2440
        %v3483 = vunpack.c.h.b16 %v2440
        %v3484 = vunpack.c.l.b16 %v2441
        %v3485 = vunpack.c.h.b16 %v2441
        %v3486 = vunpack.c.l.b16 %v2442
        %v3487 = vunpack.c.h.b16 %v2442
        %v3488 = vunpack.c.l.b16 %v2443
        %v3489 = vunpack.c.h.b16 %v2443
        %v3490 = vunpack.c.l.b16 %v2444
        %v3491 = vunpack.c.h.b16 %v2444
        %v3492 = vunpack.c.l.b16 %v2445
        %v3493 = vunpack.c.h.b16 %v2445
        %v3494 = vunpack.c.l.b16 %v2446
        %v3495 = vunpack.c.h.b16 %v2446
        %v3496 = vunpack.c.l.b16 %v2447
        %v3497 = vunpack.c.h.b16 %v2447
        %v3498 = vunpack.c.l.b16 %v2448
        %v3499 = vunpack.c.h.b16 %v2448
        %v3500 = vunpack.c.l.b16 %v2449
        %v3501 = vunpack.c.h.b16 %v2449
        %v3502 = vunpack.c.l.b16 %v2450
        %v3503 = vunpack.c.h.b16 %v2450
        %v3504 = vunpack.c.l.b16 %v2451
        %v3505 = vunpack.c.h.b16 %v2451
        %v3506 = vunpack.c.l.b16 %v2452
        %v3507 = vunpack.c.h.b16 %v2452
        %v3508 = vunpack.c.l.b16 %v2453
        %v3509 = vunpack.c.h.b16 %v2453
        %v3510 = vunpack.c.l.b16 %v2454
        %v3511 = vunpack.c.h.b16 %v2454
        %v3512 = vunpack.c.l.b16 %v2455
        %v3513 = vunpack.c.h.b16 %v2455
        %v3514 = vunpack.c.l.b16 %v2456
        %v3515 = vunpack.c.h.b16 %v2456
        %v3516 = vunpack.c.l.b16 %v2457
        %v3517 = vunpack.c.h.b16 %v2457
        %v3518 = vunpack.c.l.b16 %v2458
        %v3519 = vunpack.c.l.b16 %v2459
        %v3520 = vunpack.c.h.b16 %v2459
        %v3521 = vunpack.c.l.b16 %v2460
        %v3522 = vunpack.c.h.b16 %v2460
        %v3523 = vunpack.c.l.b16 %v2461
        %v3524 = vunpack.c.h.b16 %v2461
        %v3525 = vunpack.c.l.b16 %v2462
        %v3526 = vunpack.c.h.b16 %v2462
        %v3527 = vunpack.c.l.b16 %v2463
        %v3528 = vunpack.c.h.b16 %v2463
        %v3529 = vunpack.c.l.b16 %v2464
        %v3530 = vunpack.c.h.b16 %v2464
        %v3531 = vunpack.c.l.b16 %v2465
        %v3532 = vunpack.c.h.b16 %v2465
        %v3533 = vunpack.c.l.b16 %v2466
        %v3534 = vunpack.c.h.b16 %v2466
        %v3535 = vunpack.c.l.b16 %v2467
        %v3536 = vunpack.c.h.b16 %v2467
        %v3537 = vunpack.c.l.b16 %v2468
        %v3538 = vunpack.c.h.b16 %v2468
        %v3539 = vunpack.c.l.b16 %v2469
        %v3540 = vunpack.c.h.b16 %v2469
        %v3541 = vunpack.c.l.b16 %v2470
        %v3542 = vunpack.c.h.b16 %v2470
        %v3543 = vunpack.c.l.b16 %v2471
        %v3544 = vunpack.c.h.b16 %v2471
        %v3545 = vunpack.c.l.b16 %v2472
        %v3546 = vunpack.c.h.b16 %v2472
        %v3547 = vunpack.c.l.b16 %v2473
        %v3548 = vunpack.c.h.b16 %v2473
        %v3549 = vunpack.c.l.b16 %v2474
        %v3550 = vunpack.c.h.b16 %v2474
        %v3551 = vunpack.c.l.b16 %v2475
        %v3552 = vunpack.c.h.b16 %v2475
        %v3553 = vunpack.c.l.b16 %v2476
        %v3554 = vunpack.c.h.b16 %v2476
        %v3555 = vunpack.c.l.b16 %v2477
        %v3556 = vunpack.c.h.b16 %v2477
        %v3557 = vunpack.c.l.b16 %v2478
        %v3558 = vunpack.c.h.b16 %v2478
        %v3559 = vunpack.c.l.b16 %v2479
        %v3560 = vunpack.c.h.b16 %v2479
        %v3561 = vunpack.c.l.b16 %v2480
        %v3562 = vunpack.c.h.b16 %v2480
        %v3563 = vunpack.c.l.b16 %v2481
        %v3564 = vunpack.c.h.b16 %v2481
        %v3565 = vunpack.c.l.b16 %v2482
        %v3566 = vunpack.c.h.b16 %v2482
        %v3567 = vunpack.c.l.b16 %v2483
        %v3568 = vunpack.c.h.b16 %v2483
        %v3569 = vunpack.c.l.b16 %v2484
        %v3570 = vunpack.c.h.b16 %v2484
        %v3571 = vunpack.c.l.b16 %v2485
        %v3572 = vunpack.c.h.b16 %v2485
        %v3573 = vunpack.c.l.b16 %v2486
        %v3574 = vunpack.c.h.b16 %v2486
        %v3575 = vunpack.c.l.b16 %v2487
        %v3576 = vunpack.c.h.b16 %v2487
        %v3577 = vunpack.c.l.b16 %v2488
        %v3578 = vunpack.c.h.b16 %v2488
        %v3579 = vunpack.c.l.b16 %v2489
        %v3580 = vunpack.c.h.b16 %v2489
        %v3581 = vunpack.c.l.b16 %v2490
        %v3582 = vpack.c.b16 %v3141, %v3078
        %v3583 = vpack.c.b16 %v3142, %v3079
        %v3584 = vpack.c.b16 %v3143, %v3080
        %v3585 = vpack.c.b16 %v3144, %v3081
        %v3586 = vpack.c.b16 %v3145, %v3082
        %v3587 = vpack.c.b16 %v3146, %v3083
        %v3588 = vpack.c.b16 %v3147, %v3084
        %v3589 = vpack.c.b16 %v3148, %v3085
        %v3590 = vpack.c.b16 %v3149, %v3086
        %v3591 = vpack.c.b16 %v3150, %v3087
        %v3592 = vpack.c.b16 %v3151, %v3088
        %v3593 = vpack.c.b16 %v3152, %v3089
        %v3594 = vpack.c.b16 %v3153, %v3090
        %v3595 = vpack.c.b16 %v3154, %v3091
        %v3596 = vpack.c.b16 %v3155, %v3092
        %v3597 = vpack.c.b16 %v3156, %v3093
        %v3598 = vpack.c.b16 %v3157, %v3094
        %v3599 = vpack.c.b16 %v3158, %v3095
        %v3600 = vpack.c.b16 %v3159, %v3096
        %v3601 = vpack.c.b16 %v3160, %v3097
        %v3602 = vpack.c.b16 %v3161, %v3098
        %v3603 = vpack.c.b16 %v3162, %v3099
        %v3604 = vpack.c.b16 %v3163, %v3100
        %v3605 = vpack.c.b16 %v3164, %v3101
        %v3606 = vpack.c.b16 %v3165, %v3102
        %v3607 = vpack.c.b16 %v3166, %v3103
        %v3608 = vpack.c.b16 %v3167, %v3104
        %v3609 = vpack.c.b16 %v3168, %v3105
        %v3610 = vpack.c.b16 %v3169, %v3106
        %v3611 = vpack.c.b16 %v3170, %v3107
        %v3612 = vpack.c.b16 %v3171, %v3108
        %v3613 = vpack.c.b16 %v3172, %v3109
        %v3614 = vpack.c.b16 %v3173, %v3110
        %v3615 = vpack.c.b16 %v3174, %v3111
        %v3616 = vpack.c.b16 %v3175, %v3112
        %v3617 = vpack.c.b16 %v3176, %v3113
        %v3618 = vpack.c.b16 %v3177, %v3114
        %v3619 = vpack.c.b16 %v3178, %v3115
        %v3620 = vpack.c.b16 %v3179, %v3116
        %v3621 = vpack.c.b16 %v3180, %v3117
        %v3622 = vpack.c.b16 %v3181, %v3118
        %v3623 = vpack.c.b16 %v3182, %v3119
        %v3624 = vpack.c.b16 %v3183, %v3120
        %v3625 = vpack.c.b16 %v3184, %v3121
        %v3626 = vpack.c.b16 %v3185, %v3122
        %v3627 = vpack.c.b16 %v3186, %v3123
        %v3628 = vpack.c.b16 %v3187, %v3124
        %v3629 = vpack.c.b16 %v3188, %v3125
        %v3630 = vpack.c.b16 %v3189, %v3126
        %v3631 = vpack.c.b16 %v3190, %v3127
        %v3632 = vpack.c.b16 %v3191, %v3128
        %v3633 = vpack.c.b16 %v3192, %v3129
        %v3634 = vpack.c.b16 %v3193, %v3130
        %v3635 = vpack.c.b16 %v3194, %v3131
        %v3636 = vpack.c.b16 %v3195, %v3132
        %v3637 = vpack.c.b16 %v3196, %v3133
        %v3638 = vpack.c.b16 %v3197, %v3134
        %v3639 = vpack.c.b16 %v3198, %v3135
        %v3640 = vpack.c.b16 %v3199, %v3136
        %v3641 = vpack.c.b16 %v3200, %v3137
        %v3642 = vpack.c.b16 %v3201, %v3138
        %v3643 = vpack.c.b16 %v3202, %v3139
        %v3644 = vpack.c.b16 %v3203, %v3140
        %v3645 = vpack.c.b16 %v3267, %v3204
        %v3646 = vpack.c.b16 %v3268, %v3205
        %v3647 = vpack.c.b16 %v3269, %v3206
        %v3648 = vpack.c.b16 %v3270, %v3207
        %v3649 = vpack.c.b16 %v3271, %v3208
        %v3650 = vpack.c.b16 %v3272, %v3209
        %v3651 = vpack.c.b16 %v3273, %v3210
        %v3652 = vpack.c.b16 %v3274, %v3211
        %v3653 = vpack.c.b16 %v3275, %v3212
        %v3654 = vpack.c.b16 %v3276, %v3213
        %v3655 = vpack.c.b16 %v3277, %v3214
        %v3656 = vpack.c.b16 %v3278, %v3215
        %v3657 = vpack.c.b16 %v3279, %v3216
        %v3658 = vpack.c.b16 %v3280, %v3217
        %v3659 = vpack.c.b16 %v3281, %v3218
        %v3660 = vpack.c.b16 %v3282, %v3219
        %v3661 = vpack.c.b16 %v3283, %v3220
        %v3662 = vpack.c.b16 %v3284, %v3221
        %v3663 = vpack.c.b16 %v3285, %v3222
        %v3664 = vpack.c.b16 %v3286, %v3223
        %v3665 = vpack.c.b16 %v3287, %v3224
        %v3666 = vpack.c.b16 %v3288, %v3225
        %v3667 = vpack.c.b16 %v3289, %v3226
        %v3668 = vpack.c.b16 %v3290, %v3227
        %v3669 = vpack.c.b16 %v3291, %v3228
        %v3670 = vpack.c.b16 %v3292, %v3229
        %v3671 = vpack.c.b16 %v3293, %v3230
        %v3672 = vpack.c.b16 %v3294, %v3231
        %v3673 = vpack.c.b16 %v3295, %v3232
        %v3674 = vpack.c.b16 %v3296, %v3233
        %v3675 = vpack.c.b16 %v3297, %v3234
        %v3676 = vpack.c.b16 %v3298, %v3235
        %v3677 = vpack.c.b16 %v3299, %v3236
        %v3678 = vpack.c.b16 %v3300, %v3237
        %v3679 = vpack.c.b16 %v3301, %v3238
        %v3680 = vpack.c.b16 %v3302, %v3239
        %v3681 = vpack.c.b16 %v3303, %v3240
        %v3682 = vpack.c.b16 %v3304, %v3241
        %v3683 = vpack.c.b16 %v3305, %v3242
        %v3684 = vpack.c.b16 %v3306, %v3243
        %v3685 = vpack.c.b16 %v3307, %v3244
        %v3686 = vpack.c.b16 %v3308, %v3245
        %v3687 = vpack.c.b16 %v3309, %v3246
        %v3688 = vpack.c.b16 %v3310, %v3247
        %v3689 = vpack.c.b16 %v3311, %v3248
        %v3690 = vpack.c.b16 %v3312, %v3249
        %v3691 = vpack.c.b16 %v3313, %v3250
        %v3692 = vpack.c.b16 %v3314, %v3251
        %v3693 = vpack.c.b16 %v3315, %v3252
        %v3694 = vpack.c.b16 %v3316, %v3253
        %v3695 = vpack.c.b16 %v3317, %v3254
        %v3696 = vpack.c.b16 %v3318, %v3255
        %v3697 = vpack.c.b16 %v3319, %v3256
        %v3698 = vpack.c.b16 %v3320, %v3257
        %v3699 = vpack.c.b16 %v3321, %v3258
        %v3700 = vpack.c.b16 %v3322, %v3259
        %v3701 = vpack.c.b16 %v3323, %v3260
        %v3702 = vpack.c.b16 %v3324, %v3261
        %v3703 = vpack.c.b16 %v3325, %v3262
        %v3704 = vpack.c.b16 %v3326, %v3263
        %v3705 = vpack.c.b16 %v3327, %v3264
        %v3706 = vpack.c.b16 %v3328, %v3265
        %v3707 = vpack.c.b16 %v3329, %v3266
        %v3708 = vpack.c.b16 %v3393, %v3330
        %v3709 = vpack.c.b16 %v3394, %v3331
        %v3710 = vpack.c.b16 %v3395, %v3332
        %v3711 = vpack.c.b16 %v3396, %v3333
        %v3712 = vpack.c.b16 %v3397, %v3334
        %v3713 = vpack.c.b16 %v3398, %v3335
        %v3714 = vpack.c.b16 %v3399, %v3336
        %v3715 = vpack.c.b16 %v3400, %v3337
        %v3716 = vpack.c.b16 %v3401, %v3338
        %v3717 = vpack.c.b16 %v3402, %v3339
        %v3718 = vpack.c.b16 %v3403, %v3340
        %v3719 = vpack.c.b16 %v3404, %v3341
        %v3720 = vpack.c.b16 %v3405, %v3342
        %v3721 = vpack.c.b16 %v3406, %v3343
        %v3722 = vpack.c.b16 %v3407, %v3344
        %v3723 = vpack.c.b16 %v3408, %v3345
        %v3724 = vpack.c.b16 %v3409, %v3346
        %v3725 = vpack.c.b16 %v3410, %v3347
        %v3726 = vpack.c.b16 %v3411, %v3348
        %v3727 = vpack.c.b16 %v3412, %v3349
        %v3728 = vpack.c.b16 %v3413, %v3350
        %v3729 = vpack.c.b16 %v3414, %v3351
        %v3730 = vpack.c.b16 %v3415, %v3352
        %v3731 = vpack.c.b16 %v3416, %v3353
        %v3732 = vpack.c.b16 %v3417, %v3354
        %v3733 = vpack.c.b16 %v3418, %v3355
        %v3734 = vpack.c.b16 %v3419, %v3356
        %v3735 = vpack.c.b16 %v3420, %v3357
        %v3736 = vpack.c.b16 %v3421, %v3358
        %v3737 = vpack.c.b16 %v3422, %v3359
        %v3738 = vpack.c.b16 %v3423, %v3360
        %v3739 = vpack.c.b16 %v3424, %v3361
        %v3740 = vpack.c.b16 %v3425, %v3362
        %v3741 = vpack.c.b16 %v3426, %v3363
        %v3742 = vpack.c.b16 %v3427, %v3364
        %v3743 = vpack.c.b16 %v3428, %v3365
        %v3744 = vpack.c.b16 %v3429, %v3366
        %v3745 = vpack.c.b16 %v3430, %v3367
        %v3746 = vpack.c.b16 %v3431, %v3368
        %v3747 = vpack.c.b16 %v3432, %v3369
        %v3748 = vpack.c.b16 %v3433, %v3370
        %v3749 = vpack.c.b16 %v3434, %v3371
        %v3750 = vpack.c.b16 %v3435, %v3372
        %v3751 = vpack.c.b16 %v3436, %v3373
        %v3752 = vpack.c.b16 %v3437, %v3374
        %v3753 = vpack.c.b16 %v3438, %v3375
        %v3754 = vpack.c.b16 %v3439, %v3376
        %v3755 = vpack.c.b16 %v3440, %v3377
        %v3756 = vpack.c.b16 %v3441, %v3378
        %v3757 = vpack.c.b16 %v3442, %v3379
        %v3758 = vpack.c.b16 %v3443, %v3380
        %v3759 = vpack.c.b16 %v3444, %v3381
        %v3760 = vpack.c.b16 %v3445, %v3382
        %v3761 = vpack.c.b16 %v3446, %v3383
        %v3762 = vpack.c.b16 %v3447, %v3384
        %v3763 = vpack.c.b16 %v3448, %v3385
        %v3764 = vpack.c.b16 %v3449, %v3386
        %v3765 = vpack.c.b16 %v3450, %v3387
        %v3766 = vpack.c.b16 %v3451, %v3388
        %v3767 = vpack.c.b16 %v3452, %v3389
        %v3768 = vpack.c.b16 %v3453, %v3390
        %v3769 = vpack.c.b16 %v3454, %v3391
        %v3770 = vpack.c.b16 %v3455, %v3392
        %v3771 = vpack.c.b16 %v3519, %v3456
        %v3772 = vpack.c.b16 %v3520, %v3457
        %v3773 = vpack.c.b16 %v3521, %v3458
        %v3774 = vpack.c.b16 %v3522, %v3459
        %v3775 = vpack.c.b16 %v3523, %v3460
        %v3776 = vpack.c.b16 %v3524, %v3461
        %v3777 = vpack.c.b16 %v3525, %v3462
        %v3778 = vpack.c.b16 %v3526, %v3463
        %v3779 = vpack.c.b16 %v3527, %v3464
        %v3780 = vpack.c.b16 %v3528, %v3465
        %v3781 = vpack.c.b16 %v3529, %v3466
        %v3782 = vpack.c.b16 %v3530, %v3467
        %v3783 = vpack.c.b16 %v3531, %v3468
        %v3784 = vpack.c.b16 %v3532, %v3469
        %v3785 = vpack.c.b16 %v3533, %v3470
        %v3786 = vpack.c.b16 %v3534, %v3471
        %v3787 = vpack.c.b16 %v3535, %v3472
        %v3788 = vpack.c.b16 %v3536, %v3473
        %v3789 = vpack.c.b16 %v3537, %v3474
        %v3790 = vpack.c.b16 %v3538, %v3475
        %v3791 = vpack.c.b16 %v3539, %v3476
        %v3792 = vpack.c.b16 %v3540, %v3477
        %v3793 = vpack.c.b16 %v3541, %v3478
        %v3794 = vpack.c.b16 %v3542, %v3479
        %v3795 = vpack.c.b16 %v3543, %v3480
        %v3796 = vpack.c.b16 %v3544, %v3481
        %v3797 = vpack.c.b16 %v3545, %v3482
        %v3798 = vpack.c.b16 %v3546, %v3483
        %v3799 = vpack.c.b16 %v3547, %v3484
        %v3800 = vpack.c.b16 %v3548, %v3485
        %v3801 = vpack.c.b16 %v3549, %v3486
        %v3802 = vpack.c.b16 %v3550, %v3487
        %v3803 = vpack.c.b16 %v3551, %v3488
        %v3804 = vpack.c.b16 %v3552, %v3489
        %v3805 = vpack.c.b16 %v3553, %v3490
        %v3806 = vpack.c.b16 %v3554, %v3491
        %v3807 = vpack.c.b16 %v3555, %v3492
        %v3808 = vpack.c.b16 %v3556, %v3493
        %v3809 = vpack.c.b16 %v3557, %v3494
        %v3810 = vpack.c.b16 %v3558, %v3495
        %v3811 = vpack.c.b16 %v3559, %v3496
        %v3812 = vpack.c.b16 %v3560, %v3497
        %v3813 = vpack.c.b16 %v3561, %v3498
        %v3814 = vpack.c.b16 %v3562, %v3499
        %v3815 = vpack.c.b16 %v3563, %v3500
        %v3816 = vpack.c.b16 %v3564, %v3501
        %v3817 = vpack.c.b16 %v3565, %v3502
        %v3818 = vpack.c.b16 %v3566, %v3503
        %v3819 = vpack.c.b16 %v3567, %v3504
        %v3820 = vpack.c.b16 %v3568, %v3505
        %v3821 = vpack.c.b16 %v3569, %v3506
        %v3822 = vpack.c.b16 %v3570, %v3507
        %v3823 = vpack.c.b16 %v3571, %v3508
        %v3824 = vpack.c.b16 %v3572, %v3509
        %v3825 = vpack.c.b16 %v3573, %v3510
        %v3826 = vpack.c.b16 %v3574, %v3511
        %v3827 = vpack.c.b16 %v3575, %v3512
        %v3828 = vpack.c.b16 %v3576, %v3513
        %v3829 = vpack.c.b16 %v3577, %v3514
        %v3830 = vpack.c.b16 %v3578, %v3515
        %v3831 = vpack.c.b16 %v3579, %v3516
        %v3832 = vpack.c.b16 %v3580, %v3517
        %v3833 = vpack.c.b16 %v3581, %v3518
        %vm4086 = vcmask 523264
        %v4088 = vsel %vm4086, %v2234, 0
        %4090 = vmatprep.subr.bf16.mxu0 %v3583
        %4091 = vmatpush1.bf16.msra.mxu0 %v3582
        %4092 = vmatprep.subr.bf16.mxu0 %v3646
        %4093 = vmatpush1.bf16.msra.mxu0 %v3645
        %4094 = vmatprep.subr.bf16.mxu0 %v3709
        %4095 = vmatpush1.bf16.msra.mxu0 %v3708
        %4096 = vmatprep.subr.bf16.mxu0 %v3772
        %4097 = vmatpush1.bf16.msra.mxu0 %v3771
        %4098 = vmatprep.subr.bf16.mxu0 0
        %4099 = vmatpush1.bf16.msra.mxu0 0
        %4100 = vmatprep.subr.bf16.mxu0 0
        %4101 = vmatpush1.bf16.msra.mxu0 0
        %4102 = vmatprep.subr.bf16.mxu0 0
        %4103 = vmatpush1.bf16.msra.mxu0 0
        %4104 = vmatprep.subr.bf16.mxu0 0
        %4105 = vmatpush1.bf16.msra.mxu0 0
        %4106 = vmatprep.subr.bf16.mxu0 0
        %4107 = vmatpush1.bf16.msra.mxu0 0
        %4108 = vmatprep.subr.bf16.mxu0 0
        %4109 = vmatpush1.bf16.msra.mxu0 0
        %4110 = vmatprep.subr.bf16.mxu0 0
        %4111 = vmatpush1.bf16.msra.mxu0 0
        %4112 = vmatprep.subr.bf16.mxu0 0
        %4113 = vmatpush1.bf16.msra.mxu0 0
        %4114 = vmatprep.subr.bf16.mxu0 0
        %4115 = vmatpush1.bf16.msra.mxu0 0
        %4116 = vmatprep.subr.bf16.mxu0 0
        %4117 = vmatpush1.bf16.msra.mxu0 0
        %4118 = vmatprep.subr.bf16.mxu0 0
        %4119 = vmatpush1.bf16.msra.mxu0 0
        %4120 = vmatprep.subr.bf16.mxu0 0
        %4121 = vmatpush1.bf16.msra.mxu0 0
        %4122 = vmatprep.mubr.bf16.mxu0 0
        %4123 = vmatmul.mubr.bf16.gmra.mrb[0].mxu0 %v4088
        %v4124 = vpop.f32.mrb[0].mxu0
        %v4125 = vadd.f32 %v2510, %v4124
        %v4126 = vpop.f32.mrb[0].mxu0
        %v4127 = vadd.f32 %v2514, %v4126
        %v4128 = vpop.f32.mrb[0].mxu0
        %v4129 = vpop.f32.mrb[0].mxu0
        %4130 = vdwg.mxu0
        %4131 = vmatprep.subr.bf16.mxu0 %v3585
        %4132 = vmatpush1.bf16.msra.mxu0 %v3584
        %4133 = vmatprep.subr.bf16.mxu0 %v3648
        %4134 = vmatpush1.bf16.msra.mxu0 %v3647
        %4135 = vmatprep.subr.bf16.mxu0 %v3711
        %4136 = vmatpush1.bf16.msra.mxu0 %v3710
        %4137 = vmatprep.subr.bf16.mxu0 %v3774
        %4138 = vmatpush1.bf16.msra.mxu0 %v3773
        %4139 = vmatprep.subr.bf16.mxu0 0
        %4140 = vmatpush1.bf16.msra.mxu0 0
        %4141 = vmatprep.subr.bf16.mxu0 0
        %4142 = vmatpush1.bf16.msra.mxu0 0
        %4143 = vmatprep.subr.bf16.mxu0 0
        %4144 = vmatpush1.bf16.msra.mxu0 0
        %4145 = vmatprep.subr.bf16.mxu0 0
        %4146 = vmatpush1.bf16.msra.mxu0 0
        %4147 = vmatprep.subr.bf16.mxu0 0
        %4148 = vmatpush1.bf16.msra.mxu0 0
        %4149 = vmatprep.subr.bf16.mxu0 0
        %4150 = vmatpush1.bf16.msra.mxu0 0
        %4151 = vmatprep.subr.bf16.mxu0 0
        %4152 = vmatpush1.bf16.msra.mxu0 0
        %4153 = vmatprep.subr.bf16.mxu0 0
        %4154 = vmatpush1.bf16.msra.mxu0 0
        %4155 = vmatprep.subr.bf16.mxu0 0
        %4156 = vmatpush1.bf16.msra.mxu0 0
        %4157 = vmatprep.subr.bf16.mxu0 0
        %4158 = vmatpush1.bf16.msra.mxu0 0
        %4159 = vmatprep.subr.bf16.mxu0 0
        %4160 = vmatpush1.bf16.msra.mxu0 0
        %4161 = vmatprep.subr.bf16.mxu0 0
        %4162 = vmatpush1.bf16.msra.mxu0 0
        %4163 = vmatprep.mubr.bf16.mxu0 0
        %4164 = vmatmul.mubr.bf16.gmra.mrb[0].mxu0 %v4088
        %v4165 = vpop.f32.mrb[0].mxu0
        %v4166 = vadd.f32 %v2518, %v4165
        %v4167 = vpop.f32.mrb[0].mxu0
        %v4168 = vadd.f32 %v2522, %v4167
        %v4169 = vpop.f32.mrb[0].mxu0
        %v4170 = vpop.f32.mrb[0].mxu0
        %4171 = vdwg.mxu0
        %4172 = vmatprep.subr.bf16.mxu0 %v3587
        %4173 = vmatpush1.bf16.msra.mxu0 %v3586
        %4174 = vmatprep.subr.bf16.mxu0 %v3650
        %4175 = vmatpush1.bf16.msra.mxu0 %v3649
        %4176 = vmatprep.subr.bf16.mxu0 %v3713
        %4177 = vmatpush1.bf16.msra.mxu0 %v3712
        %4178 = vmatprep.subr.bf16.mxu0 %v3776
        %4179 = vmatpush1.bf16.msra.mxu0 %v3775
        %4180 = vmatprep.subr.bf16.mxu0 0
        %4181 = vmatpush1.bf16.msra.mxu0 0
        %4182 = vmatprep.subr.bf16.mxu0 0
        %4183 = vmatpush1.bf16.msra.mxu0 0
        %4184 = vmatprep.subr.bf16.mxu0 0
        %4185 = vmatpush1.bf16.msra.mxu0 0
        %4186 = vmatprep.subr.bf16.mxu0 0
        %4187 = vmatpush1.bf16.msra.mxu0 0
        %4188 = vmatprep.subr.bf16.mxu0 0
        %4189 = vmatpush1.bf16.msra.mxu0 0
        %4190 = vmatprep.subr.bf16.mxu0 0
        %4191 = vmatpush1.bf16.msra.mxu0 0
        %4192 = vmatprep.subr.bf16.mxu0 0
        %4193 = vmatpush1.bf16.msra.mxu0 0
        %4194 = vmatprep.subr.bf16.mxu0 0
        %4195 = vmatpush1.bf16.msra.mxu0 0
        %4196 = vmatprep.subr.bf16.mxu0 0
        %4197 = vmatpush1.bf16.msra.mxu0 0
        %4198 = vmatprep.subr.bf16.mxu0 0
        %4199 = vmatpush1.bf16.msra.mxu0 0
        %4200 = vmatprep.subr.bf16.mxu0 0
        %4201 = vmatpush1.bf16.msra.mxu0 0
        %4202 = vmatprep.subr.bf16.mxu0 0
        %4203 = vmatpush1.bf16.msra.mxu0 0
        %4204 = vmatprep.mubr.bf16.mxu0 0
        %4205 = vmatmul.mubr.bf16.gmra.mrb[0].mxu0 %v4088
        %v4206 = vpop.f32.mrb[0].mxu0
        %v4207 = vadd.f32 %v2526, %v4206
        %v4208 = vpop.f32.mrb[0].mxu0
        %v4209 = vadd.f32 %v2530, %v4208
        %v4210 = vpop.f32.mrb[0].mxu0
        %v4211 = vpop.f32.mrb[0].mxu0
        %4212 = vdwg.mxu0
        %4213 = vmatprep.subr.bf16.mxu0 %v3589
        %4214 = vmatpush1.bf16.msra.mxu0 %v3588
        %4215 = vmatprep.subr.bf16.mxu0 %v3652
        %4216 = vmatpush1.bf16.msra.mxu0 %v3651
        %4217 = vmatprep.subr.bf16.mxu0 %v3715
        %4218 = vmatpush1.bf16.msra.mxu0 %v3714
        %4219 = vmatprep.subr.bf16.mxu0 %v3778
        %4220 = vmatpush1.bf16.msra.mxu0 %v3777
        %4221 = vmatprep.subr.bf16.mxu0 0
        %4222 = vmatpush1.bf16.msra.mxu0 0
        %4223 = vmatprep.subr.bf16.mxu0 0
        %4224 = vmatpush1.bf16.msra.mxu0 0
        %4225 = vmatprep.subr.bf16.mxu0 0
        %4226 = vmatpush1.bf16.msra.mxu0 0
        %4227 = vmatprep.subr.bf16.mxu0 0
        %4228 = vmatpush1.bf16.msra.mxu0 0
        %4229 = vmatprep.subr.bf16.mxu0 0
        %4230 = vmatpush1.bf16.msra.mxu0 0
        %4231 = vmatprep.subr.bf16.mxu0 0
        %4232 = vmatpush1.bf16.msra.mxu0 0
        %4233 = vmatprep.subr.bf16.mxu0 0
        %4234 = vmatpush1.bf16.msra.mxu0 0
        %4235 = vmatprep.subr.bf16.mxu0 0
        %4236 = vmatpush1.bf16.msra.mxu0 0
        %4237 = vmatprep.subr.bf16.mxu0 0
        %4238 = vmatpush1.bf16.msra.mxu0 0
        %4239 = vmatprep.subr.bf16.mxu0 0
        %4240 = vmatpush1.bf16.msra.mxu0 0
        %4241 = vmatprep.subr.bf16.mxu0 0
        %4242 = vmatpush1.bf16.msra.mxu0 0
        %4243 = vmatprep.subr.bf16.mxu0 0
        %4244 = vmatpush1.bf16.msra.mxu0 0
        %4245 = vmatprep.mubr.bf16.mxu0 0
        %4246 = vmatmul.mubr.bf16.gmra.mrb[0].mxu0 %v4088
        %v4247 = vpop.f32.mrb[0].mxu0
        %v4248 = vadd.f32 %v2534, %v4247
        %v4249 = vpop.f32.mrb[0].mxu0
        %v4250 = vadd.f32 %v2538, %v4249
        %v4251 = vpop.f32.mrb[0].mxu0
        %v4252 = vpop.f32.mrb[0].mxu0
        %4253 = vdwg.mxu0
        %4254 = vmatprep.subr.bf16.mxu0 %v3591
        %4255 = vmatpush1.bf16.msra.mxu0 %v3590
        %4256 = vmatprep.subr.bf16.mxu0 %v3654
        %4257 = vmatpush1.bf16.msra.mxu0 %v3653
        %4258 = vmatprep.subr.bf16.mxu0 %v3717
        %4259 = vmatpush1.bf16.msra.mxu0 %v3716
        %4260 = vmatprep.subr.bf16.mxu0 %v3780
        %4261 = vmatpush1.bf16.msra.mxu0 %v3779
        %4262 = vmatprep.subr.bf16.mxu0 0
        %4263 = vmatpush1.bf16.msra.mxu0 0
        %4264 = vmatprep.subr.bf16.mxu0 0
        %4265 = vmatpush1.bf16.msra.mxu0 0
        %4266 = vmatprep.subr.bf16.mxu0 0
        %4267 = vmatpush1.bf16.msra.mxu0 0
        %4268 = vmatprep.subr.bf16.mxu0 0
        %4269 = vmatpush1.bf16.msra.mxu0 0
        %4270 = vmatprep.subr.bf16.mxu0 0
        %4271 = vmatpush1.bf16.msra.mxu0 0
        %4272 = vmatprep.subr.bf16.mxu0 0
        %4273 = vmatpush1.bf16.msra.mxu0 0
        %4274 = vmatprep.subr.bf16.mxu0 0
        %4275 = vmatpush1.bf16.msra.mxu0 0
        %4276 = vmatprep.subr.bf16.mxu0 0
        %4277 = vmatpush1.bf16.msra.mxu0 0
        %4278 = vmatprep.subr.bf16.mxu0 0
        %4279 = vmatpush1.bf16.msra.mxu0 0
        %4280 = vmatprep.subr.bf16.mxu0 0
        %4281 = vmatpush1.bf16.msra.mxu0 0
        %4282 = vmatprep.subr.bf16.mxu0 0
        %4283 = vmatpush1.bf16.msra.mxu0 0
        %4284 = vmatprep.subr.bf16.mxu0 0
        %4285 = vmatpush1.bf16.msra.mxu0 0
        %4286 = vmatprep.mubr.bf16.mxu0 0
        %4287 = vmatmul.mubr.bf16.gmra.mrb[0].mxu0 %v4088
        %v4288 = vpop.f32.mrb[0].mxu0
        %v4289 = vadd.f32 %v2542, %v4288
        %v4290 = vpop.f32.mrb[0].mxu0
        %v4291 = vadd.f32 %v2546, %v4290
        %v4292 = vpop.f32.mrb[0].mxu0
        %v4293 = vpop.f32.mrb[0].mxu0
        %4294 = vdwg.mxu0
        %4295 = vmatprep.subr.bf16.mxu0 %v3593
        %4296 = vmatpush1.bf16.msra.mxu0 %v3592
        %4297 = vmatprep.subr.bf16.mxu0 %v3656
        %4298 = vmatpush1.bf16.msra.mxu0 %v3655
        %4299 = vmatprep.subr.bf16.mxu0 %v3719
        %4300 = vmatpush1.bf16.msra.mxu0 %v3718
        %4301 = vmatprep.subr.bf16.mxu0 %v3782
        %4302 = vmatpush1.bf16.msra.mxu0 %v3781
        %4303 = vmatprep.subr.bf16.mxu0 0
        %4304 = vmatpush1.bf16.msra.mxu0 0
        %4305 = vmatprep.subr.bf16.mxu0 0
        %4306 = vmatpush1.bf16.msra.mxu0 0
        %4307 = vmatprep.subr.bf16.mxu0 0
        %4308 = vmatpush1.bf16.msra.mxu0 0
        %4309 = vmatprep.subr.bf16.mxu0 0
        %4310 = vmatpush1.bf16.msra.mxu0 0
        %4311 = vmatprep.subr.bf16.mxu0 0
        %4312 = vmatpush1.bf16.msra.mxu0 0
        %4313 = vmatprep.subr.bf16.mxu0 0
        %4314 = vmatpush1.bf16.msra.mxu0 0
        %4315 = vmatprep.subr.bf16.mxu0 0
        %4316 = vmatpush1.bf16.msra.mxu0 0
        %4317 = vmatprep.subr.bf16.mxu0 0
        %4318 = vmatpush1.bf16.msra.mxu0 0
        %4319 = vmatprep.subr.bf16.mxu0 0
        %4320 = vmatpush1.bf16.msra.mxu0 0
        %4321 = vmatprep.subr.bf16.mxu0 0
        %4322 = vmatpush1.bf16.msra.mxu0 0
        %4323 = vmatprep.subr.bf16.mxu0 0
        %4324 = vmatpush1.bf16.msra.mxu0 0
        %4325 = vmatprep.subr.bf16.mxu0 0
        %4326 = vmatpush1.bf16.msra.mxu0 0
        %4327 = vmatprep.mubr.bf16.mxu0 0
        %4328 = vmatmul.mubr.bf16.gmra.mrb[0].mxu0 %v4088
        %v4329 = vpop.f32.mrb[0].mxu0
        %v4330 = vadd.f32 %v2550, %v4329
        %v4331 = vpop.f32.mrb[0].mxu0
        %v4332 = vadd.f32 %v2554, %v4331
        %v4333 = vpop.f32.mrb[0].mxu0
        %v4334 = vpop.f32.mrb[0].mxu0
        %4335 = vdwg.mxu0
        %4336 = vmatprep.subr.bf16.mxu0 %v3595
        %4337 = vmatpush1.bf16.msra.mxu0 %v3594
        %4338 = vmatprep.subr.bf16.mxu0 %v3658
        %4339 = vmatpush1.bf16.msra.mxu0 %v3657
        %4340 = vmatprep.subr.bf16.mxu0 %v3721
        %4341 = vmatpush1.bf16.msra.mxu0 %v3720
        %4342 = vmatprep.subr.bf16.mxu0 %v3784
        %4343 = vmatpush1.bf16.msra.mxu0 %v3783
        %4344 = vmatprep.subr.bf16.mxu0 0
        %4345 = vmatpush1.bf16.msra.mxu0 0
        %4346 = vmatprep.subr.bf16.mxu0 0
        %4347 = vmatpush1.bf16.msra.mxu0 0
        %4348 = vmatprep.subr.bf16.mxu0 0
        %4349 = vmatpush1.bf16.msra.mxu0 0
        %4350 = vmatprep.subr.bf16.mxu0 0
        %4351 = vmatpush1.bf16.msra.mxu0 0
        %4352 = vmatprep.subr.bf16.mxu0 0
        %4353 = vmatpush1.bf16.msra.mxu0 0
        %4354 = vmatprep.subr.bf16.mxu0 0
        %4355 = vmatpush1.bf16.msra.mxu0 0
        %4356 = vmatprep.subr.bf16.mxu0 0
        %4357 = vmatpush1.bf16.msra.mxu0 0
        %4358 = vmatprep.subr.bf16.mxu0 0
        %4359 = vmatpush1.bf16.msra.mxu0 0
        %4360 = vmatprep.subr.bf16.mxu0 0
        %4361 = vmatpush1.bf16.msra.mxu0 0
        %4362 = vmatprep.subr.bf16.mxu0 0
        %4363 = vmatpush1.bf16.msra.mxu0 0
        %4364 = vmatprep.subr.bf16.mxu0 0
        %4365 = vmatpush1.bf16.msra.mxu0 0
        %4366 = vmatprep.subr.bf16.mxu0 0
        %4367 = vmatpush1.bf16.msra.mxu0 0
        %4368 = vmatprep.mubr.bf16.mxu0 0
        %4369 = vmatmul.mubr.bf16.gmra.mrb[0].mxu0 %v4088
        %v4370 = vpop.f32.mrb[0].mxu0
        %v4371 = vadd.f32 %v2558, %v4370
        %v4372 = vpop.f32.mrb[0].mxu0
        %v4373 = vadd.f32 %v2562, %v4372
        %v4374 = vpop.f32.mrb[0].mxu0
        %v4375 = vpop.f32.mrb[0].mxu0
        %4376 = vdwg.mxu0
        %4377 = vmatprep.subr.bf16.mxu0 %v3597
        %4378 = vmatpush1.bf16.msra.mxu0 %v3596
        %4379 = vmatprep.subr.bf16.mxu0 %v3660
        %4380 = vmatpush1.bf16.msra.mxu0 %v3659
        %4381 = vmatprep.subr.bf16.mxu0 %v3723
        %4382 = vmatpush1.bf16.msra.mxu0 %v3722
        %4383 = vmatprep.subr.bf16.mxu0 %v3786
        %4384 = vmatpush1.bf16.msra.mxu0 %v3785
        %4385 = vmatprep.subr.bf16.mxu0 0
        %4386 = vmatpush1.bf16.msra.mxu0 0
        %4387 = vmatprep.subr.bf16.mxu0 0
        %4388 = vmatpush1.bf16.msra.mxu0 0
        %4389 = vmatprep.subr.bf16.mxu0 0
        %4390 = vmatpush1.bf16.msra.mxu0 0
        %4391 = vmatprep.subr.bf16.mxu0 0
        %4392 = vmatpush1.bf16.msra.mxu0 0
        %4393 = vmatprep.subr.bf16.mxu0 0
        %4394 = vmatpush1.bf16.msra.mxu0 0
        %4395 = vmatprep.subr.bf16.mxu0 0
        %4396 = vmatpush1.bf16.msra.mxu0 0
        %4397 = vmatprep.subr.bf16.mxu0 0
        %4398 = vmatpush1.bf16.msra.mxu0 0
        %4399 = vmatprep.subr.bf16.mxu0 0
        %4400 = vmatpush1.bf16.msra.mxu0 0
        %4401 = vmatprep.subr.bf16.mxu0 0
        %4402 = vmatpush1.bf16.msra.mxu0 0
        %4403 = vmatprep.subr.bf16.mxu0 0
        %4404 = vmatpush1.bf16.msra.mxu0 0
        %4405 = vmatprep.subr.bf16.mxu0 0
        %4406 = vmatpush1.bf16.msra.mxu0 0
        %4407 = vmatprep.subr.bf16.mxu0 0
        %4408 = vmatpush1.bf16.msra.mxu0 0
        %4409 = vmatprep.mubr.bf16.mxu0 0
        %4410 = vmatmul.mubr.bf16.gmra.mrb[0].mxu0 %v4088
        %v4411 = vpop.f32.mrb[0].mxu0
        %v4412 = vadd.f32 %v2566, %v4411
        %v4413 = vpop.f32.mrb[0].mxu0
        %v4414 = vadd.f32 %v2570, %v4413
        %v4415 = vpop.f32.mrb[0].mxu0
        %v4416 = vpop.f32.mrb[0].mxu0
        %4417 = vdwg.mxu0
        %4418 = vmatprep.subr.bf16.mxu0 %v3599
        %4419 = vmatpush1.bf16.msra.mxu0 %v3598
        %4420 = vmatprep.subr.bf16.mxu0 %v3662
        %4421 = vmatpush1.bf16.msra.mxu0 %v3661
        %4422 = vmatprep.subr.bf16.mxu0 %v3725
        %4423 = vmatpush1.bf16.msra.mxu0 %v3724
        %4424 = vmatprep.subr.bf16.mxu0 %v3788
        %4425 = vmatpush1.bf16.msra.mxu0 %v3787
        %4426 = vmatprep.subr.bf16.mxu0 0
        %4427 = vmatpush1.bf16.msra.mxu0 0
        %4428 = vmatprep.subr.bf16.mxu0 0
        %4429 = vmatpush1.bf16.msra.mxu0 0
        %4430 = vmatprep.subr.bf16.mxu0 0
        %4431 = vmatpush1.bf16.msra.mxu0 0
        %4432 = vmatprep.subr.bf16.mxu0 0
        %4433 = vmatpush1.bf16.msra.mxu0 0
        %4434 = vmatprep.subr.bf16.mxu0 0
        %4435 = vmatpush1.bf16.msra.mxu0 0
        %4436 = vmatprep.subr.bf16.mxu0 0
        %4437 = vmatpush1.bf16.msra.mxu0 0
        %4438 = vmatprep.subr.bf16.mxu0 0
        %4439 = vmatpush1.bf16.msra.mxu0 0
        %4440 = vmatprep.subr.bf16.mxu0 0
        %4441 = vmatpush1.bf16.msra.mxu0 0
        %4442 = vmatprep.subr.bf16.mxu0 0
        %4443 = vmatpush1.bf16.msra.mxu0 0
        %4444 = vmatprep.subr.bf16.mxu0 0
        %4445 = vmatpush1.bf16.msra.mxu0 0
        %4446 = vmatprep.subr.bf16.mxu0 0
        %4447 = vmatpush1.bf16.msra.mxu0 0
        %4448 = vmatprep.subr.bf16.mxu0 0
        %4449 = vmatpush1.bf16.msra.mxu0 0
        %4450 = vmatprep.mubr.bf16.mxu0 0
        %4451 = vmatmul.mubr.bf16.gmra.mrb[0].mxu0 %v4088
        %v4452 = vpop.f32.mrb[0].mxu0
        %v4453 = vadd.f32 %v2574, %v4452
        %v4454 = vpop.f32.mrb[0].mxu0
        %v4455 = vadd.f32 %v2578, %v4454
        %v4456 = vpop.f32.mrb[0].mxu0
        %v4457 = vpop.f32.mrb[0].mxu0
        %4458 = vdwg.mxu0
        %4459 = vmatprep.subr.bf16.mxu0 %v3601
        %4460 = vmatpush1.bf16.msra.mxu0 %v3600
        %4461 = vmatprep.subr.bf16.mxu0 %v3664
        %4462 = vmatpush1.bf16.msra.mxu0 %v3663
        %4463 = vmatprep.subr.bf16.mxu0 %v3727
        %4464 = vmatpush1.bf16.msra.mxu0 %v3726
        %4465 = vmatprep.subr.bf16.mxu0 %v3790
        %4466 = vmatpush1.bf16.msra.mxu0 %v3789
        %4467 = vmatprep.subr.bf16.mxu0 0
        %4468 = vmatpush1.bf16.msra.mxu0 0
        %4469 = vmatprep.subr.bf16.mxu0 0
        %4470 = vmatpush1.bf16.msra.mxu0 0
        %4471 = vmatprep.subr.bf16.mxu0 0
        %4472 = vmatpush1.bf16.msra.mxu0 0
        %4473 = vmatprep.subr.bf16.mxu0 0
        %4474 = vmatpush1.bf16.msra.mxu0 0
        %4475 = vmatprep.subr.bf16.mxu0 0
        %4476 = vmatpush1.bf16.msra.mxu0 0
        %4477 = vmatprep.subr.bf16.mxu0 0
        %4478 = vmatpush1.bf16.msra.mxu0 0
        %4479 = vmatprep.subr.bf16.mxu0 0
        %4480 = vmatpush1.bf16.msra.mxu0 0
        %4481 = vmatprep.subr.bf16.mxu0 0
        %4482 = vmatpush1.bf16.msra.mxu0 0
        %4483 = vmatprep.subr.bf16.mxu0 0
        %4484 = vmatpush1.bf16.msra.mxu0 0
        %4485 = vmatprep.subr.bf16.mxu0 0
        %4486 = vmatpush1.bf16.msra.mxu0 0
        %4487 = vmatprep.subr.bf16.mxu0 0
        %4488 = vmatpush1.bf16.msra.mxu0 0
        %4489 = vmatprep.subr.bf16.mxu0 0
        %4490 = vmatpush1.bf16.msra.mxu0 0
        %4491 = vmatprep.mubr.bf16.mxu0 0
        %4492 = vmatmul.mubr.bf16.gmra.mrb[0].mxu0 %v4088
        %v4493 = vpop.f32.mrb[0].mxu0
        %v4494 = vadd.f32 %v2582, %v4493
        %v4495 = vpop.f32.mrb[0].mxu0
        %v4496 = vadd.f32 %v2586, %v4495
        %v4497 = vpop.f32.mrb[0].mxu0
        %v4498 = vpop.f32.mrb[0].mxu0
        %4499 = vdwg.mxu0
        %4500 = vmatprep.subr.bf16.mxu0 %v3603
        %4501 = vmatpush1.bf16.msra.mxu0 %v3602
        %4502 = vmatprep.subr.bf16.mxu0 %v3666
        %4503 = vmatpush1.bf16.msra.mxu0 %v3665
        %4504 = vmatprep.subr.bf16.mxu0 %v3729
        %4505 = vmatpush1.bf16.msra.mxu0 %v3728
        %4506 = vmatprep.subr.bf16.mxu0 %v3792
        %4507 = vmatpush1.bf16.msra.mxu0 %v3791
        %4508 = vmatprep.subr.bf16.mxu0 0
        %4509 = vmatpush1.bf16.msra.mxu0 0
        %4510 = vmatprep.subr.bf16.mxu0 0
        %4511 = vmatpush1.bf16.msra.mxu0 0
        %4512 = vmatprep.subr.bf16.mxu0 0
        %4513 = vmatpush1.bf16.msra.mxu0 0
        %4514 = vmatprep.subr.bf16.mxu0 0
        %4515 = vmatpush1.bf16.msra.mxu0 0
        %4516 = vmatprep.subr.bf16.mxu0 0
        %4517 = vmatpush1.bf16.msra.mxu0 0
        %4518 = vmatprep.subr.bf16.mxu0 0
        %4519 = vmatpush1.bf16.msra.mxu0 0
        %4520 = vmatprep.subr.bf16.mxu0 0
        %4521 = vmatpush1.bf16.msra.mxu0 0
        %4522 = vmatprep.subr.bf16.mxu0 0
        %4523 = vmatpush1.bf16.msra.mxu0 0
        %4524 = vmatprep.subr.bf16.mxu0 0
        %4525 = vmatpush1.bf16.msra.mxu0 0
        %4526 = vmatprep.subr.bf16.mxu0 0
        %4527 = vmatpush1.bf16.msra.mxu0 0
        %4528 = vmatprep.subr.bf16.mxu0 0
        %4529 = vmatpush1.bf16.msra.mxu0 0
        %4530 = vmatprep.subr.bf16.mxu0 0
        %4531 = vmatpush1.bf16.msra.mxu0 0
        %4532 = vmatprep.mubr.bf16.mxu0 0
        %4533 = vmatmul.mubr.bf16.gmra.mrb[0].mxu0 %v4088
        %v4534 = vpop.f32.mrb[0].mxu0
        %v4535 = vadd.f32 %v2590, %v4534
        %v4536 = vpop.f32.mrb[0].mxu0
        %v4537 = vadd.f32 %v2594, %v4536
        %v4538 = vpop.f32.mrb[0].mxu0
        %v4539 = vpop.f32.mrb[0].mxu0
        %4540 = vdwg.mxu0
        %4541 = vmatprep.subr.bf16.mxu0 %v3605
        %4542 = vmatpush1.bf16.msra.mxu0 %v3604
        %4543 = vmatprep.subr.bf16.mxu0 %v3668
        %4544 = vmatpush1.bf16.msra.mxu0 %v3667
        %4545 = vmatprep.subr.bf16.mxu0 %v3731
        %4546 = vmatpush1.bf16.msra.mxu0 %v3730
        %4547 = vmatprep.subr.bf16.mxu0 %v3794
        %4548 = vmatpush1.bf16.msra.mxu0 %v3793
        %4549 = vmatprep.subr.bf16.mxu0 0
        %4550 = vmatpush1.bf16.msra.mxu0 0
        %4551 = vmatprep.subr.bf16.mxu0 0
        %4552 = vmatpush1.bf16.msra.mxu0 0
        %4553 = vmatprep.subr.bf16.mxu0 0
        %4554 = vmatpush1.bf16.msra.mxu0 0
        %4555 = vmatprep.subr.bf16.mxu0 0
        %4556 = vmatpush1.bf16.msra.mxu0 0
        %4557 = vmatprep.subr.bf16.mxu0 0
        %4558 = vmatpush1.bf16.msra.mxu0 0
        %4559 = vmatprep.subr.bf16.mxu0 0
        %4560 = vmatpush1.bf16.msra.mxu0 0
        %4561 = vmatprep.subr.bf16.mxu0 0
        %4562 = vmatpush1.bf16.msra.mxu0 0
        %4563 = vmatprep.subr.bf16.mxu0 0
        %4564 = vmatpush1.bf16.msra.mxu0 0
        %4565 = vmatprep.subr.bf16.mxu0 0
        %4566 = vmatpush1.bf16.msra.mxu0 0
        %4567 = vmatprep.subr.bf16.mxu0 0
        %4568 = vmatpush1.bf16.msra.mxu0 0
        %4569 = vmatprep.subr.bf16.mxu0 0
        %4570 = vmatpush1.bf16.msra.mxu0 0
        %4571 = vmatprep.subr.bf16.mxu0 0
        %4572 = vmatpush1.bf16.msra.mxu0 0
        %4573 = vmatprep.mubr.bf16.mxu0 0
        %4574 = vmatmul.mubr.bf16.gmra.mrb[0].mxu0 %v4088
        %v4575 = vpop.f32.mrb[0].mxu0
        %v4576 = vadd.f32 %v2598, %v4575
        %v4577 = vpop.f32.mrb[0].mxu0
        %v4578 = vadd.f32 %v2602, %v4577
        %v4579 = vpop.f32.mrb[0].mxu0
        %v4580 = vpop.f32.mrb[0].mxu0
        %4581 = vdwg.mxu0
        %4582 = vmatprep.subr.bf16.mxu0 %v3607
        %4583 = vmatpush1.bf16.msra.mxu0 %v3606
        %4584 = vmatprep.subr.bf16.mxu0 %v3670
        %4585 = vmatpush1.bf16.msra.mxu0 %v3669
        %4586 = vmatprep.subr.bf16.mxu0 %v3733
        %4587 = vmatpush1.bf16.msra.mxu0 %v3732
        %4588 = vmatprep.subr.bf16.mxu0 %v3796
        %4589 = vmatpush1.bf16.msra.mxu0 %v3795
        %4590 = vmatprep.subr.bf16.mxu0 0
        %4591 = vmatpush1.bf16.msra.mxu0 0
        %4592 = vmatprep.subr.bf16.mxu0 0
        %4593 = vmatpush1.bf16.msra.mxu0 0
        %4594 = vmatprep.subr.bf16.mxu0 0
        %4595 = vmatpush1.bf16.msra.mxu0 0
        %4596 = vmatprep.subr.bf16.mxu0 0
        %4597 = vmatpush1.bf16.msra.mxu0 0
        %4598 = vmatprep.subr.bf16.mxu0 0
        %4599 = vmatpush1.bf16.msra.mxu0 0
        %4600 = vmatprep.subr.bf16.mxu0 0
        %4601 = vmatpush1.bf16.msra.mxu0 0
        %4602 = vmatprep.subr.bf16.mxu0 0
        %4603 = vmatpush1.bf16.msra.mxu0 0
        %4604 = vmatprep.subr.bf16.mxu0 0
        %4605 = vmatpush1.bf16.msra.mxu0 0
        %4606 = vmatprep.subr.bf16.mxu0 0
        %4607 = vmatpush1.bf16.msra.mxu0 0
        %4608 = vmatprep.subr.bf16.mxu0 0
        %4609 = vmatpush1.bf16.msra.mxu0 0
        %4610 = vmatprep.subr.bf16.mxu0 0
        %4611 = vmatpush1.bf16.msra.mxu0 0
        %4612 = vmatprep.subr.bf16.mxu0 0
        %4613 = vmatpush1.bf16.msra.mxu0 0
        %4614 = vmatprep.mubr.bf16.mxu0 0
        %4615 = vmatmul.mubr.bf16.gmra.mrb[0].mxu0 %v4088
        %v4616 = vpop.f32.mrb[0].mxu0
        %v4617 = vadd.f32 %v2606, %v4616
        %v4618 = vpop.f32.mrb[0].mxu0
        %v4619 = vadd.f32 %v2610, %v4618
        %v4620 = vpop.f32.mrb[0].mxu0
        %v4621 = vpop.f32.mrb[0].mxu0
        %4622 = vdwg.mxu0
        %4623 = vmatprep.subr.bf16.mxu0 %v3609
        %4624 = vmatpush1.bf16.msra.mxu0 %v3608
        %4625 = vmatprep.subr.bf16.mxu0 %v3672
        %4626 = vmatpush1.bf16.msra.mxu0 %v3671
        %4627 = vmatprep.subr.bf16.mxu0 %v3735
        %4628 = vmatpush1.bf16.msra.mxu0 %v3734
        %4629 = vmatprep.subr.bf16.mxu0 %v3798
        %4630 = vmatpush1.bf16.msra.mxu0 %v3797
        %4631 = vmatprep.subr.bf16.mxu0 0
        %4632 = vmatpush1.bf16.msra.mxu0 0
        %4633 = vmatprep.subr.bf16.mxu0 0
        %4634 = vmatpush1.bf16.msra.mxu0 0
        %4635 = vmatprep.subr.bf16.mxu0 0
        %4636 = vmatpush1.bf16.msra.mxu0 0
        %4637 = vmatprep.subr.bf16.mxu0 0
        %4638 = vmatpush1.bf16.msra.mxu0 0
        %4639 = vmatprep.subr.bf16.mxu0 0
        %4640 = vmatpush1.bf16.msra.mxu0 0
        %4641 = vmatprep.subr.bf16.mxu0 0
        %4642 = vmatpush1.bf16.msra.mxu0 0
        %4643 = vmatprep.subr.bf16.mxu0 0
        %4644 = vmatpush1.bf16.msra.mxu0 0
        %4645 = vmatprep.subr.bf16.mxu0 0
        %4646 = vmatpush1.bf16.msra.mxu0 0
        %4647 = vmatprep.subr.bf16.mxu0 0
        %4648 = vmatpush1.bf16.msra.mxu0 0
        %4649 = vmatprep.subr.bf16.mxu0 0
        %4650 = vmatpush1.bf16.msra.mxu0 0
        %4651 = vmatprep.subr.bf16.mxu0 0
        %4652 = vmatpush1.bf16.msra.mxu0 0
        %4653 = vmatprep.subr.bf16.mxu0 0
        %4654 = vmatpush1.bf16.msra.mxu0 0
        %4655 = vmatprep.mubr.bf16.mxu0 0
        %4656 = vmatmul.mubr.bf16.gmra.mrb[0].mxu0 %v4088
        %v4657 = vpop.f32.mrb[0].mxu0
        %v4658 = vadd.f32 %v2614, %v4657
        %v4659 = vpop.f32.mrb[0].mxu0
        %v4660 = vadd.f32 %v2618, %v4659
        %v4661 = vpop.f32.mrb[0].mxu0
        %v4662 = vpop.f32.mrb[0].mxu0
        %4663 = vdwg.mxu0
        %4664 = vmatprep.subr.bf16.mxu0 %v3611
        %4665 = vmatpush1.bf16.msra.mxu0 %v3610
        %4666 = vmatprep.subr.bf16.mxu0 %v3674
        %4667 = vmatpush1.bf16.msra.mxu0 %v3673
        %4668 = vmatprep.subr.bf16.mxu0 %v3737
        %4669 = vmatpush1.bf16.msra.mxu0 %v3736
        %4670 = vmatprep.subr.bf16.mxu0 %v3800
        %4671 = vmatpush1.bf16.msra.mxu0 %v3799
        %4672 = vmatprep.subr.bf16.mxu0 0
        %4673 = vmatpush1.bf16.msra.mxu0 0
        %4674 = vmatprep.subr.bf16.mxu0 0
        %4675 = vmatpush1.bf16.msra.mxu0 0
        %4676 = vmatprep.subr.bf16.mxu0 0
        %4677 = vmatpush1.bf16.msra.mxu0 0
        %4678 = vmatprep.subr.bf16.mxu0 0
        %4679 = vmatpush1.bf16.msra.mxu0 0
        %4680 = vmatprep.subr.bf16.mxu0 0
        %4681 = vmatpush1.bf16.msra.mxu0 0
        %4682 = vmatprep.subr.bf16.mxu0 0
        %4683 = vmatpush1.bf16.msra.mxu0 0
        %4684 = vmatprep.subr.bf16.mxu0 0
        %4685 = vmatpush1.bf16.msra.mxu0 0
        %4686 = vmatprep.subr.bf16.mxu0 0
        %4687 = vmatpush1.bf16.msra.mxu0 0
        %4688 = vmatprep.subr.bf16.mxu0 0
        %4689 = vmatpush1.bf16.msra.mxu0 0
        %4690 = vmatprep.subr.bf16.mxu0 0
        %4691 = vmatpush1.bf16.msra.mxu0 0
        %4692 = vmatprep.subr.bf16.mxu0 0
        %4693 = vmatpush1.bf16.msra.mxu0 0
        %4694 = vmatprep.subr.bf16.mxu0 0
        %4695 = vmatpush1.bf16.msra.mxu0 0
        %4696 = vmatprep.mubr.bf16.mxu0 0
        %4697 = vmatmul.mubr.bf16.gmra.mrb[0].mxu0 %v4088
        %v4698 = vpop.f32.mrb[0].mxu0
        %v4699 = vadd.f32 %v2622, %v4698
        %v4700 = vpop.f32.mrb[0].mxu0
        %v4701 = vadd.f32 %v2626, %v4700
        %v4702 = vpop.f32.mrb[0].mxu0
        %v4703 = vpop.f32.mrb[0].mxu0
        %4704 = vdwg.mxu0
        %4705 = vmatprep.subr.bf16.mxu0 %v3613
        %4706 = vmatpush1.bf16.msra.mxu0 %v3612
        %4707 = vmatprep.subr.bf16.mxu0 %v3676
        %4708 = vmatpush1.bf16.msra.mxu0 %v3675
        %4709 = vmatprep.subr.bf16.mxu0 %v3739
        %4710 = vmatpush1.bf16.msra.mxu0 %v3738
        %4711 = vmatprep.subr.bf16.mxu0 %v3802
        %4712 = vmatpush1.bf16.msra.mxu0 %v3801
        %4713 = vmatprep.subr.bf16.mxu0 0
        %4714 = vmatpush1.bf16.msra.mxu0 0
        %4715 = vmatprep.subr.bf16.mxu0 0
        %4716 = vmatpush1.bf16.msra.mxu0 0
        %4717 = vmatprep.subr.bf16.mxu0 0
        %4718 = vmatpush1.bf16.msra.mxu0 0
        %4719 = vmatprep.subr.bf16.mxu0 0
        %4720 = vmatpush1.bf16.msra.mxu0 0
        %4721 = vmatprep.subr.bf16.mxu0 0
        %4722 = vmatpush1.bf16.msra.mxu0 0
        %4723 = vmatprep.subr.bf16.mxu0 0
        %4724 = vmatpush1.bf16.msra.mxu0 0
        %4725 = vmatprep.subr.bf16.mxu0 0
        %4726 = vmatpush1.bf16.msra.mxu0 0
        %4727 = vmatprep.subr.bf16.mxu0 0
        %4728 = vmatpush1.bf16.msra.mxu0 0
        %4729 = vmatprep.subr.bf16.mxu0 0
        %4730 = vmatpush1.bf16.msra.mxu0 0
        %4731 = vmatprep.subr.bf16.mxu0 0
        %4732 = vmatpush1.bf16.msra.mxu0 0
        %4733 = vmatprep.subr.bf16.mxu0 0
        %4734 = vmatpush1.bf16.msra.mxu0 0
        %4735 = vmatprep.subr.bf16.mxu0 0
        %4736 = vmatpush1.bf16.msra.mxu0 0
        %4737 = vmatprep.mubr.bf16.mxu0 0
        %4738 = vmatmul.mubr.bf16.gmra.mrb[0].mxu0 %v4088
        %v4739 = vpop.f32.mrb[0].mxu0
        %v4740 = vadd.f32 %v2630, %v4739
        %v4741 = vpop.f32.mrb[0].mxu0
        %v4742 = vadd.f32 %v2634, %v4741
        %v4743 = vpop.f32.mrb[0].mxu0
        %v4744 = vpop.f32.mrb[0].mxu0
        %4745 = vdwg.mxu0
        %4746 = vmatprep.subr.bf16.mxu0 %v3615
        %4747 = vmatpush1.bf16.msra.mxu0 %v3614
        %4748 = vmatprep.subr.bf16.mxu0 %v3678
        %4749 = vmatpush1.bf16.msra.mxu0 %v3677
        %4750 = vmatprep.subr.bf16.mxu0 %v3741
        %4751 = vmatpush1.bf16.msra.mxu0 %v3740
        %4752 = vmatprep.subr.bf16.mxu0 %v3804
        %4753 = vmatpush1.bf16.msra.mxu0 %v3803
        %4754 = vmatprep.subr.bf16.mxu0 0
        %4755 = vmatpush1.bf16.msra.mxu0 0
        %4756 = vmatprep.subr.bf16.mxu0 0
        %4757 = vmatpush1.bf16.msra.mxu0 0
        %4758 = vmatprep.subr.bf16.mxu0 0
        %4759 = vmatpush1.bf16.msra.mxu0 0
        %4760 = vmatprep.subr.bf16.mxu0 0
        %4761 = vmatpush1.bf16.msra.mxu0 0
        %4762 = vmatprep.subr.bf16.mxu0 0
        %4763 = vmatpush1.bf16.msra.mxu0 0
        %4764 = vmatprep.subr.bf16.mxu0 0
        %4765 = vmatpush1.bf16.msra.mxu0 0
        %4766 = vmatprep.subr.bf16.mxu0 0
        %4767 = vmatpush1.bf16.msra.mxu0 0
        %4768 = vmatprep.subr.bf16.mxu0 0
        %4769 = vmatpush1.bf16.msra.mxu0 0
        %4770 = vmatprep.subr.bf16.mxu0 0
        %4771 = vmatpush1.bf16.msra.mxu0 0
        %4772 = vmatprep.subr.bf16.mxu0 0
        %4773 = vmatpush1.bf16.msra.mxu0 0
        %4774 = vmatprep.subr.bf16.mxu0 0
        %4775 = vmatpush1.bf16.msra.mxu0 0
        %4776 = vmatprep.subr.bf16.mxu0 0
        %4777 = vmatpush1.bf16.msra.mxu0 0
        %4778 = vmatprep.mubr.bf16.mxu0 0
        %4779 = vmatmul.mubr.bf16.gmra.mrb[0].mxu0 %v4088
        %v4780 = vpop.f32.mrb[0].mxu0
        %v4781 = vadd.f32 %v2638, %v4780
        %v4782 = vpop.f32.mrb[0].mxu0
        %v4783 = vadd.f32 %v2642, %v4782
        %v4784 = vpop.f32.mrb[0].mxu0
        %v4785 = vpop.f32.mrb[0].mxu0
        %4786 = vdwg.mxu0
        %4787 = vmatprep.subr.bf16.mxu0 %v3617
        %4788 = vmatpush1.bf16.msra.mxu0 %v3616
        %4789 = vmatprep.subr.bf16.mxu0 %v3680
        %4790 = vmatpush1.bf16.msra.mxu0 %v3679
        %4791 = vmatprep.subr.bf16.mxu0 %v3743
        %4792 = vmatpush1.bf16.msra.mxu0 %v3742
        %4793 = vmatprep.subr.bf16.mxu0 %v3806
        %4794 = vmatpush1.bf16.msra.mxu0 %v3805
        %4795 = vmatprep.subr.bf16.mxu0 0
        %4796 = vmatpush1.bf16.msra.mxu0 0
        %4797 = vmatprep.subr.bf16.mxu0 0
        %4798 = vmatpush1.bf16.msra.mxu0 0
        %4799 = vmatprep.subr.bf16.mxu0 0
        %4800 = vmatpush1.bf16.msra.mxu0 0
        %4801 = vmatprep.subr.bf16.mxu0 0
        %4802 = vmatpush1.bf16.msra.mxu0 0
        %4803 = vmatprep.subr.bf16.mxu0 0
        %4804 = vmatpush1.bf16.msra.mxu0 0
        %4805 = vmatprep.subr.bf16.mxu0 0
        %4806 = vmatpush1.bf16.msra.mxu0 0
        %4807 = vmatprep.subr.bf16.mxu0 0
        %4808 = vmatpush1.bf16.msra.mxu0 0
        %4809 = vmatprep.subr.bf16.mxu0 0
        %4810 = vmatpush1.bf16.msra.mxu0 0
        %4811 = vmatprep.subr.bf16.mxu0 0
        %4812 = vmatpush1.bf16.msra.mxu0 0
        %4813 = vmatprep.subr.bf16.mxu0 0
        %4814 = vmatpush1.bf16.msra.mxu0 0
        %4815 = vmatprep.subr.bf16.mxu0 0
        %4816 = vmatpush1.bf16.msra.mxu0 0
        %4817 = vmatprep.subr.bf16.mxu0 0
        %4818 = vmatpush1.bf16.msra.mxu0 0
        %4819 = vmatprep.mubr.bf16.mxu0 0
        %4820 = vmatmul.mubr.bf16.gmra.mrb[0].mxu0 %v4088
        %v4821 = vpop.f32.mrb[0].mxu0
        %v4822 = vadd.f32 %v2646, %v4821
        %v4823 = vpop.f32.mrb[0].mxu0
        %v4824 = vadd.f32 %v2650, %v4823
        %v4825 = vpop.f32.mrb[0].mxu0
        %v4826 = vpop.f32.mrb[0].mxu0
        %4827 = vdwg.mxu0
        %4828 = vmatprep.subr.bf16.mxu0 %v3619
        %4829 = vmatpush1.bf16.msra.mxu0 %v3618
        %4830 = vmatprep.subr.bf16.mxu0 %v3682
        %4831 = vmatpush1.bf16.msra.mxu0 %v3681
        %4832 = vmatprep.subr.bf16.mxu0 %v3745
        %4833 = vmatpush1.bf16.msra.mxu0 %v3744
        %4834 = vmatprep.subr.bf16.mxu0 %v3808
        %4835 = vmatpush1.bf16.msra.mxu0 %v3807
        %4836 = vmatprep.subr.bf16.mxu0 0
        %4837 = vmatpush1.bf16.msra.mxu0 0
        %4838 = vmatprep.subr.bf16.mxu0 0
        %4839 = vmatpush1.bf16.msra.mxu0 0
        %4840 = vmatprep.subr.bf16.mxu0 0
        %4841 = vmatpush1.bf16.msra.mxu0 0
        %4842 = vmatprep.subr.bf16.mxu0 0
        %4843 = vmatpush1.bf16.msra.mxu0 0
        %4844 = vmatprep.subr.bf16.mxu0 0
        %4845 = vmatpush1.bf16.msra.mxu0 0
        %4846 = vmatprep.subr.bf16.mxu0 0
        %4847 = vmatpush1.bf16.msra.mxu0 0
        %4848 = vmatprep.subr.bf16.mxu0 0
        %4849 = vmatpush1.bf16.msra.mxu0 0
        %4850 = vmatprep.subr.bf16.mxu0 0
        %4851 = vmatpush1.bf16.msra.mxu0 0
        %4852 = vmatprep.subr.bf16.mxu0 0
        %4853 = vmatpush1.bf16.msra.mxu0 0
        %4854 = vmatprep.subr.bf16.mxu0 0
        %4855 = vmatpush1.bf16.msra.mxu0 0
        %4856 = vmatprep.subr.bf16.mxu0 0
        %4857 = vmatpush1.bf16.msra.mxu0 0
        %4858 = vmatprep.subr.bf16.mxu0 0
        %4859 = vmatpush1.bf16.msra.mxu0 0
        %4860 = vmatprep.mubr.bf16.mxu0 0
        %4861 = vmatmul.mubr.bf16.gmra.mrb[0].mxu0 %v4088
        %v4862 = vpop.f32.mrb[0].mxu0
        %v4863 = vadd.f32 %v2654, %v4862
        %v4864 = vpop.f32.mrb[0].mxu0
        %v4865 = vadd.f32 %v2658, %v4864
        %v4866 = vpop.f32.mrb[0].mxu0
        %v4867 = vpop.f32.mrb[0].mxu0
        %4868 = vdwg.mxu0
        %4869 = vmatprep.subr.bf16.mxu0 %v3621
        %4870 = vmatpush1.bf16.msra.mxu0 %v3620
        %4871 = vmatprep.subr.bf16.mxu0 %v3684
        %4872 = vmatpush1.bf16.msra.mxu0 %v3683
        %4873 = vmatprep.subr.bf16.mxu0 %v3747
        %4874 = vmatpush1.bf16.msra.mxu0 %v3746
        %4875 = vmatprep.subr.bf16.mxu0 %v3810
        %4876 = vmatpush1.bf16.msra.mxu0 %v3809
        %4877 = vmatprep.subr.bf16.mxu0 0
        %4878 = vmatpush1.bf16.msra.mxu0 0
        %4879 = vmatprep.subr.bf16.mxu0 0
        %4880 = vmatpush1.bf16.msra.mxu0 0
        %4881 = vmatprep.subr.bf16.mxu0 0
        %4882 = vmatpush1.bf16.msra.mxu0 0
        %4883 = vmatprep.subr.bf16.mxu0 0
        %4884 = vmatpush1.bf16.msra.mxu0 0
        %4885 = vmatprep.subr.bf16.mxu0 0
        %4886 = vmatpush1.bf16.msra.mxu0 0
        %4887 = vmatprep.subr.bf16.mxu0 0
        %4888 = vmatpush1.bf16.msra.mxu0 0
        %4889 = vmatprep.subr.bf16.mxu0 0
        %4890 = vmatpush1.bf16.msra.mxu0 0
        %4891 = vmatprep.subr.bf16.mxu0 0
        %4892 = vmatpush1.bf16.msra.mxu0 0
        %4893 = vmatprep.subr.bf16.mxu0 0
        %4894 = vmatpush1.bf16.msra.mxu0 0
        %4895 = vmatprep.subr.bf16.mxu0 0
        %4896 = vmatpush1.bf16.msra.mxu0 0
        %4897 = vmatprep.subr.bf16.mxu0 0
        %4898 = vmatpush1.bf16.msra.mxu0 0
        %4899 = vmatprep.subr.bf16.mxu0 0
        %4900 = vmatpush1.bf16.msra.mxu0 0
        %4901 = vmatprep.mubr.bf16.mxu0 0
        %4902 = vmatmul.mubr.bf16.gmra.mrb[0].mxu0 %v4088
        %v4903 = vpop.f32.mrb[0].mxu0
        %v4904 = vadd.f32 %v2662, %v4903
        %v4905 = vpop.f32.mrb[0].mxu0
        %v4906 = vadd.f32 %v2666, %v4905
        %v4907 = vpop.f32.mrb[0].mxu0
        %v4908 = vpop.f32.mrb[0].mxu0
        %4909 = vdwg.mxu0
        %4910 = vmatprep.subr.bf16.mxu0 %v3623
        %4911 = vmatpush1.bf16.msra.mxu0 %v3622
        %4912 = vmatprep.subr.bf16.mxu0 %v3686
        %4913 = vmatpush1.bf16.msra.mxu0 %v3685
        %4914 = vmatprep.subr.bf16.mxu0 %v3749
        %4915 = vmatpush1.bf16.msra.mxu0 %v3748
        %4916 = vmatprep.subr.bf16.mxu0 %v3812
        %4917 = vmatpush1.bf16.msra.mxu0 %v3811
        %4918 = vmatprep.subr.bf16.mxu0 0
        %4919 = vmatpush1.bf16.msra.mxu0 0
        %4920 = vmatprep.subr.bf16.mxu0 0
        %4921 = vmatpush1.bf16.msra.mxu0 0
        %4922 = vmatprep.subr.bf16.mxu0 0
        %4923 = vmatpush1.bf16.msra.mxu0 0
        %4924 = vmatprep.subr.bf16.mxu0 0
        %4925 = vmatpush1.bf16.msra.mxu0 0
        %4926 = vmatprep.subr.bf16.mxu0 0
        %4927 = vmatpush1.bf16.msra.mxu0 0
        %4928 = vmatprep.subr.bf16.mxu0 0
        %4929 = vmatpush1.bf16.msra.mxu0 0
        %4930 = vmatprep.subr.bf16.mxu0 0
        %4931 = vmatpush1.bf16.msra.mxu0 0
        %4932 = vmatprep.subr.bf16.mxu0 0
        %4933 = vmatpush1.bf16.msra.mxu0 0
        %4934 = vmatprep.subr.bf16.mxu0 0
        %4935 = vmatpush1.bf16.msra.mxu0 0
        %4936 = vmatprep.subr.bf16.mxu0 0
        %4937 = vmatpush1.bf16.msra.mxu0 0
        %4938 = vmatprep.subr.bf16.mxu0 0
        %4939 = vmatpush1.bf16.msra.mxu0 0
        %4940 = vmatprep.subr.bf16.mxu0 0
        %4941 = vmatpush1.bf16.msra.mxu0 0
        %4942 = vmatprep.mubr.bf16.mxu0 0
        %4943 = vmatmul.mubr.bf16.gmra.mrb[0].mxu0 %v4088
        %v4944 = vpop.f32.mrb[0].mxu0
        %v4945 = vadd.f32 %v2670, %v4944
        %v4946 = vpop.f32.mrb[0].mxu0
        %v4947 = vadd.f32 %v2674, %v4946
        %v4948 = vpop.f32.mrb[0].mxu0
        %v4949 = vpop.f32.mrb[0].mxu0
        %4950 = vdwg.mxu0
        %4951 = vmatprep.subr.bf16.mxu0 %v3625
        %4952 = vmatpush1.bf16.msra.mxu0 %v3624
        %4953 = vmatprep.subr.bf16.mxu0 %v3688
        %4954 = vmatpush1.bf16.msra.mxu0 %v3687
        %4955 = vmatprep.subr.bf16.mxu0 %v3751
        %4956 = vmatpush1.bf16.msra.mxu0 %v3750
        %4957 = vmatprep.subr.bf16.mxu0 %v3814
        %4958 = vmatpush1.bf16.msra.mxu0 %v3813
        %4959 = vmatprep.subr.bf16.mxu0 0
        %4960 = vmatpush1.bf16.msra.mxu0 0
        %4961 = vmatprep.subr.bf16.mxu0 0
        %4962 = vmatpush1.bf16.msra.mxu0 0
        %4963 = vmatprep.subr.bf16.mxu0 0
        %4964 = vmatpush1.bf16.msra.mxu0 0
        %4965 = vmatprep.subr.bf16.mxu0 0
        %4966 = vmatpush1.bf16.msra.mxu0 0
        %4967 = vmatprep.subr.bf16.mxu0 0
        %4968 = vmatpush1.bf16.msra.mxu0 0
        %4969 = vmatprep.subr.bf16.mxu0 0
        %4970 = vmatpush1.bf16.msra.mxu0 0
        %4971 = vmatprep.subr.bf16.mxu0 0
        %4972 = vmatpush1.bf16.msra.mxu0 0
        %4973 = vmatprep.subr.bf16.mxu0 0
        %4974 = vmatpush1.bf16.msra.mxu0 0
        %4975 = vmatprep.subr.bf16.mxu0 0
        %4976 = vmatpush1.bf16.msra.mxu0 0
        %4977 = vmatprep.subr.bf16.mxu0 0
        %4978 = vmatpush1.bf16.msra.mxu0 0
        %4979 = vmatprep.subr.bf16.mxu0 0
        %4980 = vmatpush1.bf16.msra.mxu0 0
        %4981 = vmatprep.subr.bf16.mxu0 0
        %4982 = vmatpush1.bf16.msra.mxu0 0
        %4983 = vmatprep.mubr.bf16.mxu0 0
        %4984 = vmatmul.mubr.bf16.gmra.mrb[0].mxu0 %v4088
        %v4985 = vpop.f32.mrb[0].mxu0
        %v4986 = vadd.f32 %v2678, %v4985
        %v4987 = vpop.f32.mrb[0].mxu0
        %v4988 = vadd.f32 %v2682, %v4987
        %v4989 = vpop.f32.mrb[0].mxu0
        %v4990 = vpop.f32.mrb[0].mxu0
        %4991 = vdwg.mxu0
        %4992 = vmatprep.subr.bf16.mxu0 %v3627
        %4993 = vmatpush1.bf16.msra.mxu0 %v3626
        %4994 = vmatprep.subr.bf16.mxu0 %v3690
        %4995 = vmatpush1.bf16.msra.mxu0 %v3689
        %4996 = vmatprep.subr.bf16.mxu0 %v3753
        %4997 = vmatpush1.bf16.msra.mxu0 %v3752
        %4998 = vmatprep.subr.bf16.mxu0 %v3816
        %4999 = vmatpush1.bf16.msra.mxu0 %v3815
        %5000 = vmatprep.subr.bf16.mxu0 0
        %5001 = vmatpush1.bf16.msra.mxu0 0
        %5002 = vmatprep.subr.bf16.mxu0 0
        %5003 = vmatpush1.bf16.msra.mxu0 0
        %5004 = vmatprep.subr.bf16.mxu0 0
        %5005 = vmatpush1.bf16.msra.mxu0 0
        %5006 = vmatprep.subr.bf16.mxu0 0
        %5007 = vmatpush1.bf16.msra.mxu0 0
        %5008 = vmatprep.subr.bf16.mxu0 0
        %5009 = vmatpush1.bf16.msra.mxu0 0
        %5010 = vmatprep.subr.bf16.mxu0 0
        %5011 = vmatpush1.bf16.msra.mxu0 0
        %5012 = vmatprep.subr.bf16.mxu0 0
        %5013 = vmatpush1.bf16.msra.mxu0 0
        %5014 = vmatprep.subr.bf16.mxu0 0
        %5015 = vmatpush1.bf16.msra.mxu0 0
        %5016 = vmatprep.subr.bf16.mxu0 0
        %5017 = vmatpush1.bf16.msra.mxu0 0
        %5018 = vmatprep.subr.bf16.mxu0 0
        %5019 = vmatpush1.bf16.msra.mxu0 0
        %5020 = vmatprep.subr.bf16.mxu0 0
        %5021 = vmatpush1.bf16.msra.mxu0 0
        %5022 = vmatprep.subr.bf16.mxu0 0
        %5023 = vmatpush1.bf16.msra.mxu0 0
        %5024 = vmatprep.mubr.bf16.mxu0 0
        %5025 = vmatmul.mubr.bf16.gmra.mrb[0].mxu0 %v4088
        %v5026 = vpop.f32.mrb[0].mxu0
        %v5027 = vadd.f32 %v2686, %v5026
        %v5028 = vpop.f32.mrb[0].mxu0
        %v5029 = vadd.f32 %v2690, %v5028
        %v5030 = vpop.f32.mrb[0].mxu0
        %v5031 = vpop.f32.mrb[0].mxu0
        %5032 = vdwg.mxu0
        %5033 = vmatprep.subr.bf16.mxu0 %v3629
        %5034 = vmatpush1.bf16.msra.mxu0 %v3628
        %5035 = vmatprep.subr.bf16.mxu0 %v3692
        %5036 = vmatpush1.bf16.msra.mxu0 %v3691
        %5037 = vmatprep.subr.bf16.mxu0 %v3755
        %5038 = vmatpush1.bf16.msra.mxu0 %v3754
        %5039 = vmatprep.subr.bf16.mxu0 %v3818
        %5040 = vmatpush1.bf16.msra.mxu0 %v3817
        %5041 = vmatprep.subr.bf16.mxu0 0
        %5042 = vmatpush1.bf16.msra.mxu0 0
        %5043 = vmatprep.subr.bf16.mxu0 0
        %5044 = vmatpush1.bf16.msra.mxu0 0
        %5045 = vmatprep.subr.bf16.mxu0 0
        %5046 = vmatpush1.bf16.msra.mxu0 0
        %5047 = vmatprep.subr.bf16.mxu0 0
        %5048 = vmatpush1.bf16.msra.mxu0 0
        %5049 = vmatprep.subr.bf16.mxu0 0
        %5050 = vmatpush1.bf16.msra.mxu0 0
        %5051 = vmatprep.subr.bf16.mxu0 0
        %5052 = vmatpush1.bf16.msra.mxu0 0
        %5053 = vmatprep.subr.bf16.mxu0 0
        %5054 = vmatpush1.bf16.msra.mxu0 0
        %5055 = vmatprep.subr.bf16.mxu0 0
        %5056 = vmatpush1.bf16.msra.mxu0 0
        %5057 = vmatprep.subr.bf16.mxu0 0
        %5058 = vmatpush1.bf16.msra.mxu0 0
        %5059 = vmatprep.subr.bf16.mxu0 0
        %5060 = vmatpush1.bf16.msra.mxu0 0
        %5061 = vmatprep.subr.bf16.mxu0 0
        %5062 = vmatpush1.bf16.msra.mxu0 0
        %5063 = vmatprep.subr.bf16.mxu0 0
        %5064 = vmatpush1.bf16.msra.mxu0 0
        %5065 = vmatprep.mubr.bf16.mxu0 0
        %5066 = vmatmul.mubr.bf16.gmra.mrb[0].mxu0 %v4088
        %v5067 = vpop.f32.mrb[0].mxu0
        %v5068 = vadd.f32 %v2694, %v5067
        %v5069 = vpop.f32.mrb[0].mxu0
        %v5070 = vadd.f32 %v2698, %v5069
        %v5071 = vpop.f32.mrb[0].mxu0
        %v5072 = vpop.f32.mrb[0].mxu0
        %5073 = vdwg.mxu0
        %5074 = vmatprep.subr.bf16.mxu0 %v3631
        %5075 = vmatpush1.bf16.msra.mxu0 %v3630
        %5076 = vmatprep.subr.bf16.mxu0 %v3694
        %5077 = vmatpush1.bf16.msra.mxu0 %v3693
        %5078 = vmatprep.subr.bf16.mxu0 %v3757
        %5079 = vmatpush1.bf16.msra.mxu0 %v3756
        %5080 = vmatprep.subr.bf16.mxu0 %v3820
        %5081 = vmatpush1.bf16.msra.mxu0 %v3819
        %5082 = vmatprep.subr.bf16.mxu0 0
        %5083 = vmatpush1.bf16.msra.mxu0 0
        %5084 = vmatprep.subr.bf16.mxu0 0
        %5085 = vmatpush1.bf16.msra.mxu0 0
        %5086 = vmatprep.subr.bf16.mxu0 0
        %5087 = vmatpush1.bf16.msra.mxu0 0
        %5088 = vmatprep.subr.bf16.mxu0 0
        %5089 = vmatpush1.bf16.msra.mxu0 0
        %5090 = vmatprep.subr.bf16.mxu0 0
        %5091 = vmatpush1.bf16.msra.mxu0 0
        %5092 = vmatprep.subr.bf16.mxu0 0
        %5093 = vmatpush1.bf16.msra.mxu0 0
        %5094 = vmatprep.subr.bf16.mxu0 0
        %5095 = vmatpush1.bf16.msra.mxu0 0
        %5096 = vmatprep.subr.bf16.mxu0 0
        %5097 = vmatpush1.bf16.msra.mxu0 0
        %5098 = vmatprep.subr.bf16.mxu0 0
        %5099 = vmatpush1.bf16.msra.mxu0 0
        %5100 = vmatprep.subr.bf16.mxu0 0
        %5101 = vmatpush1.bf16.msra.mxu0 0
        %5102 = vmatprep.subr.bf16.mxu0 0
        %5103 = vmatpush1.bf16.msra.mxu0 0
        %5104 = vmatprep.subr.bf16.mxu0 0
        %5105 = vmatpush1.bf16.msra.mxu0 0
        %5106 = vmatprep.mubr.bf16.mxu0 0
        %5107 = vmatmul.mubr.bf16.gmra.mrb[0].mxu0 %v4088
        %v5108 = vpop.f32.mrb[0].mxu0
        %v5109 = vadd.f32 %v2702, %v5108
        %v5110 = vpop.f32.mrb[0].mxu0
        %v5111 = vadd.f32 %v2706, %v5110
        %v5112 = vpop.f32.mrb[0].mxu0
        %v5113 = vpop.f32.mrb[0].mxu0
        %5114 = vdwg.mxu0
        %5115 = vmatprep.subr.bf16.mxu0 %v3633
        %5116 = vmatpush1.bf16.msra.mxu0 %v3632
        %5117 = vmatprep.subr.bf16.mxu0 %v3696
        %5118 = vmatpush1.bf16.msra.mxu0 %v3695
        %5119 = vmatprep.subr.bf16.mxu0 %v3759
        %5120 = vmatpush1.bf16.msra.mxu0 %v3758
        %5121 = vmatprep.subr.bf16.mxu0 %v3822
        %5122 = vmatpush1.bf16.msra.mxu0 %v3821
        %5123 = vmatprep.subr.bf16.mxu0 0
        %5124 = vmatpush1.bf16.msra.mxu0 0
        %5125 = vmatprep.subr.bf16.mxu0 0
        %5126 = vmatpush1.bf16.msra.mxu0 0
        %5127 = vmatprep.subr.bf16.mxu0 0
        %5128 = vmatpush1.bf16.msra.mxu0 0
        %5129 = vmatprep.subr.bf16.mxu0 0
        %5130 = vmatpush1.bf16.msra.mxu0 0
        %5131 = vmatprep.subr.bf16.mxu0 0
        %5132 = vmatpush1.bf16.msra.mxu0 0
        %5133 = vmatprep.subr.bf16.mxu0 0
        %5134 = vmatpush1.bf16.msra.mxu0 0
        %5135 = vmatprep.subr.bf16.mxu0 0
        %5136 = vmatpush1.bf16.msra.mxu0 0
        %5137 = vmatprep.subr.bf16.mxu0 0
        %5138 = vmatpush1.bf16.msra.mxu0 0
        %5139 = vmatprep.subr.bf16.mxu0 0
        %5140 = vmatpush1.bf16.msra.mxu0 0
        %5141 = vmatprep.subr.bf16.mxu0 0
        %5142 = vmatpush1.bf16.msra.mxu0 0
        %5143 = vmatprep.subr.bf16.mxu0 0
        %5144 = vmatpush1.bf16.msra.mxu0 0
        %5145 = vmatprep.subr.bf16.mxu0 0
        %5146 = vmatpush1.bf16.msra.mxu0 0
        %5147 = vmatprep.mubr.bf16.mxu0 0
        %5148 = vmatmul.mubr.bf16.gmra.mrb[0].mxu0 %v4088
        %v5149 = vpop.f32.mrb[0].mxu0
        %v5150 = vadd.f32 %v2710, %v5149
        %v5151 = vpop.f32.mrb[0].mxu0
        %v5152 = vadd.f32 %v2714, %v5151
        %v5153 = vpop.f32.mrb[0].mxu0
        %v5154 = vpop.f32.mrb[0].mxu0
        %5155 = vdwg.mxu0
        %5156 = vmatprep.subr.bf16.mxu0 %v3635
        %5157 = vmatpush1.bf16.msra.mxu0 %v3634
        %5158 = vmatprep.subr.bf16.mxu0 %v3698
        %5159 = vmatpush1.bf16.msra.mxu0 %v3697
        %5160 = vmatprep.subr.bf16.mxu0 %v3761
        %5161 = vmatpush1.bf16.msra.mxu0 %v3760
        %5162 = vmatprep.subr.bf16.mxu0 %v3824
        %5163 = vmatpush1.bf16.msra.mxu0 %v3823
        %5164 = vmatprep.subr.bf16.mxu0 0
        %5165 = vmatpush1.bf16.msra.mxu0 0
        %5166 = vmatprep.subr.bf16.mxu0 0
        %5167 = vmatpush1.bf16.msra.mxu0 0
        %5168 = vmatprep.subr.bf16.mxu0 0
        %5169 = vmatpush1.bf16.msra.mxu0 0
        %5170 = vmatprep.subr.bf16.mxu0 0
        %5171 = vmatpush1.bf16.msra.mxu0 0
        %5172 = vmatprep.subr.bf16.mxu0 0
        %5173 = vmatpush1.bf16.msra.mxu0 0
        %5174 = vmatprep.subr.bf16.mxu0 0
        %5175 = vmatpush1.bf16.msra.mxu0 0
        %5176 = vmatprep.subr.bf16.mxu0 0
        %5177 = vmatpush1.bf16.msra.mxu0 0
        %5178 = vmatprep.subr.bf16.mxu0 0
        %5179 = vmatpush1.bf16.msra.mxu0 0
        %5180 = vmatprep.subr.bf16.mxu0 0
        %5181 = vmatpush1.bf16.msra.mxu0 0
        %5182 = vmatprep.subr.bf16.mxu0 0
        %5183 = vmatpush1.bf16.msra.mxu0 0
        %5184 = vmatprep.subr.bf16.mxu0 0
        %5185 = vmatpush1.bf16.msra.mxu0 0
        %5186 = vmatprep.subr.bf16.mxu0 0
        %5187 = vmatpush1.bf16.msra.mxu0 0
        %5188 = vmatprep.mubr.bf16.mxu0 0
        %5189 = vmatmul.mubr.bf16.gmra.mrb[0].mxu0 %v4088
        %v5190 = vpop.f32.mrb[0].mxu0
        %v5191 = vadd.f32 %v2718, %v5190
        %v5192 = vpop.f32.mrb[0].mxu0
        %v5193 = vadd.f32 %v2722, %v5192
        %v5194 = vpop.f32.mrb[0].mxu0
        %v5195 = vpop.f32.mrb[0].mxu0
        %5196 = vdwg.mxu0
        %5197 = vmatprep.subr.bf16.mxu0 %v3637
        %5198 = vmatpush1.bf16.msra.mxu0 %v3636
        %5199 = vmatprep.subr.bf16.mxu0 %v3700
        %5200 = vmatpush1.bf16.msra.mxu0 %v3699
        %5201 = vmatprep.subr.bf16.mxu0 %v3763
        %5202 = vmatpush1.bf16.msra.mxu0 %v3762
        %5203 = vmatprep.subr.bf16.mxu0 %v3826
        %5204 = vmatpush1.bf16.msra.mxu0 %v3825
        %5205 = vmatprep.subr.bf16.mxu0 0
        %5206 = vmatpush1.bf16.msra.mxu0 0
        %5207 = vmatprep.subr.bf16.mxu0 0
        %5208 = vmatpush1.bf16.msra.mxu0 0
        %5209 = vmatprep.subr.bf16.mxu0 0
        %5210 = vmatpush1.bf16.msra.mxu0 0
        %5211 = vmatprep.subr.bf16.mxu0 0
        %5212 = vmatpush1.bf16.msra.mxu0 0
        %5213 = vmatprep.subr.bf16.mxu0 0
        %5214 = vmatpush1.bf16.msra.mxu0 0
        %5215 = vmatprep.subr.bf16.mxu0 0
        %5216 = vmatpush1.bf16.msra.mxu0 0
        %5217 = vmatprep.subr.bf16.mxu0 0
        %5218 = vmatpush1.bf16.msra.mxu0 0
        %5219 = vmatprep.subr.bf16.mxu0 0
        %5220 = vmatpush1.bf16.msra.mxu0 0
        %5221 = vmatprep.subr.bf16.mxu0 0
        %5222 = vmatpush1.bf16.msra.mxu0 0
        %5223 = vmatprep.subr.bf16.mxu0 0
        %5224 = vmatpush1.bf16.msra.mxu0 0
        %5225 = vmatprep.subr.bf16.mxu0 0
        %5226 = vmatpush1.bf16.msra.mxu0 0
        %5227 = vmatprep.subr.bf16.mxu0 0
        %5228 = vmatpush1.bf16.msra.mxu0 0
        %5229 = vmatprep.mubr.bf16.mxu0 0
        %5230 = vmatmul.mubr.bf16.gmra.mrb[0].mxu0 %v4088
        %v5231 = vpop.f32.mrb[0].mxu0
        %v5232 = vadd.f32 %v2726, %v5231
        %v5233 = vpop.f32.mrb[0].mxu0
        %v5234 = vadd.f32 %v2730, %v5233
        %v5235 = vpop.f32.mrb[0].mxu0
        %v5236 = vpop.f32.mrb[0].mxu0
        %5237 = vdwg.mxu0
        %5238 = vmatprep.subr.bf16.mxu0 %v3639
        %5239 = vmatpush1.bf16.msra.mxu0 %v3638
        %5240 = vmatprep.subr.bf16.mxu0 %v3702
        %5241 = vmatpush1.bf16.msra.mxu0 %v3701
        %5242 = vmatprep.subr.bf16.mxu0 %v3765
        %5243 = vmatpush1.bf16.msra.mxu0 %v3764
        %5244 = vmatprep.subr.bf16.mxu0 %v3828
        %5245 = vmatpush1.bf16.msra.mxu0 %v3827
        %5246 = vmatprep.subr.bf16.mxu0 0
        %5247 = vmatpush1.bf16.msra.mxu0 0
        %5248 = vmatprep.subr.bf16.mxu0 0
        %5249 = vmatpush1.bf16.msra.mxu0 0
        %5250 = vmatprep.subr.bf16.mxu0 0
        %5251 = vmatpush1.bf16.msra.mxu0 0
        %5252 = vmatprep.subr.bf16.mxu0 0
        %5253 = vmatpush1.bf16.msra.mxu0 0
        %5254 = vmatprep.subr.bf16.mxu0 0
        %5255 = vmatpush1.bf16.msra.mxu0 0
        %5256 = vmatprep.subr.bf16.mxu0 0
        %5257 = vmatpush1.bf16.msra.mxu0 0
        %5258 = vmatprep.subr.bf16.mxu0 0
        %5259 = vmatpush1.bf16.msra.mxu0 0
        %5260 = vmatprep.subr.bf16.mxu0 0
        %5261 = vmatpush1.bf16.msra.mxu0 0
        %5262 = vmatprep.subr.bf16.mxu0 0
        %5263 = vmatpush1.bf16.msra.mxu0 0
        %5264 = vmatprep.subr.bf16.mxu0 0
        %5265 = vmatpush1.bf16.msra.mxu0 0
        %5266 = vmatprep.subr.bf16.mxu0 0
        %5267 = vmatpush1.bf16.msra.mxu0 0
        %5268 = vmatprep.subr.bf16.mxu0 0
        %5269 = vmatpush1.bf16.msra.mxu0 0
        %5270 = vmatprep.mubr.bf16.mxu0 0
        %5271 = vmatmul.mubr.bf16.gmra.mrb[0].mxu0 %v4088
        %v5272 = vpop.f32.mrb[0].mxu0
        %v5273 = vadd.f32 %v2734, %v5272
        %v5274 = vpop.f32.mrb[0].mxu0
        %v5275 = vadd.f32 %v2738, %v5274
        %v5276 = vpop.f32.mrb[0].mxu0
        %v5277 = vpop.f32.mrb[0].mxu0
        %5278 = vdwg.mxu0
        %5279 = vmatprep.subr.bf16.mxu0 %v3641
        %5280 = vmatpush1.bf16.msra.mxu0 %v3640
        %5281 = vmatprep.subr.bf16.mxu0 %v3704
        %5282 = vmatpush1.bf16.msra.mxu0 %v3703
        %5283 = vmatprep.subr.bf16.mxu0 %v3767
        %5284 = vmatpush1.bf16.msra.mxu0 %v3766
        %5285 = vmatprep.subr.bf16.mxu0 %v3830
        %5286 = vmatpush1.bf16.msra.mxu0 %v3829
        %5287 = vmatprep.subr.bf16.mxu0 0
        %5288 = vmatpush1.bf16.msra.mxu0 0
        %5289 = vmatprep.subr.bf16.mxu0 0
        %5290 = vmatpush1.bf16.msra.mxu0 0
        %5291 = vmatprep.subr.bf16.mxu0 0
        %5292 = vmatpush1.bf16.msra.mxu0 0
        %5293 = vmatprep.subr.bf16.mxu0 0
        %5294 = vmatpush1.bf16.msra.mxu0 0
        %5295 = vmatprep.subr.bf16.mxu0 0
        %5296 = vmatpush1.bf16.msra.mxu0 0
        %5297 = vmatprep.subr.bf16.mxu0 0
        %5298 = vmatpush1.bf16.msra.mxu0 0
        %5299 = vmatprep.subr.bf16.mxu0 0
        %5300 = vmatpush1.bf16.msra.mxu0 0
        %5301 = vmatprep.subr.bf16.mxu0 0
        %5302 = vmatpush1.bf16.msra.mxu0 0
        %5303 = vmatprep.subr.bf16.mxu0 0
        %5304 = vmatpush1.bf16.msra.mxu0 0
        %5305 = vmatprep.subr.bf16.mxu0 0
        %5306 = vmatpush1.bf16.msra.mxu0 0
        %5307 = vmatprep.subr.bf16.mxu0 0
        %5308 = vmatpush1.bf16.msra.mxu0 0
        %5309 = vmatprep.subr.bf16.mxu0 0
        %5310 = vmatpush1.bf16.msra.mxu0 0
        %5311 = vmatprep.mubr.bf16.mxu0 0
        %5312 = vmatmul.mubr.bf16.gmra.mrb[0].mxu0 %v4088
        %v5313 = vpop.f32.mrb[0].mxu0
        %v5314 = vadd.f32 %v2742, %v5313
        %v5315 = vpop.f32.mrb[0].mxu0
        %v5316 = vadd.f32 %v2746, %v5315
        %v5317 = vpop.f32.mrb[0].mxu0
        %v5318 = vpop.f32.mrb[0].mxu0
        %5319 = vdwg.mxu0
        %5320 = vmatprep.subr.bf16.mxu0 %v3643
        %5321 = vmatpush1.bf16.msra.mxu0 %v3642
        %5322 = vmatprep.subr.bf16.mxu0 %v3706
        %5323 = vmatpush1.bf16.msra.mxu0 %v3705
        %5324 = vmatprep.subr.bf16.mxu0 %v3769
        %5325 = vmatpush1.bf16.msra.mxu0 %v3768
        %5326 = vmatprep.subr.bf16.mxu0 %v3832
        %5327 = vmatpush1.bf16.msra.mxu0 %v3831
        %5328 = vmatprep.subr.bf16.mxu0 0
        %5329 = vmatpush1.bf16.msra.mxu0 0
        %5330 = vmatprep.subr.bf16.mxu0 0
        %5331 = vmatpush1.bf16.msra.mxu0 0
        %5332 = vmatprep.subr.bf16.mxu0 0
        %5333 = vmatpush1.bf16.msra.mxu0 0
        %5334 = vmatprep.subr.bf16.mxu0 0
        %5335 = vmatpush1.bf16.msra.mxu0 0
        %5336 = vmatprep.subr.bf16.mxu0 0
        %5337 = vmatpush1.bf16.msra.mxu0 0
        %5338 = vmatprep.subr.bf16.mxu0 0
        %5339 = vmatpush1.bf16.msra.mxu0 0
        %5340 = vmatprep.subr.bf16.mxu0 0
        %5341 = vmatpush1.bf16.msra.mxu0 0
        %5342 = vmatprep.subr.bf16.mxu0 0
        %5343 = vmatpush1.bf16.msra.mxu0 0
        %5344 = vmatprep.subr.bf16.mxu0 0
        %5345 = vmatpush1.bf16.msra.mxu0 0
        %5346 = vmatprep.subr.bf16.mxu0 0
        %5347 = vmatpush1.bf16.msra.mxu0 0
        %5348 = vmatprep.subr.bf16.mxu0 0
        %5349 = vmatpush1.bf16.msra.mxu0 0
        %5350 = vmatprep.subr.bf16.mxu0 0
        %5351 = vmatpush1.bf16.msra.mxu0 0
        %5352 = vmatprep.mubr.bf16.mxu0 0
        %5353 = vmatmul.mubr.bf16.gmra.mrb[0].mxu0 %v4088
        %v5354 = vpop.f32.mrb[0].mxu0
        %v5355 = vadd.f32 %v2750, %v5354
        %v5356 = vpop.f32.mrb[0].mxu0
        %v5357 = vadd.f32 %v2754, %v5356
        %v5358 = vpop.f32.mrb[0].mxu0
        %v5359 = vpop.f32.mrb[0].mxu0
        %5360 = vdwg.mxu0
        %5361 = vmatprep.subr.bf16.mxu0 0
        %5362 = vmatpush1.bf16.msra.mxu0 %v3644
        %5363 = vmatprep.subr.bf16.mxu0 0
        %5364 = vmatpush1.bf16.msra.mxu0 %v3707
        %5365 = vmatprep.subr.bf16.mxu0 0
        %5366 = vmatpush1.bf16.msra.mxu0 %v3770
        %5367 = vmatprep.subr.bf16.mxu0 0
        %5368 = vmatpush1.bf16.msra.mxu0 %v3833
        %5369 = vmatprep.subr.bf16.mxu0 0
        %5370 = vmatpush1.bf16.msra.mxu0 0
        %5371 = vmatprep.subr.bf16.mxu0 0
        %5372 = vmatpush1.bf16.msra.mxu0 0
        %5373 = vmatprep.subr.bf16.mxu0 0
        %5374 = vmatpush1.bf16.msra.mxu0 0
        %5375 = vmatprep.subr.bf16.mxu0 0
        %5376 = vmatpush1.bf16.msra.mxu0 0
        %5377 = vmatprep.subr.bf16.mxu0 0
        %5378 = vmatpush1.bf16.msra.mxu0 0
        %5379 = vmatprep.subr.bf16.mxu0 0
        %5380 = vmatpush1.bf16.msra.mxu0 0
        %5381 = vmatprep.subr.bf16.mxu0 0
        %5382 = vmatpush1.bf16.msra.mxu0 0
        %5383 = vmatprep.subr.bf16.mxu0 0
        %5384 = vmatpush1.bf16.msra.mxu0 0
        %5385 = vmatprep.subr.bf16.mxu0 0
        %5386 = vmatpush1.bf16.msra.mxu0 0
        %5387 = vmatprep.subr.bf16.mxu0 0
        %5388 = vmatpush1.bf16.msra.mxu0 0
        %5389 = vmatprep.subr.bf16.mxu0 0
        %5390 = vmatpush1.bf16.msra.mxu0 0
        %5391 = vmatprep.subr.bf16.mxu0 0
        %5392 = vmatpush1.bf16.msra.mxu0 0
        %5393 = vmatprep.mubr.bf16.mxu0 0
        %5394 = vmatmul.mubr.bf16.gmra.mrb[0].mxu0 %v4088
        %v5395 = vpop.f32.mrb[0].mxu0
        %v5396 = vadd.f32 %v2758, %v5395
        %v5397 = vpop.f32.mrb[0].mxu0
        %v5398 = vpop.f32.mrb[0].mxu0
        %v5399 = vpop.f32.mrb[0].mxu0
        %5400 = vdwg.mxu0
        %v5401 = vcombine.low %v4125, %v4166
        %v5403 = vunpack.c.l.s4 1983009808
        %v5404 = vunpack.c.0.s8 %v5403
        %v5405 = vlaneseq
        %v5406 = vshrl.u32 %v5405, 7
        %v5407 = vsub.s32 %v5404, %v5406
        %v5408 = vrot.slane %v5401, %v5407
        %v5409 = vcombine.low %v4127, %v4168
        %v5411 = vunpack.c.l.s4 1983009808
        %v5412 = vunpack.c.0.s8 %v5411
        %v5413 = vlaneseq
        %v5414 = vshrl.u32 %v5413, 7
        %v5415 = vsub.s32 %v5412, %v5414
        %v5416 = vrot.slane %v5409, %v5415
        %v5417 = vcombine.low %v4207, %v4248
        %v5419 = vunpack.c.l.s4 1983009808
        %v5420 = vunpack.c.0.s8 %v5419
        %v5421 = vlaneseq
        %v5422 = vshrl.u32 %v5421, 7
        %v5423 = vsub.s32 %v5420, %v5422
        %v5424 = vrot.slane %v5417, %v5423
        %v5425 = vcombine.low %v4209, %v4250
        %v5427 = vunpack.c.l.s4 1983009808
        %v5428 = vunpack.c.0.s8 %v5427
        %v5429 = vlaneseq
        %v5430 = vshrl.u32 %v5429, 7
        %v5431 = vsub.s32 %v5428, %v5430
        %v5432 = vrot.slane %v5425, %v5431
        %v5433 = vcombine.low %v5408, %v5416
        %v5435 = vunpack.c.l.s4 1934713408
        %v5436 = vunpack.c.0.s8 %v5435
        %v5437 = vlaneseq
        %v5438 = vshrl.u32 %v5437, 7
        %v5439 = vsub.s32 %v5436, %v5438
        %v5440 = vrot.slane %v5433, %v5439
        %v5441 = vcombine.low %v5424, %v5432
        %v5443 = vunpack.c.l.s4 1934713408
        %v5444 = vunpack.c.0.s8 %v5443
        %v5445 = vlaneseq
        %v5446 = vshrl.u32 %v5445, 7
        %v5447 = vsub.s32 %v5444, %v5446
        %v5448 = vrot.slane %v5441, %v5447
        %v5449 = vcombine.low %v5440, %v5448
        %v5450 = vcombine.high %v5440, %v5448
        %v5451 = vcombine.low %v4289, %v4330
        %v5453 = vunpack.c.l.s4 1983009808
        %v5454 = vunpack.c.0.s8 %v5453
        %v5455 = vlaneseq
        %v5456 = vshrl.u32 %v5455, 7
        %v5457 = vsub.s32 %v5454, %v5456
        %v5458 = vrot.slane %v5451, %v5457
        %v5459 = vcombine.low %v4291, %v4332
        %v5461 = vunpack.c.l.s4 1983009808
        %v5462 = vunpack.c.0.s8 %v5461
        %v5463 = vlaneseq
        %v5464 = vshrl.u32 %v5463, 7
        %v5465 = vsub.s32 %v5462, %v5464
        %v5466 = vrot.slane %v5459, %v5465
        %v5467 = vcombine.low %v4371, %v4412
        %v5469 = vunpack.c.l.s4 1983009808
        %v5470 = vunpack.c.0.s8 %v5469
        %v5471 = vlaneseq
        %v5472 = vshrl.u32 %v5471, 7
        %v5473 = vsub.s32 %v5470, %v5472
        %v5474 = vrot.slane %v5467, %v5473
        %v5475 = vcombine.low %v4373, %v4414
        %v5477 = vunpack.c.l.s4 1983009808
        %v5478 = vunpack.c.0.s8 %v5477
        %v5479 = vlaneseq
        %v5480 = vshrl.u32 %v5479, 7
        %v5481 = vsub.s32 %v5478, %v5480
        %v5482 = vrot.slane %v5475, %v5481
        %v5483 = vcombine.low %v5458, %v5466
        %v5485 = vunpack.c.l.s4 1934713408
        %v5486 = vunpack.c.0.s8 %v5485
        %v5487 = vlaneseq
        %v5488 = vshrl.u32 %v5487, 7
        %v5489 = vsub.s32 %v5486, %v5488
        %v5490 = vrot.slane %v5483, %v5489
        %v5491 = vcombine.low %v5474, %v5482
        %v5493 = vunpack.c.l.s4 1934713408
        %v5494 = vunpack.c.0.s8 %v5493
        %v5495 = vlaneseq
        %v5496 = vshrl.u32 %v5495, 7
        %v5497 = vsub.s32 %v5494, %v5496
        %v5498 = vrot.slane %v5491, %v5497
        %v5499 = vcombine.low %v5490, %v5498
        %v5500 = vcombine.high %v5490, %v5498
        %v5501 = vcombine.low %v4453, %v4494
        %v5503 = vunpack.c.l.s4 1983009808
        %v5504 = vunpack.c.0.s8 %v5503
        %v5505 = vlaneseq
        %v5506 = vshrl.u32 %v5505, 7
        %v5507 = vsub.s32 %v5504, %v5506
        %v5508 = vrot.slane %v5501, %v5507
        %v5509 = vcombine.low %v4455, %v4496
        %v5511 = vunpack.c.l.s4 1983009808
        %v5512 = vunpack.c.0.s8 %v5511
        %v5513 = vlaneseq
        %v5514 = vshrl.u32 %v5513, 7
        %v5515 = vsub.s32 %v5512, %v5514
        %v5516 = vrot.slane %v5509, %v5515
        %v5517 = vcombine.low %v4535, %v4576
        %v5519 = vunpack.c.l.s4 1983009808
        %v5520 = vunpack.c.0.s8 %v5519
        %v5521 = vlaneseq
        %v5522 = vshrl.u32 %v5521, 7
        %v5523 = vsub.s32 %v5520, %v5522
        %v5524 = vrot.slane %v5517, %v5523
        %v5525 = vcombine.low %v4537, %v4578
        %v5527 = vunpack.c.l.s4 1983009808
        %v5528 = vunpack.c.0.s8 %v5527
        %v5529 = vlaneseq
        %v5530 = vshrl.u32 %v5529, 7
        %v5531 = vsub.s32 %v5528, %v5530
        %v5532 = vrot.slane %v5525, %v5531
        %v5533 = vcombine.low %v5508, %v5516
        %v5535 = vunpack.c.l.s4 1934713408
        %v5536 = vunpack.c.0.s8 %v5535
        %v5537 = vlaneseq
        %v5538 = vshrl.u32 %v5537, 7
        %v5539 = vsub.s32 %v5536, %v5538
        %v5540 = vrot.slane %v5533, %v5539
        %v5541 = vcombine.low %v5524, %v5532
        %v5543 = vunpack.c.l.s4 1934713408
        %v5544 = vunpack.c.0.s8 %v5543
        %v5545 = vlaneseq
        %v5546 = vshrl.u32 %v5545, 7
        %v5547 = vsub.s32 %v5544, %v5546
        %v5548 = vrot.slane %v5541, %v5547
        %v5549 = vcombine.low %v5540, %v5548
        %v5550 = vcombine.high %v5540, %v5548
        %v5551 = vcombine.low %v4617, %v4658
        %v5553 = vunpack.c.l.s4 1983009808
        %v5554 = vunpack.c.0.s8 %v5553
        %v5555 = vlaneseq
        %v5556 = vshrl.u32 %v5555, 7
        %v5557 = vsub.s32 %v5554, %v5556
        %v5558 = vrot.slane %v5551, %v5557
        %v5559 = vcombine.low %v4619, %v4660
        %v5561 = vunpack.c.l.s4 1983009808
        %v5562 = vunpack.c.0.s8 %v5561
        %v5563 = vlaneseq
        %v5564 = vshrl.u32 %v5563, 7
        %v5565 = vsub.s32 %v5562, %v5564
        %v5566 = vrot.slane %v5559, %v5565
        %v5567 = vcombine.low %v4699, %v4740
        %v5569 = vunpack.c.l.s4 1983009808
        %v5570 = vunpack.c.0.s8 %v5569
        %v5571 = vlaneseq
        %v5572 = vshrl.u32 %v5571, 7
        %v5573 = vsub.s32 %v5570, %v5572
        %v5574 = vrot.slane %v5567, %v5573
        %v5575 = vcombine.low %v4701, %v4742
        %v5577 = vunpack.c.l.s4 1983009808
        %v5578 = vunpack.c.0.s8 %v5577
        %v5579 = vlaneseq
        %v5580 = vshrl.u32 %v5579, 7
        %v5581 = vsub.s32 %v5578, %v5580
        %v5582 = vrot.slane %v5575, %v5581
        %v5583 = vcombine.low %v5558, %v5566
        %v5585 = vunpack.c.l.s4 1934713408
        %v5586 = vunpack.c.0.s8 %v5585
        %v5587 = vlaneseq
        %v5588 = vshrl.u32 %v5587, 7
        %v5589 = vsub.s32 %v5586, %v5588
        %v5590 = vrot.slane %v5583, %v5589
        %v5591 = vcombine.low %v5574, %v5582
        %v5593 = vunpack.c.l.s4 1934713408
        %v5594 = vunpack.c.0.s8 %v5593
        %v5595 = vlaneseq
        %v5596 = vshrl.u32 %v5595, 7
        %v5597 = vsub.s32 %v5594, %v5596
        %v5598 = vrot.slane %v5591, %v5597
        %v5599 = vcombine.low %v5590, %v5598
        %v5600 = vcombine.high %v5590, %v5598
        %v5601 = vcombine.low %v4781, %v4822
        %v5603 = vunpack.c.l.s4 1983009808
        %v5604 = vunpack.c.0.s8 %v5603
        %v5605 = vlaneseq
        %v5606 = vshrl.u32 %v5605, 7
        %v5607 = vsub.s32 %v5604, %v5606
        %v5608 = vrot.slane %v5601, %v5607
        %v5609 = vcombine.low %v4783, %v4824
        %v5611 = vunpack.c.l.s4 1983009808
        %v5612 = vunpack.c.0.s8 %v5611
        %v5613 = vlaneseq
        %v5614 = vshrl.u32 %v5613, 7
        %v5615 = vsub.s32 %v5612, %v5614
        %v5616 = vrot.slane %v5609, %v5615
        %v5617 = vcombine.low %v4863, %v4904
        %v5619 = vunpack.c.l.s4 1983009808
        %v5620 = vunpack.c.0.s8 %v5619
        %v5621 = vlaneseq
        %v5622 = vshrl.u32 %v5621, 7
        %v5623 = vsub.s32 %v5620, %v5622
        %v5624 = vrot.slane %v5617, %v5623
        %v5625 = vcombine.low %v4865, %v4906
        %v5627 = vunpack.c.l.s4 1983009808
        %v5628 = vunpack.c.0.s8 %v5627
        %v5629 = vlaneseq
        %v5630 = vshrl.u32 %v5629, 7
        %v5631 = vsub.s32 %v5628, %v5630
        %v5632 = vrot.slane %v5625, %v5631
        %v5633 = vcombine.low %v5608, %v5616
        %v5635 = vunpack.c.l.s4 1934713408
        %v5636 = vunpack.c.0.s8 %v5635
        %v5637 = vlaneseq
        %v5638 = vshrl.u32 %v5637, 7
        %v5639 = vsub.s32 %v5636, %v5638
        %v5640 = vrot.slane %v5633, %v5639
        %v5641 = vcombine.low %v5624, %v5632
        %v5643 = vunpack.c.l.s4 1934713408
        %v5644 = vunpack.c.0.s8 %v5643
        %v5645 = vlaneseq
        %v5646 = vshrl.u32 %v5645, 7
        %v5647 = vsub.s32 %v5644, %v5646
        %v5648 = vrot.slane %v5641, %v5647
        %v5649 = vcombine.low %v5640, %v5648
        %v5650 = vcombine.high %v5640, %v5648
        %v5651 = vcombine.low %v4945, %v4986
        %v5653 = vunpack.c.l.s4 1983009808
        %v5654 = vunpack.c.0.s8 %v5653
        %v5655 = vlaneseq
        %v5656 = vshrl.u32 %v5655, 7
        %v5657 = vsub.s32 %v5654, %v5656
        %v5658 = vrot.slane %v5651, %v5657
        %v5659 = vcombine.low %v4947, %v4988
        %v5661 = vunpack.c.l.s4 1983009808
        %v5662 = vunpack.c.0.s8 %v5661
        %v5663 = vlaneseq
        %v5664 = vshrl.u32 %v5663, 7
        %v5665 = vsub.s32 %v5662, %v5664
        %v5666 = vrot.slane %v5659, %v5665
        %v5667 = vcombine.low %v5027, %v5068
        %v5669 = vunpack.c.l.s4 1983009808
        %v5670 = vunpack.c.0.s8 %v5669
        %v5671 = vlaneseq
        %v5672 = vshrl.u32 %v5671, 7
        %v5673 = vsub.s32 %v5670, %v5672
        %v5674 = vrot.slane %v5667, %v5673
        %v5675 = vcombine.low %v5029, %v5070
        %v5677 = vunpack.c.l.s4 1983009808
        %v5678 = vunpack.c.0.s8 %v5677
        %v5679 = vlaneseq
        %v5680 = vshrl.u32 %v5679, 7
        %v5681 = vsub.s32 %v5678, %v5680
        %v5682 = vrot.slane %v5675, %v5681
        %v5683 = vcombine.low %v5658, %v5666
        %v5685 = vunpack.c.l.s4 1934713408
        %v5686 = vunpack.c.0.s8 %v5685
        %v5687 = vlaneseq
        %v5688 = vshrl.u32 %v5687, 7
        %v5689 = vsub.s32 %v5686, %v5688
        %v5690 = vrot.slane %v5683, %v5689
        %v5691 = vcombine.low %v5674, %v5682
        %v5693 = vunpack.c.l.s4 1934713408
        %v5694 = vunpack.c.0.s8 %v5693
        %v5695 = vlaneseq
        %v5696 = vshrl.u32 %v5695, 7
        %v5697 = vsub.s32 %v5694, %v5696
        %v5698 = vrot.slane %v5691, %v5697
        %v5699 = vcombine.low %v5690, %v5698
        %v5700 = vcombine.high %v5690, %v5698
        %v5701 = vcombine.low %v5109, %v5150
        %v5703 = vunpack.c.l.s4 1983009808
        %v5704 = vunpack.c.0.s8 %v5703
        %v5705 = vlaneseq
        %v5706 = vshrl.u32 %v5705, 7
        %v5707 = vsub.s32 %v5704, %v5706
        %v5708 = vrot.slane %v5701, %v5707
        %v5709 = vcombine.low %v5111, %v5152
        %v5711 = vunpack.c.l.s4 1983009808
        %v5712 = vunpack.c.0.s8 %v5711
        %v5713 = vlaneseq
        %v5714 = vshrl.u32 %v5713, 7
        %v5715 = vsub.s32 %v5712, %v5714
        %v5716 = vrot.slane %v5709, %v5715
        %v5717 = vcombine.low %v5191, %v5232
        %v5719 = vunpack.c.l.s4 1983009808
        %v5720 = vunpack.c.0.s8 %v5719
        %v5721 = vlaneseq
        %v5722 = vshrl.u32 %v5721, 7
        %v5723 = vsub.s32 %v5720, %v5722
        %v5724 = vrot.slane %v5717, %v5723
        %v5725 = vcombine.low %v5193, %v5234
        %v5727 = vunpack.c.l.s4 1983009808
        %v5728 = vunpack.c.0.s8 %v5727
        %v5729 = vlaneseq
        %v5730 = vshrl.u32 %v5729, 7
        %v5731 = vsub.s32 %v5728, %v5730
        %v5732 = vrot.slane %v5725, %v5731
        %v5733 = vcombine.low %v5708, %v5716
        %v5735 = vunpack.c.l.s4 1934713408
        %v5736 = vunpack.c.0.s8 %v5735
        %v5737 = vlaneseq
        %v5738 = vshrl.u32 %v5737, 7
        %v5739 = vsub.s32 %v5736, %v5738
        %v5740 = vrot.slane %v5733, %v5739
        %v5741 = vcombine.low %v5724, %v5732
        %v5743 = vunpack.c.l.s4 1934713408
        %v5744 = vunpack.c.0.s8 %v5743
        %v5745 = vlaneseq
        %v5746 = vshrl.u32 %v5745, 7
        %v5747 = vsub.s32 %v5744, %v5746
        %v5748 = vrot.slane %v5741, %v5747
        %v5749 = vcombine.low %v5740, %v5748
        %v5750 = vcombine.high %v5740, %v5748
        %v5751 = vcombine.low %v5273, %v5314
        %v5753 = vunpack.c.l.s4 1983009808
        %v5754 = vunpack.c.0.s8 %v5753
        %v5755 = vlaneseq
        %v5756 = vshrl.u32 %v5755, 7
        %v5757 = vsub.s32 %v5754, %v5756
        %v5758 = vrot.slane %v5751, %v5757
        %v5759 = vcombine.low %v5275, %v5316
        %v5761 = vunpack.c.l.s4 1983009808
        %v5762 = vunpack.c.0.s8 %v5761
        %v5763 = vlaneseq
        %v5764 = vshrl.u32 %v5763, 7
        %v5765 = vsub.s32 %v5762, %v5764
        %v5766 = vrot.slane %v5759, %v5765
        %v5767 = vcombine.low %v5355, %v5396
        %v5769 = vunpack.c.l.s4 1983009808
        %v5770 = vunpack.c.0.s8 %v5769
        %v5771 = vlaneseq
        %v5772 = vshrl.u32 %v5771, 7
        %v5773 = vsub.s32 %v5770, %v5772
        %v5774 = vrot.slane %v5767, %v5773
        %v5775 = vcombine.low %v5758, %v5766
        %v5777 = vunpack.c.l.s4 1934713408
        %v5778 = vunpack.c.0.s8 %v5777
        %v5779 = vlaneseq
        %v5780 = vshrl.u32 %v5779, 7
        %v5781 = vsub.s32 %v5778, %v5780
        %v5782 = vrot.slane %v5775, %v5781
        %v5783 = vcombine.low %v5774, %v5357
        %v5785 = vunpack.c.l.s4 1934713408
        %v5786 = vunpack.c.0.s8 %v5785
        %v5787 = vlaneseq
        %v5788 = vshrl.u32 %v5787, 7
        %v5789 = vsub.s32 %v5786, %v5788
        %v5790 = vrot.slane %v5783, %v5789
        %v5791 = vcombine.low %v5782, %v5790
        %v5792 = vcombine.high %v5782, %v5790
        %5793 = vmax.xlane.f32.xlu0 %v5449
        %v5794 = vpop.xlane.xlu0 %5793
        %5795 = vmax.xlane.f32.xlu0 %v5499
        %v5796 = vpop.xlane.xlu0 %5795
        %5797 = vmax.xlane.f32.xlu0 %v5549
        %v5798 = vpop.xlane.xlu0 %5797
        %5799 = vmax.xlane.f32.xlu0 %v5599
        %v5800 = vpop.xlane.xlu0 %5799
        %5801 = vmax.xlane.f32.xlu0 %v5649
        %v5802 = vpop.xlane.xlu0 %5801
        %5803 = vmax.xlane.f32.xlu0 %v5699
        %v5804 = vpop.xlane.xlu0 %5803
        %5805 = vmax.xlane.f32.xlu0 %v5749
        %v5806 = vpop.xlane.xlu0 %5805
        %vm5807 = vcmask 1046528
        %v5808 = vsel %vm5807, %v5791, -inf
        %5809 = vmax.xlane.f32.xlu0 %v5808
        %v5810 = vpop.xlane.xlu0 %5809
        %5811 = vmax.xlane.f32.xlu0 %v5450
        %v5812 = vpop.xlane.xlu0 %5811
        %5813 = vmax.xlane.f32.xlu0 %v5500
        %v5814 = vpop.xlane.xlu0 %5813
        %5815 = vmax.xlane.f32.xlu0 %v5550
        %v5816 = vpop.xlane.xlu0 %5815
        %5817 = vmax.xlane.f32.xlu0 %v5600
        %v5818 = vpop.xlane.xlu0 %5817
        %5819 = vmax.xlane.f32.xlu0 %v5650
        %v5820 = vpop.xlane.xlu0 %5819
        %5821 = vmax.xlane.f32.xlu0 %v5700
        %v5822 = vpop.xlane.xlu0 %5821
        %5823 = vmax.xlane.f32.xlu0 %v5750
        %v5824 = vpop.xlane.xlu0 %5823
        %v5825 = vsel %vm5807, %v5792, -inf
        %5826 = vmax.xlane.f32.xlu0 %v5825
        %v5827 = vpop.xlane.xlu0 %5826
        %v5828 = vsub.f32 %v5449, %v5794
        %v5829 = vsub.f32 %v5499, %v5796
        %v5830 = vsub.f32 %v5549, %v5798
        %v5831 = vsub.f32 %v5599, %v5800
        %v5832 = vsub.f32 %v5649, %v5802
        %v5833 = vsub.f32 %v5699, %v5804
        %v5834 = vsub.f32 %v5749, %v5806
        %v5835 = vsub.f32 %v5791, %v5810
        %v5836 = vsub.f32 %v5450, %v5812
        %v5837 = vsub.f32 %v5500, %v5814
        %v5838 = vsub.f32 %v5550, %v5816
        %v5839 = vsub.f32 %v5600, %v5818
        %v5840 = vsub.f32 %v5650, %v5820
        %v5841 = vsub.f32 %v5700, %v5822
        %v5842 = vsub.f32 %v5750, %v5824
        %v5843 = vsub.f32 %v5792, %v5827
        %v5844 = vmul.f32 %v5828, 1.442695
        %v5845 = vpow.pop %v5844
        %v5846 = vmul.f32 %v5829, 1.442695
        %v5847 = vpow.pop %v5846
        %v5848 = vmul.f32 %v5830, 1.442695
        %v5849 = vpow.pop %v5848
        %v5850 = vmul.f32 %v5831, 1.442695
        %v5851 = vpow.pop %v5850
        %v5852 = vmul.f32 %v5832, 1.442695
        %v5853 = vpow.pop %v5852
        %v5854 = vmul.f32 %v5833, 1.442695
        %v5855 = vpow.pop %v5854
        %v5856 = vmul.f32 %v5834, 1.442695
        %v5857 = vpow.pop %v5856
        %v5858 = vmul.f32 %v5835, 1.442695
        %v5859 = vpow.pop %v5858
        %v5860 = vmul.f32 %v5836, 1.442695
        %v5861 = vpow.pop %v5860
        %v5862 = vmul.f32 %v5837, 1.442695
        %v5863 = vpow.pop %v5862
        %v5864 = vmul.f32 %v5838, 1.442695
        %v5865 = vpow.pop %v5864
        %v5866 = vmul.f32 %v5839, 1.442695
        %v5867 = vpow.pop %v5866
        %v5868 = vmul.f32 %v5840, 1.442695
        %v5869 = vpow.pop %v5868
        %v5870 = vmul.f32 %v5841, 1.442695
        %v5871 = vpow.pop %v5870
        %v5872 = vmul.f32 %v5842, 1.442695
        %v5873 = vpow.pop %v5872
        %v5874 = vmul.f32 %v5843, 1.442695
        %v5875 = vpow.pop %v5874
        %5876 = vadd.xlane.f32.xlu0 %v5845
        %v5877 = vpop.xlane.xlu0 %5876
        %5878 = vadd.xlane.f32.xlu0 %v5847
        %v5879 = vpop.xlane.xlu0 %5878
        %5880 = vadd.xlane.f32.xlu0 %v5849
        %v5881 = vpop.xlane.xlu0 %5880
        %5882 = vadd.xlane.f32.xlu0 %v5851
        %v5883 = vpop.xlane.xlu0 %5882
        %5884 = vadd.xlane.f32.xlu0 %v5853
        %v5885 = vpop.xlane.xlu0 %5884
        %5886 = vadd.xlane.f32.xlu0 %v5855
        %v5887 = vpop.xlane.xlu0 %5886
        %5888 = vadd.xlane.f32.xlu0 %v5857
        %v5889 = vpop.xlane.xlu0 %5888
        %v5890 = vsel %vm5807, %v5859, 0.0
        %5891 = vadd.xlane.f32.xlu0 %v5890
        %v5892 = vpop.xlane.xlu0 %5891
        %5893 = vadd.xlane.f32.xlu0 %v5861
        %v5894 = vpop.xlane.xlu0 %5893
        %5895 = vadd.xlane.f32.xlu0 %v5863
        %v5896 = vpop.xlane.xlu0 %5895
        %5897 = vadd.xlane.f32.xlu0 %v5865
        %v5898 = vpop.xlane.xlu0 %5897
        %5899 = vadd.xlane.f32.xlu0 %v5867
        %v5900 = vpop.xlane.xlu0 %5899
        %5901 = vadd.xlane.f32.xlu0 %v5869
        %v5902 = vpop.xlane.xlu0 %5901
        %5903 = vadd.xlane.f32.xlu0 %v5871
        %v5904 = vpop.xlane.xlu0 %5903
        %5905 = vadd.xlane.f32.xlu0 %v5873
        %v5906 = vpop.xlane.xlu0 %5905
        %v5907 = vsel %vm5807, %v5875, 0.0
        %5908 = vadd.xlane.f32.xlu0 %v5907
        %v5909 = vpop.xlane.xlu0 %5908
        %v5910 = vlog2.pop %v5877
        %v5911 = vmul.f32 %v5910, 0.6931472
        %v5912 = vlog2.pop %v5879
        %v5913 = vmul.f32 %v5912, 0.6931472
        %v5914 = vlog2.pop %v5881
        %v5915 = vmul.f32 %v5914, 0.6931472
        %v5916 = vlog2.pop %v5883
        %v5917 = vmul.f32 %v5916, 0.6931472
        %v5918 = vlog2.pop %v5885
        %v5919 = vmul.f32 %v5918, 0.6931472
        %v5920 = vlog2.pop %v5887
        %v5921 = vmul.f32 %v5920, 0.6931472
        %v5922 = vlog2.pop %v5889
        %v5923 = vmul.f32 %v5922, 0.6931472
        %v5924 = vlog2.pop %v5892
        %v5925 = vmul.f32 %v5924, 0.6931472
        %v5926 = vlog2.pop %v5894
        %v5927 = vmul.f32 %v5926, 0.6931472
        %v5928 = vlog2.pop %v5896
        %v5929 = vmul.f32 %v5928, 0.6931472
        %v5930 = vlog2.pop %v5898
        %v5931 = vmul.f32 %v5930, 0.6931472
        %v5932 = vlog2.pop %v5900
        %v5933 = vmul.f32 %v5932, 0.6931472
        %v5934 = vlog2.pop %v5902
        %v5935 = vmul.f32 %v5934, 0.6931472
        %v5936 = vlog2.pop %v5904
        %v5937 = vmul.f32 %v5936, 0.6931472
        %v5938 = vlog2.pop %v5906
        %v5939 = vmul.f32 %v5938, 0.6931472
        %v5940 = vlog2.pop %v5909
        %v5941 = vmul.f32 %v5940, 0.6931472
        %v5942 = vadd.f32 %v5911, %v5794
        %v5943 = vadd.f32 %v5913, %v5796
        %v5944 = vadd.f32 %v5915, %v5798
        %v5945 = vadd.f32 %v5917, %v5800
        %v5946 = vadd.f32 %v5919, %v5802
        %v5947 = vadd.f32 %v5921, %v5804
        %v5948 = vadd.f32 %v5923, %v5806
        %v5949 = vadd.f32 %v5925, %v5810
        %v5950 = vadd.f32 %v5927, %v5812
        %v5951 = vadd.f32 %v5929, %v5814
        %v5952 = vadd.f32 %v5931, %v5816
        %v5953 = vadd.f32 %v5933, %v5818
        %v5954 = vadd.f32 %v5935, %v5820
        %v5955 = vadd.f32 %v5937, %v5822
        %v5956 = vadd.f32 %v5939, %v5824
        %v5957 = vadd.f32 %v5941, %v5827
        %v5958 = vsub.f32 %v5449, %v5942
        %v5959 = vsub.f32 %v5499, %v5943
        %v5960 = vsub.f32 %v5549, %v5944
        %v5961 = vsub.f32 %v5599, %v5945
        %v5962 = vsub.f32 %v5649, %v5946
        %v5963 = vsub.f32 %v5699, %v5947
        %v5964 = vsub.f32 %v5749, %v5948
        %v5965 = vsub.f32 %v5791, %v5949
        %v5966 = vsub.f32 %v5450, %v5950
        %v5967 = vsub.f32 %v5500, %v5951
        %v5968 = vsub.f32 %v5550, %v5952
        %v5969 = vsub.f32 %v5600, %v5953
        %v5970 = vsub.f32 %v5650, %v5954
        %v5971 = vsub.f32 %v5700, %v5955
        %v5972 = vsub.f32 %v5750, %v5956
        %v5973 = vsub.f32 %v5792, %v5957
        %v5974 = vlaneseq
        %v5975 = vand.u32 %v5974, 127
        %v5976 = vld [vmem:[%s703] sm:$0x3]
        %v5977 = vlaneseq
        %v5978 = vshrl.u32 %v5977, 7
        %v5979 = vsub.s32 0, %v5978
        %v5980 = vrot.slane %v5976, %v5979
        %5982 = vbcast.lane.b32.xlu0 %v5980, 256
        %v5983 = vpop.permute.xlu0 %5982
        %s5985 = sor.u32 256, 8
        %5986 = vbcast.lane.b32.xlu0 %v5980, %s5985
        %v5987 = vpop.permute.xlu0 %5986
        %s5989 = sor.u32 256, 16
        %5990 = vbcast.lane.b32.xlu0 %v5980, %s5989
        %v5991 = vpop.permute.xlu0 %5990
        %s5993 = sor.u32 256, 24
        %5994 = vbcast.lane.b32.xlu0 %v5980, %s5993
        %v5995 = vpop.permute.xlu0 %5994
        %s5997 = sor.u32 256, 32
        %5998 = vbcast.lane.b32.xlu0 %v5980, %s5997
        %v5999 = vpop.permute.xlu0 %5998
        %s6001 = sor.u32 256, 40
        %6002 = vbcast.lane.b32.xlu0 %v5980, %s6001
        %v6003 = vpop.permute.xlu0 %6002
        %s6005 = sor.u32 256, 48
        %6006 = vbcast.lane.b32.xlu0 %v5980, %s6005
        %v6007 = vpop.permute.xlu0 %6006
        %s6009 = sor.u32 256, 56
        %6010 = vbcast.lane.b32.xlu0 %v5980, %s6009
        %v6011 = vpop.permute.xlu0 %6010
        %v6012 = vlaneseq
        %v6013 = vshrl.u32 %v6012, 7
        %v6014 = vsub.s32 1, %v6013
        %v6015 = vrot.slane %v5976, %v6014
        %6017 = vbcast.lane.b32.xlu0 %v6015, 256
        %v6018 = vpop.permute.xlu0 %6017
        %s6020 = sor.u32 256, 8
        %6021 = vbcast.lane.b32.xlu0 %v6015, %s6020
        %v6022 = vpop.permute.xlu0 %6021
        %s6024 = sor.u32 256, 16
        %6025 = vbcast.lane.b32.xlu0 %v6015, %s6024
        %v6026 = vpop.permute.xlu0 %6025
        %s6028 = sor.u32 256, 24
        %6029 = vbcast.lane.b32.xlu0 %v6015, %s6028
        %v6030 = vpop.permute.xlu0 %6029
        %s6032 = sor.u32 256, 32
        %6033 = vbcast.lane.b32.xlu0 %v6015, %s6032
        %v6034 = vpop.permute.xlu0 %6033
        %s6036 = sor.u32 256, 40
        %6037 = vbcast.lane.b32.xlu0 %v6015, %s6036
        %v6038 = vpop.permute.xlu0 %6037
        %s6040 = sor.u32 256, 48
        %6041 = vbcast.lane.b32.xlu0 %v6015, %s6040
        %v6042 = vpop.permute.xlu0 %6041
        %s6044 = sor.u32 256, 56
        %6045 = vbcast.lane.b32.xlu0 %v6015, %s6044
        %v6046 = vpop.permute.xlu0 %6045
        %vm6047 = vcmp.eq.s32.totalorder %v5975, %v5983
        %vm6048 = vcmp.eq.s32.totalorder %v5975, %v5987
        %vm6049 = vcmp.eq.s32.totalorder %v5975, %v5991
        %vm6050 = vcmp.eq.s32.totalorder %v5975, %v5995
        %vm6051 = vcmp.eq.s32.totalorder %v5975, %v5999
        %vm6052 = vcmp.eq.s32.totalorder %v5975, %v6003
        %vm6053 = vcmp.eq.s32.totalorder %v5975, %v6007
        %vm6054 = vcmp.eq.s32.totalorder %v5975, %v6011
        %vm6055 = vcmp.eq.s32.totalorder %v5975, %v6018
        %vm6056 = vcmp.eq.s32.totalorder %v5975, %v6022
        %vm6057 = vcmp.eq.s32.totalorder %v5975, %v6026
        %vm6058 = vcmp.eq.s32.totalorder %v5975, %v6030
        %vm6059 = vcmp.eq.s32.totalorder %v5975, %v6034
        %vm6060 = vcmp.eq.s32.totalorder %v5975, %v6038
        %vm6061 = vcmp.eq.s32.totalorder %v5975, %v6042
        %vm6062 = vcmp.eq.s32.totalorder %v5975, %v6046
        %v6063 = vsub.f32 0.0, %v5958
        %v6064 = vsub.f32 0.0, %v5959
        %v6065 = vsub.f32 0.0, %v5960
        %v6066 = vsub.f32 0.0, %v5961
        %v6067 = vsub.f32 0.0, %v5962
        %v6068 = vsub.f32 0.0, %v5963
        %v6069 = vsub.f32 0.0, %v5964
        %v6070 = vsub.f32 0.0, %v5965
        %v6071 = vsub.f32 0.0, %v5966
        %v6072 = vsub.f32 0.0, %v5967
        %v6073 = vsub.f32 0.0, %v5968
        %v6074 = vsub.f32 0.0, %v5969
        %v6075 = vsub.f32 0.0, %v5970
        %v6076 = vsub.f32 0.0, %v5971
        %v6077 = vsub.f32 0.0, %v5972
        %v6078 = vsub.f32 0.0, %v5973
        %v6079 = vsel %vm6047, %v6063, 0.0
        %v6080 = vsel %vm6048, %v6064, 0.0
        %v6081 = vsel %vm6049, %v6065, 0.0
        %v6082 = vsel %vm6050, %v6066, 0.0
        %v6083 = vsel %vm6051, %v6067, 0.0
        %v6084 = vsel %vm6052, %v6068, 0.0
        %v6085 = vsel %vm6053, %v6069, 0.0
        %v6086 = vsel %vm6054, %v6070, 0.0
        %v6087 = vsel %vm6055, %v6071, 0.0
        %v6088 = vsel %vm6056, %v6072, 0.0
        %v6089 = vsel %vm6057, %v6073, 0.0
        %v6090 = vsel %vm6058, %v6074, 0.0
        %v6091 = vsel %vm6059, %v6075, 0.0
        %v6092 = vsel %vm6060, %v6076, 0.0
        %v6093 = vsel %vm6061, %v6077, 0.0
        %v6094 = vsel %vm6062, %v6078, 0.0
        %6095 = vadd.xlane.f32.xlu0 %v6079
        %v6096 = vpop.xlane.xlu0 %6095
        %6097 = vadd.xlane.f32.xlu0 %v6080
        %v6098 = vpop.xlane.xlu0 %6097
        %6099 = vadd.xlane.f32.xlu0 %v6081
        %v6100 = vpop.xlane.xlu0 %6099
        %6101 = vadd.xlane.f32.xlu0 %v6082
        %v6102 = vpop.xlane.xlu0 %6101
        %6103 = vadd.xlane.f32.xlu0 %v6083
        %v6104 = vpop.xlane.xlu0 %6103
        %6105 = vadd.xlane.f32.xlu0 %v6084
        %v6106 = vpop.xlane.xlu0 %6105
        %6107 = vadd.xlane.f32.xlu0 %v6085
        %v6108 = vpop.xlane.xlu0 %6107
        %v6109 = vsel %vm5807, %v6086, 0.0
        %6110 = vadd.xlane.f32.xlu0 %v6109
        %v6111 = vpop.xlane.xlu0 %6110
        %6112 = vadd.xlane.f32.xlu0 %v6087
        %v6113 = vpop.xlane.xlu0 %6112
        %6114 = vadd.xlane.f32.xlu0 %v6088
        %v6115 = vpop.xlane.xlu0 %6114
        %6116 = vadd.xlane.f32.xlu0 %v6089
        %v6117 = vpop.xlane.xlu0 %6116
        %6118 = vadd.xlane.f32.xlu0 %v6090
        %v6119 = vpop.xlane.xlu0 %6118
        %6120 = vadd.xlane.f32.xlu0 %v6091
        %v6121 = vpop.xlane.xlu0 %6120
        %6122 = vadd.xlane.f32.xlu0 %v6092
        %v6123 = vpop.xlane.xlu0 %6122
        %6124 = vadd.xlane.f32.xlu0 %v6093
        %v6125 = vpop.xlane.xlu0 %6124
        %v6126 = vsel %vm5807, %v6094, 0.0
        %6127 = vadd.xlane.f32.xlu0 %v6126
        %v6128 = vpop.xlane.xlu0 %6127
        %v6129 = vld [vmem:[%s707] sm:$0x3]
        %v6131 = vlaneseq
        %v6132 = vshrl.u32 %v6131, 7
        %v6133 = vsub.s32 0, %v6132
        %v6134 = vrot.slane %v6129, %v6133
        %6136 = vbcast.lane.b32.xlu0 %v6134, 256
        %v6137 = vpop.permute.xlu0 %6136
        %s6139 = sor.u32 256, 8
        %6140 = vbcast.lane.b32.xlu0 %v6134, %s6139
        %v6141 = vpop.permute.xlu0 %6140
        %s6143 = sor.u32 256, 16
        %6144 = vbcast.lane.b32.xlu0 %v6134, %s6143
        %v6145 = vpop.permute.xlu0 %6144
        %s6147 = sor.u32 256, 24
        %6148 = vbcast.lane.b32.xlu0 %v6134, %s6147
        %v6149 = vpop.permute.xlu0 %6148
        %s6151 = sor.u32 256, 32
        %6152 = vbcast.lane.b32.xlu0 %v6134, %s6151
        %v6153 = vpop.permute.xlu0 %6152
        %s6155 = sor.u32 256, 40
        %6156 = vbcast.lane.b32.xlu0 %v6134, %s6155
        %v6157 = vpop.permute.xlu0 %6156
        %s6159 = sor.u32 256, 48
        %6160 = vbcast.lane.b32.xlu0 %v6134, %s6159
        %v6161 = vpop.permute.xlu0 %6160
        %s6163 = sor.u32 256, 56
        %6164 = vbcast.lane.b32.xlu0 %v6134, %s6163
        %v6165 = vpop.permute.xlu0 %6164
        %v6166 = vlaneseq
        %v6167 = vshrl.u32 %v6166, 7
        %v6168 = vsub.s32 1, %v6167
        %v6169 = vrot.slane %v6129, %v6168
        %6171 = vbcast.lane.b32.xlu0 %v6169, 256
        %v6172 = vpop.permute.xlu0 %6171
        %s6174 = sor.u32 256, 8
        %6175 = vbcast.lane.b32.xlu0 %v6169, %s6174
        %v6176 = vpop.permute.xlu0 %6175
        %s6178 = sor.u32 256, 16
        %6179 = vbcast.lane.b32.xlu0 %v6169, %s6178
        %v6180 = vpop.permute.xlu0 %6179
        %s6182 = sor.u32 256, 24
        %6183 = vbcast.lane.b32.xlu0 %v6169, %s6182
        %v6184 = vpop.permute.xlu0 %6183
        %s6186 = sor.u32 256, 32
        %6187 = vbcast.lane.b32.xlu0 %v6169, %s6186
        %v6188 = vpop.permute.xlu0 %6187
        %s6190 = sor.u32 256, 40
        %6191 = vbcast.lane.b32.xlu0 %v6169, %s6190
        %v6192 = vpop.permute.xlu0 %6191
        %s6194 = sor.u32 256, 48
        %6195 = vbcast.lane.b32.xlu0 %v6169, %s6194
        %v6196 = vpop.permute.xlu0 %6195
        %s6198 = sor.u32 256, 56
        %6199 = vbcast.lane.b32.xlu0 %v6169, %s6198
        %v6200 = vpop.permute.xlu0 %6199
        %v6217 = vmul.f32 %v6096, %v6137
        %v6218 = vmul.f32 %v6098, %v6141
        %v6219 = vmul.f32 %v6100, %v6145
        %v6220 = vmul.f32 %v6102, %v6149
        %v6221 = vmul.f32 %v6104, %v6153
        %v6222 = vmul.f32 %v6106, %v6157
        %v6223 = vmul.f32 %v6108, %v6161
        %v6224 = vmul.f32 %v6111, %v6165
        %v6225 = vmul.f32 %v6113, %v6172
        %v6226 = vmul.f32 %v6115, %v6176
        %v6227 = vmul.f32 %v6117, %v6180
        %v6228 = vmul.f32 %v6119, %v6184
        %v6229 = vmul.f32 %v6121, %v6188
        %v6230 = vmul.f32 %v6123, %v6192
        %v6231 = vmul.f32 %v6125, %v6196
        %v6232 = vmul.f32 %v6128, %v6200
        %v6233 = vmul.f32 %v6217, 0.0078125
        %v6234 = vmul.f32 %v6218, 0.0078125
        %v6235 = vmul.f32 %v6219, 0.0078125
        %v6236 = vmul.f32 %v6220, 0.0078125
        %v6237 = vmul.f32 %v6221, 0.0078125
        %v6238 = vmul.f32 %v6222, 0.0078125
        %v6239 = vmul.f32 %v6223, 0.0078125
        %v6240 = vmul.f32 %v6224, 0.0078125
        %v6241 = vmul.f32 %v6225, 0.0078125
        %v6242 = vmul.f32 %v6226, 0.0078125
        %v6243 = vmul.f32 %v6227, 0.0078125
        %v6244 = vmul.f32 %v6228, 0.0078125
        %v6245 = vmul.f32 %v6229, 0.0078125
        %v6246 = vmul.f32 %v6230, 0.0078125
        %v6247 = vmul.f32 %v6231, 0.0078125
        %v6248 = vmul.f32 %v6232, 0.0078125
        %vm6249 = vcmp.lt.s32.totalorder %v5975, 0
        %v6250 = vsub.s32 0, %v5975
        %v6251 = vsel %vm6249, %v6250, %v5975
        %v6252 = vmul.u32.u64.compose %v6251, 2863311531
        %v6253 = vextract.low.u32 %v6252
        %v6254 = vextract.high.u32 %v6252
        %v6255 = vshrl.u32 %v6254, 1
        %v6256 = vmul.u32 %v6255, 3
        %v6257 = vsub.s32 %v6251, %v6256
        %v6258 = vsub.s32 0, %v6257
        %v6259 = vsel %vm6249, %v6258, %v6257
        %vm6260 = vcmp.ne.s32.totalorder %v6259, 0
        %vm6261 = vcmp.lt.s32.totalorder %v6259, 0
        %vm6262 = vmand %vm6261, %vm6260
        %v6263 = vadd.s32 %v6259, 3
        %v6264 = vsel %vm6262, %v6263, %v6259
        %vm6265 = vcmp.lt.s32.totalorder %v6264, 2
        %s6266 = scalar_select %p709, 1, 0
        %v6267 = vstv %s6266
        %vm6268 = vcmp.eq.s32.totalorder %v6267, 1
        %vm6269 = vmand %vm6265, %vm6268
        %6286 = vset.pattern.permute.xlu0 0
        %6287 = vperm.xlu0 %6286, %v6233
        %v6288 = vpop.permute.xlu0 %6287
        %6289 = vset.pattern.permute.xlu0 0
        %6290 = vperm.xlu0 %6289, %v6234
        %v6291 = vpop.permute.xlu0 %6290
        %6292 = vset.pattern.permute.xlu0 0
        %6293 = vperm.xlu0 %6292, %v6235
        %v6294 = vpop.permute.xlu0 %6293
        %6295 = vset.pattern.permute.xlu0 0
        %6296 = vperm.xlu0 %6295, %v6236
        %v6297 = vpop.permute.xlu0 %6296
        %6298 = vset.pattern.permute.xlu0 0
        %6299 = vperm.xlu0 %6298, %v6237
        %v6300 = vpop.permute.xlu0 %6299
        %6301 = vset.pattern.permute.xlu0 0
        %6302 = vperm.xlu0 %6301, %v6238
        %v6303 = vpop.permute.xlu0 %6302
        %6304 = vset.pattern.permute.xlu0 0
        %6305 = vperm.xlu0 %6304, %v6239
        %v6306 = vpop.permute.xlu0 %6305
        %6307 = vset.pattern.permute.xlu0 0
        %6308 = vperm.xlu0 %6307, %v6240
        %v6309 = vpop.permute.xlu0 %6308
        %6310 = vset.pattern.permute.xlu0 0
        %6311 = vperm.xlu0 %6310, %v6241
        %v6312 = vpop.permute.xlu0 %6311
        %6313 = vset.pattern.permute.xlu0 0
        %6314 = vperm.xlu0 %6313, %v6242
        %v6315 = vpop.permute.xlu0 %6314
        %6316 = vset.pattern.permute.xlu0 0
        %6317 = vperm.xlu0 %6316, %v6243
        %v6318 = vpop.permute.xlu0 %6317
        %6319 = vset.pattern.permute.xlu0 0
        %6320 = vperm.xlu0 %6319, %v6244
        %v6321 = vpop.permute.xlu0 %6320
        %6322 = vset.pattern.permute.xlu0 0
        %6323 = vperm.xlu0 %6322, %v6245
        %v6324 = vpop.permute.xlu0 %6323
        %6325 = vset.pattern.permute.xlu0 0
        %6326 = vperm.xlu0 %6325, %v6246
        %v6327 = vpop.permute.xlu0 %6326
        %6328 = vset.pattern.permute.xlu0 0
        %6329 = vperm.xlu0 %6328, %v6247
        %v6330 = vpop.permute.xlu0 %6329
        %6331 = vset.pattern.permute.xlu0 0
        %6332 = vperm.xlu0 %6331, %v6248
        %v6333 = vpop.permute.xlu0 %6332
        %v6334 = vlaneseq
        %v6335 = vshrl.u32 %v6334, 7
        %v6336 = vsub.s32 %v5975, %v6335
        %v6337 = vrot.slane %v6288, %v6336
        %v6338 = vadd.s32 %v5975, 4294967288
        %v6339 = vlaneseq
        %v6340 = vshrl.u32 %v6339, 7
        %v6341 = vsub.s32 %v6338, %v6340
        %v6342 = vrot.slane %v6291, %v6341
        %vm6343 = vcmask 130112
        %v6344 = vsel %vm6343, %v6342, %v6337
        %v6345 = vadd.s32 %v5975, 4294967280
        %v6346 = vlaneseq
        %v6347 = vshrl.u32 %v6346, 7
        %v6348 = vsub.s32 %v6345, %v6347
        %v6349 = vrot.slane %v6294, %v6348
        %vm6350 = vcmask 195712
        %v6351 = vsel %vm6350, %v6349, %v6344
        %v6352 = vadd.s32 %v5975, 4294967272
        %v6353 = vlaneseq
        %v6354 = vshrl.u32 %v6353, 7
        %v6355 = vsub.s32 %v6352, %v6354
        %v6356 = vrot.slane %v6297, %v6355
        %vm6357 = vcmask 261312
        %v6358 = vsel %vm6357, %v6356, %v6351
        %v6359 = vadd.s32 %v5975, 4294967264
        %v6360 = vlaneseq
        %v6361 = vshrl.u32 %v6360, 7
        %v6362 = vsub.s32 %v6359, %v6361
        %v6363 = vrot.slane %v6300, %v6362
        %vm6364 = vcmask 326912
        %v6365 = vsel %vm6364, %v6363, %v6358
        %v6366 = vadd.s32 %v5975, 4294967256
        %v6367 = vlaneseq
        %v6368 = vshrl.u32 %v6367, 7
        %v6369 = vsub.s32 %v6366, %v6368
        %v6370 = vrot.slane %v6303, %v6369
        %vm6371 = vcmask 392512
        %v6372 = vsel %vm6371, %v6370, %v6365
        %v6373 = vadd.s32 %v5975, 4294967248
        %v6374 = vlaneseq
        %v6375 = vshrl.u32 %v6374, 7
        %v6376 = vsub.s32 %v6373, %v6375
        %v6377 = vrot.slane %v6306, %v6376
        %vm6378 = vcmask 458112
        %v6379 = vsel %vm6378, %v6377, %v6372
        %v6380 = vadd.s32 %v5975, 4294967240
        %v6381 = vlaneseq
        %v6382 = vshrl.u32 %v6381, 7
        %v6383 = vsub.s32 %v6380, %v6382
        %v6384 = vrot.slane %v6309, %v6383
        %vm6385 = vcmask 523712
        %v6386 = vsel %vm6385, %v6384, %v6379
        %v6387 = vlaneseq
        %v6388 = vshrl.u32 %v6387, 7
        %v6389 = vsub.s32 %v5975, %v6388
        %v6390 = vrot.slane %v6312, %v6389
        %v6391 = vlaneseq
        %v6392 = vshrl.u32 %v6391, 7
        %v6393 = vsub.s32 %v6338, %v6392
        %v6394 = vrot.slane %v6315, %v6393
        %v6395 = vsel %vm6343, %v6394, %v6390
        %v6396 = vlaneseq
        %v6397 = vshrl.u32 %v6396, 7
        %v6398 = vsub.s32 %v6345, %v6397
        %v6399 = vrot.slane %v6318, %v6398
        %v6400 = vsel %vm6350, %v6399, %v6395
        %v6401 = vlaneseq
        %v6402 = vshrl.u32 %v6401, 7
        %v6403 = vsub.s32 %v6352, %v6402
        %v6404 = vrot.slane %v6321, %v6403
        %v6405 = vsel %vm6357, %v6404, %v6400
        %v6406 = vlaneseq
        %v6407 = vshrl.u32 %v6406, 7
        %v6408 = vsub.s32 %v6359, %v6407
        %v6409 = vrot.slane %v6324, %v6408
        %v6410 = vsel %vm6364, %v6409, %v6405
        %v6411 = vlaneseq
        %v6412 = vshrl.u32 %v6411, 7
        %v6413 = vsub.s32 %v6366, %v6412
        %v6414 = vrot.slane %v6327, %v6413
        %v6415 = vsel %vm6371, %v6414, %v6410
        %v6416 = vlaneseq
        %v6417 = vshrl.u32 %v6416, 7
        %v6418 = vsub.s32 %v6373, %v6417
        %v6419 = vrot.slane %v6330, %v6418
        %v6420 = vsel %vm6378, %v6419, %v6415
        %v6421 = vlaneseq
        %v6422 = vshrl.u32 %v6421, 7
        %v6423 = vsub.s32 %v6380, %v6422
        %v6424 = vrot.slane %v6333, %v6423
        %v6425 = vsel %vm6385, %v6424, %v6420
        %vm6426 = vcmask 1041409
        %v6427 = vsel %vm6426, %v6425, %v6386
        %v6429 = vsel %vm6269, %v6427, 0.0
        %vm6430 = vcmask 508928
        %v6431 = vsel %vm6430, %v6429, 0.0
        %6432 = vadd.xlane.f32.xlu0 %v6431
        %v6433 = vpop.xlane.xlu0 %6432
        %v6434 = vrot.slane %v6433, 4
        %v6435 = vadd.f32 %v6433, %v6434
        %v6436 = vrot.slane %v6435, 2
        %v6437 = vadd.f32 %v6435, %v6436
        %v6438 = vrot.slane %v6437, 1
        %v6439 = vadd.f32 %v6437, %v6438
        %s6440 = vtos %v6439
        %vm6441 = vcmp.eq.s32.totalorder %v5975, 0
        %v6442 = vstv %s6440
        %v6443 = vsel %vm6441, %v6442, 0.0
        %v6444 = vadd.f32 %v6443, 0.0
        %v6445 = vsel %vm6441, 1.1904762, 0.0
        %v6446 = vadd.f32 %v6445, 0.0
        %p6447 = scmp.ne.s32.totalorder %s33, 0
        %s6448 = scalar_select %p6447, 1, 0
        %v6449 = vstv %s6448
        %vm6450 = vcmp.eq.s32.totalorder %v6449, 1
        %vm6451 = vmand %vm6265, %vm6450
        %v6452 = vsel %vm6451, %v6427, 0.0
        %v6453 = vsel %vm6430, %v6452, 0.0
        %6454 = vadd.xlane.f32.xlu0 %v6453
        %v6455 = vpop.xlane.xlu0 %6454
        %v6456 = vrot.slane %v6455, 4
        %v6457 = vadd.f32 %v6455, %v6456
        %v6458 = vrot.slane %v6457, 2
        %v6459 = vadd.f32 %v6457, %v6458
        %v6460 = vrot.slane %v6459, 1
        %v6461 = vadd.f32 %v6459, %v6460
        %s6462 = vtos %v6461
        %vm6463 = vcmp.eq.s32.totalorder %v5975, 1
        %v6464 = vstv %s6462
        %v6465 = vsel %vm6463, %v6464, 0.0
        %v6466 = vadd.f32 %v6444, %v6465
        %v6467 = vsel %vm6463, 0.5952381, 0.0
        %v6468 = vadd.f32 %v6446, %v6467
        %vm6469 = vmxor %vm6265, 1
        %vm6470 = vmand %vm6469, %vm6268
        %v6471 = vsel %vm6470, %v6427, 0.0
        %v6472 = vsel %vm6430, %v6471, 0.0
        %6473 = vadd.xlane.f32.xlu0 %v6472
        %v6474 = vpop.xlane.xlu0 %6473
        %v6475 = vrot.slane %v6474, 4
        %v6476 = vadd.f32 %v6474, %v6475
        %v6477 = vrot.slane %v6476, 2
        %v6478 = vadd.f32 %v6476, %v6477
        %v6479 = vrot.slane %v6478, 1
        %v6480 = vadd.f32 %v6478, %v6479
        %s6481 = vtos %v6480
        %vm6482 = vcmp.eq.s32.totalorder %v5975, 2
        %v6483 = vstv %s6481
        %v6484 = vsel %vm6482, %v6483, 0.0
        %v6485 = vadd.f32 %v6466, %v6484
        %v6486 = vsel %vm6482, 2.3809524, 0.0
        %v6487 = vadd.f32 %v6468, %v6486
        %vm6488 = vmand %vm6469, %vm6450
        %v6489 = vsel %vm6488, %v6427, 0.0
        %v6490 = vsel %vm6430, %v6489, 0.0
        %6491 = vadd.xlane.f32.xlu0 %v6490
        %v6492 = vpop.xlane.xlu0 %6491
        %v6493 = vrot.slane %v6492, 4
        %v6494 = vadd.f32 %v6492, %v6493
        %v6495 = vrot.slane %v6494, 2
        %v6496 = vadd.f32 %v6494, %v6495
        %v6497 = vrot.slane %v6496, 1
        %v6498 = vadd.f32 %v6496, %v6497
        %s6499 = vtos %v6498
        %vm6500 = vcmp.eq.s32.totalorder %v5975, 3
        %v6501 = vstv %s6499
        %v6502 = vsel %vm6500, %v6501, 0.0
        %v6503 = vadd.f32 %v6485, %v6502
        %v6504 = vsel %vm6500, 1.1904762, 0.0
        %v6505 = vadd.f32 %v6487, %v6504
        %v6506 = vld [vmem:[%s16] sm:$0x1]
        %v6507 = vadd.f32 %v6506, %v6503
        %vm6508 = vcmask 24576
        %6509 = vst.msk [vmem:[%s16] sm:$0x1] %vm6508, %v6507
        %p6510 = scmp.eq.s32.totalorder %s33, 2
        // Predicated region
        $region133: #{model_forward.1} parent=83 // pred_check
          %p6511 = pneg %p6510
        $region134: #{model_forward.1} parent=83 // pred_check_branch
          %6513 = sbr.rel (%p6511) target = $region136
        $region135: #{model_forward.1} parent=83 // pred_region
          %v6514 = vld [vmem:[%s16] sm:$0x1]
          %v6515 = vmul.f32 %v6514, %v6505
          %6516 = vst.msk [vmem:[%s16] sm:$0x1] %vm6508, %v6515
        $region136: #{model_forward.1} parent=83 // pred_fallthru
          _
        // Predicated region
        $region137: #{model_forward.1} parent=83 // pred_check
          %p6517 = pneg %p402
        $region138: #{model_forward.1} parent=83 // pred_check_branch
          %6519 = sbr.rel (%p6517) target = $region140
        $region139: #{model_forward.1} parent=83 // pred_region
          _
        $region140: #{model_forward.1} parent=83 // pred_fallthru
          _
        // Predicated region
        $region141: #{model_forward.1} parent=83 // pred_check
          %p6520 = pneg %p402
        $region142: #{model_forward.1} parent=83 // pred_check_branch
          %6522 = sbr.rel (%p6520) target = $region144
        $region143: #{model_forward.1} parent=83 // pred_region
          _
        $region144: #{model_forward.1} parent=83 // pred_fallthru
          _
      $region84: #{model_forward.1} parent=5 // pred_fallthru
        _
      %p6523 = scmp.le.s32.totalorder 2, %s28
      // Predicated region
      $region145: #{model_forward.1} parent=5 // pred_check
        %p6524 = pneg %p6523
      $region146: #{model_forward.1} parent=5 // pred_check_branch
        %6526 = sbr.rel (%p6524) target = $region148
      $region147: #{model_forward.1} parent=5 // pred_region
        %s6527 = ssub.s32 %s28, 2
      $region148: #{model_forward.1} parent=5 // pred_fallthru
        _
    $region6: #{model_forward.1} parent=1 // loop_footer
      %s32 = sadd.s32 1, %s28
    $region7: #{model_forward.1} parent=1 // loop_footer_branch
      %27 = sbr.rel target = $region3
    $region8: #{model_forward.1} parent=1 // loop_exit
      _
    %6528 = vsyncpa [#allocation4], 1
    %s6529 = scalar_lea.sflag [#allocation4], 1
    %6530 = vsyncpa %s6529, 1
    %6531 = vsyncpa [#allocation6], 1
    %6532 = vsyncpa [#allocation9], 1
    %6533 = vsyncpa [#allocation12], 1
    %6534 = vsyncpa [#allocation15], 1
    %6535 = vsyncpa [#allocation18], 1

</llo_original>
